<compile_context>
chip_gen: v6e
topology: v6e:2x2x1
jax: 0.10.0
libtpu: 0.0.40
codegen_flags: <defaults>
</compile_context>

<pallas_src>
import jax
import jax.numpy as jnp
from jax import lax
from jax.experimental import pallas as pl
from jax.experimental.pallas import tpu as pltpu

# ---- problem sizes (channel sizes are fixed by the module: 64 -> 128) ----
N = 2            # batch
C1 = 64          # unit_gtcn_5 in_channels
C2 = 128         # unit_gtcn_5 out_channels (= unit_tcn channels)
T = 8            # temporal length into the gcn
V = 16           # graph vertices
S = 3            # num_subset
COFF = 4         # coff_embedding
IC = C2 // COFF  # inter_channels = 32
K = 9            # temporal kernel size
PAD = 4          # temporal padding
STRIDE = 2       # unit_tcn temporal stride
TO = (T + 2 * PAD - K) // STRIDE + 1   # = 4, temporal length after the tcn
P = T * V        # 128  lane-dense "time*vertex" axis
Q = TO * V       # 64
BN_EPS = 1e-5


# --------------------------------------------------------------------------
# Pallas kernel: one batch sample per grid step.
# --------------------------------------------------------------------------
def _resblock_kernel(xtaps_ref, x2_ref, wab_ref, bab_ref, wT_ref, bT_ref,
                     wd_ref, bmain_ref, A_ref, E_ref, ET_ref, mask_ref,
                     sel_ref, wt_ref, btcn_ref, out_ref):
    f32 = jnp.float32
    xt = xtaps_ref[0]                              # (K*C1, P)   tap-stacked x
    x_s = xt[PAD * C1:(PAD + 1) * C1, :]           # (C1, P)     centre tap == x

    # All 1x1 conv_a/conv_b outputs in one matmul; all 9-tap conv_T1/conv_T2
    # outputs in one matmul against the stacked taps.  Rows: (subset, type, ic).
    ab = jnp.dot(wab_ref[...], x_s, preferred_element_type=f32) + bab_ref[...]  # (2*S*IC, P)
    tt = jnp.dot(wT_ref[...], xt, preferred_element_type=f32) + bT_ref[...]     # (2*S*IC, P)

    inv = 1.0 / float(IC * T)

    def attention(pa, pb):
        # M[v, w] = sum_{ic, t} pa[ic, t*V+v] * pb[ic, t*V+w], softmax over v.
        g = lax.dot_general(pa, pb, (((0,), (0,)), ((), ())),
                            preferred_element_type=f32)                          # (P, P)
        m = jnp.dot(jnp.dot(ET_ref[...], g * mask_ref[...],
                            preferred_element_type=f32),
                    E_ref[...], preferred_element_type=f32) * inv                # (V, V)
        m = m - jnp.max(m, axis=0, keepdims=True)
        e = jnp.exp(m)
        return e * pl.reciprocal(jnp.sum(e, axis=0, keepdims=True), approx=True)

    # `down` branch (bn-folded 1x1 conv) plus every folded bias term, then add
    # the S graph branches:  y += (bn_scale*Wd_i) @ x @ kron(I_T, A1_i).
    y = jnp.dot(wd_ref[S * C2:(S + 1) * C2, :], x_s,
                preferred_element_type=f32) + bmain_ref[...]                     # (C2, P)
    for i in range(S):
        r = i * 2 * IC
        a1 = (A_ref[i]
              + attention(ab[r:r + IC, :], ab[r + IC:r + 2 * IC, :])
              + attention(tt[r:r + IC, :], tt[r + IC:r + 2 * IC, :]))            # (V, V)
        ka = jnp.dot(jnp.dot(E_ref[...], a1, preferred_element_type=f32),
                     ET_ref[...], preferred_element_type=f32) * mask_ref[...]    # kron(I_T, a1)
        ui = jnp.dot(wd_ref[i * C2:(i + 1) * C2, :], x_s,
                     preferred_element_type=f32)                                 # (C2, P)
        y = y + jnp.dot(ui, ka, preferred_element_type=f32)
    y = jnp.maximum(y, 0.0)                                                      # gcn output (C2, T*V)

    # unit_tcn: 9-tap, stride-2 temporal conv (bn and w1 already folded into the
    # weights) expressed as matmuls with constant 0/1 time-selection matrices,
    # plus the w2-scaled second ResBlock input.
    tout = x2_ref[0] + btcn_ref[...]                                             # (C2, TO*V)
    for k in range(K):
        yk = jnp.dot(y, sel_ref[k], preferred_element_type=f32)                  # (C2, TO*V)
        tout = tout + jnp.dot(wt_ref[k], yk, preferred_element_type=f32)
    out_ref[0] = tout


# --------------------------------------------------------------------------
# One-time parameter folding (kept out of the per-call path).
# --------------------------------------------------------------------------
def _bn_fold(g, b, m, v):
    sc = g / jnp.sqrt(v + BN_EPS)
    return sc, b - m * sc


def prepare_params(p):
    f32 = jnp.float32
    eyeV = jnp.eye(V, dtype=f32)

    # A_ch3 = 4*A^2 - A - 2*I (elementwise pow, as torch.pow does) ; + PA
    A_comb = 4.0 * p['A'] * p['A'] - p['A'] - 2.0 * eyeV[None] + p['PA']

    bn_sc, bn_sh = _bn_fold(p['bn_g'], p['bn_b'], p['bn_m'], p['bn_v'])
    dn_sc, dn_sh = _bn_fold(p['dn_g'], p['dn_b'], p['dn_m'], p['dn_v'])
    tc_sc, tc_sh = _bn_fold(p['tc_g'], p['tc_b'], p['tc_m'], p['tc_v'])

    # conv_a / conv_b : one (S*2*IC, C1) weight, rows ordered (subset, [a|b], ic)
    wab = jnp.concatenate(
        [jnp.concatenate([p['wa'][i], p['wb'][i]], axis=0) for i in range(S)], axis=0)
    bab = jnp.concatenate(
        [jnp.concatenate([p['ba'][i], p['bb'][i]]) for i in range(S)])[:, None]

    # conv_T1 / conv_T2 : one (S*2*IC, K*C1) weight, columns ordered (tap k, c)
    def taps(w):                                   # (S, IC, C1, K) -> (S, IC, K*C1)
        return jnp.transpose(w, (0, 1, 3, 2)).reshape(S, IC, K * C1)
    wt1, wt2 = taps(p['wT1']), taps(p['wT2'])
    wT = jnp.concatenate(
        [jnp.concatenate([wt1[i], wt2[i]], axis=0) for i in range(S)], axis=0)
    bT = jnp.concatenate(
        [jnp.concatenate([p['bT1'][i], p['bT2'][i]]) for i in range(S)])[:, None]

    # conv_d (bn-folded, all subsets) stacked on top of the bn-folded `down` conv
    wd_eff = (bn_sc[None, :, None] * p['wd']).reshape(S * C2, C1)
    wdown_eff = dn_sc[:, None] * p['wdown']
    wdbig = jnp.concatenate([wd_eff, wdown_eff], axis=0)                         # (4*C2, C1)
    bmain = (bn_sc * jnp.sum(p['bd'], axis=0) + bn_sh
             + dn_sc * p['bdown'] + dn_sh)[:, None]                              # (C2, 1)

    # Constants for moving between the (V,V) attention space and the T*V lane axis.
    E = (jnp.arange(P)[:, None] % V == jnp.arange(V)[None, :]).astype(f32)       # (P, V)
    ET = E.T                                                                     # (V, P)
    mask = (jnp.arange(P)[:, None] // V ==
            jnp.arange(P)[None, :] // V).astype(f32)                             # (P, P)

    # Selection matrices implementing the stride-2, pad-4, 9-tap temporal conv of
    # unit_tcn as plain matmuls on the lane-dense gcn output.
    tin = 2 * jnp.arange(TO)[None, :] + jnp.arange(K)[:, None] - PAD             # (K, TO)
    hit = (jnp.arange(T)[None, :, None] == tin[:, None, :]).astype(f32)          # (K, T, TO)
    sel = (hit[:, :, None, :, None] * eyeV[None, None, :, None, :]).reshape(K, P, Q)

    # ResBlock mixing weights; fold w1 and the tcn BN into the tcn weights.
    ew = jnp.exp(p['w'])
    w1 = ew[0] / jnp.sum(ew)
    w2 = ew[1] / jnp.sum(ew)
    wt = (w1 * tc_sc)[None, :, None] * jnp.transpose(p['wtcn'], (2, 0, 1))       # (K, C2, C2)
    btcn = (w1 * (tc_sc * p['btcn'] + tc_sh))[:, None]                           # (C2, 1)

    return dict(A_comb=A_comb, wab=wab, bab=bab, wT=wT, bT=bT, wdbig=wdbig,
                bmain=bmain, E=E, ET=ET, mask=mask, sel=sel, wt=wt, btcn=btcn,
                w2=w2)


# --------------------------------------------------------------------------
# Forward wrapper (jitted): only data-dependent prep + the pallas_call.
# --------------------------------------------------------------------------
@jax.jit
def resblock_forward(x1, x_res, pp):
    n = x1.shape[0]
    xp = jnp.pad(x1, ((0, 0), (0, 0), (PAD, PAD), (0, 0)))
    # Tap-stacked, lane-dense input: rows = (tap k, in-channel c), lanes = t*V+v.
    xtaps = jnp.stack([xp[:, :, k:k + T, :] for k in range(K)], axis=1)
    xtaps = xtaps.reshape(n, K * C1, P)
    x2s = (pp['w2'] * x_res).reshape(n, C2, Q)

    consts = (pp['wab'], pp['bab'], pp['wT'], pp['bT'], pp['wdbig'], pp['bmain'],
              pp['A_comb'], pp['E'], pp['ET'], pp['mask'], pp['sel'], pp['wt'],
              pp['btcn'])

    def const_spec(a):
        return pl.BlockSpec(a.shape, lambda g, _r=a.ndim: (0,) * _r)

    out = pl.pallas_call(
        _resblock_kernel,
        out_shape=jax.ShapeDtypeStruct((n, C2, Q), jnp.float32),
        grid=(n,),
        in_specs=[pl.BlockSpec((1, K * C1, P), lambda g: (g, 0, 0)),
                  pl.BlockSpec((1, C2, Q), lambda g: (g, 0, 0))]
                 + [const_spec(a) for a in consts],
        out_specs=pl.BlockSpec((1, C2, Q), lambda g: (g, 0, 0)),
        compiler_params=pltpu.CompilerParams(
            dimension_semantics=("parallel",)),
    )(xtaps, x2s, *consts)
    return out.reshape(n, C2, TO, V)


# --------------------------------------------------------------------------
# Parameters + pure-JAX reference reproducing the PyTorch forward semantics.
# --------------------------------------------------------------------------
def init_params(key):
    """Parameters with the module's shapes; BatchNorms are represented by
    (gamma, beta, running_mean, running_var) and evaluated in inference form.
    Values are random (instead of the degenerate 1e-6 / zero inits) so the
    correctness check exercises every path."""
    ks = jax.random.split(key, 20)
    f32 = jnp.float32
    nrm = lambda k, shp, std: std * jax.random.normal(k, shp, f32)
    p = {}
    p['A'] = jax.random.uniform(ks[0], (S, V, V), f32, 0.0, 0.3)
    p['PA'] = nrm(ks[1], (S, V, V), 1e-2)
    p['wa'] = nrm(ks[2], (S, IC, C1), (2.0 / IC) ** 0.5)
    p['ba'] = nrm(ks[3], (S, IC), 0.1)
    p['wb'] = nrm(ks[4], (S, IC, C1), (2.0 / IC) ** 0.5)
    p['bb'] = nrm(ks[5], (S, IC), 0.1)
    p['wT1'] = nrm(ks[6], (S, IC, C1, K), (2.0 / (IC * K)) ** 0.5)
    p['bT1'] = nrm(ks[7], (S, IC), 0.1)
    p['wT2'] = nrm(ks[8], (S, IC, C1, K), (2.0 / (IC * K)) ** 0.5)
    p['bT2'] = nrm(ks[9], (S, IC), 0.1)
    p['wd'] = nrm(ks[10], (S, C2, C1), (2.0 / (C2 * C1 * S)) ** 0.5)
    p['bd'] = nrm(ks[11], (S, C2), 0.1)
    p['wdown'] = nrm(ks[12], (C2, C1), (2.0 / C2) ** 0.5)
    p['bdown'] = nrm(ks[13], (C2,), 0.1)
    p['wtcn'] = nrm(ks[14], (C2, C2, K), (2.0 / (C2 * K)) ** 0.5)
    p['btcn'] = nrm(ks[15], (C2,), 0.1)

    def bn_params(k):
        k1, k2, k3, k4 = jax.random.split(k, 4)
        return (1.0 + 0.1 * jax.random.normal(k1, (C2,), f32),
                0.1 * jax.random.normal(k2, (C2,), f32),
                0.1 * jax.random.normal(k3, (C2,), f32),
                0.5 + jax.random.uniform(k4, (C2,), f32))
    p['bn_g'], p['bn_b'], p['bn_m'], p['bn_v'] = bn_params(ks[16])
    p['dn_g'], p['dn_b'], p['dn_m'], p['dn_v'] = bn_params(ks[17])
    p['tc_g'], p['tc_b'], p['tc_m'], p['tc_v'] = bn_params(ks[18])
    p['w'] = 1.0 + 0.1 * jax.random.normal(ks[19], (2,), f32)
    return p


def ref_forward(x1, x_res, p):
    def bn(y, g, b, m, v):
        sc = g / jnp.sqrt(v + BN_EPS)
        return y * sc[None, :, None, None] + (b - m * sc)[None, :, None, None]

    A_comb = (4.0 * p['A'] * p['A'] - p['A']
              - 2.0 * jnp.eye(V, dtype=jnp.float32)[None] + p['PA'])
    xp = jnp.pad(x1, ((0, 0), (0, 0), (PAD, PAD), (0, 0)))
    y = jnp.zeros((x1.shape[0], C2, T, V), jnp.float32)
    for i in range(S):
        ca = jnp.einsum('oc,nctv->notv', p['wa'][i], x1) + p['ba'][i][None, :, None, None]
        cb = jnp.einsum('oc,nctv->notv', p['wb'][i], x1) + p['bb'][i][None, :, None, None]
        t1 = sum(jnp.einsum('oc,nctv->notv', p['wT1'][i, :, :, k], xp[:, :, k:k + T, :])
                 for k in range(K)) + p['bT1'][i][None, :, None, None]
        t2 = sum(jnp.einsum('oc,nctv->notv', p['wT2'][i, :, :, k], xp[:, :, k:k + T, :])
                 for k in range(K)) + p['bT2'][i][None, :, None, None]
        ma = jax.nn.softmax(jnp.einsum('nitv,nitw->nvw', ca, cb) / (IC * T), axis=1)
        mt = jax.nn.softmax(jnp.einsum('nitv,nitw->nvw', t1, t2) / (IC * T), axis=1)
        a1 = A_comb[i][None] + ma + mt
        z = jnp.einsum('nctv,nvw->nctw', x1, a1)
        y = y + jnp.einsum('oc,nctv->notv', p['wd'][i], z) + p['bd'][i][None, :, None, None]
    y = bn(y, p['bn_g'], p['bn_b'], p['bn_m'], p['bn_v'])
    down = jnp.einsum('oc,nctv->notv', p['wdown'], x1) + p['bdown'][None, :, None, None]
    down = bn(down, p['dn_g'], p['dn_b'], p['dn_m'], p['dn_v'])
    y = jnp.maximum(y + down, 0.0)

    yp = jnp.pad(y, ((0, 0), (0, 0), (PAD, PAD), (0, 0)))
    tc = sum(jnp.einsum('oc,nctv->notv', p['wtcn'][:, :, k], yp[:, :, k:k + 2 * TO:2, :])
             for k in range(K)) + p['btcn'][None, :, None, None]
    tc = bn(tc, p['tc_g'], p['tc_b'], p['tc_m'], p['tc_v'])

    ew = jnp.exp(p['w'])
    w1 = ew[0] / jnp.sum(ew)
    w2 = ew[1] / jnp.sum(ew)
    return tc * w1 + x_res * w2


if __name__ == "__main__":
    key = jax.random.PRNGKey(0)
    kx1, kx2, kp = jax.random.split(key, 3)
    x1 = jax.random.normal(kx1, (N, C1, T, V), jnp.float32)      # gcn input
    x_res = jax.random.normal(kx2, (N, C2, TO, V), jnp.float32)  # ResBlock's 2nd input
    params = init_params(kp)

    prepped = prepare_params(params)          # one-time parameter folding
    out = resblock_forward(x1, x_res, prepped)
    out = jax.block_until_ready(out)

    ref = ref_forward(x1, x_res, params)
    assert out.shape == (N, C2, TO, V)
    err = jnp.max(jnp.abs(out - ref))
    assert jnp.allclose(out, ref, atol=1e-3, rtol=1e-3), f"max abs diff {err}"
    print("KERNEL_OK")
</pallas_src>

<mosaic_0001>
module attributes {stable_mosaic.version = 11 : i64} {
  func.func @_resblock_kernel(%arg0: i32, %arg1: memref<1x576x128xf32, #tpu.memory_space<vmem>>, %arg2: memref<1x128x64xf32, #tpu.memory_space<vmem>>, %arg3: memref<192x64xf32, #tpu.memory_space<vmem>>, %arg4: memref<192x1xf32, #tpu.memory_space<vmem>>, %arg5: memref<192x576xf32, #tpu.memory_space<vmem>>, %arg6: memref<192x1xf32, #tpu.memory_space<vmem>>, %arg7: memref<512x64xf32, #tpu.memory_space<vmem>>, %arg8: memref<128x1xf32, #tpu.memory_space<vmem>>, %arg9: memref<3x16x16xf32, #tpu.memory_space<vmem>>, %arg10: memref<128x16xf32, #tpu.memory_space<vmem>>, %arg11: memref<16x128xf32, #tpu.memory_space<vmem>>, %arg12: memref<128x128xf32, #tpu.memory_space<vmem>>, %arg13: memref<9x128x64xf32, #tpu.memory_space<vmem>>, %arg14: memref<9x128x128xf32, #tpu.memory_space<vmem>>, %arg15: memref<128x1xf32, #tpu.memory_space<vmem>>, %arg16: memref<1x128x64xf32, #tpu.memory_space<vmem>>) attributes {dimension_semantics = [#tpu.dimension_semantics<parallel>], iteration_bounds = array<i64: 2>, scalar_prefetch = 0 : i64, scratch_operands = 0 : i64, tpu.core_type = #tpu.core_type<tc>, window_params = [{transform_indices = @transform_0, window_bounds = array<i64: 1, 576, 128>}, {transform_indices = @transform_1, window_bounds = array<i64: 1, 128, 64>}, {pipeline_mode = #tpu.pipeline_mode<synchronous>, transform_indices = @transform_2, window_bounds = array<i64: 192, 64>}, {pipeline_mode = #tpu.pipeline_mode<synchronous>, transform_indices = @transform_3, window_bounds = array<i64: 192, 1>}, {pipeline_mode = #tpu.pipeline_mode<synchronous>, transform_indices = @transform_4, window_bounds = array<i64: 192, 576>}, {pipeline_mode = #tpu.pipeline_mode<synchronous>, transform_indices = @transform_5, window_bounds = array<i64: 192, 1>}, {pipeline_mode = #tpu.pipeline_mode<synchronous>, transform_indices = @transform_6, window_bounds = array<i64: 512, 64>}, {pipeline_mode = #tpu.pipeline_mode<synchronous>, transform_indices = @transform_7, window_bounds = array<i64: 128, 1>}, {pipeline_mode = #tpu.pipeline_mode<synchronous>, transform_indices = @transform_8, window_bounds = array<i64: 3, 16, 16>}, {pipeline_mode = #tpu.pipeline_mode<synchronous>, transform_indices = @transform_9, window_bounds = array<i64: 128, 16>}, {pipeline_mode = #tpu.pipeline_mode<synchronous>, transform_indices = @transform_10, window_bounds = array<i64: 16, 128>}, {pipeline_mode = #tpu.pipeline_mode<synchronous>, transform_indices = @transform_11, window_bounds = array<i64: 128, 128>}, {pipeline_mode = #tpu.pipeline_mode<synchronous>, transform_indices = @transform_12, window_bounds = array<i64: 9, 128, 64>}, {pipeline_mode = #tpu.pipeline_mode<synchronous>, transform_indices = @transform_13, window_bounds = array<i64: 9, 128, 128>}, {pipeline_mode = #tpu.pipeline_mode<synchronous>, transform_indices = @transform_14, window_bounds = array<i64: 128, 1>}, {transform_indices = @transform_15, window_bounds = array<i64: 1, 128, 64>}]} {
    %c0 = arith.constant 0 : index
    %c0_0 = arith.constant 0 : index
    %c0_1 = arith.constant 0 : index
    %0 = vector.load %arg1[%c0, %c0_0, %c0_1] : memref<1x576x128xf32, #tpu.memory_space<vmem>>, vector<1x576x128xf32>
    %1 = vector.shape_cast %0 : vector<1x576x128xf32> to vector<576x128xf32>
    %2 = vector.extract_strided_slice %1 {offsets = [256, 0], sizes = [64, 128], strides = [1, 1]} : vector<576x128xf32> to vector<64x128xf32>
    %c0_2 = arith.constant 0 : index
    %c0_3 = arith.constant 0 : index
    %3 = vector.load %arg3[%c0_2, %c0_3] : memref<192x64xf32, #tpu.memory_space<vmem>>, vector<192x64xf32>
    %cst = arith.constant dense<0.000000e+00> : vector<192x128xf32>
    %4 = tpu.matmul %3, %2, %cst {dimension_numbers = #tpu.dot_dimension_numbers<[1], [0], [0], [1], [0, 0, 1, 1], [], []>} : vector<192x64xf32>, vector<64x128xf32>, vector<192x128xf32> -> vector<192x128xf32>
    %c0_4 = arith.constant 0 : index
    %c0_5 = arith.constant 0 : index
    %5 = vector.load %arg4[%c0_4, %c0_5] : memref<192x1xf32, #tpu.memory_space<vmem>>, vector<192x1xf32>
    %6 = vector.broadcast %5 : vector<192x1xf32> to vector<192x128xf32>
    %7 = arith.addf %4, %6 : vector<192x128xf32>
    %c0_6 = arith.constant 0 : index
    %c0_7 = arith.constant 0 : index
    %8 = vector.load %arg5[%c0_6, %c0_7] : memref<192x576xf32, #tpu.memory_space<vmem>>, vector<192x576xf32>
    %cst_8 = arith.constant dense<0.000000e+00> : vector<192x128xf32>
    %9 = tpu.matmul %8, %1, %cst_8 {dimension_numbers = #tpu.dot_dimension_numbers<[1], [0], [0], [1], [0, 0, 1, 1], [], []>} : vector<192x576xf32>, vector<576x128xf32>, vector<192x128xf32> -> vector<192x128xf32>
    %c0_9 = arith.constant 0 : index
    %c0_10 = arith.constant 0 : index
    %10 = vector.load %arg6[%c0_9, %c0_10] : memref<192x1xf32, #tpu.memory_space<vmem>>, vector<192x1xf32>
    %11 = vector.broadcast %10 : vector<192x1xf32> to vector<192x128xf32>
    %12 = arith.addf %9, %11 : vector<192x128xf32>
    %c384 = arith.constant 384 : index
    %c0_11 = arith.constant 0 : index
    %13 = vector.load %arg7[%c384, %c0_11] : memref<512x64xf32, #tpu.memory_space<vmem>>, vector<128x64xf32>
    %cst_12 = arith.constant dense<0.000000e+00> : vector<128x128xf32>
    %14 = tpu.matmul %13, %2, %cst_12 {dimension_numbers = #tpu.dot_dimension_numbers<[1], [0], [0], [1], [0, 0, 1, 1], [], []>} : vector<128x64xf32>, vector<64x128xf32>, vector<128x128xf32> -> vector<128x128xf32>
    %c0_13 = arith.constant 0 : index
    %c0_14 = arith.constant 0 : index
    %15 = vector.load %arg8[%c0_13, %c0_14] : memref<128x1xf32, #tpu.memory_space<vmem>>, vector<128x1xf32>
    %16 = vector.broadcast %15 : vector<128x1xf32> to vector<128x128xf32>
    %17 = arith.addf %14, %16 : vector<128x128xf32>
    %c0_15 = arith.constant 0 : index
    %c0_16 = arith.constant 0 : index
    %c0_17 = arith.constant 0 : index
    %18 = vector.load %arg9[%c0_15, %c0_16, %c0_17] : memref<3x16x16xf32, #tpu.memory_space<vmem>>, vector<1x16x16xf32>
    %19 = vector.shape_cast %18 : vector<1x16x16xf32> to vector<16x16xf32>
    %20 = vector.extract_strided_slice %7 {offsets = [0, 0], sizes = [32, 128], strides = [1, 1]} : vector<192x128xf32> to vector<32x128xf32>
    %21 = vector.extract_strided_slice %7 {offsets = [32, 0], sizes = [32, 128], strides = [1, 1]} : vector<192x128xf32> to vector<32x128xf32>
    %cst_18 = arith.constant dense<0.000000e+00> : vector<128x128xf32>
    %22 = tpu.matmul %20, %21, %cst_18 {dimension_numbers = #tpu.dot_dimension_numbers<[0], [0], [1], [1], [0, 1, 1, 1], [], []>} : vector<32x128xf32>, vector<32x128xf32>, vector<128x128xf32> -> vector<128x128xf32>
    %c0_19 = arith.constant 0 : index
    %c0_20 = arith.constant 0 : index
    %23 = vector.load %arg11[%c0_19, %c0_20] : memref<16x128xf32, #tpu.memory_space<vmem>>, vector<16x128xf32>
    %c0_21 = arith.constant 0 : index
    %c0_22 = arith.constant 0 : index
    %24 = vector.load %arg12[%c0_21, %c0_22] : memref<128x128xf32, #tpu.memory_space<vmem>>, vector<128x128xf32>
    %25 = arith.mulf %22, %24 : vector<128x128xf32>
    %cst_23 = arith.constant dense<0.000000e+00> : vector<16x128xf32>
    %26 = tpu.matmul %23, %25, %cst_23 {dimension_numbers = #tpu.dot_dimension_numbers<[1], [0], [0], [1], [0, 0, 1, 1], [], []>} : vector<16x128xf32>, vector<128x128xf32>, vector<16x128xf32> -> vector<16x128xf32>
    %c0_24 = arith.constant 0 : index
    %c0_25 = arith.constant 0 : index
    %27 = vector.load %arg10[%c0_24, %c0_25] : memref<128x16xf32, #tpu.memory_space<vmem>>, vector<128x16xf32>
    %cst_26 = arith.constant dense<0.000000e+00> : vector<16x16xf32>
    %28 = tpu.matmul %26, %27, %cst_26 {dimension_numbers = #tpu.dot_dimension_numbers<[1], [0], [0], [1], [0, 0, 1, 1], [], []>} : vector<16x128xf32>, vector<128x16xf32>, vector<16x16xf32> -> vector<16x16xf32>
    %cst_27 = arith.constant 3.906250e-03 : f32
    %29 = vector.broadcast %cst_27 : f32 to vector<16x16xf32>
    %30 = arith.mulf %28, %29 : vector<16x16xf32>
    %cst_28 = arith.constant dense<0xFF800000> : vector<16xf32>
    %31 = vector.multi_reduction <maximumf>, %30, %cst_28 [0] : vector<16x16xf32> to vector<16xf32>
    %32 = vector.shape_cast %31 : vector<16xf32> to vector<1x16xf32>
    %33 = vector.broadcast %32 : vector<1x16xf32> to vector<16x16xf32>
    %34 = arith.subf %30, %33 : vector<16x16xf32>
    %35 = math.exp %34 : vector<16x16xf32>
    %cst_29 = arith.constant dense<0.000000e+00> : vector<16xf32>
    %36 = vector.multi_reduction <add>, %35, %cst_29 [0] : vector<16x16xf32> to vector<16xf32>
    %37 = vector.shape_cast %36 : vector<16xf32> to vector<1x16xf32>
    %38 = tpu.reciprocal %37 {approx = true} : vector<1x16xf32> -> vector<1x16xf32>
    %39 = vector.broadcast %38 : vector<1x16xf32> to vector<16x16xf32>
    %40 = arith.mulf %35, %39 : vector<16x16xf32>
    %41 = arith.addf %19, %40 : vector<16x16xf32>
    %42 = vector.extract_strided_slice %12 {offsets = [0, 0], sizes = [32, 128], strides = [1, 1]} : vector<192x128xf32> to vector<32x128xf32>
    %43 = vector.extract_strided_slice %12 {offsets = [32, 0], sizes = [32, 128], strides = [1, 1]} : vector<192x128xf32> to vector<32x128xf32>
    %cst_30 = arith.constant dense<0.000000e+00> : vector<128x128xf32>
    %44 = tpu.matmul %42, %43, %cst_30 {dimension_numbers = #tpu.dot_dimension_numbers<[0], [0], [1], [1], [0, 1, 1, 1], [], []>} : vector<32x128xf32>, vector<32x128xf32>, vector<128x128xf32> -> vector<128x128xf32>
    %c0_31 = arith.constant 0 : index
    %c0_32 = arith.constant 0 : index
    %45 = vector.load %arg11[%c0_31, %c0_32] : memref<16x128xf32, #tpu.memory_space<vmem>>, vector<16x128xf32>
    %c0_33 = arith.constant 0 : index
    %c0_34 = arith.constant 0 : index
    %46 = vector.load %arg12[%c0_33, %c0_34] : memref<128x128xf32, #tpu.memory_space<vmem>>, vector<128x128xf32>
    %47 = arith.mulf %44, %46 : vector<128x128xf32>
    %cst_35 = arith.constant dense<0.000000e+00> : vector<16x128xf32>
    %48 = tpu.matmul %45, %47, %cst_35 {dimension_numbers = #tpu.dot_dimension_numbers<[1], [0], [0], [1], [0, 0, 1, 1], [], []>} : vector<16x128xf32>, vector<128x128xf32>, vector<16x128xf32> -> vector<16x128xf32>
    %c0_36 = arith.constant 0 : index
    %c0_37 = arith.constant 0 : index
    %49 = vector.load %arg10[%c0_36, %c0_37] : memref<128x16xf32, #tpu.memory_space<vmem>>, vector<128x16xf32>
    %cst_38 = arith.constant dense<0.000000e+00> : vector<16x16xf32>
    %50 = tpu.matmul %48, %49, %cst_38 {dimension_numbers = #tpu.dot_dimension_numbers<[1], [0], [0], [1], [0, 0, 1, 1], [], []>} : vector<16x128xf32>, vector<128x16xf32>, vector<16x16xf32> -> vector<16x16xf32>
    %cst_39 = arith.constant 3.906250e-03 : f32
    %51 = vector.broadcast %cst_39 : f32 to vector<16x16xf32>
    %52 = arith.mulf %50, %51 : vector<16x16xf32>
    %cst_40 = arith.constant dense<0xFF800000> : vector<16xf32>
    %53 = vector.multi_reduction <maximumf>, %52, %cst_40 [0] : vector<16x16xf32> to vector<16xf32>
    %54 = vector.shape_cast %53 : vector<16xf32> to vector<1x16xf32>
    %55 = vector.broadcast %54 : vector<1x16xf32> to vector<16x16xf32>
    %56 = arith.subf %52, %55 : vector<16x16xf32>
    %57 = math.exp %56 : vector<16x16xf32>
    %cst_41 = arith.constant dense<0.000000e+00> : vector<16xf32>
    %58 = vector.multi_reduction <add>, %57, %cst_41 [0] : vector<16x16xf32> to vector<16xf32>
    %59 = vector.shape_cast %58 : vector<16xf32> to vector<1x16xf32>
    %60 = tpu.reciprocal %59 {approx = true} : vector<1x16xf32> -> vector<1x16xf32>
    %61 = vector.broadcast %60 : vector<1x16xf32> to vector<16x16xf32>
    %62 = arith.mulf %57, %61 : vector<16x16xf32>
    %63 = arith.addf %41, %62 : vector<16x16xf32>
    %c0_42 = arith.constant 0 : index
    %c0_43 = arith.constant 0 : index
    %64 = vector.load %arg10[%c0_42, %c0_43] : memref<128x16xf32, #tpu.memory_space<vmem>>, vector<128x16xf32>
    %cst_44 = arith.constant dense<0.000000e+00> : vector<128x16xf32>
    %65 = tpu.matmul %64, %63, %cst_44 {dimension_numbers = #tpu.dot_dimension_numbers<[1], [0], [0], [1], [0, 0, 1, 1], [], []>} : vector<128x16xf32>, vector<16x16xf32>, vector<128x16xf32> -> vector<128x16xf32>
    %c0_45 = arith.constant 0 : index
    %c0_46 = arith.constant 0 : index
    %66 = vector.load %arg11[%c0_45, %c0_46] : memref<16x128xf32, #tpu.memory_space<vmem>>, vector<16x128xf32>
    %cst_47 = arith.constant dense<0.000000e+00> : vector<128x128xf32>
    %67 = tpu.matmul %65, %66, %cst_47 {dimension_numbers = #tpu.dot_dimension_numbers<[1], [0], [0], [1], [0, 0, 1, 1], [], []>} : vector<128x16xf32>, vector<16x128xf32>, vector<128x128xf32> -> vector<128x128xf32>
    %c0_48 = arith.constant 0 : index
    %c0_49 = arith.constant 0 : index
    %68 = vector.load %arg12[%c0_48, %c0_49] : memref<128x128xf32, #tpu.memory_space<vmem>>, vector<128x128xf32>
    %69 = arith.mulf %67, %68 : vector<128x128xf32>
    %c0_50 = arith.constant 0 : index
    %c0_51 = arith.constant 0 : index
    %70 = vector.load %arg7[%c0_50, %c0_51] : memref<512x64xf32, #tpu.memory_space<vmem>>, vector<128x64xf32>
    %cst_52 = arith.constant dense<0.000000e+00> : vector<128x128xf32>
    %71 = tpu.matmul %70, %2, %cst_52 {dimension_numbers = #tpu.dot_dimension_numbers<[1], [0], [0], [1], [0, 0, 1, 1], [], []>} : vector<128x64xf32>, vector<64x128xf32>, vector<128x128xf32> -> vector<128x128xf32>
    %cst_53 = arith.constant dense<0.000000e+00> : vector<128x128xf32>
    %72 = tpu.matmul %71, %69, %cst_53 {dimension_numbers = #tpu.dot_dimension_numbers<[1], [0], [0], [1], [0, 0, 1, 1], [], []>} : vector<128x128xf32>, vector<128x128xf32>, vector<128x128xf32> -> vector<128x128xf32>
    %73 = arith.addf %17, %72 : vector<128x128xf32>
    %c1 = arith.constant 1 : index
    %c0_54 = arith.constant 0 : index
    %c0_55 = arith.constant 0 : index
    %74 = vector.load %arg9[%c1, %c0_54, %c0_55] : memref<3x16x16xf32, #tpu.memory_space<vmem>>, vector<1x16x16xf32>
    %75 = vector.shape_cast %74 : vector<1x16x16xf32> to vector<16x16xf32>
    %76 = vector.extract_strided_slice %7 {offsets = [64, 0], sizes = [32, 128], strides = [1, 1]} : vector<192x128xf32> to vector<32x128xf32>
    %77 = vector.extract_strided_slice %7 {offsets = [96, 0], sizes = [32, 128], strides = [1, 1]} : vector<192x128xf32> to vector<32x128xf32>
    %cst_56 = arith.constant dense<0.000000e+00> : vector<128x128xf32>
    %78 = tpu.matmul %76, %77, %cst_56 {dimension_numbers = #tpu.dot_dimension_numbers<[0], [0], [1], [1], [0, 1, 1, 1], [], []>} : vector<32x128xf32>, vector<32x128xf32>, vector<128x128xf32> -> vector<128x128xf32>
    %c0_57 = arith.constant 0 : index
    %c0_58 = arith.constant 0 : index
    %79 = vector.load %arg11[%c0_57, %c0_58] : memref<16x128xf32, #tpu.memory_space<vmem>>, vector<16x128xf32>
    %c0_59 = arith.constant 0 : index
    %c0_60 = arith.constant 0 : index
    %80 = vector.load %arg12[%c0_59, %c0_60] : memref<128x128xf32, #tpu.memory_space<vmem>>, vector<128x128xf32>
    %81 = arith.mulf %78, %80 : vector<128x128xf32>
    %cst_61 = arith.constant dense<0.000000e+00> : vector<16x128xf32>
    %82 = tpu.matmul %79, %81, %cst_61 {dimension_numbers = #tpu.dot_dimension_numbers<[1], [0], [0], [1], [0, 0, 1, 1], [], []>} : vector<16x128xf32>, vector<128x128xf32>, vector<16x128xf32> -> vector<16x128xf32>
    %c0_62 = arith.constant 0 : index
    %c0_63 = arith.constant 0 : index
    %83 = vector.load %arg10[%c0_62, %c0_63] : memref<128x16xf32, #tpu.memory_space<vmem>>, vector<128x16xf32>
    %cst_64 = arith.constant dense<0.000000e+00> : vector<16x16xf32>
    %84 = tpu.matmul %82, %83, %cst_64 {dimension_numbers = #tpu.dot_dimension_numbers<[1], [0], [0], [1], [0, 0, 1, 1], [], []>} : vector<16x128xf32>, vector<128x16xf32>, vector<16x16xf32> -> vector<16x16xf32>
    %cst_65 = arith.constant 3.906250e-03 : f32
    %85 = vector.broadcast %cst_65 : f32 to vector<16x16xf32>
    %86 = arith.mulf %84, %85 : vector<16x16xf32>
    %cst_66 = arith.constant dense<0xFF800000> : vector<16xf32>
    %87 = vector.multi_reduction <maximumf>, %86, %cst_66 [0] : vector<16x16xf32> to vector<16xf32>
    %88 = vector.shape_cast %87 : vector<16xf32> to vector<1x16xf32>
    %89 = vector.broadcast %88 : vector<1x16xf32> to vector<16x16xf32>
    %90 = arith.subf %86, %89 : vector<16x16xf32>
    %91 = math.exp %90 : vector<16x16xf32>
    %cst_67 = arith.constant dense<0.000000e+00> : vector<16xf32>
    %92 = vector.multi_reduction <add>, %91, %cst_67 [0] : vector<16x16xf32> to vector<16xf32>
    %93 = vector.shape_cast %92 : vector<16xf32> to vector<1x16xf32>
    %94 = tpu.reciprocal %93 {approx = true} : vector<1x16xf32> -> vector<1x16xf32>
    %95 = vector.broadcast %94 : vector<1x16xf32> to vector<16x16xf32>
    %96 = arith.mulf %91, %95 : vector<16x16xf32>
    %97 = arith.addf %75, %96 : vector<16x16xf32>
    %98 = vector.extract_strided_slice %12 {offsets = [64, 0], sizes = [32, 128], strides = [1, 1]} : vector<192x128xf32> to vector<32x128xf32>
    %99 = vector.extract_strided_slice %12 {offsets = [96, 0], sizes = [32, 128], strides = [1, 1]} : vector<192x128xf32> to vector<32x128xf32>
    %cst_68 = arith.constant dense<0.000000e+00> : vector<128x128xf32>
    %100 = tpu.matmul %98, %99, %cst_68 {dimension_numbers = #tpu.dot_dimension_numbers<[0], [0], [1], [1], [0, 1, 1, 1], [], []>} : vector<32x128xf32>, vector<32x128xf32>, vector<128x128xf32> -> vector<128x128xf32>
    %c0_69 = arith.constant 0 : index
    %c0_70 = arith.constant 0 : index
    %101 = vector.load %arg11[%c0_69, %c0_70] : memref<16x128xf32, #tpu.memory_space<vmem>>, vector<16x128xf32>
    %c0_71 = arith.constant 0 : index
    %c0_72 = arith.constant 0 : index
    %102 = vector.load %arg12[%c0_71, %c0_72] : memref<128x128xf32, #tpu.memory_space<vmem>>, vector<128x128xf32>
    %103 = arith.mulf %100, %102 : vector<128x128xf32>
    %cst_73 = arith.constant dense<0.000000e+00> : vector<16x128xf32>
    %104 = tpu.matmul %101, %103, %cst_73 {dimension_numbers = #tpu.dot_dimension_numbers<[1], [0], [0], [1], [0, 0, 1, 1], [], []>} : vector<16x128xf32>, vector<128x128xf32>, vector<16x128xf32> -> vector<16x128xf32>
    %c0_74 = arith.constant 0 : index
    %c0_75 = arith.constant 0 : index
    %105 = vector.load %arg10[%c0_74, %c0_75] : memref<128x16xf32, #tpu.memory_space<vmem>>, vector<128x16xf32>
    %cst_76 = arith.constant dense<0.000000e+00> : vector<16x16xf32>
    %106 = tpu.matmul %104, %105, %cst_76 {dimension_numbers = #tpu.dot_dimension_numbers<[1], [0], [0], [1], [0, 0, 1, 1], [], []>} : vector<16x128xf32>, vector<128x16xf32>, vector<16x16xf32> -> vector<16x16xf32>
    %cst_77 = arith.constant 3.906250e-03 : f32
    %107 = vector.broadcast %cst_77 : f32 to vector<16x16xf32>
    %108 = arith.mulf %106, %107 : vector<16x16xf32>
    %cst_78 = arith.constant dense<0xFF800000> : vector<16xf32>
    %109 = vector.multi_reduction <maximumf>, %108, %cst_78 [0] : vector<16x16xf32> to vector<16xf32>
    %110 = vector.shape_cast %109 : vector<16xf32> to vector<1x16xf32>
    %111 = vector.broadcast %110 : vector<1x16xf32> to vector<16x16xf32>
    %112 = arith.subf %108, %111 : vector<16x16xf32>
    %113 = math.exp %112 : vector<16x16xf32>
    %cst_79 = arith.constant dense<0.000000e+00> : vector<16xf32>
    %114 = vector.multi_reduction <add>, %113, %cst_79 [0] : vector<16x16xf32> to vector<16xf32>
    %115 = vector.shape_cast %114 : vector<16xf32> to vector<1x16xf32>
    %116 = tpu.reciprocal %115 {approx = true} : vector<1x16xf32> -> vector<1x16xf32>
    %117 = vector.broadcast %116 : vector<1x16xf32> to vector<16x16xf32>
    %118 = arith.mulf %113, %117 : vector<16x16xf32>
    %119 = arith.addf %97, %118 : vector<16x16xf32>
    %c0_80 = arith.constant 0 : index
    %c0_81 = arith.constant 0 : index
    %120 = vector.load %arg10[%c0_80, %c0_81] : memref<128x16xf32, #tpu.memory_space<vmem>>, vector<128x16xf32>
    %cst_82 = arith.constant dense<0.000000e+00> : vector<128x16xf32>
    %121 = tpu.matmul %120, %119, %cst_82 {dimension_numbers = #tpu.dot_dimension_numbers<[1], [0], [0], [1], [0, 0, 1, 1], [], []>} : vector<128x16xf32>, vector<16x16xf32>, vector<128x16xf32> -> vector<128x16xf32>
    %c0_83 = arith.constant 0 : index
    %c0_84 = arith.constant 0 : index
    %122 = vector.load %arg11[%c0_83, %c0_84] : memref<16x128xf32, #tpu.memory_space<vmem>>, vector<16x128xf32>
    %cst_85 = arith.constant dense<0.000000e+00> : vector<128x128xf32>
    %123 = tpu.matmul %121, %122, %cst_85 {dimension_numbers = #tpu.dot_dimension_numbers<[1], [0], [0], [1], [0, 0, 1, 1], [], []>} : vector<128x16xf32>, vector<16x128xf32>, vector<128x128xf32> -> vector<128x128xf32>
    %c0_86 = arith.constant 0 : index
    %c0_87 = arith.constant 0 : index
    %124 = vector.load %arg12[%c0_86, %c0_87] : memref<128x128xf32, #tpu.memory_space<vmem>>, vector<128x128xf32>
    %125 = arith.mulf %123, %124 : vector<128x128xf32>
    %c128 = arith.constant 128 : index
    %c0_88 = arith.constant 0 : index
    %126 = vector.load %arg7[%c128, %c0_88] : memref<512x64xf32, #tpu.memory_space<vmem>>, vector<128x64xf32>
    %cst_89 = arith.constant dense<0.000000e+00> : vector<128x128xf32>
    %127 = tpu.matmul %126, %2, %cst_89 {dimension_numbers = #tpu.dot_dimension_numbers<[1], [0], [0], [1], [0, 0, 1, 1], [], []>} : vector<128x64xf32>, vector<64x128xf32>, vector<128x128xf32> -> vector<128x128xf32>
    %cst_90 = arith.constant dense<0.000000e+00> : vector<128x128xf32>
    %128 = tpu.matmul %127, %125, %cst_90 {dimension_numbers = #tpu.dot_dimension_numbers<[1], [0], [0], [1], [0, 0, 1, 1], [], []>} : vector<128x128xf32>, vector<128x128xf32>, vector<128x128xf32> -> vector<128x128xf32>
    %129 = arith.addf %73, %128 : vector<128x128xf32>
    %c2 = arith.constant 2 : index
    %c0_91 = arith.constant 0 : index
    %c0_92 = arith.constant 0 : index
    %130 = vector.load %arg9[%c2, %c0_91, %c0_92] : memref<3x16x16xf32, #tpu.memory_space<vmem>>, vector<1x16x16xf32>
    %131 = vector.shape_cast %130 : vector<1x16x16xf32> to vector<16x16xf32>
    %132 = vector.extract_strided_slice %7 {offsets = [128, 0], sizes = [32, 128], strides = [1, 1]} : vector<192x128xf32> to vector<32x128xf32>
    %133 = vector.extract_strided_slice %7 {offsets = [160, 0], sizes = [32, 128], strides = [1, 1]} : vector<192x128xf32> to vector<32x128xf32>
    %cst_93 = arith.constant dense<0.000000e+00> : vector<128x128xf32>
    %134 = tpu.matmul %132, %133, %cst_93 {dimension_numbers = #tpu.dot_dimension_numbers<[0], [0], [1], [1], [0, 1, 1, 1], [], []>} : vector<32x128xf32>, vector<32x128xf32>, vector<128x128xf32> -> vector<128x128xf32>
    %c0_94 = arith.constant 0 : index
    %c0_95 = arith.constant 0 : index
    %135 = vector.load %arg11[%c0_94, %c0_95] : memref<16x128xf32, #tpu.memory_space<vmem>>, vector<16x128xf32>
    %c0_96 = arith.constant 0 : index
    %c0_97 = arith.constant 0 : index
    %136 = vector.load %arg12[%c0_96, %c0_97] : memref<128x128xf32, #tpu.memory_space<vmem>>, vector<128x128xf32>
    %137 = arith.mulf %134, %136 : vector<128x128xf32>
    %cst_98 = arith.constant dense<0.000000e+00> : vector<16x128xf32>
    %138 = tpu.matmul %135, %137, %cst_98 {dimension_numbers = #tpu.dot_dimension_numbers<[1], [0], [0], [1], [0, 0, 1, 1], [], []>} : vector<16x128xf32>, vector<128x128xf32>, vector<16x128xf32> -> vector<16x128xf32>
    %c0_99 = arith.constant 0 : index
    %c0_100 = arith.constant 0 : index
    %139 = vector.load %arg10[%c0_99, %c0_100] : memref<128x16xf32, #tpu.memory_space<vmem>>, vector<128x16xf32>
    %cst_101 = arith.constant dense<0.000000e+00> : vector<16x16xf32>
    %140 = tpu.matmul %138, %139, %cst_101 {dimension_numbers = #tpu.dot_dimension_numbers<[1], [0], [0], [1], [0, 0, 1, 1], [], []>} : vector<16x128xf32>, vector<128x16xf32>, vector<16x16xf32> -> vector<16x16xf32>
    %cst_102 = arith.constant 3.906250e-03 : f32
    %141 = vector.broadcast %cst_102 : f32 to vector<16x16xf32>
    %142 = arith.mulf %140, %141 : vector<16x16xf32>
    %cst_103 = arith.constant dense<0xFF800000> : vector<16xf32>
    %143 = vector.multi_reduction <maximumf>, %142, %cst_103 [0] : vector<16x16xf32> to vector<16xf32>
    %144 = vector.shape_cast %143 : vector<16xf32> to vector<1x16xf32>
    %145 = vector.broadcast %144 : vector<1x16xf32> to vector<16x16xf32>
    %146 = arith.subf %142, %145 : vector<16x16xf32>
    %147 = math.exp %146 : vector<16x16xf32>
    %cst_104 = arith.constant dense<0.000000e+00> : vector<16xf32>
    %148 = vector.multi_reduction <add>, %147, %cst_104 [0] : vector<16x16xf32> to vector<16xf32>
    %149 = vector.shape_cast %148 : vector<16xf32> to vector<1x16xf32>
    %150 = tpu.reciprocal %149 {approx = true} : vector<1x16xf32> -> vector<1x16xf32>
    %151 = vector.broadcast %150 : vector<1x16xf32> to vector<16x16xf32>
    %152 = arith.mulf %147, %151 : vector<16x16xf32>
    %153 = arith.addf %131, %152 : vector<16x16xf32>
    %154 = vector.extract_strided_slice %12 {offsets = [128, 0], sizes = [32, 128], strides = [1, 1]} : vector<192x128xf32> to vector<32x128xf32>
    %155 = vector.extract_strided_slice %12 {offsets = [160, 0], sizes = [32, 128], strides = [1, 1]} : vector<192x128xf32> to vector<32x128xf32>
    %cst_105 = arith.constant dense<0.000000e+00> : vector<128x128xf32>
    %156 = tpu.matmul %154, %155, %cst_105 {dimension_numbers = #tpu.dot_dimension_numbers<[0], [0], [1], [1], [0, 1, 1, 1], [], []>} : vector<32x128xf32>, vector<32x128xf32>, vector<128x128xf32> -> vector<128x128xf32>
    %c0_106 = arith.constant 0 : index
    %c0_107 = arith.constant 0 : index
    %157 = vector.load %arg11[%c0_106, %c0_107] : memref<16x128xf32, #tpu.memory_space<vmem>>, vector<16x128xf32>
    %c0_108 = arith.constant 0 : index
    %c0_109 = arith.constant 0 : index
    %158 = vector.load %arg12[%c0_108, %c0_109] : memref<128x128xf32, #tpu.memory_space<vmem>>, vector<128x128xf32>
    %159 = arith.mulf %156, %158 : vector<128x128xf32>
    %cst_110 = arith.constant dense<0.000000e+00> : vector<16x128xf32>
    %160 = tpu.matmul %157, %159, %cst_110 {dimension_numbers = #tpu.dot_dimension_numbers<[1], [0], [0], [1], [0, 0, 1, 1], [], []>} : vector<16x128xf32>, vector<128x128xf32>, vector<16x128xf32> -> vector<16x128xf32>
    %c0_111 = arith.constant 0 : index
    %c0_112 = arith.constant 0 : index
    %161 = vector.load %arg10[%c0_111, %c0_112] : memref<128x16xf32, #tpu.memory_space<vmem>>, vector<128x16xf32>
    %cst_113 = arith.constant dense<0.000000e+00> : vector<16x16xf32>
    %162 = tpu.matmul %160, %161, %cst_113 {dimension_numbers = #tpu.dot_dimension_numbers<[1], [0], [0], [1], [0, 0, 1, 1], [], []>} : vector<16x128xf32>, vector<128x16xf32>, vector<16x16xf32> -> vector<16x16xf32>
    %cst_114 = arith.constant 3.906250e-03 : f32
    %163 = vector.broadcast %cst_114 : f32 to vector<16x16xf32>
    %164 = arith.mulf %162, %163 : vector<16x16xf32>
    %cst_115 = arith.constant dense<0xFF800000> : vector<16xf32>
    %165 = vector.multi_reduction <maximumf>, %164, %cst_115 [0] : vector<16x16xf32> to vector<16xf32>
    %166 = vector.shape_cast %165 : vector<16xf32> to vector<1x16xf32>
    %167 = vector.broadcast %166 : vector<1x16xf32> to vector<16x16xf32>
    %168 = arith.subf %164, %167 : vector<16x16xf32>
    %169 = math.exp %168 : vector<16x16xf32>
    %cst_116 = arith.constant dense<0.000000e+00> : vector<16xf32>
    %170 = vector.multi_reduction <add>, %169, %cst_116 [0] : vector<16x16xf32> to vector<16xf32>
    %171 = vector.shape_cast %170 : vector<16xf32> to vector<1x16xf32>
    %172 = tpu.reciprocal %171 {approx = true} : vector<1x16xf32> -> vector<1x16xf32>
    %173 = vector.broadcast %172 : vector<1x16xf32> to vector<16x16xf32>
    %174 = arith.mulf %169, %173 : vector<16x16xf32>
    %175 = arith.addf %153, %174 : vector<16x16xf32>
    %c0_117 = arith.constant 0 : index
    %c0_118 = arith.constant 0 : index
    %176 = vector.load %arg10[%c0_117, %c0_118] : memref<128x16xf32, #tpu.memory_space<vmem>>, vector<128x16xf32>
    %cst_119 = arith.constant dense<0.000000e+00> : vector<128x16xf32>
    %177 = tpu.matmul %176, %175, %cst_119 {dimension_numbers = #tpu.dot_dimension_numbers<[1], [0], [0], [1], [0, 0, 1, 1], [], []>} : vector<128x16xf32>, vector<16x16xf32>, vector<128x16xf32> -> vector<128x16xf32>
    %c0_120 = arith.constant 0 : index
    %c0_121 = arith.constant 0 : index
    %178 = vector.load %arg11[%c0_120, %c0_121] : memref<16x128xf32, #tpu.memory_space<vmem>>, vector<16x128xf32>
    %cst_122 = arith.constant dense<0.000000e+00> : vector<128x128xf32>
    %179 = tpu.matmul %177, %178, %cst_122 {dimension_numbers = #tpu.dot_dimension_numbers<[1], [0], [0], [1], [0, 0, 1, 1], [], []>} : vector<128x16xf32>, vector<16x128xf32>, vector<128x128xf32> -> vector<128x128xf32>
    %c0_123 = arith.constant 0 : index
    %c0_124 = arith.constant 0 : index
    %180 = vector.load %arg12[%c0_123, %c0_124] : memref<128x128xf32, #tpu.memory_space<vmem>>, vector<128x128xf32>
    %181 = arith.mulf %179, %180 : vector<128x128xf32>
    %c256 = arith.constant 256 : index
    %c0_125 = arith.constant 0 : index
    %182 = vector.load %arg7[%c256, %c0_125] : memref<512x64xf32, #tpu.memory_space<vmem>>, vector<128x64xf32>
    %cst_126 = arith.constant dense<0.000000e+00> : vector<128x128xf32>
    %183 = tpu.matmul %182, %2, %cst_126 {dimension_numbers = #tpu.dot_dimension_numbers<[1], [0], [0], [1], [0, 0, 1, 1], [], []>} : vector<128x64xf32>, vector<64x128xf32>, vector<128x128xf32> -> vector<128x128xf32>
    %cst_127 = arith.constant dense<0.000000e+00> : vector<128x128xf32>
    %184 = tpu.matmul %183, %181, %cst_127 {dimension_numbers = #tpu.dot_dimension_numbers<[1], [0], [0], [1], [0, 0, 1, 1], [], []>} : vector<128x128xf32>, vector<128x128xf32>, vector<128x128xf32> -> vector<128x128xf32>
    %185 = arith.addf %129, %184 : vector<128x128xf32>
    %cst_128 = arith.constant 0.000000e+00 : f32
    %186 = vector.broadcast %cst_128 : f32 to vector<128x128xf32>
    %187 = arith.maximumf %185, %186 : vector<128x128xf32>
    %c0_129 = arith.constant 0 : index
    %c0_130 = arith.constant 0 : index
    %c0_131 = arith.constant 0 : index
    %188 = vector.load %arg2[%c0_129, %c0_130, %c0_131] : memref<1x128x64xf32, #tpu.memory_space<vmem>>, vector<1x128x64xf32>
    %189 = vector.shape_cast %188 : vector<1x128x64xf32> to vector<128x64xf32>
    %c0_132 = arith.constant 0 : index
    %c0_133 = arith.constant 0 : index
    %190 = vector.load %arg15[%c0_132, %c0_133] : memref<128x1xf32, #tpu.memory_space<vmem>>, vector<128x1xf32>
    %191 = vector.broadcast %190 : vector<128x1xf32> to vector<128x64xf32>
    %192 = arith.addf %189, %191 : vector<128x64xf32>
    %c0_134 = arith.constant 0 : index
    %c0_135 = arith.constant 0 : index
    %c0_136 = arith.constant 0 : index
    %193 = vector.load %arg13[%c0_134, %c0_135, %c0_136] : memref<9x128x64xf32, #tpu.memory_space<vmem>>, vector<1x128x64xf32>
    %194 = vector.shape_cast %193 : vector<1x128x64xf32> to vector<128x64xf32>
    %cst_137 = arith.constant dense<0.000000e+00> : vector<128x64xf32>
    %195 = tpu.matmul %187, %194, %cst_137 {dimension_numbers = #tpu.dot_dimension_numbers<[1], [0], [0], [1], [0, 0, 1, 1], [], []>} : vector<128x128xf32>, vector<128x64xf32>, vector<128x64xf32> -> vector<128x64xf32>
    %c0_138 = arith.constant 0 : index
    %c0_139 = arith.constant 0 : index
    %c0_140 = arith.constant 0 : index
    %196 = vector.load %arg14[%c0_138, %c0_139, %c0_140] : memref<9x128x128xf32, #tpu.memory_space<vmem>>, vector<1x128x128xf32>
    %197 = vector.shape_cast %196 : vector<1x128x128xf32> to vector<128x128xf32>
    %cst_141 = arith.constant dense<0.000000e+00> : vector<128x64xf32>
    %198 = tpu.matmul %197, %195, %cst_141 {dimension_numbers = #tpu.dot_dimension_numbers<[1], [0], [0], [1], [0, 0, 1, 1], [], []>} : vector<128x128xf32>, vector<128x64xf32>, vector<128x64xf32> -> vector<128x64xf32>
    %199 = arith.addf %192, %198 : vector<128x64xf32>
    %c1_142 = arith.constant 1 : index
    %c0_143 = arith.constant 0 : index
    %c0_144 = arith.constant 0 : index
    %200 = vector.load %arg13[%c1_142, %c0_143, %c0_144] : memref<9x128x64xf32, #tpu.memory_space<vmem>>, vector<1x128x64xf32>
    %201 = vector.shape_cast %200 : vector<1x128x64xf32> to vector<128x64xf32>
    %cst_145 = arith.constant dense<0.000000e+00> : vector<128x64xf32>
    %202 = tpu.matmul %187, %201, %cst_145 {dimension_numbers = #tpu.dot_dimension_numbers<[1], [0], [0], [1], [0, 0, 1, 1], [], []>} : vector<128x128xf32>, vector<128x64xf32>, vector<128x64xf32> -> vector<128x64xf32>
    %c1_146 = arith.constant 1 : index
    %c0_147 = arith.constant 0 : index
    %c0_148 = arith.constant 0 : index
    %203 = vector.load %arg14[%c1_146, %c0_147, %c0_148] : memref<9x128x128xf32, #tpu.memory_space<vmem>>, vector<1x128x128xf32>
    %204 = vector.shape_cast %203 : vector<1x128x128xf32> to vector<128x128xf32>
    %cst_149 = arith.constant dense<0.000000e+00> : vector<128x64xf32>
    %205 = tpu.matmul %204, %202, %cst_149 {dimension_numbers = #tpu.dot_dimension_numbers<[1], [0], [0], [1], [0, 0, 1, 1], [], []>} : vector<128x128xf32>, vector<128x64xf32>, vector<128x64xf32> -> vector<128x64xf32>
    %206 = arith.addf %199, %205 : vector<128x64xf32>
    %c2_150 = arith.constant 2 : index
    %c0_151 = arith.constant 0 : index
    %c0_152 = arith.constant 0 : index
    %207 = vector.load %arg13[%c2_150, %c0_151, %c0_152] : memref<9x128x64xf32, #tpu.memory_space<vmem>>, vector<1x128x64xf32>
    %208 = vector.shape_cast %207 : vector<1x128x64xf32> to vector<128x64xf32>
    %cst_153 = arith.constant dense<0.000000e+00> : vector<128x64xf32>
    %209 = tpu.matmul %187, %208, %cst_153 {dimension_numbers = #tpu.dot_dimension_numbers<[1], [0], [0], [1], [0, 0, 1, 1], [], []>} : vector<128x128xf32>, vector<128x64xf32>, vector<128x64xf32> -> vector<128x64xf32>
    %c2_154 = arith.constant 2 : index
    %c0_155 = arith.constant 0 : index
    %c0_156 = arith.constant 0 : index
    %210 = vector.load %arg14[%c2_154, %c0_155, %c0_156] : memref<9x128x128xf32, #tpu.memory_space<vmem>>, vector<1x128x128xf32>
    %211 = vector.shape_cast %210 : vector<1x128x128xf32> to vector<128x128xf32>
    %cst_157 = arith.constant dense<0.000000e+00> : vector<128x64xf32>
    %212 = tpu.matmul %211, %209, %cst_157 {dimension_numbers = #tpu.dot_dimension_numbers<[1], [0], [0], [1], [0, 0, 1, 1], [], []>} : vector<128x128xf32>, vector<128x64xf32>, vector<128x64xf32> -> vector<128x64xf32>
    %213 = arith.addf %206, %212 : vector<128x64xf32>
    %c3 = arith.constant 3 : index
    %c0_158 = arith.constant 0 : index
    %c0_159 = arith.constant 0 : index
    %214 = vector.load %arg13[%c3, %c0_158, %c0_159] : memref<9x128x64xf32, #tpu.memory_space<vmem>>, vector<1x128x64xf32>
    %215 = vector.shape_cast %214 : vector<1x128x64xf32> to vector<128x64xf32>
    %cst_160 = arith.constant dense<0.000000e+00> : vector<128x64xf32>
    %216 = tpu.matmul %187, %215, %cst_160 {dimension_numbers = #tpu.dot_dimension_numbers<[1], [0], [0], [1], [0, 0, 1, 1], [], []>} : vector<128x128xf32>, vector<128x64xf32>, vector<128x64xf32> -> vector<128x64xf32>
    %c3_161 = arith.constant 3 : index
    %c0_162 = arith.constant 0 : index
    %c0_163 = arith.constant 0 : index
    %217 = vector.load %arg14[%c3_161, %c0_162, %c0_163] : memref<9x128x128xf32, #tpu.memory_space<vmem>>, vector<1x128x128xf32>
    %218 = vector.shape_cast %217 : vector<1x128x128xf32> to vector<128x128xf32>
    %cst_164 = arith.constant dense<0.000000e+00> : vector<128x64xf32>
    %219 = tpu.matmul %218, %216, %cst_164 {dimension_numbers = #tpu.dot_dimension_numbers<[1], [0], [0], [1], [0, 0, 1, 1], [], []>} : vector<128x128xf32>, vector<128x64xf32>, vector<128x64xf32> -> vector<128x64xf32>
    %220 = arith.addf %213, %219 : vector<128x64xf32>
    %c4 = arith.constant 4 : index
    %c0_165 = arith.constant 0 : index
    %c0_166 = arith.constant 0 : index
    %221 = vector.load %arg13[%c4, %c0_165, %c0_166] : memref<9x128x64xf32, #tpu.memory_space<vmem>>, vector<1x128x64xf32>
    %222 = vector.shape_cast %221 : vector<1x128x64xf32> to vector<128x64xf32>
    %cst_167 = arith.constant dense<0.000000e+00> : vector<128x64xf32>
    %223 = tpu.matmul %187, %222, %cst_167 {dimension_numbers = #tpu.dot_dimension_numbers<[1], [0], [0], [1], [0, 0, 1, 1], [], []>} : vector<128x128xf32>, vector<128x64xf32>, vector<128x64xf32> -> vector<128x64xf32>
    %c4_168 = arith.constant 4 : index
    %c0_169 = arith.constant 0 : index
    %c0_170 = arith.constant 0 : index
    %224 = vector.load %arg14[%c4_168, %c0_169, %c0_170] : memref<9x128x128xf32, #tpu.memory_space<vmem>>, vector<1x128x128xf32>
    %225 = vector.shape_cast %224 : vector<1x128x128xf32> to vector<128x128xf32>
    %cst_171 = arith.constant dense<0.000000e+00> : vector<128x64xf32>
    %226 = tpu.matmul %225, %223, %cst_171 {dimension_numbers = #tpu.dot_dimension_numbers<[1], [0], [0], [1], [0, 0, 1, 1], [], []>} : vector<128x128xf32>, vector<128x64xf32>, vector<128x64xf32> -> vector<128x64xf32>
    %227 = arith.addf %220, %226 : vector<128x64xf32>
    %c5 = arith.constant 5 : index
    %c0_172 = arith.constant 0 : index
    %c0_173 = arith.constant 0 : index
    %228 = vector.load %arg13[%c5, %c0_172, %c0_173] : memref<9x128x64xf32, #tpu.memory_space<vmem>>, vector<1x128x64xf32>
    %229 = vector.shape_cast %228 : vector<1x128x64xf32> to vector<128x64xf32>
    %cst_174 = arith.constant dense<0.000000e+00> : vector<128x64xf32>
    %230 = tpu.matmul %187, %229, %cst_174 {dimension_numbers = #tpu.dot_dimension_numbers<[1], [0], [0], [1], [0, 0, 1, 1], [], []>} : vector<128x128xf32>, vector<128x64xf32>, vector<128x64xf32> -> vector<128x64xf32>
    %c5_175 = arith.constant 5 : index
    %c0_176 = arith.constant 0 : index
    %c0_177 = arith.constant 0 : index
    %231 = vector.load %arg14[%c5_175, %c0_176, %c0_177] : memref<9x128x128xf32, #tpu.memory_space<vmem>>, vector<1x128x128xf32>
    %232 = vector.shape_cast %231 : vector<1x128x128xf32> to vector<128x128xf32>
    %cst_178 = arith.constant dense<0.000000e+00> : vector<128x64xf32>
    %233 = tpu.matmul %232, %230, %cst_178 {dimension_numbers = #tpu.dot_dimension_numbers<[1], [0], [0], [1], [0, 0, 1, 1], [], []>} : vector<128x128xf32>, vector<128x64xf32>, vector<128x64xf32> -> vector<128x64xf32>
    %234 = arith.addf %227, %233 : vector<128x64xf32>
    %c6 = arith.constant 6 : index
    %c0_179 = arith.constant 0 : index
    %c0_180 = arith.constant 0 : index
    %235 = vector.load %arg13[%c6, %c0_179, %c0_180] : memref<9x128x64xf32, #tpu.memory_space<vmem>>, vector<1x128x64xf32>
    %236 = vector.shape_cast %235 : vector<1x128x64xf32> to vector<128x64xf32>
    %cst_181 = arith.constant dense<0.000000e+00> : vector<128x64xf32>
    %237 = tpu.matmul %187, %236, %cst_181 {dimension_numbers = #tpu.dot_dimension_numbers<[1], [0], [0], [1], [0, 0, 1, 1], [], []>} : vector<128x128xf32>, vector<128x64xf32>, vector<128x64xf32> -> vector<128x64xf32>
    %c6_182 = arith.constant 6 : index
    %c0_183 = arith.constant 0 : index
    %c0_184 = arith.constant 0 : index
    %238 = vector.load %arg14[%c6_182, %c0_183, %c0_184] : memref<9x128x128xf32, #tpu.memory_space<vmem>>, vector<1x128x128xf32>
    %239 = vector.shape_cast %238 : vector<1x128x128xf32> to vector<128x128xf32>
    %cst_185 = arith.constant dense<0.000000e+00> : vector<128x64xf32>
    %240 = tpu.matmul %239, %237, %cst_185 {dimension_numbers = #tpu.dot_dimension_numbers<[1], [0], [0], [1], [0, 0, 1, 1], [], []>} : vector<128x128xf32>, vector<128x64xf32>, vector<128x64xf32> -> vector<128x64xf32>
    %241 = arith.addf %234, %240 : vector<128x64xf32>
    %c7 = arith.constant 7 : index
    %c0_186 = arith.constant 0 : index
    %c0_187 = arith.constant 0 : index
    %242 = vector.load %arg13[%c7, %c0_186, %c0_187] : memref<9x128x64xf32, #tpu.memory_space<vmem>>, vector<1x128x64xf32>
    %243 = vector.shape_cast %242 : vector<1x128x64xf32> to vector<128x64xf32>
    %cst_188 = arith.constant dense<0.000000e+00> : vector<128x64xf32>
    %244 = tpu.matmul %187, %243, %cst_188 {dimension_numbers = #tpu.dot_dimension_numbers<[1], [0], [0], [1], [0, 0, 1, 1], [], []>} : vector<128x128xf32>, vector<128x64xf32>, vector<128x64xf32> -> vector<128x64xf32>
    %c7_189 = arith.constant 7 : index
    %c0_190 = arith.constant 0 : index
    %c0_191 = arith.constant 0 : index
    %245 = vector.load %arg14[%c7_189, %c0_190, %c0_191] : memref<9x128x128xf32, #tpu.memory_space<vmem>>, vector<1x128x128xf32>
    %246 = vector.shape_cast %245 : vector<1x128x128xf32> to vector<128x128xf32>
    %cst_192 = arith.constant dense<0.000000e+00> : vector<128x64xf32>
    %247 = tpu.matmul %246, %244, %cst_192 {dimension_numbers = #tpu.dot_dimension_numbers<[1], [0], [0], [1], [0, 0, 1, 1], [], []>} : vector<128x128xf32>, vector<128x64xf32>, vector<128x64xf32> -> vector<128x64xf32>
    %248 = arith.addf %241, %247 : vector<128x64xf32>
    %c8 = arith.constant 8 : index
    %c0_193 = arith.constant 0 : index
    %c0_194 = arith.constant 0 : index
    %249 = vector.load %arg13[%c8, %c0_193, %c0_194] : memref<9x128x64xf32, #tpu.memory_space<vmem>>, vector<1x128x64xf32>
    %250 = vector.shape_cast %249 : vector<1x128x64xf32> to vector<128x64xf32>
    %cst_195 = arith.constant dense<0.000000e+00> : vector<128x64xf32>
    %251 = tpu.matmul %187, %250, %cst_195 {dimension_numbers = #tpu.dot_dimension_numbers<[1], [0], [0], [1], [0, 0, 1, 1], [], []>} : vector<128x128xf32>, vector<128x64xf32>, vector<128x64xf32> -> vector<128x64xf32>
    %c8_196 = arith.constant 8 : index
    %c0_197 = arith.constant 0 : index
    %c0_198 = arith.constant 0 : index
    %252 = vector.load %arg14[%c8_196, %c0_197, %c0_198] : memref<9x128x128xf32, #tpu.memory_space<vmem>>, vector<1x128x128xf32>
    %253 = vector.shape_cast %252 : vector<1x128x128xf32> to vector<128x128xf32>
    %cst_199 = arith.constant dense<0.000000e+00> : vector<128x64xf32>
    %254 = tpu.matmul %253, %251, %cst_199 {dimension_numbers = #tpu.dot_dimension_numbers<[1], [0], [0], [1], [0, 0, 1, 1], [], []>} : vector<128x128xf32>, vector<128x64xf32>, vector<128x64xf32> -> vector<128x64xf32>
    %255 = arith.addf %248, %254 : vector<128x64xf32>
    %c0_200 = arith.constant 0 : index
    %c0_201 = arith.constant 0 : index
    %c0_202 = arith.constant 0 : index
    %256 = vector.load %arg16[%c0_200, %c0_201, %c0_202] : memref<1x128x64xf32, #tpu.memory_space<vmem>>, vector<1x128x64xf32>
    %257 = vector.shape_cast %256 : vector<1x128x64xf32> to vector<128x64xf32>
    %258 = vector.shape_cast %255 : vector<128x64xf32> to vector<1x128x64xf32>
    tpu.vector_store %arg16[%c0_200, %c0_201, %c0_202], %258 {strides = array<i32>} : memref<1x128x64xf32, #tpu.memory_space<vmem>>, vector<1x128x64xf32>,
    return
  }
  func.func @transform_0(%arg0: i32) -> (i32, i32, i32) {
    %c0_i32 = arith.constant 0 : i32
    %c0_i32_0 = arith.constant 0 : i32
    %c0_i32_1 = arith.constant 0 : i32
    return %arg0, %c0_i32, %c0_i32_0 : i32, i32, i32
  }
  func.func @transform_1(%arg0: i32) -> (i32, i32, i32) {
    %c0_i32 = arith.constant 0 : i32
    %c0_i32_0 = arith.constant 0 : i32
    %c0_i32_1 = arith.constant 0 : i32
    return %arg0, %c0_i32, %c0_i32_0 : i32, i32, i32
  }
  func.func @transform_2(%arg0: i32) -> (i32, i32) {
    %c0_i32 = arith.constant 0 : i32
    %c0_i32_0 = arith.constant 0 : i32
    %c0_i32_1 = arith.constant 0 : i32
    return %c0_i32, %c0_i32_0 : i32, i32
  }
  func.func @transform_3(%arg0: i32) -> (i32, i32) {
    %c0_i32 = arith.constant 0 : i32
    %c0_i32_0 = arith.constant 0 : i32
    %c0_i32_1 = arith.constant 0 : i32
    return %c0_i32, %c0_i32_0 : i32, i32
  }
  func.func @transform_4(%arg0: i32) -> (i32, i32) {
    %c0_i32 = arith.constant 0 : i32
    %c0_i32_0 = arith.constant 0 : i32
    %c0_i32_1 = arith.constant 0 : i32
    return %c0_i32, %c0_i32_0 : i32, i32
  }
  func.func @transform_5(%arg0: i32) -> (i32, i32) {
    %c0_i32 = arith.constant 0 : i32
    %c0_i32_0 = arith.constant 0 : i32
    %c0_i32_1 = arith.constant 0 : i32
    return %c0_i32, %c0_i32_0 : i32, i32
  }
  func.func @transform_6(%arg0: i32) -> (i32, i32) {
    %c0_i32 = arith.constant 0 : i32
    %c0_i32_0 = arith.constant 0 : i32
    %c0_i32_1 = arith.constant 0 : i32
    return %c0_i32, %c0_i32_0 : i32, i32
  }
  func.func @transform_7(%arg0: i32) -> (i32, i32) {
    %c0_i32 = arith.constant 0 : i32
    %c0_i32_0 = arith.constant 0 : i32
    %c0_i32_1 = arith.constant 0 : i32
    return %c0_i32, %c0_i32_0 : i32, i32
  }
  func.func @transform_8(%arg0: i32) -> (i32, i32, i32) {
    %c0_i32 = arith.constant 0 : i32
    %c0_i32_0 = arith.constant 0 : i32
    %c0_i32_1 = arith.constant 0 : i32
    %c0_i32_2 = arith.constant 0 : i32
    return %c0_i32, %c0_i32_0, %c0_i32_1 : i32, i32, i32
  }
  func.func @transform_9(%arg0: i32) -> (i32, i32) {
    %c0_i32 = arith.constant 0 : i32
    %c0_i32_0 = arith.constant 0 : i32
    %c0_i32_1 = arith.constant 0 : i32
    return %c0_i32, %c0_i32_0 : i32, i32
  }
  func.func @transform_10(%arg0: i32) -> (i32, i32) {
    %c0_i32 = arith.constant 0 : i32
    %c0_i32_0 = arith.constant 0 : i32
    %c0_i32_1 = arith.constant 0 : i32
    return %c0_i32, %c0_i32_0 : i32, i32
  }
  func.func @transform_11(%arg0: i32) -> (i32, i32) {
    %c0_i32 = arith.constant 0 : i32
    %c0_i32_0 = arith.constant 0 : i32
    %c0_i32_1 = arith.constant 0 : i32
    return %c0_i32, %c0_i32_0 : i32, i32
  }
  func.func @transform_12(%arg0: i32) -> (i32, i32, i32) {
    %c0_i32 = arith.constant 0 : i32
    %c0_i32_0 = arith.constant 0 : i32
    %c0_i32_1 = arith.constant 0 : i32
    %c0_i32_2 = arith.constant 0 : i32
    return %c0_i32, %c0_i32_0, %c0_i32_1 : i32, i32, i32
  }
  func.func @transform_13(%arg0: i32) -> (i32, i32, i32) {
    %c0_i32 = arith.constant 0 : i32
    %c0_i32_0 = arith.constant 0 : i32
    %c0_i32_1 = arith.constant 0 : i32
    %c0_i32_2 = arith.constant 0 : i32
    return %c0_i32, %c0_i32_0, %c0_i32_1 : i32, i32, i32
  }
  func.func @transform_14(%arg0: i32) -> (i32, i32) {
    %c0_i32 = arith.constant 0 : i32
    %c0_i32_0 = arith.constant 0 : i32
    %c0_i32_1 = arith.constant 0 : i32
    return %c0_i32, %c0_i32_0 : i32, i32
  }
  func.func @transform_15(%arg0: i32) -> (i32, i32, i32) {
    %c0_i32 = arith.constant 0 : i32
    %c0_i32_0 = arith.constant 0 : i32
    %c0_i32_1 = arith.constant 0 : i32
    return %arg0, %c0_i32, %c0_i32_0 : i32, i32, i32
  }
}

</mosaic_0001>

<llo_original>
// kernel: resblock_forward.1
$region0: #{resblock_forward.1}
  #allocation0 [shape = 'u32[]', space=smem, size = 0x4, offset = 0x4, fixed_abs, tag = 'smem constant byte address 0x4 - core index']
  #allocation1 [shape = 'u32[144,128]{1,0:T(1,128)}', space=vmem, size = 0x12000, scoped, tag = 'internal scratch']
  %s0 = inlined_call_operand.vmem [shape: f32[2,576,128], index: 0, kind: input, shape index: {}]
  %s1 = inlined_call_operand.vmem [shape: f32[2,128,64], index: 1, kind: input, shape index: {}]
  %s2 = inlined_call_operand.vmem [shape: f32[192,64], index: 2, kind: input, shape index: {}]
  %s3 = inlined_call_operand.vmem [shape: f32[192,1], index: 3, kind: input, shape index: {}]
  %s4 = inlined_call_operand.vmem [shape: f32[192,576], index: 4, kind: input, shape index: {}]
  %s5 = inlined_call_operand.vmem [shape: f32[192,1], index: 5, kind: input, shape index: {}]
  %s6 = inlined_call_operand.vmem [shape: f32[512,64], index: 6, kind: input, shape index: {}]
  %s7 = inlined_call_operand.vmem [shape: f32[128,1], index: 7, kind: input, shape index: {}]
  %s8 = inlined_call_operand.vmem [shape: f32[3,16,16], index: 8, kind: input, shape index: {}]
  %s9 = inlined_call_operand.vmem [shape: f32[128,16], index: 9, kind: input, shape index: {}]
  %s10 = inlined_call_operand.vmem [shape: f32[16,128], index: 10, kind: input, shape index: {}]
  %s11 = inlined_call_operand.vmem [shape: f32[128,128], index: 11, kind: input, shape index: {}]
  %s12 = inlined_call_operand.vmem [shape: f32[9,128,64], index: 12, kind: input, shape index: {}]
  %s13 = inlined_call_operand.vmem [shape: f32[9,128,128], index: 13, kind: input, shape index: {}]
  %s14 = inlined_call_operand.vmem [shape: f32[128,1], index: 14, kind: input, shape index: {}]
  %s15 = inlined_call_operand.vmem [shape: f32[2,128,64], index: 15, kind: output, shape index: {}]
  %s16 = sld [smem:[#allocation0]]
  $region93: #{resblock_forward.1} parent=0
    _
  %s18 = ssub.s32 1, %s16
  %s19 = scalar_select 0, %s18, %s16
  loop: start=0, step=1, limit=4
  $region2: #{resblock_forward.1} parent=0 // loop_pre_header
    _
  $region3: #{resblock_forward.1} parent=0 // loop_header
    %s21 = sphi 0, %s25
    %p22 = scmp.ge.s32.totalorder %s21, 4
    %s31 = sphi 0, %s33
    %s34 = sphi 0, %s31
    %s35 = sphi 0, %s34
    %s51 = sphi 0, %s35
    %s57 = sphi 0, %s59
    %s60 = sphi 0, %s57
    %s61 = sphi 0, %s60
    %s77 = sphi 0, %s61
    %s81 = sphi 0, %s81
    %s83 = sphi 0, %s81
    %s84 = sphi 0, %s83
    %s98 = sphi 0, %s84
    %s102 = sphi 0, %s102
    %s104 = sphi 0, %s102
    %s105 = sphi 0, %s104
    %s119 = sphi 0, %s105
    %s123 = sphi 0, %s123
    %s125 = sphi 0, %s123
    %s126 = sphi 0, %s125
    %s140 = sphi 0, %s126
    %s144 = sphi 0, %s144
    %s146 = sphi 0, %s144
    %s147 = sphi 0, %s146
    %s161 = sphi 0, %s147
    %s165 = sphi 0, %s165
    %s167 = sphi 0, %s165
    %s168 = sphi 0, %s167
    %s182 = sphi 0, %s168
    %s186 = sphi 0, %s186
    %s188 = sphi 0, %s186
    %s189 = sphi 0, %s188
    %s203 = sphi 0, %s189
    %s207 = sphi 0, %s207
    %s209 = sphi 0, %s207
    %s210 = sphi 0, %s209
    %s224 = sphi 0, %s210
    %s228 = sphi 0, %s228
    %s230 = sphi 0, %s228
    %s231 = sphi 0, %s230
    %s245 = sphi 0, %s231
    %s249 = sphi 0, %s249
    %s251 = sphi 0, %s249
    %s252 = sphi 0, %s251
    %s266 = sphi 0, %s252
    %s270 = sphi 0, %s270
    %s272 = sphi 0, %s270
    %s273 = sphi 0, %s272
    %s287 = sphi 0, %s273
    %s291 = sphi 0, %s291
    %s293 = sphi 0, %s291
    %s294 = sphi 0, %s293
    %s308 = sphi 0, %s294
    %s312 = sphi 0, %s312
    %s314 = sphi 0, %s312
    %s315 = sphi 0, %s314
    %s329 = sphi 0, %s315
    %s333 = sphi 0, %s333
    %s335 = sphi 0, %s333
    %s336 = sphi 0, %s335
    %s350 = sphi 0, %s336
    %s356 = sphi 0, %s358
    %s359 = sphi 0, %s356
    %s360 = sphi 0, %s359
    %s376 = sphi 0, %s360
  $region4: #{resblock_forward.1} parent=0 // loop_header_branch
    %24 = sbr.rel (%p22) target = $region8
  $region5: #{resblock_forward.1} parent=0 // loop_body
    %s26 = ssub.s32 %s21, 1
    %s27 = ssub.s32 %s21, 2
    %s28 = sadd.s32 %s21, 1
    %s29 = ssub.s32 %s21, %s28
    %p30 = scmp.eq.s32.totalorder %s29, 0
    %s32 = sadd.s32 %s31, 1
    %s33 = scalar_select %p30, %s31, %s32
    %p36 = pneg %p30
    %p37 = scmp.eq.s32.totalorder %s21, 1
    %p38 = por %p36, %p37
    %p39 = scmp.ne.s32.totalorder %s31, %s34
    %p40 = scmp.eq.s32.totalorder %s21, 0
    %p41 = por %p39, %p40
    %p42 = scmp.ne.s32.totalorder %s31, %s34
    %p43 = scmp.eq.s32.totalorder %s26, 1
    %p44 = por %p42, %p43
    %p45 = scmp.ne.s32.totalorder %s34, %s35
    %p46 = scmp.eq.s32.totalorder %s26, 0
    %p47 = por %p45, %p46
    %p48 = scmp.ne.s32.totalorder %s34, %s35
    %p49 = scmp.eq.s32.totalorder %s27, 1
    %p50 = por %p48, %p49
    %p52 = scmp.ne.s32.totalorder %s35, %s51
    %p53 = scmp.eq.s32.totalorder %s27, 0
    %p54 = por %p52, %p53
    %s55 = ssub.s32 %s21, %s28
    %p56 = scmp.eq.s32.totalorder %s55, 0
    %s58 = sadd.s32 %s57, 1
    %s59 = scalar_select %p56, %s57, %s58
    %p62 = pneg %p56
    %p63 = scmp.eq.s32.totalorder %s21, 1
    %p64 = por %p62, %p63
    %p65 = scmp.ne.s32.totalorder %s57, %s60
    %p66 = scmp.eq.s32.totalorder %s21, 0
    %p67 = por %p65, %p66
    %p68 = scmp.ne.s32.totalorder %s57, %s60
    %p69 = scmp.eq.s32.totalorder %s26, 1
    %p70 = por %p68, %p69
    %p71 = scmp.ne.s32.totalorder %s60, %s61
    %p72 = scmp.eq.s32.totalorder %s26, 0
    %p73 = por %p71, %p72
    %p74 = scmp.ne.s32.totalorder %s60, %s61
    %p75 = scmp.eq.s32.totalorder %s27, 1
    %p76 = por %p74, %p75
    %p78 = scmp.ne.s32.totalorder %s61, %s77
    %p79 = scmp.eq.s32.totalorder %s27, 0
    %p80 = por %p78, %p79
    %s82 = sadd.s32 %s81, 1
    %p85 = scmp.eq.s32.totalorder %s21, 1
    %p86 = scmp.ne.s32.totalorder %s81, %s83
    %p87 = scmp.eq.s32.totalorder %s21, 0
    %p88 = por %p86, %p87
    %p89 = scmp.ne.s32.totalorder %s81, %s83
    %p90 = scmp.eq.s32.totalorder %s26, 1
    %p91 = por %p89, %p90
    %p92 = scmp.ne.s32.totalorder %s83, %s84
    %p93 = scmp.eq.s32.totalorder %s26, 0
    %p94 = por %p92, %p93
    %p95 = scmp.ne.s32.totalorder %s83, %s84
    %p96 = scmp.eq.s32.totalorder %s27, 1
    %p97 = por %p95, %p96
    %p99 = scmp.ne.s32.totalorder %s84, %s98
    %p100 = scmp.eq.s32.totalorder %s27, 0
    %p101 = por %p99, %p100
    %s103 = sadd.s32 %s102, 1
    %p106 = scmp.eq.s32.totalorder %s21, 1
    %p107 = scmp.ne.s32.totalorder %s102, %s104
    %p108 = scmp.eq.s32.totalorder %s21, 0
    %p109 = por %p107, %p108
    %p110 = scmp.ne.s32.totalorder %s102, %s104
    %p111 = scmp.eq.s32.totalorder %s26, 1
    %p112 = por %p110, %p111
    %p113 = scmp.ne.s32.totalorder %s104, %s105
    %p114 = scmp.eq.s32.totalorder %s26, 0
    %p115 = por %p113, %p114
    %p116 = scmp.ne.s32.totalorder %s104, %s105
    %p117 = scmp.eq.s32.totalorder %s27, 1
    %p118 = por %p116, %p117
    %p120 = scmp.ne.s32.totalorder %s105, %s119
    %p121 = scmp.eq.s32.totalorder %s27, 0
    %p122 = por %p120, %p121
    %s124 = sadd.s32 %s123, 1
    %p127 = scmp.eq.s32.totalorder %s21, 1
    %p128 = scmp.ne.s32.totalorder %s123, %s125
    %p129 = scmp.eq.s32.totalorder %s21, 0
    %p130 = por %p128, %p129
    %p131 = scmp.ne.s32.totalorder %s123, %s125
    %p132 = scmp.eq.s32.totalorder %s26, 1
    %p133 = por %p131, %p132
    %p134 = scmp.ne.s32.totalorder %s125, %s126
    %p135 = scmp.eq.s32.totalorder %s26, 0
    %p136 = por %p134, %p135
    %p137 = scmp.ne.s32.totalorder %s125, %s126
    %p138 = scmp.eq.s32.totalorder %s27, 1
    %p139 = por %p137, %p138
    %p141 = scmp.ne.s32.totalorder %s126, %s140
    %p142 = scmp.eq.s32.totalorder %s27, 0
    %p143 = por %p141, %p142
    %s145 = sadd.s32 %s144, 1
    %p148 = scmp.eq.s32.totalorder %s21, 1
    %p149 = scmp.ne.s32.totalorder %s144, %s146
    %p150 = scmp.eq.s32.totalorder %s21, 0
    %p151 = por %p149, %p150
    %p152 = scmp.ne.s32.totalorder %s144, %s146
    %p153 = scmp.eq.s32.totalorder %s26, 1
    %p154 = por %p152, %p153
    %p155 = scmp.ne.s32.totalorder %s146, %s147
    %p156 = scmp.eq.s32.totalorder %s26, 0
    %p157 = por %p155, %p156
    %p158 = scmp.ne.s32.totalorder %s146, %s147
    %p159 = scmp.eq.s32.totalorder %s27, 1
    %p160 = por %p158, %p159
    %p162 = scmp.ne.s32.totalorder %s147, %s161
    %p163 = scmp.eq.s32.totalorder %s27, 0
    %p164 = por %p162, %p163
    %s166 = sadd.s32 %s165, 1
    %p169 = scmp.eq.s32.totalorder %s21, 1
    %p170 = scmp.ne.s32.totalorder %s165, %s167
    %p171 = scmp.eq.s32.totalorder %s21, 0
    %p172 = por %p170, %p171
    %p173 = scmp.ne.s32.totalorder %s165, %s167
    %p174 = scmp.eq.s32.totalorder %s26, 1
    %p175 = por %p173, %p174
    %p176 = scmp.ne.s32.totalorder %s167, %s168
    %p177 = scmp.eq.s32.totalorder %s26, 0
    %p178 = por %p176, %p177
    %p179 = scmp.ne.s32.totalorder %s167, %s168
    %p180 = scmp.eq.s32.totalorder %s27, 1
    %p181 = por %p179, %p180
    %p183 = scmp.ne.s32.totalorder %s168, %s182
    %p184 = scmp.eq.s32.totalorder %s27, 0
    %p185 = por %p183, %p184
    %s187 = sadd.s32 %s186, 1
    %p190 = scmp.eq.s32.totalorder %s21, 1
    %p191 = scmp.ne.s32.totalorder %s186, %s188
    %p192 = scmp.eq.s32.totalorder %s21, 0
    %p193 = por %p191, %p192
    %p194 = scmp.ne.s32.totalorder %s186, %s188
    %p195 = scmp.eq.s32.totalorder %s26, 1
    %p196 = por %p194, %p195
    %p197 = scmp.ne.s32.totalorder %s188, %s189
    %p198 = scmp.eq.s32.totalorder %s26, 0
    %p199 = por %p197, %p198
    %p200 = scmp.ne.s32.totalorder %s188, %s189
    %p201 = scmp.eq.s32.totalorder %s27, 1
    %p202 = por %p200, %p201
    %p204 = scmp.ne.s32.totalorder %s189, %s203
    %p205 = scmp.eq.s32.totalorder %s27, 0
    %p206 = por %p204, %p205
    %s208 = sadd.s32 %s207, 1
    %p211 = scmp.eq.s32.totalorder %s21, 1
    %p212 = scmp.ne.s32.totalorder %s207, %s209
    %p213 = scmp.eq.s32.totalorder %s21, 0
    %p214 = por %p212, %p213
    %p215 = scmp.ne.s32.totalorder %s207, %s209
    %p216 = scmp.eq.s32.totalorder %s26, 1
    %p217 = por %p215, %p216
    %p218 = scmp.ne.s32.totalorder %s209, %s210
    %p219 = scmp.eq.s32.totalorder %s26, 0
    %p220 = por %p218, %p219
    %p221 = scmp.ne.s32.totalorder %s209, %s210
    %p222 = scmp.eq.s32.totalorder %s27, 1
    %p223 = por %p221, %p222
    %p225 = scmp.ne.s32.totalorder %s210, %s224
    %p226 = scmp.eq.s32.totalorder %s27, 0
    %p227 = por %p225, %p226
    %s229 = sadd.s32 %s228, 1
    %p232 = scmp.eq.s32.totalorder %s21, 1
    %p233 = scmp.ne.s32.totalorder %s228, %s230
    %p234 = scmp.eq.s32.totalorder %s21, 0
    %p235 = por %p233, %p234
    %p236 = scmp.ne.s32.totalorder %s228, %s230
    %p237 = scmp.eq.s32.totalorder %s26, 1
    %p238 = por %p236, %p237
    %p239 = scmp.ne.s32.totalorder %s230, %s231
    %p240 = scmp.eq.s32.totalorder %s26, 0
    %p241 = por %p239, %p240
    %p242 = scmp.ne.s32.totalorder %s230, %s231
    %p243 = scmp.eq.s32.totalorder %s27, 1
    %p244 = por %p242, %p243
    %p246 = scmp.ne.s32.totalorder %s231, %s245
    %p247 = scmp.eq.s32.totalorder %s27, 0
    %p248 = por %p246, %p247
    %s250 = sadd.s32 %s249, 1
    %p253 = scmp.eq.s32.totalorder %s21, 1
    %p254 = scmp.ne.s32.totalorder %s249, %s251
    %p255 = scmp.eq.s32.totalorder %s21, 0
    %p256 = por %p254, %p255
    %p257 = scmp.ne.s32.totalorder %s249, %s251
    %p258 = scmp.eq.s32.totalorder %s26, 1
    %p259 = por %p257, %p258
    %p260 = scmp.ne.s32.totalorder %s251, %s252
    %p261 = scmp.eq.s32.totalorder %s26, 0
    %p262 = por %p260, %p261
    %p263 = scmp.ne.s32.totalorder %s251, %s252
    %p264 = scmp.eq.s32.totalorder %s27, 1
    %p265 = por %p263, %p264
    %p267 = scmp.ne.s32.totalorder %s252, %s266
    %p268 = scmp.eq.s32.totalorder %s27, 0
    %p269 = por %p267, %p268
    %s271 = sadd.s32 %s270, 1
    %p274 = scmp.eq.s32.totalorder %s21, 1
    %p275 = scmp.ne.s32.totalorder %s270, %s272
    %p276 = scmp.eq.s32.totalorder %s21, 0
    %p277 = por %p275, %p276
    %p278 = scmp.ne.s32.totalorder %s270, %s272
    %p279 = scmp.eq.s32.totalorder %s26, 1
    %p280 = por %p278, %p279
    %p281 = scmp.ne.s32.totalorder %s272, %s273
    %p282 = scmp.eq.s32.totalorder %s26, 0
    %p283 = por %p281, %p282
    %p284 = scmp.ne.s32.totalorder %s272, %s273
    %p285 = scmp.eq.s32.totalorder %s27, 1
    %p286 = por %p284, %p285
    %p288 = scmp.ne.s32.totalorder %s273, %s287
    %p289 = scmp.eq.s32.totalorder %s27, 0
    %p290 = por %p288, %p289
    %s292 = sadd.s32 %s291, 1
    %p295 = scmp.eq.s32.totalorder %s21, 1
    %p296 = scmp.ne.s32.totalorder %s291, %s293
    %p297 = scmp.eq.s32.totalorder %s21, 0
    %p298 = por %p296, %p297
    %p299 = scmp.ne.s32.totalorder %s291, %s293
    %p300 = scmp.eq.s32.totalorder %s26, 1
    %p301 = por %p299, %p300
    %p302 = scmp.ne.s32.totalorder %s293, %s294
    %p303 = scmp.eq.s32.totalorder %s26, 0
    %p304 = por %p302, %p303
    %p305 = scmp.ne.s32.totalorder %s293, %s294
    %p306 = scmp.eq.s32.totalorder %s27, 1
    %p307 = por %p305, %p306
    %p309 = scmp.ne.s32.totalorder %s294, %s308
    %p310 = scmp.eq.s32.totalorder %s27, 0
    %p311 = por %p309, %p310
    %s313 = sadd.s32 %s312, 1
    %p316 = scmp.eq.s32.totalorder %s21, 1
    %p317 = scmp.ne.s32.totalorder %s312, %s314
    %p318 = scmp.eq.s32.totalorder %s21, 0
    %p319 = por %p317, %p318
    %p320 = scmp.ne.s32.totalorder %s312, %s314
    %p321 = scmp.eq.s32.totalorder %s26, 1
    %p322 = por %p320, %p321
    %p323 = scmp.ne.s32.totalorder %s314, %s315
    %p324 = scmp.eq.s32.totalorder %s26, 0
    %p325 = por %p323, %p324
    %p326 = scmp.ne.s32.totalorder %s314, %s315
    %p327 = scmp.eq.s32.totalorder %s27, 1
    %p328 = por %p326, %p327
    %p330 = scmp.ne.s32.totalorder %s315, %s329
    %p331 = scmp.eq.s32.totalorder %s27, 0
    %p332 = por %p330, %p331
    %s334 = sadd.s32 %s333, 1
    %p337 = scmp.eq.s32.totalorder %s21, 1
    %p338 = scmp.ne.s32.totalorder %s333, %s335
    %p339 = scmp.eq.s32.totalorder %s21, 0
    %p340 = por %p338, %p339
    %p341 = scmp.ne.s32.totalorder %s333, %s335
    %p342 = scmp.eq.s32.totalorder %s26, 1
    %p343 = por %p341, %p342
    %p344 = scmp.ne.s32.totalorder %s335, %s336
    %p345 = scmp.eq.s32.totalorder %s26, 0
    %p346 = por %p344, %p345
    %p347 = scmp.ne.s32.totalorder %s335, %s336
    %p348 = scmp.eq.s32.totalorder %s27, 1
    %p349 = por %p347, %p348
    %p351 = scmp.ne.s32.totalorder %s336, %s350
    %p352 = scmp.eq.s32.totalorder %s27, 0
    %p353 = por %p351, %p352
    %s354 = ssub.s32 %s21, %s28
    %p355 = scmp.eq.s32.totalorder %s354, 0
    %s357 = sadd.s32 %s356, 1
    %s358 = scalar_select %p355, %s356, %s357
    %p361 = pneg %p355
    %p362 = scmp.eq.s32.totalorder %s21, 1
    %p363 = por %p361, %p362
    %p364 = scmp.ne.s32.totalorder %s356, %s359
    %p365 = scmp.eq.s32.totalorder %s21, 0
    %p366 = por %p364, %p365
    %p367 = scmp.ne.s32.totalorder %s356, %s359
    %p368 = scmp.eq.s32.totalorder %s26, 1
    %p369 = por %p367, %p368
    %p370 = scmp.ne.s32.totalorder %s359, %s360
    %p371 = scmp.eq.s32.totalorder %s26, 0
    %p372 = por %p370, %p371
    %p373 = scmp.ne.s32.totalorder %s359, %s360
    %p374 = scmp.eq.s32.totalorder %s27, 1
    %p375 = por %p373, %p374
    %p377 = scmp.ne.s32.totalorder %s360, %s376
    %p378 = scmp.eq.s32.totalorder %s27, 0
    %p379 = por %p377, %p378
    %p380 = scmp.le.s32.totalorder 1, %s21
    %p381 = scmp.lt.s32.totalorder %s21, 3
    %p382 = pnand %p380, %p381
    %p383 = pneg %p382
    // Predicated region
    $region9: #{resblock_forward.1} parent=5 // pred_check
      _
    $region10: #{resblock_forward.1} parent=5 // pred_check_branch
      %385 = sbr.rel (%p382) target = $region12
    $region11: #{resblock_forward.1} parent=5 // pred_region
      %s386 = ssub.s32 %s21, 1
      // Predicated region
      $region13: #{resblock_forward.1} parent=11 // pred_check
        %p387 = pneg %p94
      $region14: #{resblock_forward.1} parent=11 // pred_check_branch
        %389 = sbr.rel (%p387) target = $region16
      $region15: #{resblock_forward.1} parent=11 // pred_region
        _
      $region16: #{resblock_forward.1} parent=11 // pred_fallthru
        _
      // Predicated region
      $region17: #{resblock_forward.1} parent=11 // pred_check
        %p390 = pneg %p115
      $region18: #{resblock_forward.1} parent=11 // pred_check_branch
        %392 = sbr.rel (%p390) target = $region20
      $region19: #{resblock_forward.1} parent=11 // pred_region
        _
      $region20: #{resblock_forward.1} parent=11 // pred_fallthru
        _
      // Predicated region
      $region21: #{resblock_forward.1} parent=11 // pred_check
        %p393 = pneg %p136
      $region22: #{resblock_forward.1} parent=11 // pred_check_branch
        %395 = sbr.rel (%p393) target = $region24
      $region23: #{resblock_forward.1} parent=11 // pred_region
        _
      $region24: #{resblock_forward.1} parent=11 // pred_fallthru
        _
      // Predicated region
      $region25: #{resblock_forward.1} parent=11 // pred_check
        %p396 = pneg %p157
      $region26: #{resblock_forward.1} parent=11 // pred_check_branch
        %398 = sbr.rel (%p396) target = $region28
      $region27: #{resblock_forward.1} parent=11 // pred_region
        _
      $region28: #{resblock_forward.1} parent=11 // pred_fallthru
        _
      // Predicated region
      $region29: #{resblock_forward.1} parent=11 // pred_check
        %p399 = pneg %p178
      $region30: #{resblock_forward.1} parent=11 // pred_check_branch
        %401 = sbr.rel (%p399) target = $region32
      $region31: #{resblock_forward.1} parent=11 // pred_region
        _
      $region32: #{resblock_forward.1} parent=11 // pred_fallthru
        _
      // Predicated region
      $region33: #{resblock_forward.1} parent=11 // pred_check
        %p402 = pneg %p199
      $region34: #{resblock_forward.1} parent=11 // pred_check_branch
        %404 = sbr.rel (%p402) target = $region36
      $region35: #{resblock_forward.1} parent=11 // pred_region
        _
      $region36: #{resblock_forward.1} parent=11 // pred_fallthru
        _
      // Predicated region
      $region37: #{resblock_forward.1} parent=11 // pred_check
        %p405 = pneg %p220
      $region38: #{resblock_forward.1} parent=11 // pred_check_branch
        %407 = sbr.rel (%p405) target = $region40
      $region39: #{resblock_forward.1} parent=11 // pred_region
        _
      $region40: #{resblock_forward.1} parent=11 // pred_fallthru
        _
      // Predicated region
      $region41: #{resblock_forward.1} parent=11 // pred_check
        %p408 = pneg %p241
      $region42: #{resblock_forward.1} parent=11 // pred_check_branch
        %410 = sbr.rel (%p408) target = $region44
      $region43: #{resblock_forward.1} parent=11 // pred_region
        _
      $region44: #{resblock_forward.1} parent=11 // pred_fallthru
        _
      // Predicated region
      $region45: #{resblock_forward.1} parent=11 // pred_check
        %p411 = pneg %p262
      $region46: #{resblock_forward.1} parent=11 // pred_check_branch
        %413 = sbr.rel (%p411) target = $region48
      $region47: #{resblock_forward.1} parent=11 // pred_region
        _
      $region48: #{resblock_forward.1} parent=11 // pred_fallthru
        _
      // Predicated region
      $region49: #{resblock_forward.1} parent=11 // pred_check
        %p414 = pneg %p283
      $region50: #{resblock_forward.1} parent=11 // pred_check_branch
        %416 = sbr.rel (%p414) target = $region52
      $region51: #{resblock_forward.1} parent=11 // pred_region
        _
      $region52: #{resblock_forward.1} parent=11 // pred_fallthru
        _
      // Predicated region
      $region53: #{resblock_forward.1} parent=11 // pred_check
        %p417 = pneg %p304
      $region54: #{resblock_forward.1} parent=11 // pred_check_branch
        %419 = sbr.rel (%p417) target = $region56
      $region55: #{resblock_forward.1} parent=11 // pred_region
        _
      $region56: #{resblock_forward.1} parent=11 // pred_fallthru
        _
      // Predicated region
      $region57: #{resblock_forward.1} parent=11 // pred_check
        %p420 = pneg %p325
      $region58: #{resblock_forward.1} parent=11 // pred_check_branch
        %422 = sbr.rel (%p420) target = $region60
      $region59: #{resblock_forward.1} parent=11 // pred_region
        _
      $region60: #{resblock_forward.1} parent=11 // pred_fallthru
        _
      // Predicated region
      $region61: #{resblock_forward.1} parent=11 // pred_check
        %p423 = pneg %p346
      $region62: #{resblock_forward.1} parent=11 // pred_check_branch
        %425 = sbr.rel (%p423) target = $region64
      $region63: #{resblock_forward.1} parent=11 // pred_region
        _
      $region64: #{resblock_forward.1} parent=11 // pred_fallthru
        _
    $region12: #{resblock_forward.1} parent=5 // pred_fallthru
      _
    %p426 = scmp.lt.s32.totalorder %s21, 2
    // Predicated region
    $region65: #{resblock_forward.1} parent=5 // pred_check
      %p427 = pneg %p426
    $region66: #{resblock_forward.1} parent=5 // pred_check_branch
      %429 = sbr.rel (%p427) target = $region68
    $region67: #{resblock_forward.1} parent=5 // pred_region
      // Predicated region
      $region69: #{resblock_forward.1} parent=67 // pred_check
        %p430 = pneg %p41
      $region70: #{resblock_forward.1} parent=67 // pred_check_branch
        %432 = sbr.rel (%p430) target = $region72
      $region71: #{resblock_forward.1} parent=67 // pred_region
        %p433 = scmp.lt.s32.totalorder %s21, 1
        %s434 = scalar_select %p433, %s21, 1
        %s435 = smul.addr %s434, 72
        %s436 = smul.addr %s435, 8
        %s437 = scalar_lea.vmem %s0, %s436
      $region72: #{resblock_forward.1} parent=67 // pred_fallthru
        _
      // Predicated region
      $region73: #{resblock_forward.1} parent=67 // pred_check
        %p438 = pneg %p67
      $region74: #{resblock_forward.1} parent=67 // pred_check_branch
        %440 = sbr.rel (%p438) target = $region76
      $region75: #{resblock_forward.1} parent=67 // pred_region
        %p441 = scmp.lt.s32.totalorder %s21, 1
        %s442 = scalar_select %p441, %s21, 1
        %s443 = smul.addr %s442, 16
        %s444 = smul.addr %s443, 8
        %s445 = scalar_lea.vmem %s1, %s444
      $region76: #{resblock_forward.1} parent=67 // pred_fallthru
        _
    $region68: #{resblock_forward.1} parent=5 // pred_fallthru
      _
    %p446 = scmp.le.s32.totalorder 1, %s21
    %p447 = scmp.lt.s32.totalorder %s21, 3
    %p448 = pnand %p446, %p447
    %p449 = pneg %p448
    // Predicated region
    $region77: #{resblock_forward.1} parent=5 // pred_check
      _
    $region78: #{resblock_forward.1} parent=5 // pred_check_branch
      %451 = sbr.rel (%p448) target = $region80
    $region79: #{resblock_forward.1} parent=5 // pred_region
      %s452 = ssub.s32 %s21, 1
      %p453 = scmp.lt.s32.totalorder %s26, 1
      %s454 = scalar_select %p453, %s26, 1
      %s455 = smul.addr %s454, 72
      %s456 = smul.addr %s455, 8
      %s457 = scalar_lea.vmem %s0, %s456
      %p458 = pneg %p47
      %p459 = pneg %p44
      %p460 = scmp.lt.s32.totalorder %s26, 1
      %s461 = scalar_select %p460, %s26, 1
      %s462 = smul.addr %s461, 16
      %s463 = smul.addr %s462, 8
      %s464 = scalar_lea.vmem %s1, %s463
      %p465 = pneg %p73
      %p466 = pneg %p70
      %p467 = pneg %p94
      %p468 = pneg %p91
      %p469 = pneg %p115
      %p470 = pneg %p112
      %p471 = pneg %p136
      %p472 = pneg %p133
      %p473 = pneg %p157
      %p474 = pneg %p154
      %p475 = pneg %p178
      %p476 = pneg %p175
      %p477 = pneg %p199
      %p478 = pneg %p196
      %p479 = pneg %p220
      %p480 = pneg %p217
      %p481 = pneg %p241
      %p482 = pneg %p238
      %p483 = pneg %p262
      %p484 = pneg %p259
      %p485 = pneg %p283
      %p486 = pneg %p280
      %p487 = pneg %p304
      %p488 = pneg %p301
      %p489 = pneg %p325
      %p490 = pneg %p322
      %p491 = pneg %p346
      %p492 = pneg %p343
      %p493 = pneg %p372
      %p494 = pneg %p369
      %p495 = scmp.lt.s32.totalorder %s26, 1
      %s496 = scalar_select %p495, %s26, 1
      %s497 = smul.addr %s496, 16
      %s498 = smul.addr %s497, 8
      %s499 = scalar_lea.vmem %s15, %s498
      %p500 = scmp.lt.s32.totalorder %s26, 1
      %s501 = scalar_select %p500, %s26, 1
      %s502 = smul.addr %s501, 72
      %s503 = smul.addr %s502, 8
      %s504 = scalar_lea.vmem %s0, %s503
      %p505 = scmp.lt.s32.totalorder %s26, 1
      %s506 = scalar_select %p505, %s26, 1
      %s507 = smul.addr %s506, 16
      %s508 = smul.addr %s507, 8
      %s509 = scalar_lea.vmem %s1, %s508
      %p510 = scmp.lt.s32.totalorder %s26, 1
      %s511 = scalar_select %p510, %s26, 1
      %s512 = smul.addr %s511, 16
      %s513 = smul.addr %s512, 8
      %s514 = scalar_lea.vmem %s15, %s513
      %v515 = vld [vmem:[%s504] sm:$0xff]
      %v516 = vld [vmem:[%s504 + $0x8] sm:$0xff]
      %v517 = vld [vmem:[%s504 + $0x10] sm:$0xff]
      %v518 = vld [vmem:[%s504 + $0x18] sm:$0xff]
      %v519 = vld [vmem:[%s504 + $0x20] sm:$0xff]
      %v520 = vld [vmem:[%s504 + $0x28] sm:$0xff]
      %v521 = vld [vmem:[%s504 + $0x30] sm:$0xff]
      %v522 = vld [vmem:[%s504 + $0x38] sm:$0xff]
      %v523 = vld [vmem:[%s504 + $0x40] sm:$0xff]
      %v524 = vld [vmem:[%s504 + $0x48] sm:$0xff]
      %v525 = vld [vmem:[%s504 + $0x50] sm:$0xff]
      %v526 = vld [vmem:[%s504 + $0x58] sm:$0xff]
      %v527 = vld [vmem:[%s504 + $0x60] sm:$0xff]
      %v528 = vld [vmem:[%s504 + $0x68] sm:$0xff]
      %v529 = vld [vmem:[%s504 + $0x70] sm:$0xff]
      %v530 = vld [vmem:[%s504 + $0x78] sm:$0xff]
      %v531 = vld [vmem:[%s504 + $0x80] sm:$0xff]
      %v532 = vld [vmem:[%s504 + $0x88] sm:$0xff]
      %v533 = vld [vmem:[%s504 + $0x90] sm:$0xff]
      %v534 = vld [vmem:[%s504 + $0x98] sm:$0xff]
      %v535 = vld [vmem:[%s504 + $0xa0] sm:$0xff]
      %v536 = vld [vmem:[%s504 + $0xa8] sm:$0xff]
      %v537 = vld [vmem:[%s504 + $0xb0] sm:$0xff]
      %v538 = vld [vmem:[%s504 + $0xb8] sm:$0xff]
      %v539 = vld [vmem:[%s504 + $0xc0] sm:$0xff]
      %v540 = vld [vmem:[%s504 + $0xc8] sm:$0xff]
      %v541 = vld [vmem:[%s504 + $0xd0] sm:$0xff]
      %v542 = vld [vmem:[%s504 + $0xd8] sm:$0xff]
      %v543 = vld [vmem:[%s504 + $0xe0] sm:$0xff]
      %v544 = vld [vmem:[%s504 + $0xe8] sm:$0xff]
      %v545 = vld [vmem:[%s504 + $0xf0] sm:$0xff]
      %v546 = vld [vmem:[%s504 + $0xf8] sm:$0xff]
      %v547 = vld [vmem:[%s504 + $0x100] sm:$0xff]
      %v548 = vld [vmem:[%s504 + $0x108] sm:$0xff]
      %v549 = vld [vmem:[%s504 + $0x110] sm:$0xff]
      %v550 = vld [vmem:[%s504 + $0x118] sm:$0xff]
      %v551 = vld [vmem:[%s504 + $0x120] sm:$0xff]
      %v552 = vld [vmem:[%s504 + $0x128] sm:$0xff]
      %v553 = vld [vmem:[%s504 + $0x130] sm:$0xff]
      %v554 = vld [vmem:[%s504 + $0x138] sm:$0xff]
      %v555 = vld [vmem:[%s504 + $0x140] sm:$0xff]
      %v556 = vld [vmem:[%s504 + $0x148] sm:$0xff]
      %v557 = vld [vmem:[%s504 + $0x150] sm:$0xff]
      %v558 = vld [vmem:[%s504 + $0x158] sm:$0xff]
      %v559 = vld [vmem:[%s504 + $0x160] sm:$0xff]
      %v560 = vld [vmem:[%s504 + $0x168] sm:$0xff]
      %v561 = vld [vmem:[%s504 + $0x170] sm:$0xff]
      %v562 = vld [vmem:[%s504 + $0x178] sm:$0xff]
      %v563 = vld [vmem:[%s504 + $0x180] sm:$0xff]
      %v564 = vld [vmem:[%s504 + $0x188] sm:$0xff]
      %v565 = vld [vmem:[%s504 + $0x190] sm:$0xff]
      %v566 = vld [vmem:[%s504 + $0x198] sm:$0xff]
      %v567 = vld [vmem:[%s504 + $0x1a0] sm:$0xff]
      %v568 = vld [vmem:[%s504 + $0x1a8] sm:$0xff]
      %v569 = vld [vmem:[%s504 + $0x1b0] sm:$0xff]
      %v570 = vld [vmem:[%s504 + $0x1b8] sm:$0xff]
      %v571 = vld [vmem:[%s504 + $0x1c0] sm:$0xff]
      %v572 = vld [vmem:[%s504 + $0x1c8] sm:$0xff]
      %v573 = vld [vmem:[%s504 + $0x1d0] sm:$0xff]
      %v574 = vld [vmem:[%s504 + $0x1d8] sm:$0xff]
      %v575 = vld [vmem:[%s504 + $0x1e0] sm:$0xff]
      %v576 = vld [vmem:[%s504 + $0x1e8] sm:$0xff]
      %v577 = vld [vmem:[%s504 + $0x1f0] sm:$0xff]
      %v578 = vld [vmem:[%s504 + $0x1f8] sm:$0xff]
      %v579 = vld [vmem:[%s504 + $0x200] sm:$0xff]
      %v580 = vld [vmem:[%s504 + $0x208] sm:$0xff]
      %v581 = vld [vmem:[%s504 + $0x210] sm:$0xff]
      %v582 = vld [vmem:[%s504 + $0x218] sm:$0xff]
      %v583 = vld [vmem:[%s504 + $0x220] sm:$0xff]
      %v584 = vld [vmem:[%s504 + $0x228] sm:$0xff]
      %v585 = vld [vmem:[%s504 + $0x230] sm:$0xff]
      %v586 = vld [vmem:[%s504 + $0x238] sm:$0xff]
      %v587 = vld [vmem:[%s2] sm:$0xff]
      %v588 = vld [vmem:[%s2 + $0x8] sm:$0xff]
      %v589 = vld [vmem:[%s2 + $0x10] sm:$0xff]
      %v590 = vld [vmem:[%s2 + $0x18] sm:$0xff]
      %v591 = vld [vmem:[%s2 + $0x20] sm:$0xff]
      %v592 = vld [vmem:[%s2 + $0x28] sm:$0xff]
      %v593 = vld [vmem:[%s2 + $0x30] sm:$0xff]
      %v594 = vld [vmem:[%s2 + $0x38] sm:$0xff]
      %v595 = vld [vmem:[%s2 + $0x40] sm:$0xff]
      %v596 = vld [vmem:[%s2 + $0x48] sm:$0xff]
      %v597 = vld [vmem:[%s2 + $0x50] sm:$0xff]
      %v598 = vld [vmem:[%s2 + $0x58] sm:$0xff]
      %v599 = vld [vmem:[%s2 + $0x60] sm:$0xff]
      %v600 = vld [vmem:[%s2 + $0x68] sm:$0xff]
      %v601 = vld [vmem:[%s2 + $0x70] sm:$0xff]
      %v602 = vld [vmem:[%s2 + $0x78] sm:$0xff]
      %v603 = vld [vmem:[%s2 + $0x80] sm:$0xff]
      %v604 = vld [vmem:[%s2 + $0x88] sm:$0xff]
      %v605 = vld [vmem:[%s2 + $0x90] sm:$0xff]
      %v606 = vld [vmem:[%s2 + $0x98] sm:$0xff]
      %v607 = vld [vmem:[%s2 + $0xa0] sm:$0xff]
      %v608 = vld [vmem:[%s2 + $0xa8] sm:$0xff]
      %v609 = vld [vmem:[%s2 + $0xb0] sm:$0xff]
      %v610 = vld [vmem:[%s2 + $0xb8] sm:$0xff]
      %v611 = vld [vmem:[%s3] sm:$0xff]
      %v612 = vld [vmem:[%s3 + $0x8] sm:$0xff]
      %v613 = vld [vmem:[%s3 + $0x10] sm:$0xff]
      %v614 = vld [vmem:[%s3 + $0x18] sm:$0xff]
      %v615 = vld [vmem:[%s3 + $0x20] sm:$0xff]
      %v616 = vld [vmem:[%s3 + $0x28] sm:$0xff]
      %v617 = vld [vmem:[%s3 + $0x30] sm:$0xff]
      %v618 = vld [vmem:[%s3 + $0x38] sm:$0xff]
      %v619 = vld [vmem:[%s3 + $0x40] sm:$0xff]
      %v620 = vld [vmem:[%s3 + $0x48] sm:$0xff]
      %v621 = vld [vmem:[%s3 + $0x50] sm:$0xff]
      %v622 = vld [vmem:[%s3 + $0x58] sm:$0xff]
      %v623 = vld [vmem:[%s3 + $0x60] sm:$0xff]
      %v624 = vld [vmem:[%s3 + $0x68] sm:$0xff]
      %v625 = vld [vmem:[%s3 + $0x70] sm:$0xff]
      %v626 = vld [vmem:[%s3 + $0x78] sm:$0xff]
      %v627 = vld [vmem:[%s3 + $0x80] sm:$0xff]
      %v628 = vld [vmem:[%s3 + $0x88] sm:$0xff]
      %v629 = vld [vmem:[%s3 + $0x90] sm:$0xff]
      %v630 = vld [vmem:[%s3 + $0x98] sm:$0xff]
      %v631 = vld [vmem:[%s3 + $0xa0] sm:$0xff]
      %v632 = vld [vmem:[%s3 + $0xa8] sm:$0xff]
      %v633 = vld [vmem:[%s3 + $0xb0] sm:$0xff]
      %v634 = vld [vmem:[%s3 + $0xb8] sm:$0xff]
      %636 = vset.pattern.permute.xlu0 0
      %637 = vperm.xlu0 %636, %v611
      %v638 = vpop.permute.xlu0 %637
      %641 = vset.pattern.permute.xlu0 0
      %642 = vperm.xlu0 %641, %v612
      %v643 = vpop.permute.xlu0 %642
      %646 = vset.pattern.permute.xlu0 0
      %647 = vperm.xlu0 %646, %v613
      %v648 = vpop.permute.xlu0 %647
      %651 = vset.pattern.permute.xlu0 0
      %652 = vperm.xlu0 %651, %v614
      %v653 = vpop.permute.xlu0 %652
      %656 = vset.pattern.permute.xlu0 0
      %657 = vperm.xlu0 %656, %v615
      %v658 = vpop.permute.xlu0 %657
      %661 = vset.pattern.permute.xlu0 0
      %662 = vperm.xlu0 %661, %v616
      %v663 = vpop.permute.xlu0 %662
      %666 = vset.pattern.permute.xlu0 0
      %667 = vperm.xlu0 %666, %v617
      %v668 = vpop.permute.xlu0 %667
      %671 = vset.pattern.permute.xlu0 0
      %672 = vperm.xlu0 %671, %v618
      %v673 = vpop.permute.xlu0 %672
      %676 = vset.pattern.permute.xlu0 0
      %677 = vperm.xlu0 %676, %v619
      %v678 = vpop.permute.xlu0 %677
      %681 = vset.pattern.permute.xlu0 0
      %682 = vperm.xlu0 %681, %v620
      %v683 = vpop.permute.xlu0 %682
      %686 = vset.pattern.permute.xlu0 0
      %687 = vperm.xlu0 %686, %v621
      %v688 = vpop.permute.xlu0 %687
      %691 = vset.pattern.permute.xlu0 0
      %692 = vperm.xlu0 %691, %v622
      %v693 = vpop.permute.xlu0 %692
      %696 = vset.pattern.permute.xlu0 0
      %697 = vperm.xlu0 %696, %v623
      %v698 = vpop.permute.xlu0 %697
      %701 = vset.pattern.permute.xlu0 0
      %702 = vperm.xlu0 %701, %v624
      %v703 = vpop.permute.xlu0 %702
      %706 = vset.pattern.permute.xlu0 0
      %707 = vperm.xlu0 %706, %v625
      %v708 = vpop.permute.xlu0 %707
      %711 = vset.pattern.permute.xlu0 0
      %712 = vperm.xlu0 %711, %v626
      %v713 = vpop.permute.xlu0 %712
      %716 = vset.pattern.permute.xlu0 0
      %717 = vperm.xlu0 %716, %v627
      %v718 = vpop.permute.xlu0 %717
      %721 = vset.pattern.permute.xlu0 0
      %722 = vperm.xlu0 %721, %v628
      %v723 = vpop.permute.xlu0 %722
      %726 = vset.pattern.permute.xlu0 0
      %727 = vperm.xlu0 %726, %v629
      %v728 = vpop.permute.xlu0 %727
      %731 = vset.pattern.permute.xlu0 0
      %732 = vperm.xlu0 %731, %v630
      %v733 = vpop.permute.xlu0 %732
      %736 = vset.pattern.permute.xlu0 0
      %737 = vperm.xlu0 %736, %v631
      %v738 = vpop.permute.xlu0 %737
      %741 = vset.pattern.permute.xlu0 0
      %742 = vperm.xlu0 %741, %v632
      %v743 = vpop.permute.xlu0 %742
      %746 = vset.pattern.permute.xlu0 0
      %747 = vperm.xlu0 %746, %v633
      %v748 = vpop.permute.xlu0 %747
      %751 = vset.pattern.permute.xlu0 0
      %752 = vperm.xlu0 %751, %v634
      %v753 = vpop.permute.xlu0 %752
      %vm755 = vcmask 523264
      %v757 = vsel %vm755, %v587, 0
      %v760 = vsel %vm755, %v588, 0
      %v763 = vsel %vm755, %v589, 0
      %v766 = vsel %vm755, %v590, 0
      %v769 = vsel %vm755, %v591, 0
      %v772 = vsel %vm755, %v592, 0
      %v775 = vsel %vm755, %v593, 0
      %v778 = vsel %vm755, %v594, 0
      %v781 = vsel %vm755, %v595, 0
      %v784 = vsel %vm755, %v596, 0
      %v787 = vsel %vm755, %v597, 0
      %v790 = vsel %vm755, %v598, 0
      %v793 = vsel %vm755, %v599, 0
      %v796 = vsel %vm755, %v600, 0
      %v799 = vsel %vm755, %v601, 0
      %v802 = vsel %vm755, %v602, 0
      %v805 = vsel %vm755, %v603, 0
      %v808 = vsel %vm755, %v604, 0
      %v811 = vsel %vm755, %v605, 0
      %v814 = vsel %vm755, %v606, 0
      %v817 = vsel %vm755, %v607, 0
      %v820 = vsel %vm755, %v608, 0
      %v823 = vsel %vm755, %v609, 0
      %v826 = vsel %vm755, %v610, 0
      %828 = vmatprep.subr.mxu0 0.0
      %829 = vmatpush1.msra.mxu0 0.0
      %830 = vmatprep.subr.mxu0 0.0
      %831 = vmatpush1.msra.mxu0 0.0
      %832 = vmatprep.subr.mxu0 0.0
      %833 = vmatpush1.msra.mxu0 0.0
      %834 = vmatprep.subr.mxu0 0.0
      %835 = vmatpush1.msra.mxu0 0.0
      %836 = vmatprep.subr.mxu0 0.0
      %837 = vmatpush1.msra.mxu0 0.0
      %838 = vmatprep.subr.mxu0 0.0
      %839 = vmatpush1.msra.mxu0 0.0
      %840 = vmatprep.subr.mxu0 0.0
      %841 = vmatpush1.msra.mxu0 0.0
      %842 = vmatprep.subr.mxu0 0.0
      %843 = vmatpush1.msra.mxu0 0.0
      %844 = vmatprep.subr.mxu0 0.0
      %845 = vmatpush1.msra.mxu0 %v554
      %846 = vmatprep.subr.mxu0 0.0
      %847 = vmatpush1.msra.mxu0 %v553
      %848 = vmatprep.subr.mxu0 0.0
      %849 = vmatpush1.msra.mxu0 %v552
      %850 = vmatprep.subr.mxu0 0.0
      %851 = vmatpush1.msra.mxu0 %v551
      %852 = vmatprep.subr.mxu0 0.0
      %853 = vmatpush1.msra.mxu0 %v550
      %854 = vmatprep.subr.mxu0 0.0
      %855 = vmatpush1.msra.mxu0 %v549
      %856 = vmatprep.subr.mxu0 0.0
      %857 = vmatpush1.msra.mxu0 %v548
      %858 = vmatprep.subr.mxu0 0.0
      %859 = vmatpush1.msra.mxu0 %v547
      %860 = vmatprep.subr.mxu0 0.0
      %861 = vmatpush2.msra.mxu0 0.0
      %862 = vmatprep.subr.mxu0 0.0
      %863 = vmatpush2.msra.mxu0 0.0
      %864 = vmatprep.subr.mxu0 0.0
      %865 = vmatpush2.msra.mxu0 0.0
      %866 = vmatprep.subr.mxu0 0.0
      %867 = vmatpush2.msra.mxu0 0.0
      %868 = vmatprep.subr.mxu0 0.0
      %869 = vmatpush2.msra.mxu0 0.0
      %870 = vmatprep.subr.mxu0 0.0
      %871 = vmatpush2.msra.mxu0 0.0
      %872 = vmatprep.subr.mxu0 0.0
      %873 = vmatpush2.msra.mxu0 0.0
      %874 = vmatprep.subr.mxu0 0.0
      %875 = vmatpush2.msra.mxu0 0.0
      %876 = vmatprep.subr.mxu0 0.0
      %877 = vmatpush2.msra.mxu0 0.0
      %878 = vmatprep.subr.mxu0 0.0
      %879 = vmatpush2.msra.mxu0 0.0
      %880 = vmatprep.subr.mxu0 0.0
      %881 = vmatpush2.msra.mxu0 0.0
      %882 = vmatprep.subr.mxu0 0.0
      %883 = vmatpush2.msra.mxu0 0.0
      %884 = vmatprep.subr.mxu0 0.0
      %885 = vmatpush2.msra.mxu0 0.0
      %886 = vmatprep.subr.mxu0 0.0
      %887 = vmatpush2.msra.mxu0 0.0
      %888 = vmatprep.subr.mxu0 0.0
      %889 = vmatpush2.msra.mxu0 0.0
      %890 = vmatprep.subr.mxu0 0.0
      %891 = vmatpush2.msra.mxu0 0.0
      %892 = vmatprep.mubr.f32.mxu0 0.0
      %893 = vmatmul.mubr.f32.gmra.mxu0 %v757
      %v894 = vpop.f32.mrf.mxu0
      %v895 = vadd.f32 %v638, %v894
      %v896 = vpop.f32.mrf.mxu0
      %897 = vmatprep.mubr.f32.mxu0 0.0
      %898 = vmatmul.mubr.f32.gmra.mxu0 %v760
      %v899 = vpop.f32.mrf.mxu0
      %v900 = vadd.f32 %v643, %v899
      %v901 = vpop.f32.mrf.mxu0
      %902 = vmatprep.mubr.f32.mxu0 0.0
      %903 = vmatmul.mubr.f32.gmra.mxu0 %v763
      %v904 = vpop.f32.mrf.mxu0
      %v905 = vadd.f32 %v648, %v904
      %v906 = vpop.f32.mrf.mxu0
      %907 = vmatprep.mubr.f32.mxu0 0.0
      %908 = vmatmul.mubr.f32.gmra.mxu0 %v766
      %v909 = vpop.f32.mrf.mxu0
      %v910 = vadd.f32 %v653, %v909
      %v911 = vpop.f32.mrf.mxu0
      %912 = vmatprep.mubr.f32.mxu0 0.0
      %913 = vmatmul.mubr.f32.gmra.mxu0 %v769
      %v914 = vpop.f32.mrf.mxu0
      %v915 = vadd.f32 %v658, %v914
      %v916 = vpop.f32.mrf.mxu0
      %917 = vmatprep.mubr.f32.mxu0 0.0
      %918 = vmatmul.mubr.f32.gmra.mxu0 %v772
      %v919 = vpop.f32.mrf.mxu0
      %v920 = vadd.f32 %v663, %v919
      %v921 = vpop.f32.mrf.mxu0
      %922 = vmatprep.mubr.f32.mxu0 0.0
      %923 = vmatmul.mubr.f32.gmra.mxu0 %v775
      %v924 = vpop.f32.mrf.mxu0
      %v925 = vadd.f32 %v668, %v924
      %v926 = vpop.f32.mrf.mxu0
      %927 = vmatprep.mubr.f32.mxu0 0.0
      %928 = vmatmul.mubr.f32.gmra.mxu0 %v778
      %v929 = vpop.f32.mrf.mxu0
      %v930 = vadd.f32 %v673, %v929
      %v931 = vpop.f32.mrf.mxu0
      %932 = vmatprep.mubr.f32.mxu0 0.0
      %933 = vmatmul.mubr.f32.gmra.mxu0 %v781
      %v934 = vpop.f32.mrf.mxu0
      %v935 = vadd.f32 %v678, %v934
      %v936 = vpop.f32.mrf.mxu0
      %937 = vmatprep.mubr.f32.mxu0 0.0
      %938 = vmatmul.mubr.f32.gmra.mxu0 %v784
      %v939 = vpop.f32.mrf.mxu0
      %v940 = vadd.f32 %v683, %v939
      %v941 = vpop.f32.mrf.mxu0
      %942 = vmatprep.mubr.f32.mxu0 0.0
      %943 = vmatmul.mubr.f32.gmra.mxu0 %v787
      %v944 = vpop.f32.mrf.mxu0
      %v945 = vadd.f32 %v688, %v944
      %v946 = vpop.f32.mrf.mxu0
      %947 = vmatprep.mubr.f32.mxu0 0.0
      %948 = vmatmul.mubr.f32.gmra.mxu0 %v790
      %v949 = vpop.f32.mrf.mxu0
      %v950 = vadd.f32 %v693, %v949
      %v951 = vpop.f32.mrf.mxu0
      %952 = vmatprep.mubr.f32.mxu0 0.0
      %953 = vmatmul.mubr.f32.gmra.mxu0 %v793
      %v954 = vpop.f32.mrf.mxu0
      %v955 = vadd.f32 %v698, %v954
      %v956 = vpop.f32.mrf.mxu0
      %957 = vmatprep.mubr.f32.mxu0 0.0
      %958 = vmatmul.mubr.f32.gmra.mxu0 %v796
      %v959 = vpop.f32.mrf.mxu0
      %v960 = vadd.f32 %v703, %v959
      %v961 = vpop.f32.mrf.mxu0
      %962 = vmatprep.mubr.f32.mxu0 0.0
      %963 = vmatmul.mubr.f32.gmra.mxu0 %v799
      %v964 = vpop.f32.mrf.mxu0
      %v965 = vadd.f32 %v708, %v964
      %v966 = vpop.f32.mrf.mxu0
      %967 = vmatprep.mubr.f32.mxu0 0.0
      %968 = vmatmul.mubr.f32.gmra.mxu0 %v802
      %v969 = vpop.f32.mrf.mxu0
      %v970 = vadd.f32 %v713, %v969
      %v971 = vpop.f32.mrf.mxu0
      %972 = vmatprep.mubr.f32.mxu0 0.0
      %973 = vmatmul.mubr.f32.gmra.mxu0 %v805
      %v974 = vpop.f32.mrf.mxu0
      %v975 = vadd.f32 %v718, %v974
      %v976 = vpop.f32.mrf.mxu0
      %977 = vmatprep.mubr.f32.mxu0 0.0
      %978 = vmatmul.mubr.f32.gmra.mxu0 %v808
      %v979 = vpop.f32.mrf.mxu0
      %v980 = vadd.f32 %v723, %v979
      %v981 = vpop.f32.mrf.mxu0
      %982 = vmatprep.mubr.f32.mxu0 0.0
      %983 = vmatmul.mubr.f32.gmra.mxu0 %v811
      %v984 = vpop.f32.mrf.mxu0
      %v985 = vadd.f32 %v728, %v984
      %v986 = vpop.f32.mrf.mxu0
      %987 = vmatprep.mubr.f32.mxu0 0.0
      %988 = vmatmul.mubr.f32.gmra.mxu0 %v814
      %v989 = vpop.f32.mrf.mxu0
      %v990 = vadd.f32 %v733, %v989
      %v991 = vpop.f32.mrf.mxu0
      %992 = vmatprep.mubr.f32.mxu0 0.0
      %993 = vmatmul.mubr.f32.gmra.mxu0 %v817
      %v994 = vpop.f32.mrf.mxu0
      %v995 = vadd.f32 %v738, %v994
      %v996 = vpop.f32.mrf.mxu0
      %997 = vmatprep.mubr.f32.mxu0 0.0
      %998 = vmatmul.mubr.f32.gmra.mxu0 %v820
      %v999 = vpop.f32.mrf.mxu0
      %v1000 = vadd.f32 %v743, %v999
      %v1001 = vpop.f32.mrf.mxu0
      %1002 = vmatprep.mubr.f32.mxu0 0.0
      %1003 = vmatmul.mubr.f32.gmra.mxu0 %v823
      %v1004 = vpop.f32.mrf.mxu0
      %v1005 = vadd.f32 %v748, %v1004
      %v1006 = vpop.f32.mrf.mxu0
      %1007 = vmatprep.mubr.f32.mxu0 0.0
      %1008 = vmatmul.mubr.f32.gmra.mxu0 %v826
      %v1009 = vpop.f32.mrf.mxu0
      %v1010 = vadd.f32 %v753, %v1009
      %v1011 = vpop.f32.mrf.mxu0
      %1012 = vdwg.mxu0
      %v1013 = vld [vmem:[%s4] sm:$0xff]
      %v1014 = vld [vmem:[%s4 + $0x8] sm:$0xff]
      %v1015 = vld [vmem:[%s4 + $0x10] sm:$0xff]
      %v1016 = vld [vmem:[%s4 + $0x18] sm:$0xff]
      %v1017 = vld [vmem:[%s4 + $0x20] sm:$0xff]
      %v1018 = vld [vmem:[%s4 + $0x28] sm:$0xff]
      %v1019 = vld [vmem:[%s4 + $0x30] sm:$0xff]
      %v1020 = vld [vmem:[%s4 + $0x38] sm:$0xff]
      %v1021 = vld [vmem:[%s4 + $0x40] sm:$0xff]
      %v1022 = vld [vmem:[%s4 + $0x48] sm:$0xff]
      %v1023 = vld [vmem:[%s4 + $0x50] sm:$0xff]
      %v1024 = vld [vmem:[%s4 + $0x58] sm:$0xff]
      %v1025 = vld [vmem:[%s4 + $0x60] sm:$0xff]
      %v1026 = vld [vmem:[%s4 + $0x68] sm:$0xff]
      %v1027 = vld [vmem:[%s4 + $0x70] sm:$0xff]
      %v1028 = vld [vmem:[%s4 + $0x78] sm:$0xff]
      %v1029 = vld [vmem:[%s4 + $0x80] sm:$0xff]
      %v1030 = vld [vmem:[%s4 + $0x88] sm:$0xff]
      %v1031 = vld [vmem:[%s4 + $0x90] sm:$0xff]
      %v1032 = vld [vmem:[%s4 + $0x98] sm:$0xff]
      %v1033 = vld [vmem:[%s4 + $0xa0] sm:$0xff]
      %v1034 = vld [vmem:[%s4 + $0xa8] sm:$0xff]
      %v1035 = vld [vmem:[%s4 + $0xb0] sm:$0xff]
      %v1036 = vld [vmem:[%s4 + $0xb8] sm:$0xff]
      %v1037 = vld [vmem:[%s4 + $0xc0] sm:$0xff]
      %v1038 = vld [vmem:[%s4 + $0xc8] sm:$0xff]
      %v1039 = vld [vmem:[%s4 + $0xd0] sm:$0xff]
      %v1040 = vld [vmem:[%s4 + $0xd8] sm:$0xff]
      %v1041 = vld [vmem:[%s4 + $0xe0] sm:$0xff]
      %v1042 = vld [vmem:[%s4 + $0xe8] sm:$0xff]
      %v1043 = vld [vmem:[%s4 + $0xf0] sm:$0xff]
      %v1044 = vld [vmem:[%s4 + $0xf8] sm:$0xff]
      %v1045 = vld [vmem:[%s4 + $0x100] sm:$0xff]
      %v1046 = vld [vmem:[%s4 + $0x108] sm:$0xff]
      %v1047 = vld [vmem:[%s4 + $0x110] sm:$0xff]
      %v1048 = vld [vmem:[%s4 + $0x118] sm:$0xff]
      %v1049 = vld [vmem:[%s4 + $0x120] sm:$0xff]
      %v1050 = vld [vmem:[%s4 + $0x128] sm:$0xff]
      %v1051 = vld [vmem:[%s4 + $0x130] sm:$0xff]
      %v1052 = vld [vmem:[%s4 + $0x138] sm:$0xff]
      %v1053 = vld [vmem:[%s4 + $0x140] sm:$0xff]
      %v1054 = vld [vmem:[%s4 + $0x148] sm:$0xff]
      %v1055 = vld [vmem:[%s4 + $0x150] sm:$0xff]
      %v1056 = vld [vmem:[%s4 + $0x158] sm:$0xff]
      %v1057 = vld [vmem:[%s4 + $0x160] sm:$0xff]
      %v1058 = vld [vmem:[%s4 + $0x168] sm:$0xff]
      %v1059 = vld [vmem:[%s4 + $0x170] sm:$0xff]
      %v1060 = vld [vmem:[%s4 + $0x178] sm:$0xff]
      %v1061 = vld [vmem:[%s4 + $0x180] sm:$0xff]
      %v1062 = vld [vmem:[%s4 + $0x188] sm:$0xff]
      %v1063 = vld [vmem:[%s4 + $0x190] sm:$0xff]
      %v1064 = vld [vmem:[%s4 + $0x198] sm:$0xff]
      %v1065 = vld [vmem:[%s4 + $0x1a0] sm:$0xff]
      %v1066 = vld [vmem:[%s4 + $0x1a8] sm:$0xff]
      %v1067 = vld [vmem:[%s4 + $0x1b0] sm:$0xff]
      %v1068 = vld [vmem:[%s4 + $0x1b8] sm:$0xff]
      %v1069 = vld [vmem:[%s4 + $0x1c0] sm:$0xff]
      %v1070 = vld [vmem:[%s4 + $0x1c8] sm:$0xff]
      %v1071 = vld [vmem:[%s4 + $0x1d0] sm:$0xff]
      %v1072 = vld [vmem:[%s4 + $0x1d8] sm:$0xff]
      %v1073 = vld [vmem:[%s4 + $0x1e0] sm:$0xff]
      %v1074 = vld [vmem:[%s4 + $0x1e8] sm:$0xff]
      %v1075 = vld [vmem:[%s4 + $0x1f0] sm:$0xff]
      %v1076 = vld [vmem:[%s4 + $0x1f8] sm:$0xff]
      %v1077 = vld [vmem:[%s4 + $0x200] sm:$0xff]
      %v1078 = vld [vmem:[%s4 + $0x208] sm:$0xff]
      %v1079 = vld [vmem:[%s4 + $0x210] sm:$0xff]
      %v1080 = vld [vmem:[%s4 + $0x218] sm:$0xff]
      %v1081 = vld [vmem:[%s4 + $0x220] sm:$0xff]
      %v1082 = vld [vmem:[%s4 + $0x228] sm:$0xff]
      %v1083 = vld [vmem:[%s4 + $0x230] sm:$0xff]
      %v1084 = vld [vmem:[%s4 + $0x238] sm:$0xff]
      %v1085 = vld [vmem:[%s4 + $0x240] sm:$0xff]
      %v1086 = vld [vmem:[%s4 + $0x248] sm:$0xff]
      %v1087 = vld [vmem:[%s4 + $0x250] sm:$0xff]
      %v1088 = vld [vmem:[%s4 + $0x258] sm:$0xff]
      %v1089 = vld [vmem:[%s4 + $0x260] sm:$0xff]
      %v1090 = vld [vmem:[%s4 + $0x268] sm:$0xff]
      %v1091 = vld [vmem:[%s4 + $0x270] sm:$0xff]
      %v1092 = vld [vmem:[%s4 + $0x278] sm:$0xff]
      %v1093 = vld [vmem:[%s4 + $0x280] sm:$0xff]
      %v1094 = vld [vmem:[%s4 + $0x288] sm:$0xff]
      %v1095 = vld [vmem:[%s4 + $0x290] sm:$0xff]
      %v1096 = vld [vmem:[%s4 + $0x298] sm:$0xff]
      %v1097 = vld [vmem:[%s4 + $0x2a0] sm:$0xff]
      %v1098 = vld [vmem:[%s4 + $0x2a8] sm:$0xff]
      %v1099 = vld [vmem:[%s4 + $0x2b0] sm:$0xff]
      %v1100 = vld [vmem:[%s4 + $0x2b8] sm:$0xff]
      %v1101 = vld [vmem:[%s4 + $0x2c0] sm:$0xff]
      %v1102 = vld [vmem:[%s4 + $0x2c8] sm:$0xff]
      %v1103 = vld [vmem:[%s4 + $0x2d0] sm:$0xff]
      %v1104 = vld [vmem:[%s4 + $0x2d8] sm:$0xff]
      %v1105 = vld [vmem:[%s4 + $0x2e0] sm:$0xff]
      %v1106 = vld [vmem:[%s4 + $0x2e8] sm:$0xff]
      %v1107 = vld [vmem:[%s4 + $0x2f0] sm:$0xff]
      %v1108 = vld [vmem:[%s4 + $0x2f8] sm:$0xff]
      %v1109 = vld [vmem:[%s4 + $0x300] sm:$0xff]
      %v1110 = vld [vmem:[%s4 + $0x308] sm:$0xff]
      %v1111 = vld [vmem:[%s4 + $0x310] sm:$0xff]
      %v1112 = vld [vmem:[%s4 + $0x318] sm:$0xff]
      %v1113 = vld [vmem:[%s4 + $0x320] sm:$0xff]
      %v1114 = vld [vmem:[%s4 + $0x328] sm:$0xff]
      %v1115 = vld [vmem:[%s4 + $0x330] sm:$0xff]
      %v1116 = vld [vmem:[%s4 + $0x338] sm:$0xff]
      %v1117 = vld [vmem:[%s4 + $0x340] sm:$0xff]
      %v1118 = vld [vmem:[%s4 + $0x348] sm:$0xff]
      %v1119 = vld [vmem:[%s4 + $0x350] sm:$0xff]
      %v1120 = vld [vmem:[%s4 + $0x358] sm:$0xff]
      %v1121 = vld [vmem:[%s4 + $0x360] sm:$0xff]
      %v1122 = vld [vmem:[%s4 + $0x368] sm:$0xff]
      %v1123 = vld [vmem:[%s4 + $0x370] sm:$0xff]
      %v1124 = vld [vmem:[%s4 + $0x378] sm:$0xff]
      %v1125 = vld [vmem:[%s4 + $0x380] sm:$0xff]
      %v1126 = vld [vmem:[%s4 + $0x388] sm:$0xff]
      %v1127 = vld [vmem:[%s4 + $0x390] sm:$0xff]
      %v1128 = vld [vmem:[%s4 + $0x398] sm:$0xff]
      %v1129 = vld [vmem:[%s4 + $0x3a0] sm:$0xff]
      %v1130 = vld [vmem:[%s4 + $0x3a8] sm:$0xff]
      %v1131 = vld [vmem:[%s4 + $0x3b0] sm:$0xff]
      %v1132 = vld [vmem:[%s4 + $0x3b8] sm:$0xff]
      %v1133 = vld [vmem:[%s5] sm:$0xff]
      %v1134 = vld [vmem:[%s5 + $0x8] sm:$0xff]
      %v1135 = vld [vmem:[%s5 + $0x10] sm:$0xff]
      %v1136 = vld [vmem:[%s5 + $0x18] sm:$0xff]
      %v1137 = vld [vmem:[%s5 + $0x20] sm:$0xff]
      %v1138 = vld [vmem:[%s5 + $0x28] sm:$0xff]
      %v1139 = vld [vmem:[%s5 + $0x30] sm:$0xff]
      %v1140 = vld [vmem:[%s5 + $0x38] sm:$0xff]
      %v1141 = vld [vmem:[%s5 + $0x40] sm:$0xff]
      %v1142 = vld [vmem:[%s5 + $0x48] sm:$0xff]
      %v1143 = vld [vmem:[%s5 + $0x50] sm:$0xff]
      %v1144 = vld [vmem:[%s5 + $0x58] sm:$0xff]
      %v1145 = vld [vmem:[%s5 + $0x60] sm:$0xff]
      %v1146 = vld [vmem:[%s5 + $0x68] sm:$0xff]
      %v1147 = vld [vmem:[%s5 + $0x70] sm:$0xff]
      %v1148 = vld [vmem:[%s5 + $0x78] sm:$0xff]
      %v1149 = vld [vmem:[%s5 + $0x80] sm:$0xff]
      %v1150 = vld [vmem:[%s5 + $0x88] sm:$0xff]
      %v1151 = vld [vmem:[%s5 + $0x90] sm:$0xff]
      %v1152 = vld [vmem:[%s5 + $0x98] sm:$0xff]
      %v1153 = vld [vmem:[%s5 + $0xa0] sm:$0xff]
      %v1154 = vld [vmem:[%s5 + $0xa8] sm:$0xff]
      %v1155 = vld [vmem:[%s5 + $0xb0] sm:$0xff]
      %v1156 = vld [vmem:[%s5 + $0xb8] sm:$0xff]
      %1158 = vset.pattern.permute.xlu0 0
      %1159 = vperm.xlu0 %1158, %v1133
      %v1160 = vpop.permute.xlu0 %1159
      %1163 = vset.pattern.permute.xlu0 0
      %1164 = vperm.xlu0 %1163, %v1134
      %v1165 = vpop.permute.xlu0 %1164
      %1168 = vset.pattern.permute.xlu0 0
      %1169 = vperm.xlu0 %1168, %v1135
      %v1170 = vpop.permute.xlu0 %1169
      %1173 = vset.pattern.permute.xlu0 0
      %1174 = vperm.xlu0 %1173, %v1136
      %v1175 = vpop.permute.xlu0 %1174
      %1178 = vset.pattern.permute.xlu0 0
      %1179 = vperm.xlu0 %1178, %v1137
      %v1180 = vpop.permute.xlu0 %1179
      %1183 = vset.pattern.permute.xlu0 0
      %1184 = vperm.xlu0 %1183, %v1138
      %v1185 = vpop.permute.xlu0 %1184
      %1188 = vset.pattern.permute.xlu0 0
      %1189 = vperm.xlu0 %1188, %v1139
      %v1190 = vpop.permute.xlu0 %1189
      %1193 = vset.pattern.permute.xlu0 0
      %1194 = vperm.xlu0 %1193, %v1140
      %v1195 = vpop.permute.xlu0 %1194
      %1198 = vset.pattern.permute.xlu0 0
      %1199 = vperm.xlu0 %1198, %v1141
      %v1200 = vpop.permute.xlu0 %1199
      %1203 = vset.pattern.permute.xlu0 0
      %1204 = vperm.xlu0 %1203, %v1142
      %v1205 = vpop.permute.xlu0 %1204
      %1208 = vset.pattern.permute.xlu0 0
      %1209 = vperm.xlu0 %1208, %v1143
      %v1210 = vpop.permute.xlu0 %1209
      %1213 = vset.pattern.permute.xlu0 0
      %1214 = vperm.xlu0 %1213, %v1144
      %v1215 = vpop.permute.xlu0 %1214
      %1218 = vset.pattern.permute.xlu0 0
      %1219 = vperm.xlu0 %1218, %v1145
      %v1220 = vpop.permute.xlu0 %1219
      %1223 = vset.pattern.permute.xlu0 0
      %1224 = vperm.xlu0 %1223, %v1146
      %v1225 = vpop.permute.xlu0 %1224
      %1228 = vset.pattern.permute.xlu0 0
      %1229 = vperm.xlu0 %1228, %v1147
      %v1230 = vpop.permute.xlu0 %1229
      %1233 = vset.pattern.permute.xlu0 0
      %1234 = vperm.xlu0 %1233, %v1148
      %v1235 = vpop.permute.xlu0 %1234
      %1238 = vset.pattern.permute.xlu0 0
      %1239 = vperm.xlu0 %1238, %v1149
      %v1240 = vpop.permute.xlu0 %1239
      %1243 = vset.pattern.permute.xlu0 0
      %1244 = vperm.xlu0 %1243, %v1150
      %v1245 = vpop.permute.xlu0 %1244
      %1248 = vset.pattern.permute.xlu0 0
      %1249 = vperm.xlu0 %1248, %v1151
      %v1250 = vpop.permute.xlu0 %1249
      %1253 = vset.pattern.permute.xlu0 0
      %1254 = vperm.xlu0 %1253, %v1152
      %v1255 = vpop.permute.xlu0 %1254
      %1258 = vset.pattern.permute.xlu0 0
      %1259 = vperm.xlu0 %1258, %v1153
      %v1260 = vpop.permute.xlu0 %1259
      %1263 = vset.pattern.permute.xlu0 0
      %1264 = vperm.xlu0 %1263, %v1154
      %v1265 = vpop.permute.xlu0 %1264
      %1268 = vset.pattern.permute.xlu0 0
      %1269 = vperm.xlu0 %1268, %v1155
      %v1270 = vpop.permute.xlu0 %1269
      %1273 = vset.pattern.permute.xlu0 0
      %1274 = vperm.xlu0 %1273, %v1156
      %v1275 = vpop.permute.xlu0 %1274
      %v1278 = vsel %vm755, %v1017, 0
      %v1281 = vsel %vm755, %v1022, 0
      %v1284 = vsel %vm755, %v1027, 0
      %v1287 = vsel %vm755, %v1032, 0
      %v1290 = vsel %vm755, %v1037, 0
      %v1293 = vsel %vm755, %v1042, 0
      %v1296 = vsel %vm755, %v1047, 0
      %v1299 = vsel %vm755, %v1052, 0
      %v1302 = vsel %vm755, %v1057, 0
      %v1305 = vsel %vm755, %v1062, 0
      %v1308 = vsel %vm755, %v1067, 0
      %v1311 = vsel %vm755, %v1072, 0
      %v1314 = vsel %vm755, %v1077, 0
      %v1317 = vsel %vm755, %v1082, 0
      %v1320 = vsel %vm755, %v1087, 0
      %v1323 = vsel %vm755, %v1092, 0
      %v1326 = vsel %vm755, %v1097, 0
      %v1329 = vsel %vm755, %v1102, 0
      %v1332 = vsel %vm755, %v1107, 0
      %v1335 = vsel %vm755, %v1112, 0
      %v1338 = vsel %vm755, %v1117, 0
      %v1341 = vsel %vm755, %v1122, 0
      %v1344 = vsel %vm755, %v1127, 0
      %v1347 = vsel %vm755, %v1132, 0
      %1349 = vmatprep.subr.mxu0 0.0
      %1350 = vmatpush1.msra.mxu0 %v530
      %1351 = vmatprep.subr.mxu0 0.0
      %1352 = vmatpush1.msra.mxu0 %v529
      %1353 = vmatprep.subr.mxu0 0.0
      %1354 = vmatpush1.msra.mxu0 %v528
      %1355 = vmatprep.subr.mxu0 0.0
      %1356 = vmatpush1.msra.mxu0 %v527
      %1357 = vmatprep.subr.mxu0 0.0
      %1358 = vmatpush1.msra.mxu0 %v526
      %1359 = vmatprep.subr.mxu0 0.0
      %1360 = vmatpush1.msra.mxu0 %v525
      %1361 = vmatprep.subr.mxu0 0.0
      %1362 = vmatpush1.msra.mxu0 %v524
      %1363 = vmatprep.subr.mxu0 0.0
      %1364 = vmatpush1.msra.mxu0 %v523
      %1365 = vmatprep.subr.mxu0 0.0
      %1366 = vmatpush1.msra.mxu0 %v522
      %1367 = vmatprep.subr.mxu0 0.0
      %1368 = vmatpush1.msra.mxu0 %v521
      %1369 = vmatprep.subr.mxu0 0.0
      %1370 = vmatpush1.msra.mxu0 %v520
      %1371 = vmatprep.subr.mxu0 0.0
      %1372 = vmatpush1.msra.mxu0 %v519
      %1373 = vmatprep.subr.mxu0 0.0
      %1374 = vmatpush1.msra.mxu0 %v518
      %1375 = vmatprep.subr.mxu0 0.0
      %1376 = vmatpush1.msra.mxu0 %v517
      %1377 = vmatprep.subr.mxu0 0.0
      %1378 = vmatpush1.msra.mxu0 %v516
      %1379 = vmatprep.subr.mxu0 0.0
      %1380 = vmatpush1.msra.mxu0 %v515
      %1381 = vmatprep.subr.mxu0 0.0
      %1382 = vmatpush2.msra.mxu0 %v546
      %1383 = vmatprep.subr.mxu0 0.0
      %1384 = vmatpush2.msra.mxu0 %v545
      %1385 = vmatprep.subr.mxu0 0.0
      %1386 = vmatpush2.msra.mxu0 %v544
      %1387 = vmatprep.subr.mxu0 0.0
      %1388 = vmatpush2.msra.mxu0 %v543
      %1389 = vmatprep.subr.mxu0 0.0
      %1390 = vmatpush2.msra.mxu0 %v542
      %1391 = vmatprep.subr.mxu0 0.0
      %1392 = vmatpush2.msra.mxu0 %v541
      %1393 = vmatprep.subr.mxu0 0.0
      %1394 = vmatpush2.msra.mxu0 %v540
      %1395 = vmatprep.subr.mxu0 0.0
      %1396 = vmatpush2.msra.mxu0 %v539
      %1397 = vmatprep.subr.mxu0 0.0
      %1398 = vmatpush2.msra.mxu0 %v538
      %1399 = vmatprep.subr.mxu0 0.0
      %1400 = vmatpush2.msra.mxu0 %v537
      %1401 = vmatprep.subr.mxu0 0.0
      %1402 = vmatpush2.msra.mxu0 %v536
      %1403 = vmatprep.subr.mxu0 0.0
      %1404 = vmatpush2.msra.mxu0 %v535
      %1405 = vmatprep.subr.mxu0 0.0
      %1406 = vmatpush2.msra.mxu0 %v534
      %1407 = vmatprep.subr.mxu0 0.0
      %1408 = vmatpush2.msra.mxu0 %v533
      %1409 = vmatprep.subr.mxu0 0.0
      %1410 = vmatpush2.msra.mxu0 %v532
      %1411 = vmatprep.subr.mxu0 0.0
      %1412 = vmatpush2.msra.mxu0 %v531
      %1413 = vmatprep.mubr.f32.mxu0 %v1014
      %1414 = vmatmul.mubr.f32.gmra.mxu0 %v1013
      %v1415 = vpop.f32.mrf.mxu0
      %v1416 = vadd.f32 %v1160, %v1415
      %v1417 = vpop.f32.mrf.mxu0
      %1418 = vmatprep.mubr.f32.mxu0 %v1019
      %1419 = vmatmul.mubr.f32.gmra.mxu0 %v1018
      %v1420 = vpop.f32.mrf.mxu0
      %v1421 = vadd.f32 %v1165, %v1420
      %v1422 = vpop.f32.mrf.mxu0
      %1423 = vmatprep.mubr.f32.mxu0 %v1024
      %1424 = vmatmul.mubr.f32.gmra.mxu0 %v1023
      %v1425 = vpop.f32.mrf.mxu0
      %v1426 = vadd.f32 %v1170, %v1425
      %v1427 = vpop.f32.mrf.mxu0
      %1428 = vmatprep.mubr.f32.mxu0 %v1029
      %1429 = vmatmul.mubr.f32.gmra.mxu0 %v1028
      %v1430 = vpop.f32.mrf.mxu0
      %v1431 = vadd.f32 %v1175, %v1430
      %v1432 = vpop.f32.mrf.mxu0
      %1433 = vmatprep.mubr.f32.mxu0 %v1034
      %1434 = vmatmul.mubr.f32.gmra.mxu0 %v1033
      %v1435 = vpop.f32.mrf.mxu0
      %v1436 = vadd.f32 %v1180, %v1435
      %v1437 = vpop.f32.mrf.mxu0
      %1438 = vmatprep.mubr.f32.mxu0 %v1039
      %1439 = vmatmul.mubr.f32.gmra.mxu0 %v1038
      %v1440 = vpop.f32.mrf.mxu0
      %v1441 = vadd.f32 %v1185, %v1440
      %v1442 = vpop.f32.mrf.mxu0
      %1443 = vmatprep.mubr.f32.mxu0 %v1044
      %1444 = vmatmul.mubr.f32.gmra.mxu0 %v1043
      %v1445 = vpop.f32.mrf.mxu0
      %v1446 = vadd.f32 %v1190, %v1445
      %v1447 = vpop.f32.mrf.mxu0
      %1448 = vmatprep.mubr.f32.mxu0 %v1049
      %1449 = vmatmul.mubr.f32.gmra.mxu0 %v1048
      %v1450 = vpop.f32.mrf.mxu0
      %v1451 = vadd.f32 %v1195, %v1450
      %v1452 = vpop.f32.mrf.mxu0
      %1453 = vmatprep.mubr.f32.mxu0 %v1054
      %1454 = vmatmul.mubr.f32.gmra.mxu0 %v1053
      %v1455 = vpop.f32.mrf.mxu0
      %v1456 = vadd.f32 %v1200, %v1455
      %v1457 = vpop.f32.mrf.mxu0
      %1458 = vmatprep.mubr.f32.mxu0 %v1059
      %1459 = vmatmul.mubr.f32.gmra.mxu0 %v1058
      %v1460 = vpop.f32.mrf.mxu0
      %v1461 = vadd.f32 %v1205, %v1460
      %v1462 = vpop.f32.mrf.mxu0
      %1463 = vmatprep.mubr.f32.mxu0 %v1064
      %1464 = vmatmul.mubr.f32.gmra.mxu0 %v1063
      %v1465 = vpop.f32.mrf.mxu0
      %v1466 = vadd.f32 %v1210, %v1465
      %v1467 = vpop.f32.mrf.mxu0
      %1468 = vmatprep.mubr.f32.mxu0 %v1069
      %1469 = vmatmul.mubr.f32.gmra.mxu0 %v1068
      %v1470 = vpop.f32.mrf.mxu0
      %v1471 = vadd.f32 %v1215, %v1470
      %v1472 = vpop.f32.mrf.mxu0
      %1473 = vmatprep.mubr.f32.mxu0 %v1074
      %1474 = vmatmul.mubr.f32.gmra.mxu0 %v1073
      %v1475 = vpop.f32.mrf.mxu0
      %v1476 = vadd.f32 %v1220, %v1475
      %v1477 = vpop.f32.mrf.mxu0
      %1478 = vmatprep.mubr.f32.mxu0 %v1079
      %1479 = vmatmul.mubr.f32.gmra.mxu0 %v1078
      %v1480 = vpop.f32.mrf.mxu0
      %v1481 = vadd.f32 %v1225, %v1480
      %v1482 = vpop.f32.mrf.mxu0
      %1483 = vmatprep.mubr.f32.mxu0 %v1084
      %1484 = vmatmul.mubr.f32.gmra.mxu0 %v1083
      %v1485 = vpop.f32.mrf.mxu0
      %v1486 = vadd.f32 %v1230, %v1485
      %v1487 = vpop.f32.mrf.mxu0
      %1488 = vmatprep.mubr.f32.mxu0 %v1089
      %1489 = vmatmul.mubr.f32.gmra.mxu0 %v1088
      %v1490 = vpop.f32.mrf.mxu0
      %v1491 = vadd.f32 %v1235, %v1490
      %v1492 = vpop.f32.mrf.mxu0
      %1493 = vmatprep.mubr.f32.mxu0 %v1094
      %1494 = vmatmul.mubr.f32.gmra.mxu0 %v1093
      %v1495 = vpop.f32.mrf.mxu0
      %v1496 = vadd.f32 %v1240, %v1495
      %v1497 = vpop.f32.mrf.mxu0
      %1498 = vmatprep.mubr.f32.mxu0 %v1099
      %1499 = vmatmul.mubr.f32.gmra.mxu0 %v1098
      %v1500 = vpop.f32.mrf.mxu0
      %v1501 = vadd.f32 %v1245, %v1500
      %v1502 = vpop.f32.mrf.mxu0
      %1503 = vmatprep.mubr.f32.mxu0 %v1104
      %1504 = vmatmul.mubr.f32.gmra.mxu0 %v1103
      %v1505 = vpop.f32.mrf.mxu0
      %v1506 = vadd.f32 %v1250, %v1505
      %v1507 = vpop.f32.mrf.mxu0
      %1508 = vmatprep.mubr.f32.mxu0 %v1109
      %1509 = vmatmul.mubr.f32.gmra.mxu0 %v1108
      %v1510 = vpop.f32.mrf.mxu0
      %v1511 = vadd.f32 %v1255, %v1510
      %v1512 = vpop.f32.mrf.mxu0
      %1513 = vmatprep.mubr.f32.mxu0 %v1114
      %1514 = vmatmul.mubr.f32.gmra.mxu0 %v1113
      %v1515 = vpop.f32.mrf.mxu0
      %v1516 = vadd.f32 %v1260, %v1515
      %v1517 = vpop.f32.mrf.mxu0
      %1518 = vmatprep.mubr.f32.mxu0 %v1119
      %1519 = vmatmul.mubr.f32.gmra.mxu0 %v1118
      %v1520 = vpop.f32.mrf.mxu0
      %v1521 = vadd.f32 %v1265, %v1520
      %v1522 = vpop.f32.mrf.mxu0
      %1523 = vmatprep.mubr.f32.mxu0 %v1124
      %1524 = vmatmul.mubr.f32.gmra.mxu0 %v1123
      %v1525 = vpop.f32.mrf.mxu0
      %v1526 = vadd.f32 %v1270, %v1525
      %v1527 = vpop.f32.mrf.mxu0
      %1528 = vmatprep.mubr.f32.mxu0 %v1129
      %1529 = vmatmul.mubr.f32.gmra.mxu0 %v1128
      %v1530 = vpop.f32.mrf.mxu0
      %v1531 = vadd.f32 %v1275, %v1530
      %v1532 = vpop.f32.mrf.mxu0
      %1533 = vdwg.mxu0
      %1534 = vmatprep.subr.mxu0 0.0
      %1535 = vmatpush1.msra.mxu0 %v562
      %1536 = vmatprep.subr.mxu0 0.0
      %1537 = vmatpush1.msra.mxu0 %v561
      %1538 = vmatprep.subr.mxu0 0.0
      %1539 = vmatpush1.msra.mxu0 %v560
      %1540 = vmatprep.subr.mxu0 0.0
      %1541 = vmatpush1.msra.mxu0 %v559
      %1542 = vmatprep.subr.mxu0 0.0
      %1543 = vmatpush1.msra.mxu0 %v558
      %1544 = vmatprep.subr.mxu0 0.0
      %1545 = vmatpush1.msra.mxu0 %v557
      %1546 = vmatprep.subr.mxu0 0.0
      %1547 = vmatpush1.msra.mxu0 %v556
      %1548 = vmatprep.subr.mxu0 0.0
      %1549 = vmatpush1.msra.mxu0 %v555
      %1550 = vmatprep.subr.mxu0 0.0
      %1551 = vmatpush1.msra.mxu0 %v554
      %1552 = vmatprep.subr.mxu0 0.0
      %1553 = vmatpush1.msra.mxu0 %v553
      %1554 = vmatprep.subr.mxu0 0.0
      %1555 = vmatpush1.msra.mxu0 %v552
      %1556 = vmatprep.subr.mxu0 0.0
      %1557 = vmatpush1.msra.mxu0 %v551
      %1558 = vmatprep.subr.mxu0 0.0
      %1559 = vmatpush1.msra.mxu0 %v550
      %1560 = vmatprep.subr.mxu0 0.0
      %1561 = vmatpush1.msra.mxu0 %v549
      %1562 = vmatprep.subr.mxu0 0.0
      %1563 = vmatpush1.msra.mxu0 %v548
      %1564 = vmatprep.subr.mxu0 0.0
      %1565 = vmatpush1.msra.mxu0 %v547
      %1566 = vmatprep.subr.mxu0 0.0
      %1567 = vmatpush2.msra.mxu0 %v578
      %1568 = vmatprep.subr.mxu0 0.0
      %1569 = vmatpush2.msra.mxu0 %v577
      %1570 = vmatprep.subr.mxu0 0.0
      %1571 = vmatpush2.msra.mxu0 %v576
      %1572 = vmatprep.subr.mxu0 0.0
      %1573 = vmatpush2.msra.mxu0 %v575
      %1574 = vmatprep.subr.mxu0 0.0
      %1575 = vmatpush2.msra.mxu0 %v574
      %1576 = vmatprep.subr.mxu0 0.0
      %1577 = vmatpush2.msra.mxu0 %v573
      %1578 = vmatprep.subr.mxu0 0.0
      %1579 = vmatpush2.msra.mxu0 %v572
      %1580 = vmatprep.subr.mxu0 0.0
      %1581 = vmatpush2.msra.mxu0 %v571
      %1582 = vmatprep.subr.mxu0 0.0
      %1583 = vmatpush2.msra.mxu0 %v570
      %1584 = vmatprep.subr.mxu0 0.0
      %1585 = vmatpush2.msra.mxu0 %v569
      %1586 = vmatprep.subr.mxu0 0.0
      %1587 = vmatpush2.msra.mxu0 %v568
      %1588 = vmatprep.subr.mxu0 0.0
      %1589 = vmatpush2.msra.mxu0 %v567
      %1590 = vmatprep.subr.mxu0 0.0
      %1591 = vmatpush2.msra.mxu0 %v566
      %1592 = vmatprep.subr.mxu0 0.0
      %1593 = vmatpush2.msra.mxu0 %v565
      %1594 = vmatprep.subr.mxu0 0.0
      %1595 = vmatpush2.msra.mxu0 %v564
      %1596 = vmatprep.subr.mxu0 0.0
      %1597 = vmatpush2.msra.mxu0 %v563
      %1598 = vmatprep.mubr.f32.mxu0 %v1016
      %1599 = vmatmul.mubr.f32.gmra.mxu0 %v1015
      %v1600 = vpop.f32.mrf.mxu0
      %v1601 = vadd.f32 %v1416, %v1600
      %v1602 = vpop.f32.mrf.mxu0
      %1603 = vmatprep.mubr.f32.mxu0 %v1021
      %1604 = vmatmul.mubr.f32.gmra.mxu0 %v1020
      %v1605 = vpop.f32.mrf.mxu0
      %v1606 = vadd.f32 %v1421, %v1605
      %v1607 = vpop.f32.mrf.mxu0
      %1608 = vmatprep.mubr.f32.mxu0 %v1026
      %1609 = vmatmul.mubr.f32.gmra.mxu0 %v1025
      %v1610 = vpop.f32.mrf.mxu0
      %v1611 = vadd.f32 %v1426, %v1610
      %v1612 = vpop.f32.mrf.mxu0
      %1613 = vmatprep.mubr.f32.mxu0 %v1031
      %1614 = vmatmul.mubr.f32.gmra.mxu0 %v1030
      %v1615 = vpop.f32.mrf.mxu0
      %v1616 = vadd.f32 %v1431, %v1615
      %v1617 = vpop.f32.mrf.mxu0
      %1618 = vmatprep.mubr.f32.mxu0 %v1036
      %1619 = vmatmul.mubr.f32.gmra.mxu0 %v1035
      %v1620 = vpop.f32.mrf.mxu0
      %v1621 = vadd.f32 %v1436, %v1620
      %v1622 = vpop.f32.mrf.mxu0
      %1623 = vmatprep.mubr.f32.mxu0 %v1041
      %1624 = vmatmul.mubr.f32.gmra.mxu0 %v1040
      %v1625 = vpop.f32.mrf.mxu0
      %v1626 = vadd.f32 %v1441, %v1625
      %v1627 = vpop.f32.mrf.mxu0
      %1628 = vmatprep.mubr.f32.mxu0 %v1046
      %1629 = vmatmul.mubr.f32.gmra.mxu0 %v1045
      %v1630 = vpop.f32.mrf.mxu0
      %v1631 = vadd.f32 %v1446, %v1630
      %v1632 = vpop.f32.mrf.mxu0
      %1633 = vmatprep.mubr.f32.mxu0 %v1051
      %1634 = vmatmul.mubr.f32.gmra.mxu0 %v1050
      %v1635 = vpop.f32.mrf.mxu0
      %v1636 = vadd.f32 %v1451, %v1635
      %v1637 = vpop.f32.mrf.mxu0
      %1638 = vmatprep.mubr.f32.mxu0 %v1056
      %1639 = vmatmul.mubr.f32.gmra.mxu0 %v1055
      %v1640 = vpop.f32.mrf.mxu0
      %v1641 = vadd.f32 %v1456, %v1640
      %v1642 = vpop.f32.mrf.mxu0
      %1643 = vmatprep.mubr.f32.mxu0 %v1061
      %1644 = vmatmul.mubr.f32.gmra.mxu0 %v1060
      %v1645 = vpop.f32.mrf.mxu0
      %v1646 = vadd.f32 %v1461, %v1645
      %v1647 = vpop.f32.mrf.mxu0
      %1648 = vmatprep.mubr.f32.mxu0 %v1066
      %1649 = vmatmul.mubr.f32.gmra.mxu0 %v1065
      %v1650 = vpop.f32.mrf.mxu0
      %v1651 = vadd.f32 %v1466, %v1650
      %v1652 = vpop.f32.mrf.mxu0
      %1653 = vmatprep.mubr.f32.mxu0 %v1071
      %1654 = vmatmul.mubr.f32.gmra.mxu0 %v1070
      %v1655 = vpop.f32.mrf.mxu0
      %v1656 = vadd.f32 %v1471, %v1655
      %v1657 = vpop.f32.mrf.mxu0
      %1658 = vmatprep.mubr.f32.mxu0 %v1076
      %1659 = vmatmul.mubr.f32.gmra.mxu0 %v1075
      %v1660 = vpop.f32.mrf.mxu0
      %v1661 = vadd.f32 %v1476, %v1660
      %v1662 = vpop.f32.mrf.mxu0
      %1663 = vmatprep.mubr.f32.mxu0 %v1081
      %1664 = vmatmul.mubr.f32.gmra.mxu0 %v1080
      %v1665 = vpop.f32.mrf.mxu0
      %v1666 = vadd.f32 %v1481, %v1665
      %v1667 = vpop.f32.mrf.mxu0
      %1668 = vmatprep.mubr.f32.mxu0 %v1086
      %1669 = vmatmul.mubr.f32.gmra.mxu0 %v1085
      %v1670 = vpop.f32.mrf.mxu0
      %v1671 = vadd.f32 %v1486, %v1670
      %v1672 = vpop.f32.mrf.mxu0
      %1673 = vmatprep.mubr.f32.mxu0 %v1091
      %1674 = vmatmul.mubr.f32.gmra.mxu0 %v1090
      %v1675 = vpop.f32.mrf.mxu0
      %v1676 = vadd.f32 %v1491, %v1675
      %v1677 = vpop.f32.mrf.mxu0
      %1678 = vmatprep.mubr.f32.mxu0 %v1096
      %1679 = vmatmul.mubr.f32.gmra.mxu0 %v1095
      %v1680 = vpop.f32.mrf.mxu0
      %v1681 = vadd.f32 %v1496, %v1680
      %v1682 = vpop.f32.mrf.mxu0
      %1683 = vmatprep.mubr.f32.mxu0 %v1101
      %1684 = vmatmul.mubr.f32.gmra.mxu0 %v1100
      %v1685 = vpop.f32.mrf.mxu0
      %v1686 = vadd.f32 %v1501, %v1685
      %v1687 = vpop.f32.mrf.mxu0
      %1688 = vmatprep.mubr.f32.mxu0 %v1106
      %1689 = vmatmul.mubr.f32.gmra.mxu0 %v1105
      %v1690 = vpop.f32.mrf.mxu0
      %v1691 = vadd.f32 %v1506, %v1690
      %v1692 = vpop.f32.mrf.mxu0
      %1693 = vmatprep.mubr.f32.mxu0 %v1111
      %1694 = vmatmul.mubr.f32.gmra.mxu0 %v1110
      %v1695 = vpop.f32.mrf.mxu0
      %v1696 = vadd.f32 %v1511, %v1695
      %v1697 = vpop.f32.mrf.mxu0
      %1698 = vmatprep.mubr.f32.mxu0 %v1116
      %1699 = vmatmul.mubr.f32.gmra.mxu0 %v1115
      %v1700 = vpop.f32.mrf.mxu0
      %v1701 = vadd.f32 %v1516, %v1700
      %v1702 = vpop.f32.mrf.mxu0
      %1703 = vmatprep.mubr.f32.mxu0 %v1121
      %1704 = vmatmul.mubr.f32.gmra.mxu0 %v1120
      %v1705 = vpop.f32.mrf.mxu0
      %v1706 = vadd.f32 %v1521, %v1705
      %v1707 = vpop.f32.mrf.mxu0
      %1708 = vmatprep.mubr.f32.mxu0 %v1126
      %1709 = vmatmul.mubr.f32.gmra.mxu0 %v1125
      %v1710 = vpop.f32.mrf.mxu0
      %v1711 = vadd.f32 %v1526, %v1710
      %v1712 = vpop.f32.mrf.mxu0
      %1713 = vmatprep.mubr.f32.mxu0 %v1131
      %1714 = vmatmul.mubr.f32.gmra.mxu0 %v1130
      %v1715 = vpop.f32.mrf.mxu0
      %v1716 = vadd.f32 %v1531, %v1715
      %v1717 = vpop.f32.mrf.mxu0
      %1718 = vdwg.mxu0
      %1719 = vmatprep.subr.mxu0 0.0
      %1720 = vmatpush1.msra.mxu0 0.0
      %1721 = vmatprep.subr.mxu0 0.0
      %1722 = vmatpush1.msra.mxu0 0.0
      %1723 = vmatprep.subr.mxu0 0.0
      %1724 = vmatpush1.msra.mxu0 0.0
      %1725 = vmatprep.subr.mxu0 0.0
      %1726 = vmatpush1.msra.mxu0 0.0
      %1727 = vmatprep.subr.mxu0 0.0
      %1728 = vmatpush1.msra.mxu0 0.0
      %1729 = vmatprep.subr.mxu0 0.0
      %1730 = vmatpush1.msra.mxu0 0.0
      %1731 = vmatprep.subr.mxu0 0.0
      %1732 = vmatpush1.msra.mxu0 0.0
      %1733 = vmatprep.subr.mxu0 0.0
      %1734 = vmatpush1.msra.mxu0 0.0
      %1735 = vmatprep.subr.mxu0 0.0
      %1736 = vmatpush1.msra.mxu0 %v586
      %1737 = vmatprep.subr.mxu0 0.0
      %1738 = vmatpush1.msra.mxu0 %v585
      %1739 = vmatprep.subr.mxu0 0.0
      %1740 = vmatpush1.msra.mxu0 %v584
      %1741 = vmatprep.subr.mxu0 0.0
      %1742 = vmatpush1.msra.mxu0 %v583
      %1743 = vmatprep.subr.mxu0 0.0
      %1744 = vmatpush1.msra.mxu0 %v582
      %1745 = vmatprep.subr.mxu0 0.0
      %1746 = vmatpush1.msra.mxu0 %v581
      %1747 = vmatprep.subr.mxu0 0.0
      %1748 = vmatpush1.msra.mxu0 %v580
      %1749 = vmatprep.subr.mxu0 0.0
      %1750 = vmatpush1.msra.mxu0 %v579
      %1751 = vmatprep.subr.mxu0 0.0
      %1752 = vmatpush2.msra.mxu0 0.0
      %1753 = vmatprep.subr.mxu0 0.0
      %1754 = vmatpush2.msra.mxu0 0.0
      %1755 = vmatprep.subr.mxu0 0.0
      %1756 = vmatpush2.msra.mxu0 0.0
      %1757 = vmatprep.subr.mxu0 0.0
      %1758 = vmatpush2.msra.mxu0 0.0
      %1759 = vmatprep.subr.mxu0 0.0
      %1760 = vmatpush2.msra.mxu0 0.0
      %1761 = vmatprep.subr.mxu0 0.0
      %1762 = vmatpush2.msra.mxu0 0.0
      %1763 = vmatprep.subr.mxu0 0.0
      %1764 = vmatpush2.msra.mxu0 0.0
      %1765 = vmatprep.subr.mxu0 0.0
      %1766 = vmatpush2.msra.mxu0 0.0
      %1767 = vmatprep.subr.mxu0 0.0
      %1768 = vmatpush2.msra.mxu0 0.0
      %1769 = vmatprep.subr.mxu0 0.0
      %1770 = vmatpush2.msra.mxu0 0.0
      %1771 = vmatprep.subr.mxu0 0.0
      %1772 = vmatpush2.msra.mxu0 0.0
      %1773 = vmatprep.subr.mxu0 0.0
      %1774 = vmatpush2.msra.mxu0 0.0
      %1775 = vmatprep.subr.mxu0 0.0
      %1776 = vmatpush2.msra.mxu0 0.0
      %1777 = vmatprep.subr.mxu0 0.0
      %1778 = vmatpush2.msra.mxu0 0.0
      %1779 = vmatprep.subr.mxu0 0.0
      %1780 = vmatpush2.msra.mxu0 0.0
      %1781 = vmatprep.subr.mxu0 0.0
      %1782 = vmatpush2.msra.mxu0 0.0
      %1783 = vmatprep.mubr.f32.mxu0 0.0
      %1784 = vmatmul.mubr.f32.gmra.mxu0 %v1278
      %v1785 = vpop.f32.mrf.mxu0
      %v1786 = vadd.f32 %v1601, %v1785
      %v1787 = vpop.f32.mrf.mxu0
      %1788 = vmatprep.mubr.f32.mxu0 0.0
      %1789 = vmatmul.mubr.f32.gmra.mxu0 %v1281
      %v1790 = vpop.f32.mrf.mxu0
      %v1791 = vadd.f32 %v1606, %v1790
      %v1792 = vpop.f32.mrf.mxu0
      %1793 = vmatprep.mubr.f32.mxu0 0.0
      %1794 = vmatmul.mubr.f32.gmra.mxu0 %v1284
      %v1795 = vpop.f32.mrf.mxu0
      %v1796 = vadd.f32 %v1611, %v1795
      %v1797 = vpop.f32.mrf.mxu0
      %1798 = vmatprep.mubr.f32.mxu0 0.0
      %1799 = vmatmul.mubr.f32.gmra.mxu0 %v1287
      %v1800 = vpop.f32.mrf.mxu0
      %v1801 = vadd.f32 %v1616, %v1800
      %v1802 = vpop.f32.mrf.mxu0
      %1803 = vmatprep.mubr.f32.mxu0 0.0
      %1804 = vmatmul.mubr.f32.gmra.mxu0 %v1290
      %v1805 = vpop.f32.mrf.mxu0
      %v1806 = vadd.f32 %v1621, %v1805
      %v1807 = vpop.f32.mrf.mxu0
      %1808 = vmatprep.mubr.f32.mxu0 0.0
      %1809 = vmatmul.mubr.f32.gmra.mxu0 %v1293
      %v1810 = vpop.f32.mrf.mxu0
      %v1811 = vadd.f32 %v1626, %v1810
      %v1812 = vpop.f32.mrf.mxu0
      %1813 = vmatprep.mubr.f32.mxu0 0.0
      %1814 = vmatmul.mubr.f32.gmra.mxu0 %v1296
      %v1815 = vpop.f32.mrf.mxu0
      %v1816 = vadd.f32 %v1631, %v1815
      %v1817 = vpop.f32.mrf.mxu0
      %1818 = vmatprep.mubr.f32.mxu0 0.0
      %1819 = vmatmul.mubr.f32.gmra.mxu0 %v1299
      %v1820 = vpop.f32.mrf.mxu0
      %v1821 = vadd.f32 %v1636, %v1820
      %v1822 = vpop.f32.mrf.mxu0
      %1823 = vmatprep.mubr.f32.mxu0 0.0
      %1824 = vmatmul.mubr.f32.gmra.mxu0 %v1302
      %v1825 = vpop.f32.mrf.mxu0
      %v1826 = vadd.f32 %v1641, %v1825
      %v1827 = vpop.f32.mrf.mxu0
      %1828 = vmatprep.mubr.f32.mxu0 0.0
      %1829 = vmatmul.mubr.f32.gmra.mxu0 %v1305
      %v1830 = vpop.f32.mrf.mxu0
      %v1831 = vadd.f32 %v1646, %v1830
      %v1832 = vpop.f32.mrf.mxu0
      %1833 = vmatprep.mubr.f32.mxu0 0.0
      %1834 = vmatmul.mubr.f32.gmra.mxu0 %v1308
      %v1835 = vpop.f32.mrf.mxu0
      %v1836 = vadd.f32 %v1651, %v1835
      %v1837 = vpop.f32.mrf.mxu0
      %1838 = vmatprep.mubr.f32.mxu0 0.0
      %1839 = vmatmul.mubr.f32.gmra.mxu0 %v1311
      %v1840 = vpop.f32.mrf.mxu0
      %v1841 = vadd.f32 %v1656, %v1840
      %v1842 = vpop.f32.mrf.mxu0
      %1843 = vmatprep.mubr.f32.mxu0 0.0
      %1844 = vmatmul.mubr.f32.gmra.mxu0 %v1314
      %v1845 = vpop.f32.mrf.mxu0
      %v1846 = vadd.f32 %v1661, %v1845
      %v1847 = vpop.f32.mrf.mxu0
      %1848 = vmatprep.mubr.f32.mxu0 0.0
      %1849 = vmatmul.mubr.f32.gmra.mxu0 %v1317
      %v1850 = vpop.f32.mrf.mxu0
      %v1851 = vadd.f32 %v1666, %v1850
      %v1852 = vpop.f32.mrf.mxu0
      %1853 = vmatprep.mubr.f32.mxu0 0.0
      %1854 = vmatmul.mubr.f32.gmra.mxu0 %v1320
      %v1855 = vpop.f32.mrf.mxu0
      %v1856 = vadd.f32 %v1671, %v1855
      %v1857 = vpop.f32.mrf.mxu0
      %1858 = vmatprep.mubr.f32.mxu0 0.0
      %1859 = vmatmul.mubr.f32.gmra.mxu0 %v1323
      %v1860 = vpop.f32.mrf.mxu0
      %v1861 = vadd.f32 %v1676, %v1860
      %v1862 = vpop.f32.mrf.mxu0
      %1863 = vmatprep.mubr.f32.mxu0 0.0
      %1864 = vmatmul.mubr.f32.gmra.mxu0 %v1326
      %v1865 = vpop.f32.mrf.mxu0
      %v1866 = vadd.f32 %v1681, %v1865
      %v1867 = vpop.f32.mrf.mxu0
      %1868 = vmatprep.mubr.f32.mxu0 0.0
      %1869 = vmatmul.mubr.f32.gmra.mxu0 %v1329
      %v1870 = vpop.f32.mrf.mxu0
      %v1871 = vadd.f32 %v1686, %v1870
      %v1872 = vpop.f32.mrf.mxu0
      %1873 = vmatprep.mubr.f32.mxu0 0.0
      %1874 = vmatmul.mubr.f32.gmra.mxu0 %v1332
      %v1875 = vpop.f32.mrf.mxu0
      %v1876 = vadd.f32 %v1691, %v1875
      %v1877 = vpop.f32.mrf.mxu0
      %1878 = vmatprep.mubr.f32.mxu0 0.0
      %1879 = vmatmul.mubr.f32.gmra.mxu0 %v1335
      %v1880 = vpop.f32.mrf.mxu0
      %v1881 = vadd.f32 %v1696, %v1880
      %v1882 = vpop.f32.mrf.mxu0
      %1883 = vmatprep.mubr.f32.mxu0 0.0
      %1884 = vmatmul.mubr.f32.gmra.mxu0 %v1338
      %v1885 = vpop.f32.mrf.mxu0
      %v1886 = vadd.f32 %v1701, %v1885
      %v1887 = vpop.f32.mrf.mxu0
      %1888 = vmatprep.mubr.f32.mxu0 0.0
      %1889 = vmatmul.mubr.f32.gmra.mxu0 %v1341
      %v1890 = vpop.f32.mrf.mxu0
      %v1891 = vadd.f32 %v1706, %v1890
      %v1892 = vpop.f32.mrf.mxu0
      %1893 = vmatprep.mubr.f32.mxu0 0.0
      %1894 = vmatmul.mubr.f32.gmra.mxu0 %v1344
      %v1895 = vpop.f32.mrf.mxu0
      %v1896 = vadd.f32 %v1711, %v1895
      %v1897 = vpop.f32.mrf.mxu0
      %1898 = vmatprep.mubr.f32.mxu0 0.0
      %1899 = vmatmul.mubr.f32.gmra.mxu0 %v1347
      %v1900 = vpop.f32.mrf.mxu0
      %v1901 = vadd.f32 %v1716, %v1900
      %v1902 = vpop.f32.mrf.mxu0
      %1903 = vdwg.mxu0
      %v1904 = vld [vmem:[%s6 + $0x180] sm:$0xff]
      %v1905 = vld [vmem:[%s6 + $0x188] sm:$0xff]
      %v1906 = vld [vmem:[%s6 + $0x190] sm:$0xff]
      %v1907 = vld [vmem:[%s6 + $0x198] sm:$0xff]
      %v1908 = vld [vmem:[%s6 + $0x1a0] sm:$0xff]
      %v1909 = vld [vmem:[%s6 + $0x1a8] sm:$0xff]
      %v1910 = vld [vmem:[%s6 + $0x1b0] sm:$0xff]
      %v1911 = vld [vmem:[%s6 + $0x1b8] sm:$0xff]
      %v1912 = vld [vmem:[%s6 + $0x1c0] sm:$0xff]
      %v1913 = vld [vmem:[%s6 + $0x1c8] sm:$0xff]
      %v1914 = vld [vmem:[%s6 + $0x1d0] sm:$0xff]
      %v1915 = vld [vmem:[%s6 + $0x1d8] sm:$0xff]
      %v1916 = vld [vmem:[%s6 + $0x1e0] sm:$0xff]
      %v1917 = vld [vmem:[%s6 + $0x1e8] sm:$0xff]
      %v1918 = vld [vmem:[%s6 + $0x1f0] sm:$0xff]
      %v1919 = vld [vmem:[%s6 + $0x1f8] sm:$0xff]
      %v1920 = vld [vmem:[%s7] sm:$0xff]
      %v1921 = vld [vmem:[%s7 + $0x8] sm:$0xff]
      %v1922 = vld [vmem:[%s7 + $0x10] sm:$0xff]
      %v1923 = vld [vmem:[%s7 + $0x18] sm:$0xff]
      %v1924 = vld [vmem:[%s7 + $0x20] sm:$0xff]
      %v1925 = vld [vmem:[%s7 + $0x28] sm:$0xff]
      %v1926 = vld [vmem:[%s7 + $0x30] sm:$0xff]
      %v1927 = vld [vmem:[%s7 + $0x38] sm:$0xff]
      %v1928 = vld [vmem:[%s7 + $0x40] sm:$0xff]
      %v1929 = vld [vmem:[%s7 + $0x48] sm:$0xff]
      %v1930 = vld [vmem:[%s7 + $0x50] sm:$0xff]
      %v1931 = vld [vmem:[%s7 + $0x58] sm:$0xff]
      %v1932 = vld [vmem:[%s7 + $0x60] sm:$0xff]
      %v1933 = vld [vmem:[%s7 + $0x68] sm:$0xff]
      %v1934 = vld [vmem:[%s7 + $0x70] sm:$0xff]
      %v1935 = vld [vmem:[%s7 + $0x78] sm:$0xff]
      %1937 = vset.pattern.permute.xlu0 0
      %1938 = vperm.xlu0 %1937, %v1920
      %v1939 = vpop.permute.xlu0 %1938
      %1942 = vset.pattern.permute.xlu0 0
      %1943 = vperm.xlu0 %1942, %v1921
      %v1944 = vpop.permute.xlu0 %1943
      %1947 = vset.pattern.permute.xlu0 0
      %1948 = vperm.xlu0 %1947, %v1922
      %v1949 = vpop.permute.xlu0 %1948
      %1952 = vset.pattern.permute.xlu0 0
      %1953 = vperm.xlu0 %1952, %v1923
      %v1954 = vpop.permute.xlu0 %1953
      %1957 = vset.pattern.permute.xlu0 0
      %1958 = vperm.xlu0 %1957, %v1924
      %v1959 = vpop.permute.xlu0 %1958
      %1962 = vset.pattern.permute.xlu0 0
      %1963 = vperm.xlu0 %1962, %v1925
      %v1964 = vpop.permute.xlu0 %1963
      %1967 = vset.pattern.permute.xlu0 0
      %1968 = vperm.xlu0 %1967, %v1926
      %v1969 = vpop.permute.xlu0 %1968
      %1972 = vset.pattern.permute.xlu0 0
      %1973 = vperm.xlu0 %1972, %v1927
      %v1974 = vpop.permute.xlu0 %1973
      %1977 = vset.pattern.permute.xlu0 0
      %1978 = vperm.xlu0 %1977, %v1928
      %v1979 = vpop.permute.xlu0 %1978
      %1982 = vset.pattern.permute.xlu0 0
      %1983 = vperm.xlu0 %1982, %v1929
      %v1984 = vpop.permute.xlu0 %1983
      %1987 = vset.pattern.permute.xlu0 0
      %1988 = vperm.xlu0 %1987, %v1930
      %v1989 = vpop.permute.xlu0 %1988
      %1992 = vset.pattern.permute.xlu0 0
      %1993 = vperm.xlu0 %1992, %v1931
      %v1994 = vpop.permute.xlu0 %1993
      %1997 = vset.pattern.permute.xlu0 0
      %1998 = vperm.xlu0 %1997, %v1932
      %v1999 = vpop.permute.xlu0 %1998
      %2002 = vset.pattern.permute.xlu0 0
      %2003 = vperm.xlu0 %2002, %v1933
      %v2004 = vpop.permute.xlu0 %2003
      %2007 = vset.pattern.permute.xlu0 0
      %2008 = vperm.xlu0 %2007, %v1934
      %v2009 = vpop.permute.xlu0 %2008
      %2012 = vset.pattern.permute.xlu0 0
      %2013 = vperm.xlu0 %2012, %v1935
      %v2014 = vpop.permute.xlu0 %2013
      %v2017 = vsel %vm755, %v1904, 0
      %v2020 = vsel %vm755, %v1905, 0
      %v2023 = vsel %vm755, %v1906, 0
      %v2026 = vsel %vm755, %v1907, 0
      %v2029 = vsel %vm755, %v1908, 0
      %v2032 = vsel %vm755, %v1909, 0
      %v2035 = vsel %vm755, %v1910, 0
      %v2038 = vsel %vm755, %v1911, 0
      %v2041 = vsel %vm755, %v1912, 0
      %v2044 = vsel %vm755, %v1913, 0
      %v2047 = vsel %vm755, %v1914, 0
      %v2050 = vsel %vm755, %v1915, 0
      %v2053 = vsel %vm755, %v1916, 0
      %v2056 = vsel %vm755, %v1917, 0
      %v2059 = vsel %vm755, %v1918, 0
      %v2062 = vsel %vm755, %v1919, 0
      %2064 = vmatprep.subr.mxu0 0.0
      %2065 = vmatpush1.msra.mxu0 0.0
      %2066 = vmatprep.subr.mxu0 0.0
      %2067 = vmatpush1.msra.mxu0 0.0
      %2068 = vmatprep.subr.mxu0 0.0
      %2069 = vmatpush1.msra.mxu0 0.0
      %2070 = vmatprep.subr.mxu0 0.0
      %2071 = vmatpush1.msra.mxu0 0.0
      %2072 = vmatprep.subr.mxu0 0.0
      %2073 = vmatpush1.msra.mxu0 0.0
      %2074 = vmatprep.subr.mxu0 0.0
      %2075 = vmatpush1.msra.mxu0 0.0
      %2076 = vmatprep.subr.mxu0 0.0
      %2077 = vmatpush1.msra.mxu0 0.0
      %2078 = vmatprep.subr.mxu0 0.0
      %2079 = vmatpush1.msra.mxu0 0.0
      %2080 = vmatprep.subr.mxu0 0.0
      %2081 = vmatpush1.msra.mxu0 %v554
      %2082 = vmatprep.subr.mxu0 0.0
      %2083 = vmatpush1.msra.mxu0 %v553
      %2084 = vmatprep.subr.mxu0 0.0
      %2085 = vmatpush1.msra.mxu0 %v552
      %2086 = vmatprep.subr.mxu0 0.0
      %2087 = vmatpush1.msra.mxu0 %v551
      %2088 = vmatprep.subr.mxu0 0.0
      %2089 = vmatpush1.msra.mxu0 %v550
      %2090 = vmatprep.subr.mxu0 0.0
      %2091 = vmatpush1.msra.mxu0 %v549
      %2092 = vmatprep.subr.mxu0 0.0
      %2093 = vmatpush1.msra.mxu0 %v548
      %2094 = vmatprep.subr.mxu0 0.0
      %2095 = vmatpush1.msra.mxu0 %v547
      %2096 = vmatprep.subr.mxu0 0.0
      %2097 = vmatpush2.msra.mxu0 0.0
      %2098 = vmatprep.subr.mxu0 0.0
      %2099 = vmatpush2.msra.mxu0 0.0
      %2100 = vmatprep.subr.mxu0 0.0
      %2101 = vmatpush2.msra.mxu0 0.0
      %2102 = vmatprep.subr.mxu0 0.0
      %2103 = vmatpush2.msra.mxu0 0.0
      %2104 = vmatprep.subr.mxu0 0.0
      %2105 = vmatpush2.msra.mxu0 0.0
      %2106 = vmatprep.subr.mxu0 0.0
      %2107 = vmatpush2.msra.mxu0 0.0
      %2108 = vmatprep.subr.mxu0 0.0
      %2109 = vmatpush2.msra.mxu0 0.0
      %2110 = vmatprep.subr.mxu0 0.0
      %2111 = vmatpush2.msra.mxu0 0.0
      %2112 = vmatprep.subr.mxu0 0.0
      %2113 = vmatpush2.msra.mxu0 0.0
      %2114 = vmatprep.subr.mxu0 0.0
      %2115 = vmatpush2.msra.mxu0 0.0
      %2116 = vmatprep.subr.mxu0 0.0
      %2117 = vmatpush2.msra.mxu0 0.0
      %2118 = vmatprep.subr.mxu0 0.0
      %2119 = vmatpush2.msra.mxu0 0.0
      %2120 = vmatprep.subr.mxu0 0.0
      %2121 = vmatpush2.msra.mxu0 0.0
      %2122 = vmatprep.subr.mxu0 0.0
      %2123 = vmatpush2.msra.mxu0 0.0
      %2124 = vmatprep.subr.mxu0 0.0
      %2125 = vmatpush2.msra.mxu0 0.0
      %2126 = vmatprep.subr.mxu0 0.0
      %2127 = vmatpush2.msra.mxu0 0.0
      %2128 = vmatprep.mubr.f32.mxu0 0.0
      %2129 = vmatmul.mubr.f32.gmra.mxu0 %v2017
      %v2130 = vpop.f32.mrf.mxu0
      %v2131 = vadd.f32 %v1939, %v2130
      %v2132 = vpop.f32.mrf.mxu0
      %2133 = vmatprep.mubr.f32.mxu0 0.0
      %2134 = vmatmul.mubr.f32.gmra.mxu0 %v2020
      %v2135 = vpop.f32.mrf.mxu0
      %v2136 = vadd.f32 %v1944, %v2135
      %v2137 = vpop.f32.mrf.mxu0
      %2138 = vmatprep.mubr.f32.mxu0 0.0
      %2139 = vmatmul.mubr.f32.gmra.mxu0 %v2023
      %v2140 = vpop.f32.mrf.mxu0
      %v2141 = vadd.f32 %v1949, %v2140
      %v2142 = vpop.f32.mrf.mxu0
      %2143 = vmatprep.mubr.f32.mxu0 0.0
      %2144 = vmatmul.mubr.f32.gmra.mxu0 %v2026
      %v2145 = vpop.f32.mrf.mxu0
      %v2146 = vadd.f32 %v1954, %v2145
      %v2147 = vpop.f32.mrf.mxu0
      %2148 = vmatprep.mubr.f32.mxu0 0.0
      %2149 = vmatmul.mubr.f32.gmra.mxu0 %v2029
      %v2150 = vpop.f32.mrf.mxu0
      %v2151 = vadd.f32 %v1959, %v2150
      %v2152 = vpop.f32.mrf.mxu0
      %2153 = vmatprep.mubr.f32.mxu0 0.0
      %2154 = vmatmul.mubr.f32.gmra.mxu0 %v2032
      %v2155 = vpop.f32.mrf.mxu0
      %v2156 = vadd.f32 %v1964, %v2155
      %v2157 = vpop.f32.mrf.mxu0
      %2158 = vmatprep.mubr.f32.mxu0 0.0
      %2159 = vmatmul.mubr.f32.gmra.mxu0 %v2035
      %v2160 = vpop.f32.mrf.mxu0
      %v2161 = vadd.f32 %v1969, %v2160
      %v2162 = vpop.f32.mrf.mxu0
      %2163 = vmatprep.mubr.f32.mxu0 0.0
      %2164 = vmatmul.mubr.f32.gmra.mxu0 %v2038
      %v2165 = vpop.f32.mrf.mxu0
      %v2166 = vadd.f32 %v1974, %v2165
      %v2167 = vpop.f32.mrf.mxu0
      %2168 = vmatprep.mubr.f32.mxu0 0.0
      %2169 = vmatmul.mubr.f32.gmra.mxu0 %v2041
      %v2170 = vpop.f32.mrf.mxu0
      %v2171 = vadd.f32 %v1979, %v2170
      %v2172 = vpop.f32.mrf.mxu0
      %2173 = vmatprep.mubr.f32.mxu0 0.0
      %2174 = vmatmul.mubr.f32.gmra.mxu0 %v2044
      %v2175 = vpop.f32.mrf.mxu0
      %v2176 = vadd.f32 %v1984, %v2175
      %v2177 = vpop.f32.mrf.mxu0
      %2178 = vmatprep.mubr.f32.mxu0 0.0
      %2179 = vmatmul.mubr.f32.gmra.mxu0 %v2047
      %v2180 = vpop.f32.mrf.mxu0
      %v2181 = vadd.f32 %v1989, %v2180
      %v2182 = vpop.f32.mrf.mxu0
      %2183 = vmatprep.mubr.f32.mxu0 0.0
      %2184 = vmatmul.mubr.f32.gmra.mxu0 %v2050
      %v2185 = vpop.f32.mrf.mxu0
      %v2186 = vadd.f32 %v1994, %v2185
      %v2187 = vpop.f32.mrf.mxu0
      %2188 = vmatprep.mubr.f32.mxu0 0.0
      %2189 = vmatmul.mubr.f32.gmra.mxu0 %v2053
      %v2190 = vpop.f32.mrf.mxu0
      %v2191 = vadd.f32 %v1999, %v2190
      %v2192 = vpop.f32.mrf.mxu0
      %2193 = vmatprep.mubr.f32.mxu0 0.0
      %2194 = vmatmul.mubr.f32.gmra.mxu0 %v2056
      %v2195 = vpop.f32.mrf.mxu0
      %v2196 = vadd.f32 %v2004, %v2195
      %v2197 = vpop.f32.mrf.mxu0
      %2198 = vmatprep.mubr.f32.mxu0 0.0
      %2199 = vmatmul.mubr.f32.gmra.mxu0 %v2059
      %v2200 = vpop.f32.mrf.mxu0
      %v2201 = vadd.f32 %v2009, %v2200
      %v2202 = vpop.f32.mrf.mxu0
      %2203 = vmatprep.mubr.f32.mxu0 0.0
      %2204 = vmatmul.mubr.f32.gmra.mxu0 %v2062
      %v2205 = vpop.f32.mrf.mxu0
      %v2206 = vadd.f32 %v2014, %v2205
      %v2207 = vpop.f32.mrf.mxu0
      %2208 = vdwg.mxu0
      %v2209 = vld [vmem:[%s8] sm:$0xff]
      %v2210 = vld [vmem:[%s8 + $0x8] sm:$0xff]
      %2211 = vxpose.xlu0.b32.start [1/16] %v895, 128
      %2212 = vxpose.xlu0.b32.cont [2/16] %v900, 128
      %2213 = vxpose.xlu0.b32.cont [3/16] %v905, 128
      %2214 = vxpose.xlu0.b32.cont [4/16] %v910, 128
      %2215 = vxpose.xlu0.b32.cont [5/16] 0.0, 128
      %2216 = vxpose.xlu0.b32.cont [6/16] 0.0, 128
      %2217 = vxpose.xlu0.b32.cont [7/16] 0.0, 128
      %2218 = vxpose.xlu0.b32.cont [8/16] 0.0, 128
      %2219 = vxpose.xlu0.b32.cont [9/16] 0.0, 128
      %2220 = vxpose.xlu0.b32.cont [10/16] 0.0, 128
      %2221 = vxpose.xlu0.b32.cont [11/16] 0.0, 128
      %2222 = vxpose.xlu0.b32.cont [12/16] 0.0, 128
      %2223 = vxpose.xlu0.b32.cont [13/16] 0.0, 128
      %2224 = vxpose.xlu0.b32.cont [14/16] 0.0, 128
      %2225 = vxpose.xlu0.b32.cont [15/16] 0.0, 128
      %2226 = vxpose.xlu0.b32.end [16/16] 0.0, 128
      %v2227 = vpop.trf.xlu0
      %v2228 = vpop.trf.xlu0
      %v2229 = vpop.trf.xlu0
      %v2230 = vpop.trf.xlu0
      %v2231 = vpop.trf.xlu0
      %v2232 = vpop.trf.xlu0
      %v2233 = vpop.trf.xlu0
      %v2234 = vpop.trf.xlu0
      %v2235 = vpop.trf.xlu0
      %v2236 = vpop.trf.xlu0
      %v2237 = vpop.trf.xlu0
      %v2238 = vpop.trf.xlu0
      %v2239 = vpop.trf.xlu0
      %v2240 = vpop.trf.xlu0
      %v2241 = vpop.trf.xlu0
      %v2242 = vpop.trf.xlu0
      %vm2243 = vcmask 261120
      %v2245 = vsel %vm2243, %v2227, 0
      %v2248 = vsel %vm2243, %v2228, 0
      %v2251 = vsel %vm2243, %v2229, 0
      %v2254 = vsel %vm2243, %v2230, 0
      %v2257 = vsel %vm2243, %v2231, 0
      %v2260 = vsel %vm2243, %v2232, 0
      %v2263 = vsel %vm2243, %v2233, 0
      %v2266 = vsel %vm2243, %v2234, 0
      %v2269 = vsel %vm2243, %v2235, 0
      %v2272 = vsel %vm2243, %v2236, 0
      %v2275 = vsel %vm2243, %v2237, 0
      %v2278 = vsel %vm2243, %v2238, 0
      %v2281 = vsel %vm2243, %v2239, 0
      %v2284 = vsel %vm2243, %v2240, 0
      %v2287 = vsel %vm2243, %v2241, 0
      %v2290 = vsel %vm2243, %v2242, 0
      %2292 = vmatprep.subr.mxu0 0.0
      %2293 = vmatpush1.msra.mxu0 0.0
      %2294 = vmatprep.subr.mxu0 0.0
      %2295 = vmatpush1.msra.mxu0 0.0
      %2296 = vmatprep.subr.mxu0 0.0
      %2297 = vmatpush1.msra.mxu0 0.0
      %2298 = vmatprep.subr.mxu0 0.0
      %2299 = vmatpush1.msra.mxu0 0.0
      %2300 = vmatprep.subr.mxu0 0.0
      %2301 = vmatpush1.msra.mxu0 0.0
      %2302 = vmatprep.subr.mxu0 0.0
      %2303 = vmatpush1.msra.mxu0 0.0
      %2304 = vmatprep.subr.mxu0 0.0
      %2305 = vmatpush1.msra.mxu0 0.0
      %2306 = vmatprep.subr.mxu0 0.0
      %2307 = vmatpush1.msra.mxu0 0.0
      %2308 = vmatprep.subr.mxu0 0.0
      %2309 = vmatpush1.msra.mxu0 0.0
      %2310 = vmatprep.subr.mxu0 0.0
      %2311 = vmatpush1.msra.mxu0 0.0
      %2312 = vmatprep.subr.mxu0 0.0
      %2313 = vmatpush1.msra.mxu0 0.0
      %2314 = vmatprep.subr.mxu0 0.0
      %2315 = vmatpush1.msra.mxu0 0.0
      %2316 = vmatprep.subr.mxu0 0.0
      %2317 = vmatpush1.msra.mxu0 %v930
      %2318 = vmatprep.subr.mxu0 0.0
      %2319 = vmatpush1.msra.mxu0 %v925
      %2320 = vmatprep.subr.mxu0 0.0
      %2321 = vmatpush1.msra.mxu0 %v920
      %2322 = vmatprep.subr.mxu0 0.0
      %2323 = vmatpush1.msra.mxu0 %v915
      %2324 = vmatprep.subr.mxu0 0.0
      %2325 = vmatpush2.msra.mxu0 0.0
      %2326 = vmatprep.subr.mxu0 0.0
      %2327 = vmatpush2.msra.mxu0 0.0
      %2328 = vmatprep.subr.mxu0 0.0
      %2329 = vmatpush2.msra.mxu0 0.0
      %2330 = vmatprep.subr.mxu0 0.0
      %2331 = vmatpush2.msra.mxu0 0.0
      %2332 = vmatprep.subr.mxu0 0.0
      %2333 = vmatpush2.msra.mxu0 0.0
      %2334 = vmatprep.subr.mxu0 0.0
      %2335 = vmatpush2.msra.mxu0 0.0
      %2336 = vmatprep.subr.mxu0 0.0
      %2337 = vmatpush2.msra.mxu0 0.0
      %2338 = vmatprep.subr.mxu0 0.0
      %2339 = vmatpush2.msra.mxu0 0.0
      %2340 = vmatprep.subr.mxu0 0.0
      %2341 = vmatpush2.msra.mxu0 0.0
      %2342 = vmatprep.subr.mxu0 0.0
      %2343 = vmatpush2.msra.mxu0 0.0
      %2344 = vmatprep.subr.mxu0 0.0
      %2345 = vmatpush2.msra.mxu0 0.0
      %2346 = vmatprep.subr.mxu0 0.0
      %2347 = vmatpush2.msra.mxu0 0.0
      %2348 = vmatprep.subr.mxu0 0.0
      %2349 = vmatpush2.msra.mxu0 0.0
      %2350 = vmatprep.subr.mxu0 0.0
      %2351 = vmatpush2.msra.mxu0 0.0
      %2352 = vmatprep.subr.mxu0 0.0
      %2353 = vmatpush2.msra.mxu0 0.0
      %2354 = vmatprep.subr.mxu0 0.0
      %2355 = vmatpush2.msra.mxu0 0.0
      %2356 = vmatprep.mubr.f32.mxu0 0.0
      %2357 = vmatmul.mubr.f32.gmra.mxu0 %v2245
      %v2358 = vpop.f32.mrf.mxu0
      %v2359 = vadd.f32 0.0, %v2358
      %v2360 = vpop.f32.mrf.mxu0
      %2361 = vmatprep.mubr.f32.mxu0 0.0
      %2362 = vmatmul.mubr.f32.gmra.mxu0 %v2248
      %v2363 = vpop.f32.mrf.mxu0
      %v2364 = vadd.f32 0.0, %v2363
      %v2365 = vpop.f32.mrf.mxu0
      %2366 = vmatprep.mubr.f32.mxu0 0.0
      %2367 = vmatmul.mubr.f32.gmra.mxu0 %v2251
      %v2368 = vpop.f32.mrf.mxu0
      %v2369 = vadd.f32 0.0, %v2368
      %v2370 = vpop.f32.mrf.mxu0
      %2371 = vmatprep.mubr.f32.mxu0 0.0
      %2372 = vmatmul.mubr.f32.gmra.mxu0 %v2254
      %v2373 = vpop.f32.mrf.mxu0
      %v2374 = vadd.f32 0.0, %v2373
      %v2375 = vpop.f32.mrf.mxu0
      %2376 = vmatprep.mubr.f32.mxu0 0.0
      %2377 = vmatmul.mubr.f32.gmra.mxu0 %v2257
      %v2378 = vpop.f32.mrf.mxu0
      %v2379 = vadd.f32 0.0, %v2378
      %v2380 = vpop.f32.mrf.mxu0
      %2381 = vmatprep.mubr.f32.mxu0 0.0
      %2382 = vmatmul.mubr.f32.gmra.mxu0 %v2260
      %v2383 = vpop.f32.mrf.mxu0
      %v2384 = vadd.f32 0.0, %v2383
      %v2385 = vpop.f32.mrf.mxu0
      %2386 = vmatprep.mubr.f32.mxu0 0.0
      %2387 = vmatmul.mubr.f32.gmra.mxu0 %v2263
      %v2388 = vpop.f32.mrf.mxu0
      %v2389 = vadd.f32 0.0, %v2388
      %v2390 = vpop.f32.mrf.mxu0
      %2391 = vmatprep.mubr.f32.mxu0 0.0
      %2392 = vmatmul.mubr.f32.gmra.mxu0 %v2266
      %v2393 = vpop.f32.mrf.mxu0
      %v2394 = vadd.f32 0.0, %v2393
      %v2395 = vpop.f32.mrf.mxu0
      %2396 = vmatprep.mubr.f32.mxu0 0.0
      %2397 = vmatmul.mubr.f32.gmra.mxu0 %v2269
      %v2398 = vpop.f32.mrf.mxu0
      %v2399 = vadd.f32 0.0, %v2398
      %v2400 = vpop.f32.mrf.mxu0
      %2401 = vmatprep.mubr.f32.mxu0 0.0
      %2402 = vmatmul.mubr.f32.gmra.mxu0 %v2272
      %v2403 = vpop.f32.mrf.mxu0
      %v2404 = vadd.f32 0.0, %v2403
      %v2405 = vpop.f32.mrf.mxu0
      %2406 = vmatprep.mubr.f32.mxu0 0.0
      %2407 = vmatmul.mubr.f32.gmra.mxu0 %v2275
      %v2408 = vpop.f32.mrf.mxu0
      %v2409 = vadd.f32 0.0, %v2408
      %v2410 = vpop.f32.mrf.mxu0
      %2411 = vmatprep.mubr.f32.mxu0 0.0
      %2412 = vmatmul.mubr.f32.gmra.mxu0 %v2278
      %v2413 = vpop.f32.mrf.mxu0
      %v2414 = vadd.f32 0.0, %v2413
      %v2415 = vpop.f32.mrf.mxu0
      %2416 = vmatprep.mubr.f32.mxu0 0.0
      %2417 = vmatmul.mubr.f32.gmra.mxu0 %v2281
      %v2418 = vpop.f32.mrf.mxu0
      %v2419 = vadd.f32 0.0, %v2418
      %v2420 = vpop.f32.mrf.mxu0
      %2421 = vmatprep.mubr.f32.mxu0 0.0
      %2422 = vmatmul.mubr.f32.gmra.mxu0 %v2284
      %v2423 = vpop.f32.mrf.mxu0
      %v2424 = vadd.f32 0.0, %v2423
      %v2425 = vpop.f32.mrf.mxu0
      %2426 = vmatprep.mubr.f32.mxu0 0.0
      %2427 = vmatmul.mubr.f32.gmra.mxu0 %v2287
      %v2428 = vpop.f32.mrf.mxu0
      %v2429 = vadd.f32 0.0, %v2428
      %v2430 = vpop.f32.mrf.mxu0
      %2431 = vmatprep.mubr.f32.mxu0 0.0
      %2432 = vmatmul.mubr.f32.gmra.mxu0 %v2290
      %v2433 = vpop.f32.mrf.mxu0
      %v2434 = vadd.f32 0.0, %v2433
      %v2435 = vpop.f32.mrf.mxu0
      %2436 = vdwg.mxu0
      %v2437 = vld [vmem:[%s10] sm:$0xff]
      %v2438 = vld [vmem:[%s10 + $0x8] sm:$0xff]
      %v2439 = vld [vmem:[%s11] sm:$0xff]
      %v2440 = vld [vmem:[%s11 + $0x8] sm:$0xff]
      %v2441 = vld [vmem:[%s11 + $0x10] sm:$0xff]
      %v2442 = vld [vmem:[%s11 + $0x18] sm:$0xff]
      %v2443 = vld [vmem:[%s11 + $0x20] sm:$0xff]
      %v2444 = vld [vmem:[%s11 + $0x28] sm:$0xff]
      %v2445 = vld [vmem:[%s11 + $0x30] sm:$0xff]
      %v2446 = vld [vmem:[%s11 + $0x38] sm:$0xff]
      %v2447 = vld [vmem:[%s11 + $0x40] sm:$0xff]
      %v2448 = vld [vmem:[%s11 + $0x48] sm:$0xff]
      %v2449 = vld [vmem:[%s11 + $0x50] sm:$0xff]
      %v2450 = vld [vmem:[%s11 + $0x58] sm:$0xff]
      %v2451 = vld [vmem:[%s11 + $0x60] sm:$0xff]
      %v2452 = vld [vmem:[%s11 + $0x68] sm:$0xff]
      %v2453 = vld [vmem:[%s11 + $0x70] sm:$0xff]
      %v2454 = vld [vmem:[%s11 + $0x78] sm:$0xff]
      %v2455 = vmul.f32 %v2359, %v2439
      %v2456 = vmul.f32 %v2364, %v2440
      %v2457 = vmul.f32 %v2369, %v2441
      %v2458 = vmul.f32 %v2374, %v2442
      %v2459 = vmul.f32 %v2379, %v2443
      %v2460 = vmul.f32 %v2384, %v2444
      %v2461 = vmul.f32 %v2389, %v2445
      %v2462 = vmul.f32 %v2394, %v2446
      %v2463 = vmul.f32 %v2399, %v2447
      %v2464 = vmul.f32 %v2404, %v2448
      %v2465 = vmul.f32 %v2409, %v2449
      %v2466 = vmul.f32 %v2414, %v2450
      %v2467 = vmul.f32 %v2419, %v2451
      %v2468 = vmul.f32 %v2424, %v2452
      %v2469 = vmul.f32 %v2429, %v2453
      %v2470 = vmul.f32 %v2434, %v2454
      %2471 = vmatprep.subr.mxu0 0.0
      %2472 = vmatpush1.msra.mxu0 %v2470
      %2473 = vmatprep.subr.mxu0 0.0
      %2474 = vmatpush1.msra.mxu0 %v2469
      %2475 = vmatprep.subr.mxu0 0.0
      %2476 = vmatpush1.msra.mxu0 %v2468
      %2477 = vmatprep.subr.mxu0 0.0
      %2478 = vmatpush1.msra.mxu0 %v2467
      %2479 = vmatprep.subr.mxu0 0.0
      %2480 = vmatpush1.msra.mxu0 %v2466
      %2481 = vmatprep.subr.mxu0 0.0
      %2482 = vmatpush1.msra.mxu0 %v2465
      %2483 = vmatprep.subr.mxu0 0.0
      %2484 = vmatpush1.msra.mxu0 %v2464
      %2485 = vmatprep.subr.mxu0 0.0
      %2486 = vmatpush1.msra.mxu0 %v2463
      %2487 = vmatprep.subr.mxu0 0.0
      %2488 = vmatpush1.msra.mxu0 %v2462
      %2489 = vmatprep.subr.mxu0 0.0
      %2490 = vmatpush1.msra.mxu0 %v2461
      %2491 = vmatprep.subr.mxu0 0.0
      %2492 = vmatpush1.msra.mxu0 %v2460
      %2493 = vmatprep.subr.mxu0 0.0
      %2494 = vmatpush1.msra.mxu0 %v2459
      %2495 = vmatprep.subr.mxu0 0.0
      %2496 = vmatpush1.msra.mxu0 %v2458
      %2497 = vmatprep.subr.mxu0 0.0
      %2498 = vmatpush1.msra.mxu0 %v2457
      %2499 = vmatprep.subr.mxu0 0.0
      %2500 = vmatpush1.msra.mxu0 %v2456
      %2501 = vmatprep.subr.mxu0 0.0
      %2502 = vmatpush1.msra.mxu0 %v2455
      %2503 = vmatprep.subr.mxu0 0.0
      %2504 = vmatpush2.msra.mxu0 0.0
      %2505 = vmatprep.subr.mxu0 0.0
      %2506 = vmatpush2.msra.mxu0 0.0
      %2507 = vmatprep.subr.mxu0 0.0
      %2508 = vmatpush2.msra.mxu0 0.0
      %2509 = vmatprep.subr.mxu0 0.0
      %2510 = vmatpush2.msra.mxu0 0.0
      %2511 = vmatprep.subr.mxu0 0.0
      %2512 = vmatpush2.msra.mxu0 0.0
      %2513 = vmatprep.subr.mxu0 0.0
      %2514 = vmatpush2.msra.mxu0 0.0
      %2515 = vmatprep.subr.mxu0 0.0
      %2516 = vmatpush2.msra.mxu0 0.0
      %2517 = vmatprep.subr.mxu0 0.0
      %2518 = vmatpush2.msra.mxu0 0.0
      %2519 = vmatprep.subr.mxu0 0.0
      %2520 = vmatpush2.msra.mxu0 0.0
      %2521 = vmatprep.subr.mxu0 0.0
      %2522 = vmatpush2.msra.mxu0 0.0
      %2523 = vmatprep.subr.mxu0 0.0
      %2524 = vmatpush2.msra.mxu0 0.0
      %2525 = vmatprep.subr.mxu0 0.0
      %2526 = vmatpush2.msra.mxu0 0.0
      %2527 = vmatprep.subr.mxu0 0.0
      %2528 = vmatpush2.msra.mxu0 0.0
      %2529 = vmatprep.subr.mxu0 0.0
      %2530 = vmatpush2.msra.mxu0 0.0
      %2531 = vmatprep.subr.mxu0 0.0
      %2532 = vmatpush2.msra.mxu0 0.0
      %2533 = vmatprep.subr.mxu0 0.0
      %2534 = vmatpush2.msra.mxu0 0.0
      %2535 = vmatprep.mubr.f32.mxu0 0.0
      %2536 = vmatmul.mubr.f32.gmra.mxu0 %v2437
      %v2537 = vpop.f32.mrf.mxu0
      %v2538 = vadd.f32 0.0, %v2537
      %v2539 = vpop.f32.mrf.mxu0
      %2540 = vmatprep.mubr.f32.mxu0 0.0
      %2541 = vmatmul.mubr.f32.gmra.mxu0 %v2438
      %v2542 = vpop.f32.mrf.mxu0
      %v2543 = vadd.f32 0.0, %v2542
      %v2544 = vpop.f32.mrf.mxu0
      %2545 = vdwg.mxu0
      %v2546 = vld [vmem:[%s9] sm:$0xff]
      %v2547 = vld [vmem:[%s9 + $0x8] sm:$0xff]
      %v2548 = vld [vmem:[%s9 + $0x10] sm:$0xff]
      %v2549 = vld [vmem:[%s9 + $0x18] sm:$0xff]
      %v2550 = vld [vmem:[%s9 + $0x20] sm:$0xff]
      %v2551 = vld [vmem:[%s9 + $0x28] sm:$0xff]
      %v2552 = vld [vmem:[%s9 + $0x30] sm:$0xff]
      %v2553 = vld [vmem:[%s9 + $0x38] sm:$0xff]
      %v2554 = vld [vmem:[%s9 + $0x40] sm:$0xff]
      %v2555 = vld [vmem:[%s9 + $0x48] sm:$0xff]
      %v2556 = vld [vmem:[%s9 + $0x50] sm:$0xff]
      %v2557 = vld [vmem:[%s9 + $0x58] sm:$0xff]
      %v2558 = vld [vmem:[%s9 + $0x60] sm:$0xff]
      %v2559 = vld [vmem:[%s9 + $0x68] sm:$0xff]
      %v2560 = vld [vmem:[%s9 + $0x70] sm:$0xff]
      %v2561 = vld [vmem:[%s9 + $0x78] sm:$0xff]
      %2562 = vmatprep.subr.mxu0 0.0
      %2563 = vmatpush1.msra.mxu0 %v2561
      %2564 = vmatprep.subr.mxu0 0.0
      %2565 = vmatpush1.msra.mxu0 %v2560
      %2566 = vmatprep.subr.mxu0 0.0
      %2567 = vmatpush1.msra.mxu0 %v2559
      %2568 = vmatprep.subr.mxu0 0.0
      %2569 = vmatpush1.msra.mxu0 %v2558
      %2570 = vmatprep.subr.mxu0 0.0
      %2571 = vmatpush1.msra.mxu0 %v2557
      %2572 = vmatprep.subr.mxu0 0.0
      %2573 = vmatpush1.msra.mxu0 %v2556
      %2574 = vmatprep.subr.mxu0 0.0
      %2575 = vmatpush1.msra.mxu0 %v2555
      %2576 = vmatprep.subr.mxu0 0.0
      %2577 = vmatpush1.msra.mxu0 %v2554
      %2578 = vmatprep.subr.mxu0 0.0
      %2579 = vmatpush1.msra.mxu0 %v2553
      %2580 = vmatprep.subr.mxu0 0.0
      %2581 = vmatpush1.msra.mxu0 %v2552
      %2582 = vmatprep.subr.mxu0 0.0
      %2583 = vmatpush1.msra.mxu0 %v2551
      %2584 = vmatprep.subr.mxu0 0.0
      %2585 = vmatpush1.msra.mxu0 %v2550
      %2586 = vmatprep.subr.mxu0 0.0
      %2587 = vmatpush1.msra.mxu0 %v2549
      %2588 = vmatprep.subr.mxu0 0.0
      %2589 = vmatpush1.msra.mxu0 %v2548
      %2590 = vmatprep.subr.mxu0 0.0
      %2591 = vmatpush1.msra.mxu0 %v2547
      %2592 = vmatprep.subr.mxu0 0.0
      %2593 = vmatpush1.msra.mxu0 %v2546
      %2594 = vmatprep.subr.mxu0 0.0
      %2595 = vmatpush2.msra.mxu0 0.0
      %2596 = vmatprep.subr.mxu0 0.0
      %2597 = vmatpush2.msra.mxu0 0.0
      %2598 = vmatprep.subr.mxu0 0.0
      %2599 = vmatpush2.msra.mxu0 0.0
      %2600 = vmatprep.subr.mxu0 0.0
      %2601 = vmatpush2.msra.mxu0 0.0
      %2602 = vmatprep.subr.mxu0 0.0
      %2603 = vmatpush2.msra.mxu0 0.0
      %2604 = vmatprep.subr.mxu0 0.0
      %2605 = vmatpush2.msra.mxu0 0.0
      %2606 = vmatprep.subr.mxu0 0.0
      %2607 = vmatpush2.msra.mxu0 0.0
      %2608 = vmatprep.subr.mxu0 0.0
      %2609 = vmatpush2.msra.mxu0 0.0
      %2610 = vmatprep.subr.mxu0 0.0
      %2611 = vmatpush2.msra.mxu0 0.0
      %2612 = vmatprep.subr.mxu0 0.0
      %2613 = vmatpush2.msra.mxu0 0.0
      %2614 = vmatprep.subr.mxu0 0.0
      %2615 = vmatpush2.msra.mxu0 0.0
      %2616 = vmatprep.subr.mxu0 0.0
      %2617 = vmatpush2.msra.mxu0 0.0
      %2618 = vmatprep.subr.mxu0 0.0
      %2619 = vmatpush2.msra.mxu0 0.0
      %2620 = vmatprep.subr.mxu0 0.0
      %2621 = vmatpush2.msra.mxu0 0.0
      %2622 = vmatprep.subr.mxu0 0.0
      %2623 = vmatpush2.msra.mxu0 0.0
      %2624 = vmatprep.subr.mxu0 0.0
      %2625 = vmatpush2.msra.mxu0 0.0
      %2626 = vmatprep.mubr.f32.mxu0 0.0
      %2627 = vmatmul.mubr.f32.gmra.mxu0 %v2538
      %v2628 = vpop.f32.mrf.mxu0
      %v2629 = vadd.f32 0.0, %v2628
      %v2630 = vpop.f32.mrf.mxu0
      %2631 = vmatprep.mubr.f32.mxu0 0.0
      %2632 = vmatmul.mubr.f32.gmra.mxu0 %v2543
      %v2633 = vpop.f32.mrf.mxu0
      %v2634 = vadd.f32 0.0, %v2633
      %v2635 = vpop.f32.mrf.mxu0
      %2636 = vdwg.mxu0
      %v2637 = vmul.f32 %v2629, 0.00390625
      %v2638 = vmul.f32 %v2634, 0.00390625
      %vm2639 = vcmask 130048
      %v2640 = vsel %vm2639, %v2637, -inf
      %v2641 = vsel %vm2639, %v2638, -inf
      %v2642 = vmax.f32 %v2640, %v2641
      %v2643 = vrot.slane %v2642, 4
      %v2644 = vmax.f32 %v2642, %v2643
      %v2645 = vrot.slane %v2644, 2
      %v2646 = vmax.f32 %v2644, %v2645
      %v2647 = vrot.slane %v2646, 1
      %v2648 = vmax.f32 %v2646, %v2647
      %v2649 = vsub.f32 %v2637, %v2648
      %v2650 = vsub.f32 %v2638, %v2648
      %v2651 = vmul.f32 %v2649, 1.442695
      %v2652 = vpow.pop %v2651
      %v2653 = vmul.f32 %v2650, 1.442695
      %v2654 = vpow.pop %v2653
      %v2655 = vsel %vm2639, %v2652, 0.0
      %v2656 = vsel %vm2639, %v2654, 0.0
      %v2657 = vadd.f32 %v2655, %v2656
      %v2658 = vrot.slane %v2657, 4
      %v2659 = vadd.f32 %v2657, %v2658
      %v2660 = vrot.slane %v2659, 2
      %v2661 = vadd.f32 %v2659, %v2660
      %v2662 = vrot.slane %v2661, 1
      %v2663 = vadd.f32 %v2661, %v2662
      %v2664 = vrcp.pop %v2663
      %v2665 = vmul.f32 %v2652, %v2664
      %v2666 = vmul.f32 %v2654, %v2664
      %v2667 = vadd.f32 %v2209, %v2665
      %v2668 = vadd.f32 %v2210, %v2666
      %2669 = vxpose.xlu0.b32.start [1/16] %v1786, 128
      %2670 = vxpose.xlu0.b32.cont [2/16] %v1791, 128
      %2671 = vxpose.xlu0.b32.cont [3/16] %v1796, 128
      %2672 = vxpose.xlu0.b32.cont [4/16] %v1801, 128
      %2673 = vxpose.xlu0.b32.cont [5/16] 0.0, 128
      %2674 = vxpose.xlu0.b32.cont [6/16] 0.0, 128
      %2675 = vxpose.xlu0.b32.cont [7/16] 0.0, 128
      %2676 = vxpose.xlu0.b32.cont [8/16] 0.0, 128
      %2677 = vxpose.xlu0.b32.cont [9/16] 0.0, 128
      %2678 = vxpose.xlu0.b32.cont [10/16] 0.0, 128
      %2679 = vxpose.xlu0.b32.cont [11/16] 0.0, 128
      %2680 = vxpose.xlu0.b32.cont [12/16] 0.0, 128
      %2681 = vxpose.xlu0.b32.cont [13/16] 0.0, 128
      %2682 = vxpose.xlu0.b32.cont [14/16] 0.0, 128
      %2683 = vxpose.xlu0.b32.cont [15/16] 0.0, 128
      %2684 = vxpose.xlu0.b32.end [16/16] 0.0, 128
      %v2685 = vpop.trf.xlu0
      %v2686 = vpop.trf.xlu0
      %v2687 = vpop.trf.xlu0
      %v2688 = vpop.trf.xlu0
      %v2689 = vpop.trf.xlu0
      %v2690 = vpop.trf.xlu0
      %v2691 = vpop.trf.xlu0
      %v2692 = vpop.trf.xlu0
      %v2693 = vpop.trf.xlu0
      %v2694 = vpop.trf.xlu0
      %v2695 = vpop.trf.xlu0
      %v2696 = vpop.trf.xlu0
      %v2697 = vpop.trf.xlu0
      %v2698 = vpop.trf.xlu0
      %v2699 = vpop.trf.xlu0
      %v2700 = vpop.trf.xlu0
      %v2702 = vsel %vm2243, %v2685, 0
      %v2705 = vsel %vm2243, %v2686, 0
      %v2708 = vsel %vm2243, %v2687, 0
      %v2711 = vsel %vm2243, %v2688, 0
      %v2714 = vsel %vm2243, %v2689, 0
      %v2717 = vsel %vm2243, %v2690, 0
      %v2720 = vsel %vm2243, %v2691, 0
      %v2723 = vsel %vm2243, %v2692, 0
      %v2726 = vsel %vm2243, %v2693, 0
      %v2729 = vsel %vm2243, %v2694, 0
      %v2732 = vsel %vm2243, %v2695, 0
      %v2735 = vsel %vm2243, %v2696, 0
      %v2738 = vsel %vm2243, %v2697, 0
      %v2741 = vsel %vm2243, %v2698, 0
      %v2744 = vsel %vm2243, %v2699, 0
      %v2747 = vsel %vm2243, %v2700, 0
      %2749 = vmatprep.subr.mxu0 0.0
      %2750 = vmatpush1.msra.mxu0 0.0
      %2751 = vmatprep.subr.mxu0 0.0
      %2752 = vmatpush1.msra.mxu0 0.0
      %2753 = vmatprep.subr.mxu0 0.0
      %2754 = vmatpush1.msra.mxu0 0.0
      %2755 = vmatprep.subr.mxu0 0.0
      %2756 = vmatpush1.msra.mxu0 0.0
      %2757 = vmatprep.subr.mxu0 0.0
      %2758 = vmatpush1.msra.mxu0 0.0
      %2759 = vmatprep.subr.mxu0 0.0
      %2760 = vmatpush1.msra.mxu0 0.0
      %2761 = vmatprep.subr.mxu0 0.0
      %2762 = vmatpush1.msra.mxu0 0.0
      %2763 = vmatprep.subr.mxu0 0.0
      %2764 = vmatpush1.msra.mxu0 0.0
      %2765 = vmatprep.subr.mxu0 0.0
      %2766 = vmatpush1.msra.mxu0 0.0
      %2767 = vmatprep.subr.mxu0 0.0
      %2768 = vmatpush1.msra.mxu0 0.0
      %2769 = vmatprep.subr.mxu0 0.0
      %2770 = vmatpush1.msra.mxu0 0.0
      %2771 = vmatprep.subr.mxu0 0.0
      %2772 = vmatpush1.msra.mxu0 0.0
      %2773 = vmatprep.subr.mxu0 0.0
      %2774 = vmatpush1.msra.mxu0 %v1821
      %2775 = vmatprep.subr.mxu0 0.0
      %2776 = vmatpush1.msra.mxu0 %v1816
      %2777 = vmatprep.subr.mxu0 0.0
      %2778 = vmatpush1.msra.mxu0 %v1811
      %2779 = vmatprep.subr.mxu0 0.0
      %2780 = vmatpush1.msra.mxu0 %v1806
      %2781 = vmatprep.subr.mxu0 0.0
      %2782 = vmatpush2.msra.mxu0 0.0
      %2783 = vmatprep.subr.mxu0 0.0
      %2784 = vmatpush2.msra.mxu0 0.0
      %2785 = vmatprep.subr.mxu0 0.0
      %2786 = vmatpush2.msra.mxu0 0.0
      %2787 = vmatprep.subr.mxu0 0.0
      %2788 = vmatpush2.msra.mxu0 0.0
      %2789 = vmatprep.subr.mxu0 0.0
      %2790 = vmatpush2.msra.mxu0 0.0
      %2791 = vmatprep.subr.mxu0 0.0
      %2792 = vmatpush2.msra.mxu0 0.0
      %2793 = vmatprep.subr.mxu0 0.0
      %2794 = vmatpush2.msra.mxu0 0.0
      %2795 = vmatprep.subr.mxu0 0.0
      %2796 = vmatpush2.msra.mxu0 0.0
      %2797 = vmatprep.subr.mxu0 0.0
      %2798 = vmatpush2.msra.mxu0 0.0
      %2799 = vmatprep.subr.mxu0 0.0
      %2800 = vmatpush2.msra.mxu0 0.0
      %2801 = vmatprep.subr.mxu0 0.0
      %2802 = vmatpush2.msra.mxu0 0.0
      %2803 = vmatprep.subr.mxu0 0.0
      %2804 = vmatpush2.msra.mxu0 0.0
      %2805 = vmatprep.subr.mxu0 0.0
      %2806 = vmatpush2.msra.mxu0 0.0
      %2807 = vmatprep.subr.mxu0 0.0
      %2808 = vmatpush2.msra.mxu0 0.0
      %2809 = vmatprep.subr.mxu0 0.0
      %2810 = vmatpush2.msra.mxu0 0.0
      %2811 = vmatprep.subr.mxu0 0.0
      %2812 = vmatpush2.msra.mxu0 0.0
      %2813 = vmatprep.mubr.f32.mxu0 0.0
      %2814 = vmatmul.mubr.f32.gmra.mxu0 %v2702
      %v2815 = vpop.f32.mrf.mxu0
      %v2816 = vadd.f32 0.0, %v2815
      %v2817 = vpop.f32.mrf.mxu0
      %2818 = vmatprep.mubr.f32.mxu0 0.0
      %2819 = vmatmul.mubr.f32.gmra.mxu0 %v2705
      %v2820 = vpop.f32.mrf.mxu0
      %v2821 = vadd.f32 0.0, %v2820
      %v2822 = vpop.f32.mrf.mxu0
      %2823 = vmatprep.mubr.f32.mxu0 0.0
      %2824 = vmatmul.mubr.f32.gmra.mxu0 %v2708
      %v2825 = vpop.f32.mrf.mxu0
      %v2826 = vadd.f32 0.0, %v2825
      %v2827 = vpop.f32.mrf.mxu0
      %2828 = vmatprep.mubr.f32.mxu0 0.0
      %2829 = vmatmul.mubr.f32.gmra.mxu0 %v2711
      %v2830 = vpop.f32.mrf.mxu0
      %v2831 = vadd.f32 0.0, %v2830
      %v2832 = vpop.f32.mrf.mxu0
      %2833 = vmatprep.mubr.f32.mxu0 0.0
      %2834 = vmatmul.mubr.f32.gmra.mxu0 %v2714
      %v2835 = vpop.f32.mrf.mxu0
      %v2836 = vadd.f32 0.0, %v2835
      %v2837 = vpop.f32.mrf.mxu0
      %2838 = vmatprep.mubr.f32.mxu0 0.0
      %2839 = vmatmul.mubr.f32.gmra.mxu0 %v2717
      %v2840 = vpop.f32.mrf.mxu0
      %v2841 = vadd.f32 0.0, %v2840
      %v2842 = vpop.f32.mrf.mxu0
      %2843 = vmatprep.mubr.f32.mxu0 0.0
      %2844 = vmatmul.mubr.f32.gmra.mxu0 %v2720
      %v2845 = vpop.f32.mrf.mxu0
      %v2846 = vadd.f32 0.0, %v2845
      %v2847 = vpop.f32.mrf.mxu0
      %2848 = vmatprep.mubr.f32.mxu0 0.0
      %2849 = vmatmul.mubr.f32.gmra.mxu0 %v2723
      %v2850 = vpop.f32.mrf.mxu0
      %v2851 = vadd.f32 0.0, %v2850
      %v2852 = vpop.f32.mrf.mxu0
      %2853 = vmatprep.mubr.f32.mxu0 0.0
      %2854 = vmatmul.mubr.f32.gmra.mxu0 %v2726
      %v2855 = vpop.f32.mrf.mxu0
      %v2856 = vadd.f32 0.0, %v2855
      %v2857 = vpop.f32.mrf.mxu0
      %2858 = vmatprep.mubr.f32.mxu0 0.0
      %2859 = vmatmul.mubr.f32.gmra.mxu0 %v2729
      %v2860 = vpop.f32.mrf.mxu0
      %v2861 = vadd.f32 0.0, %v2860
      %v2862 = vpop.f32.mrf.mxu0
      %2863 = vmatprep.mubr.f32.mxu0 0.0
      %2864 = vmatmul.mubr.f32.gmra.mxu0 %v2732
      %v2865 = vpop.f32.mrf.mxu0
      %v2866 = vadd.f32 0.0, %v2865
      %v2867 = vpop.f32.mrf.mxu0
      %2868 = vmatprep.mubr.f32.mxu0 0.0
      %2869 = vmatmul.mubr.f32.gmra.mxu0 %v2735
      %v2870 = vpop.f32.mrf.mxu0
      %v2871 = vadd.f32 0.0, %v2870
      %v2872 = vpop.f32.mrf.mxu0
      %2873 = vmatprep.mubr.f32.mxu0 0.0
      %2874 = vmatmul.mubr.f32.gmra.mxu0 %v2738
      %v2875 = vpop.f32.mrf.mxu0
      %v2876 = vadd.f32 0.0, %v2875
      %v2877 = vpop.f32.mrf.mxu0
      %2878 = vmatprep.mubr.f32.mxu0 0.0
      %2879 = vmatmul.mubr.f32.gmra.mxu0 %v2741
      %v2880 = vpop.f32.mrf.mxu0
      %v2881 = vadd.f32 0.0, %v2880
      %v2882 = vpop.f32.mrf.mxu0
      %2883 = vmatprep.mubr.f32.mxu0 0.0
      %2884 = vmatmul.mubr.f32.gmra.mxu0 %v2744
      %v2885 = vpop.f32.mrf.mxu0
      %v2886 = vadd.f32 0.0, %v2885
      %v2887 = vpop.f32.mrf.mxu0
      %2888 = vmatprep.mubr.f32.mxu0 0.0
      %2889 = vmatmul.mubr.f32.gmra.mxu0 %v2747
      %v2890 = vpop.f32.mrf.mxu0
      %v2891 = vadd.f32 0.0, %v2890
      %v2892 = vpop.f32.mrf.mxu0
      %2893 = vdwg.mxu0
      %v2894 = vmul.f32 %v2816, %v2439
      %v2895 = vmul.f32 %v2821, %v2440
      %v2896 = vmul.f32 %v2826, %v2441
      %v2897 = vmul.f32 %v2831, %v2442
      %v2898 = vmul.f32 %v2836, %v2443
      %v2899 = vmul.f32 %v2841, %v2444
      %v2900 = vmul.f32 %v2846, %v2445
      %v2901 = vmul.f32 %v2851, %v2446
      %v2902 = vmul.f32 %v2856, %v2447
      %v2903 = vmul.f32 %v2861, %v2448
      %v2904 = vmul.f32 %v2866, %v2449
      %v2905 = vmul.f32 %v2871, %v2450
      %v2906 = vmul.f32 %v2876, %v2451
      %v2907 = vmul.f32 %v2881, %v2452
      %v2908 = vmul.f32 %v2886, %v2453
      %v2909 = vmul.f32 %v2891, %v2454
      %2910 = vmatprep.subr.mxu0 0.0
      %2911 = vmatpush1.msra.mxu0 %v2909
      %2912 = vmatprep.subr.mxu0 0.0
      %2913 = vmatpush1.msra.mxu0 %v2908
      %2914 = vmatprep.subr.mxu0 0.0
      %2915 = vmatpush1.msra.mxu0 %v2907
      %2916 = vmatprep.subr.mxu0 0.0
      %2917 = vmatpush1.msra.mxu0 %v2906
      %2918 = vmatprep.subr.mxu0 0.0
      %2919 = vmatpush1.msra.mxu0 %v2905
      %2920 = vmatprep.subr.mxu0 0.0
      %2921 = vmatpush1.msra.mxu0 %v2904
      %2922 = vmatprep.subr.mxu0 0.0
      %2923 = vmatpush1.msra.mxu0 %v2903
      %2924 = vmatprep.subr.mxu0 0.0
      %2925 = vmatpush1.msra.mxu0 %v2902
      %2926 = vmatprep.subr.mxu0 0.0
      %2927 = vmatpush1.msra.mxu0 %v2901
      %2928 = vmatprep.subr.mxu0 0.0
      %2929 = vmatpush1.msra.mxu0 %v2900
      %2930 = vmatprep.subr.mxu0 0.0
      %2931 = vmatpush1.msra.mxu0 %v2899
      %2932 = vmatprep.subr.mxu0 0.0
      %2933 = vmatpush1.msra.mxu0 %v2898
      %2934 = vmatprep.subr.mxu0 0.0
      %2935 = vmatpush1.msra.mxu0 %v2897
      %2936 = vmatprep.subr.mxu0 0.0
      %2937 = vmatpush1.msra.mxu0 %v2896
      %2938 = vmatprep.subr.mxu0 0.0
      %2939 = vmatpush1.msra.mxu0 %v2895
      %2940 = vmatprep.subr.mxu0 0.0
      %2941 = vmatpush1.msra.mxu0 %v2894
      %2942 = vmatprep.subr.mxu0 0.0
      %2943 = vmatpush2.msra.mxu0 0.0
      %2944 = vmatprep.subr.mxu0 0.0
      %2945 = vmatpush2.msra.mxu0 0.0
      %2946 = vmatprep.subr.mxu0 0.0
      %2947 = vmatpush2.msra.mxu0 0.0
      %2948 = vmatprep.subr.mxu0 0.0
      %2949 = vmatpush2.msra.mxu0 0.0
      %2950 = vmatprep.subr.mxu0 0.0
      %2951 = vmatpush2.msra.mxu0 0.0
      %2952 = vmatprep.subr.mxu0 0.0
      %2953 = vmatpush2.msra.mxu0 0.0
      %2954 = vmatprep.subr.mxu0 0.0
      %2955 = vmatpush2.msra.mxu0 0.0
      %2956 = vmatprep.subr.mxu0 0.0
      %2957 = vmatpush2.msra.mxu0 0.0
      %2958 = vmatprep.subr.mxu0 0.0
      %2959 = vmatpush2.msra.mxu0 0.0
      %2960 = vmatprep.subr.mxu0 0.0
      %2961 = vmatpush2.msra.mxu0 0.0
      %2962 = vmatprep.subr.mxu0 0.0
      %2963 = vmatpush2.msra.mxu0 0.0
      %2964 = vmatprep.subr.mxu0 0.0
      %2965 = vmatpush2.msra.mxu0 0.0
      %2966 = vmatprep.subr.mxu0 0.0
      %2967 = vmatpush2.msra.mxu0 0.0
      %2968 = vmatprep.subr.mxu0 0.0
      %2969 = vmatpush2.msra.mxu0 0.0
      %2970 = vmatprep.subr.mxu0 0.0
      %2971 = vmatpush2.msra.mxu0 0.0
      %2972 = vmatprep.subr.mxu0 0.0
      %2973 = vmatpush2.msra.mxu0 0.0
      %2974 = vmatprep.mubr.f32.mxu0 0.0
      %2975 = vmatmul.mubr.f32.gmra.mxu0 %v2437
      %v2976 = vpop.f32.mrf.mxu0
      %v2977 = vadd.f32 0.0, %v2976
      %v2978 = vpop.f32.mrf.mxu0
      %2979 = vmatprep.mubr.f32.mxu0 0.0
      %2980 = vmatmul.mubr.f32.gmra.mxu0 %v2438
      %v2981 = vpop.f32.mrf.mxu0
      %v2982 = vadd.f32 0.0, %v2981
      %v2983 = vpop.f32.mrf.mxu0
      %2984 = vdwg.mxu0
      %2985 = vmatprep.subr.mxu0 0.0
      %2986 = vmatpush1.msra.mxu0 %v2561
      %2987 = vmatprep.subr.mxu0 0.0
      %2988 = vmatpush1.msra.mxu0 %v2560
      %2989 = vmatprep.subr.mxu0 0.0
      %2990 = vmatpush1.msra.mxu0 %v2559
      %2991 = vmatprep.subr.mxu0 0.0
      %2992 = vmatpush1.msra.mxu0 %v2558
      %2993 = vmatprep.subr.mxu0 0.0
      %2994 = vmatpush1.msra.mxu0 %v2557
      %2995 = vmatprep.subr.mxu0 0.0
      %2996 = vmatpush1.msra.mxu0 %v2556
      %2997 = vmatprep.subr.mxu0 0.0
      %2998 = vmatpush1.msra.mxu0 %v2555
      %2999 = vmatprep.subr.mxu0 0.0
      %3000 = vmatpush1.msra.mxu0 %v2554
      %3001 = vmatprep.subr.mxu0 0.0
      %3002 = vmatpush1.msra.mxu0 %v2553
      %3003 = vmatprep.subr.mxu0 0.0
      %3004 = vmatpush1.msra.mxu0 %v2552
      %3005 = vmatprep.subr.mxu0 0.0
      %3006 = vmatpush1.msra.mxu0 %v2551
      %3007 = vmatprep.subr.mxu0 0.0
      %3008 = vmatpush1.msra.mxu0 %v2550
      %3009 = vmatprep.subr.mxu0 0.0
      %3010 = vmatpush1.msra.mxu0 %v2549
      %3011 = vmatprep.subr.mxu0 0.0
      %3012 = vmatpush1.msra.mxu0 %v2548
      %3013 = vmatprep.subr.mxu0 0.0
      %3014 = vmatpush1.msra.mxu0 %v2547
      %3015 = vmatprep.subr.mxu0 0.0
      %3016 = vmatpush1.msra.mxu0 %v2546
      %3017 = vmatprep.subr.mxu0 0.0
      %3018 = vmatpush2.msra.mxu0 0.0
      %3019 = vmatprep.subr.mxu0 0.0
      %3020 = vmatpush2.msra.mxu0 0.0
      %3021 = vmatprep.subr.mxu0 0.0
      %3022 = vmatpush2.msra.mxu0 0.0
      %3023 = vmatprep.subr.mxu0 0.0
      %3024 = vmatpush2.msra.mxu0 0.0
      %3025 = vmatprep.subr.mxu0 0.0
      %3026 = vmatpush2.msra.mxu0 0.0
      %3027 = vmatprep.subr.mxu0 0.0
      %3028 = vmatpush2.msra.mxu0 0.0
      %3029 = vmatprep.subr.mxu0 0.0
      %3030 = vmatpush2.msra.mxu0 0.0
      %3031 = vmatprep.subr.mxu0 0.0
      %3032 = vmatpush2.msra.mxu0 0.0
      %3033 = vmatprep.subr.mxu0 0.0
      %3034 = vmatpush2.msra.mxu0 0.0
      %3035 = vmatprep.subr.mxu0 0.0
      %3036 = vmatpush2.msra.mxu0 0.0
      %3037 = vmatprep.subr.mxu0 0.0
      %3038 = vmatpush2.msra.mxu0 0.0
      %3039 = vmatprep.subr.mxu0 0.0
      %3040 = vmatpush2.msra.mxu0 0.0
      %3041 = vmatprep.subr.mxu0 0.0
      %3042 = vmatpush2.msra.mxu0 0.0
      %3043 = vmatprep.subr.mxu0 0.0
      %3044 = vmatpush2.msra.mxu0 0.0
      %3045 = vmatprep.subr.mxu0 0.0
      %3046 = vmatpush2.msra.mxu0 0.0
      %3047 = vmatprep.subr.mxu0 0.0
      %3048 = vmatpush2.msra.mxu0 0.0
      %3049 = vmatprep.mubr.f32.mxu0 0.0
      %3050 = vmatmul.mubr.f32.gmra.mxu0 %v2977
      %v3051 = vpop.f32.mrf.mxu0
      %v3052 = vadd.f32 0.0, %v3051
      %v3053 = vpop.f32.mrf.mxu0
      %3054 = vmatprep.mubr.f32.mxu0 0.0
      %3055 = vmatmul.mubr.f32.gmra.mxu0 %v2982
      %v3056 = vpop.f32.mrf.mxu0
      %v3057 = vadd.f32 0.0, %v3056
      %v3058 = vpop.f32.mrf.mxu0
      %3059 = vdwg.mxu0
      %v3060 = vmul.f32 %v3052, 0.00390625
      %v3061 = vmul.f32 %v3057, 0.00390625
      %v3062 = vsel %vm2639, %v3060, -inf
      %v3063 = vsel %vm2639, %v3061, -inf
      %v3064 = vmax.f32 %v3062, %v3063
      %v3065 = vrot.slane %v3064, 4
      %v3066 = vmax.f32 %v3064, %v3065
      %v3067 = vrot.slane %v3066, 2
      %v3068 = vmax.f32 %v3066, %v3067
      %v3069 = vrot.slane %v3068, 1
      %v3070 = vmax.f32 %v3068, %v3069
      %v3071 = vsub.f32 %v3060, %v3070
      %v3072 = vsub.f32 %v3061, %v3070
      %v3073 = vmul.f32 %v3071, 1.442695
      %v3074 = vpow.pop %v3073
      %v3075 = vmul.f32 %v3072, 1.442695
      %v3076 = vpow.pop %v3075
      %v3077 = vsel %vm2639, %v3074, 0.0
      %v3078 = vsel %vm2639, %v3076, 0.0
      %v3079 = vadd.f32 %v3077, %v3078
      %v3080 = vrot.slane %v3079, 4
      %v3081 = vadd.f32 %v3079, %v3080
      %v3082 = vrot.slane %v3081, 2
      %v3083 = vadd.f32 %v3081, %v3082
      %v3084 = vrot.slane %v3083, 1
      %v3085 = vadd.f32 %v3083, %v3084
      %v3086 = vrcp.pop %v3085
      %v3087 = vmul.f32 %v3074, %v3086
      %v3088 = vmul.f32 %v3076, %v3086
      %v3089 = vadd.f32 %v2667, %v3087
      %v3090 = vadd.f32 %v2668, %v3088
      %v3092 = vsel %vm2639, %v2546, 0
      %v3095 = vsel %vm2639, %v2547, 0
      %v3098 = vsel %vm2639, %v2548, 0
      %v3101 = vsel %vm2639, %v2549, 0
      %v3104 = vsel %vm2639, %v2550, 0
      %v3107 = vsel %vm2639, %v2551, 0
      %v3110 = vsel %vm2639, %v2552, 0
      %v3113 = vsel %vm2639, %v2553, 0
      %v3116 = vsel %vm2639, %v2554, 0
      %v3119 = vsel %vm2639, %v2555, 0
      %v3122 = vsel %vm2639, %v2556, 0
      %v3125 = vsel %vm2639, %v2557, 0
      %v3128 = vsel %vm2639, %v2558, 0
      %v3131 = vsel %vm2639, %v2559, 0
      %v3134 = vsel %vm2639, %v2560, 0
      %v3137 = vsel %vm2639, %v2561, 0
      %3139 = vmatprep.subr.mxu0 0.0
      %3140 = vmatpush1.msra.mxu0 0.0
      %3141 = vmatprep.subr.mxu0 0.0
      %3142 = vmatpush1.msra.mxu0 0.0
      %3143 = vmatprep.subr.mxu0 0.0
      %3144 = vmatpush1.msra.mxu0 0.0
      %3145 = vmatprep.subr.mxu0 0.0
      %3146 = vmatpush1.msra.mxu0 0.0
      %3147 = vmatprep.subr.mxu0 0.0
      %3148 = vmatpush1.msra.mxu0 0.0
      %3149 = vmatprep.subr.mxu0 0.0
      %3150 = vmatpush1.msra.mxu0 0.0
      %3151 = vmatprep.subr.mxu0 0.0
      %3152 = vmatpush1.msra.mxu0 0.0
      %3153 = vmatprep.subr.mxu0 0.0
      %3154 = vmatpush1.msra.mxu0 0.0
      %3155 = vmatprep.subr.mxu0 0.0
      %3156 = vmatpush1.msra.mxu0 0.0
      %3157 = vmatprep.subr.mxu0 0.0
      %3158 = vmatpush1.msra.mxu0 0.0
      %3159 = vmatprep.subr.mxu0 0.0
      %3160 = vmatpush1.msra.mxu0 0.0
      %3161 = vmatprep.subr.mxu0 0.0
      %3162 = vmatpush1.msra.mxu0 0.0
      %3163 = vmatprep.subr.mxu0 0.0
      %3164 = vmatpush1.msra.mxu0 0.0
      %3165 = vmatprep.subr.mxu0 0.0
      %3166 = vmatpush1.msra.mxu0 0.0
      %3167 = vmatprep.subr.mxu0 0.0
      %3168 = vmatpush1.msra.mxu0 %v3090
      %3169 = vmatprep.subr.mxu0 0.0
      %3170 = vmatpush1.msra.mxu0 %v3089
      %3171 = vmatprep.subr.mxu0 0.0
      %3172 = vmatpush2.msra.mxu0 0.0
      %3173 = vmatprep.subr.mxu0 0.0
      %3174 = vmatpush2.msra.mxu0 0.0
      %3175 = vmatprep.subr.mxu0 0.0
      %3176 = vmatpush2.msra.mxu0 0.0
      %3177 = vmatprep.subr.mxu0 0.0
      %3178 = vmatpush2.msra.mxu0 0.0
      %3179 = vmatprep.subr.mxu0 0.0
      %3180 = vmatpush2.msra.mxu0 0.0
      %3181 = vmatprep.subr.mxu0 0.0
      %3182 = vmatpush2.msra.mxu0 0.0
      %3183 = vmatprep.subr.mxu0 0.0
      %3184 = vmatpush2.msra.mxu0 0.0
      %3185 = vmatprep.subr.mxu0 0.0
      %3186 = vmatpush2.msra.mxu0 0.0
      %3187 = vmatprep.subr.mxu0 0.0
      %3188 = vmatpush2.msra.mxu0 0.0
      %3189 = vmatprep.subr.mxu0 0.0
      %3190 = vmatpush2.msra.mxu0 0.0
      %3191 = vmatprep.subr.mxu0 0.0
      %3192 = vmatpush2.msra.mxu0 0.0
      %3193 = vmatprep.subr.mxu0 0.0
      %3194 = vmatpush2.msra.mxu0 0.0
      %3195 = vmatprep.subr.mxu0 0.0
      %3196 = vmatpush2.msra.mxu0 0.0
      %3197 = vmatprep.subr.mxu0 0.0
      %3198 = vmatpush2.msra.mxu0 0.0
      %3199 = vmatprep.subr.mxu0 0.0
      %3200 = vmatpush2.msra.mxu0 0.0
      %3201 = vmatprep.subr.mxu0 0.0
      %3202 = vmatpush2.msra.mxu0 0.0
      %3203 = vmatprep.mubr.f32.mxu0 0.0
      %3204 = vmatmul.mubr.f32.gmra.mxu0 %v3092
      %v3205 = vpop.f32.mrf.mxu0
      %v3206 = vadd.f32 0.0, %v3205
      %v3207 = vpop.f32.mrf.mxu0
      %3208 = vmatprep.mubr.f32.mxu0 0.0
      %3209 = vmatmul.mubr.f32.gmra.mxu0 %v3095
      %v3210 = vpop.f32.mrf.mxu0
      %v3211 = vadd.f32 0.0, %v3210
      %v3212 = vpop.f32.mrf.mxu0
      %3213 = vmatprep.mubr.f32.mxu0 0.0
      %3214 = vmatmul.mubr.f32.gmra.mxu0 %v3098
      %v3215 = vpop.f32.mrf.mxu0
      %v3216 = vadd.f32 0.0, %v3215
      %v3217 = vpop.f32.mrf.mxu0
      %3218 = vmatprep.mubr.f32.mxu0 0.0
      %3219 = vmatmul.mubr.f32.gmra.mxu0 %v3101
      %v3220 = vpop.f32.mrf.mxu0
      %v3221 = vadd.f32 0.0, %v3220
      %v3222 = vpop.f32.mrf.mxu0
      %3223 = vmatprep.mubr.f32.mxu0 0.0
      %3224 = vmatmul.mubr.f32.gmra.mxu0 %v3104
      %v3225 = vpop.f32.mrf.mxu0
      %v3226 = vadd.f32 0.0, %v3225
      %v3227 = vpop.f32.mrf.mxu0
      %3228 = vmatprep.mubr.f32.mxu0 0.0
      %3229 = vmatmul.mubr.f32.gmra.mxu0 %v3107
      %v3230 = vpop.f32.mrf.mxu0
      %v3231 = vadd.f32 0.0, %v3230
      %v3232 = vpop.f32.mrf.mxu0
      %3233 = vmatprep.mubr.f32.mxu0 0.0
      %3234 = vmatmul.mubr.f32.gmra.mxu0 %v3110
      %v3235 = vpop.f32.mrf.mxu0
      %v3236 = vadd.f32 0.0, %v3235
      %v3237 = vpop.f32.mrf.mxu0
      %3238 = vmatprep.mubr.f32.mxu0 0.0
      %3239 = vmatmul.mubr.f32.gmra.mxu0 %v3113
      %v3240 = vpop.f32.mrf.mxu0
      %v3241 = vadd.f32 0.0, %v3240
      %v3242 = vpop.f32.mrf.mxu0
      %3243 = vmatprep.mubr.f32.mxu0 0.0
      %3244 = vmatmul.mubr.f32.gmra.mxu0 %v3116
      %v3245 = vpop.f32.mrf.mxu0
      %v3246 = vadd.f32 0.0, %v3245
      %v3247 = vpop.f32.mrf.mxu0
      %3248 = vmatprep.mubr.f32.mxu0 0.0
      %3249 = vmatmul.mubr.f32.gmra.mxu0 %v3119
      %v3250 = vpop.f32.mrf.mxu0
      %v3251 = vadd.f32 0.0, %v3250
      %v3252 = vpop.f32.mrf.mxu0
      %3253 = vmatprep.mubr.f32.mxu0 0.0
      %3254 = vmatmul.mubr.f32.gmra.mxu0 %v3122
      %v3255 = vpop.f32.mrf.mxu0
      %v3256 = vadd.f32 0.0, %v3255
      %v3257 = vpop.f32.mrf.mxu0
      %3258 = vmatprep.mubr.f32.mxu0 0.0
      %3259 = vmatmul.mubr.f32.gmra.mxu0 %v3125
      %v3260 = vpop.f32.mrf.mxu0
      %v3261 = vadd.f32 0.0, %v3260
      %v3262 = vpop.f32.mrf.mxu0
      %3263 = vmatprep.mubr.f32.mxu0 0.0
      %3264 = vmatmul.mubr.f32.gmra.mxu0 %v3128
      %v3265 = vpop.f32.mrf.mxu0
      %v3266 = vadd.f32 0.0, %v3265
      %v3267 = vpop.f32.mrf.mxu0
      %3268 = vmatprep.mubr.f32.mxu0 0.0
      %3269 = vmatmul.mubr.f32.gmra.mxu0 %v3131
      %v3270 = vpop.f32.mrf.mxu0
      %v3271 = vadd.f32 0.0, %v3270
      %v3272 = vpop.f32.mrf.mxu0
      %3273 = vmatprep.mubr.f32.mxu0 0.0
      %3274 = vmatmul.mubr.f32.gmra.mxu0 %v3134
      %v3275 = vpop.f32.mrf.mxu0
      %v3276 = vadd.f32 0.0, %v3275
      %v3277 = vpop.f32.mrf.mxu0
      %3278 = vmatprep.mubr.f32.mxu0 0.0
      %3279 = vmatmul.mubr.f32.gmra.mxu0 %v3137
      %v3280 = vpop.f32.mrf.mxu0
      %v3281 = vadd.f32 0.0, %v3280
      %v3282 = vpop.f32.mrf.mxu0
      %3283 = vdwg.mxu0
      %v3285 = vsel %vm2639, %v3206, 0
      %v3288 = vsel %vm2639, %v3211, 0
      %v3291 = vsel %vm2639, %v3216, 0
      %v3294 = vsel %vm2639, %v3221, 0
      %v3297 = vsel %vm2639, %v3226, 0
      %v3300 = vsel %vm2639, %v3231, 0
      %v3303 = vsel %vm2639, %v3236, 0
      %v3306 = vsel %vm2639, %v3241, 0
      %v3309 = vsel %vm2639, %v3246, 0
      %v3312 = vsel %vm2639, %v3251, 0
      %v3315 = vsel %vm2639, %v3256, 0
      %v3318 = vsel %vm2639, %v3261, 0
      %v3321 = vsel %vm2639, %v3266, 0
      %v3324 = vsel %vm2639, %v3271, 0
      %v3327 = vsel %vm2639, %v3276, 0
      %v3330 = vsel %vm2639, %v3281, 0
      %3332 = vmatprep.subr.mxu0 0.0
      %3333 = vmatpush1.msra.mxu0 0.0
      %3334 = vmatprep.subr.mxu0 0.0
      %3335 = vmatpush1.msra.mxu0 0.0
      %3336 = vmatprep.subr.mxu0 0.0
      %3337 = vmatpush1.msra.mxu0 0.0
      %3338 = vmatprep.subr.mxu0 0.0
      %3339 = vmatpush1.msra.mxu0 0.0
      %3340 = vmatprep.subr.mxu0 0.0
      %3341 = vmatpush1.msra.mxu0 0.0
      %3342 = vmatprep.subr.mxu0 0.0
      %3343 = vmatpush1.msra.mxu0 0.0
      %3344 = vmatprep.subr.mxu0 0.0
      %3345 = vmatpush1.msra.mxu0 0.0
      %3346 = vmatprep.subr.mxu0 0.0
      %3347 = vmatpush1.msra.mxu0 0.0
      %3348 = vmatprep.subr.mxu0 0.0
      %3349 = vmatpush1.msra.mxu0 0.0
      %3350 = vmatprep.subr.mxu0 0.0
      %3351 = vmatpush1.msra.mxu0 0.0
      %3352 = vmatprep.subr.mxu0 0.0
      %3353 = vmatpush1.msra.mxu0 0.0
      %3354 = vmatprep.subr.mxu0 0.0
      %3355 = vmatpush1.msra.mxu0 0.0
      %3356 = vmatprep.subr.mxu0 0.0
      %3357 = vmatpush1.msra.mxu0 0.0
      %3358 = vmatprep.subr.mxu0 0.0
      %3359 = vmatpush1.msra.mxu0 0.0
      %3360 = vmatprep.subr.mxu0 0.0
      %3361 = vmatpush1.msra.mxu0 %v2438
      %3362 = vmatprep.subr.mxu0 0.0
      %3363 = vmatpush1.msra.mxu0 %v2437
      %3364 = vmatprep.subr.mxu0 0.0
      %3365 = vmatpush2.msra.mxu0 0.0
      %3366 = vmatprep.subr.mxu0 0.0
      %3367 = vmatpush2.msra.mxu0 0.0
      %3368 = vmatprep.subr.mxu0 0.0
      %3369 = vmatpush2.msra.mxu0 0.0
      %3370 = vmatprep.subr.mxu0 0.0
      %3371 = vmatpush2.msra.mxu0 0.0
      %3372 = vmatprep.subr.mxu0 0.0
      %3373 = vmatpush2.msra.mxu0 0.0
      %3374 = vmatprep.subr.mxu0 0.0
      %3375 = vmatpush2.msra.mxu0 0.0
      %3376 = vmatprep.subr.mxu0 0.0
      %3377 = vmatpush2.msra.mxu0 0.0
      %3378 = vmatprep.subr.mxu0 0.0
      %3379 = vmatpush2.msra.mxu0 0.0
      %3380 = vmatprep.subr.mxu0 0.0
      %3381 = vmatpush2.msra.mxu0 0.0
      %3382 = vmatprep.subr.mxu0 0.0
      %3383 = vmatpush2.msra.mxu0 0.0
      %3384 = vmatprep.subr.mxu0 0.0
      %3385 = vmatpush2.msra.mxu0 0.0
      %3386 = vmatprep.subr.mxu0 0.0
      %3387 = vmatpush2.msra.mxu0 0.0
      %3388 = vmatprep.subr.mxu0 0.0
      %3389 = vmatpush2.msra.mxu0 0.0
      %3390 = vmatprep.subr.mxu0 0.0
      %3391 = vmatpush2.msra.mxu0 0.0
      %3392 = vmatprep.subr.mxu0 0.0
      %3393 = vmatpush2.msra.mxu0 0.0
      %3394 = vmatprep.subr.mxu0 0.0
      %3395 = vmatpush2.msra.mxu0 0.0
      %3396 = vmatprep.mubr.f32.mxu0 0.0
      %3397 = vmatmul.mubr.f32.gmra.mxu0 %v3285
      %v3398 = vpop.f32.mrf.mxu0
      %v3399 = vadd.f32 0.0, %v3398
      %v3400 = vpop.f32.mrf.mxu0
      %3401 = vmatprep.mubr.f32.mxu0 0.0
      %3402 = vmatmul.mubr.f32.gmra.mxu0 %v3288
      %v3403 = vpop.f32.mrf.mxu0
      %v3404 = vadd.f32 0.0, %v3403
      %v3405 = vpop.f32.mrf.mxu0
      %3406 = vmatprep.mubr.f32.mxu0 0.0
      %3407 = vmatmul.mubr.f32.gmra.mxu0 %v3291
      %v3408 = vpop.f32.mrf.mxu0
      %v3409 = vadd.f32 0.0, %v3408
      %v3410 = vpop.f32.mrf.mxu0
      %3411 = vmatprep.mubr.f32.mxu0 0.0
      %3412 = vmatmul.mubr.f32.gmra.mxu0 %v3294
      %v3413 = vpop.f32.mrf.mxu0
      %v3414 = vadd.f32 0.0, %v3413
      %v3415 = vpop.f32.mrf.mxu0
      %3416 = vmatprep.mubr.f32.mxu0 0.0
      %3417 = vmatmul.mubr.f32.gmra.mxu0 %v3297
      %v3418 = vpop.f32.mrf.mxu0
      %v3419 = vadd.f32 0.0, %v3418
      %v3420 = vpop.f32.mrf.mxu0
      %3421 = vmatprep.mubr.f32.mxu0 0.0
      %3422 = vmatmul.mubr.f32.gmra.mxu0 %v3300
      %v3423 = vpop.f32.mrf.mxu0
      %v3424 = vadd.f32 0.0, %v3423
      %v3425 = vpop.f32.mrf.mxu0
      %3426 = vmatprep.mubr.f32.mxu0 0.0
      %3427 = vmatmul.mubr.f32.gmra.mxu0 %v3303
      %v3428 = vpop.f32.mrf.mxu0
      %v3429 = vadd.f32 0.0, %v3428
      %v3430 = vpop.f32.mrf.mxu0
      %3431 = vmatprep.mubr.f32.mxu0 0.0
      %3432 = vmatmul.mubr.f32.gmra.mxu0 %v3306
      %v3433 = vpop.f32.mrf.mxu0
      %v3434 = vadd.f32 0.0, %v3433
      %v3435 = vpop.f32.mrf.mxu0
      %3436 = vmatprep.mubr.f32.mxu0 0.0
      %3437 = vmatmul.mubr.f32.gmra.mxu0 %v3309
      %v3438 = vpop.f32.mrf.mxu0
      %v3439 = vadd.f32 0.0, %v3438
      %v3440 = vpop.f32.mrf.mxu0
      %3441 = vmatprep.mubr.f32.mxu0 0.0
      %3442 = vmatmul.mubr.f32.gmra.mxu0 %v3312
      %v3443 = vpop.f32.mrf.mxu0
      %v3444 = vadd.f32 0.0, %v3443
      %v3445 = vpop.f32.mrf.mxu0
      %3446 = vmatprep.mubr.f32.mxu0 0.0
      %3447 = vmatmul.mubr.f32.gmra.mxu0 %v3315
      %v3448 = vpop.f32.mrf.mxu0
      %v3449 = vadd.f32 0.0, %v3448
      %v3450 = vpop.f32.mrf.mxu0
      %3451 = vmatprep.mubr.f32.mxu0 0.0
      %3452 = vmatmul.mubr.f32.gmra.mxu0 %v3318
      %v3453 = vpop.f32.mrf.mxu0
      %v3454 = vadd.f32 0.0, %v3453
      %v3455 = vpop.f32.mrf.mxu0
      %3456 = vmatprep.mubr.f32.mxu0 0.0
      %3457 = vmatmul.mubr.f32.gmra.mxu0 %v3321
      %v3458 = vpop.f32.mrf.mxu0
      %v3459 = vadd.f32 0.0, %v3458
      %v3460 = vpop.f32.mrf.mxu0
      %3461 = vmatprep.mubr.f32.mxu0 0.0
      %3462 = vmatmul.mubr.f32.gmra.mxu0 %v3324
      %v3463 = vpop.f32.mrf.mxu0
      %v3464 = vadd.f32 0.0, %v3463
      %v3465 = vpop.f32.mrf.mxu0
      %3466 = vmatprep.mubr.f32.mxu0 0.0
      %3467 = vmatmul.mubr.f32.gmra.mxu0 %v3327
      %v3468 = vpop.f32.mrf.mxu0
      %v3469 = vadd.f32 0.0, %v3468
      %v3470 = vpop.f32.mrf.mxu0
      %3471 = vmatprep.mubr.f32.mxu0 0.0
      %3472 = vmatmul.mubr.f32.gmra.mxu0 %v3330
      %v3473 = vpop.f32.mrf.mxu0
      %v3474 = vadd.f32 0.0, %v3473
      %v3475 = vpop.f32.mrf.mxu0
      %3476 = vdwg.mxu0
      %v3477 = vmul.f32 %v3399, %v2439
      %v3478 = vmul.f32 %v3404, %v2440
      %v3479 = vmul.f32 %v3409, %v2441
      %v3480 = vmul.f32 %v3414, %v2442
      %v3481 = vmul.f32 %v3419, %v2443
      %v3482 = vmul.f32 %v3424, %v2444
      %v3483 = vmul.f32 %v3429, %v2445
      %v3484 = vmul.f32 %v3434, %v2446
      %v3485 = vmul.f32 %v3439, %v2447
      %v3486 = vmul.f32 %v3444, %v2448
      %v3487 = vmul.f32 %v3449, %v2449
      %v3488 = vmul.f32 %v3454, %v2450
      %v3489 = vmul.f32 %v3459, %v2451
      %v3490 = vmul.f32 %v3464, %v2452
      %v3491 = vmul.f32 %v3469, %v2453
      %v3492 = vmul.f32 %v3474, %v2454
      %v3493 = vld [vmem:[%s6] sm:$0xff]
      %v3494 = vld [vmem:[%s6 + $0x8] sm:$0xff]
      %v3495 = vld [vmem:[%s6 + $0x10] sm:$0xff]
      %v3496 = vld [vmem:[%s6 + $0x18] sm:$0xff]
      %v3497 = vld [vmem:[%s6 + $0x20] sm:$0xff]
      %v3498 = vld [vmem:[%s6 + $0x28] sm:$0xff]
      %v3499 = vld [vmem:[%s6 + $0x30] sm:$0xff]
      %v3500 = vld [vmem:[%s6 + $0x38] sm:$0xff]
      %v3501 = vld [vmem:[%s6 + $0x40] sm:$0xff]
      %v3502 = vld [vmem:[%s6 + $0x48] sm:$0xff]
      %v3503 = vld [vmem:[%s6 + $0x50] sm:$0xff]
      %v3504 = vld [vmem:[%s6 + $0x58] sm:$0xff]
      %v3505 = vld [vmem:[%s6 + $0x60] sm:$0xff]
      %v3506 = vld [vmem:[%s6 + $0x68] sm:$0xff]
      %v3507 = vld [vmem:[%s6 + $0x70] sm:$0xff]
      %v3508 = vld [vmem:[%s6 + $0x78] sm:$0xff]
      %v3510 = vsel %vm755, %v3493, 0
      %v3513 = vsel %vm755, %v3494, 0
      %v3516 = vsel %vm755, %v3495, 0
      %v3519 = vsel %vm755, %v3496, 0
      %v3522 = vsel %vm755, %v3497, 0
      %v3525 = vsel %vm755, %v3498, 0
      %v3528 = vsel %vm755, %v3499, 0
      %v3531 = vsel %vm755, %v3500, 0
      %v3534 = vsel %vm755, %v3501, 0
      %v3537 = vsel %vm755, %v3502, 0
      %v3540 = vsel %vm755, %v3503, 0
      %v3543 = vsel %vm755, %v3504, 0
      %v3546 = vsel %vm755, %v3505, 0
      %v3549 = vsel %vm755, %v3506, 0
      %v3552 = vsel %vm755, %v3507, 0
      %v3555 = vsel %vm755, %v3508, 0
      %3557 = vmatprep.subr.mxu0 0.0
      %3558 = vmatpush1.msra.mxu0 0.0
      %3559 = vmatprep.subr.mxu0 0.0
      %3560 = vmatpush1.msra.mxu0 0.0
      %3561 = vmatprep.subr.mxu0 0.0
      %3562 = vmatpush1.msra.mxu0 0.0
      %3563 = vmatprep.subr.mxu0 0.0
      %3564 = vmatpush1.msra.mxu0 0.0
      %3565 = vmatprep.subr.mxu0 0.0
      %3566 = vmatpush1.msra.mxu0 0.0
      %3567 = vmatprep.subr.mxu0 0.0
      %3568 = vmatpush1.msra.mxu0 0.0
      %3569 = vmatprep.subr.mxu0 0.0
      %3570 = vmatpush1.msra.mxu0 0.0
      %3571 = vmatprep.subr.mxu0 0.0
      %3572 = vmatpush1.msra.mxu0 0.0
      %3573 = vmatprep.subr.mxu0 0.0
      %3574 = vmatpush1.msra.mxu0 %v554
      %3575 = vmatprep.subr.mxu0 0.0
      %3576 = vmatpush1.msra.mxu0 %v553
      %3577 = vmatprep.subr.mxu0 0.0
      %3578 = vmatpush1.msra.mxu0 %v552
      %3579 = vmatprep.subr.mxu0 0.0
      %3580 = vmatpush1.msra.mxu0 %v551
      %3581 = vmatprep.subr.mxu0 0.0
      %3582 = vmatpush1.msra.mxu0 %v550
      %3583 = vmatprep.subr.mxu0 0.0
      %3584 = vmatpush1.msra.mxu0 %v549
      %3585 = vmatprep.subr.mxu0 0.0
      %3586 = vmatpush1.msra.mxu0 %v548
      %3587 = vmatprep.subr.mxu0 0.0
      %3588 = vmatpush1.msra.mxu0 %v547
      %3589 = vmatprep.subr.mxu0 0.0
      %3590 = vmatpush2.msra.mxu0 0.0
      %3591 = vmatprep.subr.mxu0 0.0
      %3592 = vmatpush2.msra.mxu0 0.0
      %3593 = vmatprep.subr.mxu0 0.0
      %3594 = vmatpush2.msra.mxu0 0.0
      %3595 = vmatprep.subr.mxu0 0.0
      %3596 = vmatpush2.msra.mxu0 0.0
      %3597 = vmatprep.subr.mxu0 0.0
      %3598 = vmatpush2.msra.mxu0 0.0
      %3599 = vmatprep.subr.mxu0 0.0
      %3600 = vmatpush2.msra.mxu0 0.0
      %3601 = vmatprep.subr.mxu0 0.0
      %3602 = vmatpush2.msra.mxu0 0.0
      %3603 = vmatprep.subr.mxu0 0.0
      %3604 = vmatpush2.msra.mxu0 0.0
      %3605 = vmatprep.subr.mxu0 0.0
      %3606 = vmatpush2.msra.mxu0 0.0
      %3607 = vmatprep.subr.mxu0 0.0
      %3608 = vmatpush2.msra.mxu0 0.0
      %3609 = vmatprep.subr.mxu0 0.0
      %3610 = vmatpush2.msra.mxu0 0.0
      %3611 = vmatprep.subr.mxu0 0.0
      %3612 = vmatpush2.msra.mxu0 0.0
      %3613 = vmatprep.subr.mxu0 0.0
      %3614 = vmatpush2.msra.mxu0 0.0
      %3615 = vmatprep.subr.mxu0 0.0
      %3616 = vmatpush2.msra.mxu0 0.0
      %3617 = vmatprep.subr.mxu0 0.0
      %3618 = vmatpush2.msra.mxu0 0.0
      %3619 = vmatprep.subr.mxu0 0.0
      %3620 = vmatpush2.msra.mxu0 0.0
      %3621 = vmatprep.mubr.f32.mxu0 0.0
      %3622 = vmatmul.mubr.f32.gmra.mxu0 %v3510
      %v3623 = vpop.f32.mrf.mxu0
      %v3624 = vadd.f32 0.0, %v3623
      %v3625 = vpop.f32.mrf.mxu0
      %3626 = vmatprep.mubr.f32.mxu0 0.0
      %3627 = vmatmul.mubr.f32.gmra.mxu0 %v3513
      %v3628 = vpop.f32.mrf.mxu0
      %v3629 = vadd.f32 0.0, %v3628
      %v3630 = vpop.f32.mrf.mxu0
      %3631 = vmatprep.mubr.f32.mxu0 0.0
      %3632 = vmatmul.mubr.f32.gmra.mxu0 %v3516
      %v3633 = vpop.f32.mrf.mxu0
      %v3634 = vadd.f32 0.0, %v3633
      %v3635 = vpop.f32.mrf.mxu0
      %3636 = vmatprep.mubr.f32.mxu0 0.0
      %3637 = vmatmul.mubr.f32.gmra.mxu0 %v3519
      %v3638 = vpop.f32.mrf.mxu0
      %v3639 = vadd.f32 0.0, %v3638
      %v3640 = vpop.f32.mrf.mxu0
      %3641 = vmatprep.mubr.f32.mxu0 0.0
      %3642 = vmatmul.mubr.f32.gmra.mxu0 %v3522
      %v3643 = vpop.f32.mrf.mxu0
      %v3644 = vadd.f32 0.0, %v3643
      %v3645 = vpop.f32.mrf.mxu0
      %3646 = vmatprep.mubr.f32.mxu0 0.0
      %3647 = vmatmul.mubr.f32.gmra.mxu0 %v3525
      %v3648 = vpop.f32.mrf.mxu0
      %v3649 = vadd.f32 0.0, %v3648
      %v3650 = vpop.f32.mrf.mxu0
      %3651 = vmatprep.mubr.f32.mxu0 0.0
      %3652 = vmatmul.mubr.f32.gmra.mxu0 %v3528
      %v3653 = vpop.f32.mrf.mxu0
      %v3654 = vadd.f32 0.0, %v3653
      %v3655 = vpop.f32.mrf.mxu0
      %3656 = vmatprep.mubr.f32.mxu0 0.0
      %3657 = vmatmul.mubr.f32.gmra.mxu0 %v3531
      %v3658 = vpop.f32.mrf.mxu0
      %v3659 = vadd.f32 0.0, %v3658
      %v3660 = vpop.f32.mrf.mxu0
      %3661 = vmatprep.mubr.f32.mxu0 0.0
      %3662 = vmatmul.mubr.f32.gmra.mxu0 %v3534
      %v3663 = vpop.f32.mrf.mxu0
      %v3664 = vadd.f32 0.0, %v3663
      %v3665 = vpop.f32.mrf.mxu0
      %3666 = vmatprep.mubr.f32.mxu0 0.0
      %3667 = vmatmul.mubr.f32.gmra.mxu0 %v3537
      %v3668 = vpop.f32.mrf.mxu0
      %v3669 = vadd.f32 0.0, %v3668
      %v3670 = vpop.f32.mrf.mxu0
      %3671 = vmatprep.mubr.f32.mxu0 0.0
      %3672 = vmatmul.mubr.f32.gmra.mxu0 %v3540
      %v3673 = vpop.f32.mrf.mxu0
      %v3674 = vadd.f32 0.0, %v3673
      %v3675 = vpop.f32.mrf.mxu0
      %3676 = vmatprep.mubr.f32.mxu0 0.0
      %3677 = vmatmul.mubr.f32.gmra.mxu0 %v3543
      %v3678 = vpop.f32.mrf.mxu0
      %v3679 = vadd.f32 0.0, %v3678
      %v3680 = vpop.f32.mrf.mxu0
      %3681 = vmatprep.mubr.f32.mxu0 0.0
      %3682 = vmatmul.mubr.f32.gmra.mxu0 %v3546
      %v3683 = vpop.f32.mrf.mxu0
      %v3684 = vadd.f32 0.0, %v3683
      %v3685 = vpop.f32.mrf.mxu0
      %3686 = vmatprep.mubr.f32.mxu0 0.0
      %3687 = vmatmul.mubr.f32.gmra.mxu0 %v3549
      %v3688 = vpop.f32.mrf.mxu0
      %v3689 = vadd.f32 0.0, %v3688
      %v3690 = vpop.f32.mrf.mxu0
      %3691 = vmatprep.mubr.f32.mxu0 0.0
      %3692 = vmatmul.mubr.f32.gmra.mxu0 %v3552
      %v3693 = vpop.f32.mrf.mxu0
      %v3694 = vadd.f32 0.0, %v3693
      %v3695 = vpop.f32.mrf.mxu0
      %3696 = vmatprep.mubr.f32.mxu0 0.0
      %3697 = vmatmul.mubr.f32.gmra.mxu0 %v3555
      %v3698 = vpop.f32.mrf.mxu0
      %v3699 = vadd.f32 0.0, %v3698
      %v3700 = vpop.f32.mrf.mxu0
      %3701 = vdwg.mxu0
      %3702 = vmatprep.subr.mxu0 0.0
      %3703 = vmatpush1.msra.mxu0 %v3492
      %3704 = vmatprep.subr.mxu0 0.0
      %3705 = vmatpush1.msra.mxu0 %v3491
      %3706 = vmatprep.subr.mxu0 0.0
      %3707 = vmatpush1.msra.mxu0 %v3490
      %3708 = vmatprep.subr.mxu0 0.0
      %3709 = vmatpush1.msra.mxu0 %v3489
      %3710 = vmatprep.subr.mxu0 0.0
      %3711 = vmatpush1.msra.mxu0 %v3488
      %3712 = vmatprep.subr.mxu0 0.0
      %3713 = vmatpush1.msra.mxu0 %v3487
      %3714 = vmatprep.subr.mxu0 0.0
      %3715 = vmatpush1.msra.mxu0 %v3486
      %3716 = vmatprep.subr.mxu0 0.0
      %3717 = vmatpush1.msra.mxu0 %v3485
      %3718 = vmatprep.subr.mxu0 0.0
      %3719 = vmatpush1.msra.mxu0 %v3484
      %3720 = vmatprep.subr.mxu0 0.0
      %3721 = vmatpush1.msra.mxu0 %v3483
      %3722 = vmatprep.subr.mxu0 0.0
      %3723 = vmatpush1.msra.mxu0 %v3482
      %3724 = vmatprep.subr.mxu0 0.0
      %3725 = vmatpush1.msra.mxu0 %v3481
      %3726 = vmatprep.subr.mxu0 0.0
      %3727 = vmatpush1.msra.mxu0 %v3480
      %3728 = vmatprep.subr.mxu0 0.0
      %3729 = vmatpush1.msra.mxu0 %v3479
      %3730 = vmatprep.subr.mxu0 0.0
      %3731 = vmatpush1.msra.mxu0 %v3478
      %3732 = vmatprep.subr.mxu0 0.0
      %3733 = vmatpush1.msra.mxu0 %v3477
      %3734 = vmatprep.subr.mxu0 0.0
      %3735 = vmatpush2.msra.mxu0 0.0
      %3736 = vmatprep.subr.mxu0 0.0
      %3737 = vmatpush2.msra.mxu0 0.0
      %3738 = vmatprep.subr.mxu0 0.0
      %3739 = vmatpush2.msra.mxu0 0.0
      %3740 = vmatprep.subr.mxu0 0.0
      %3741 = vmatpush2.msra.mxu0 0.0
      %3742 = vmatprep.subr.mxu0 0.0
      %3743 = vmatpush2.msra.mxu0 0.0
      %3744 = vmatprep.subr.mxu0 0.0
      %3745 = vmatpush2.msra.mxu0 0.0
      %3746 = vmatprep.subr.mxu0 0.0
      %3747 = vmatpush2.msra.mxu0 0.0
      %3748 = vmatprep.subr.mxu0 0.0
      %3749 = vmatpush2.msra.mxu0 0.0
      %3750 = vmatprep.subr.mxu0 0.0
      %3751 = vmatpush2.msra.mxu0 0.0
      %3752 = vmatprep.subr.mxu0 0.0
      %3753 = vmatpush2.msra.mxu0 0.0
      %3754 = vmatprep.subr.mxu0 0.0
      %3755 = vmatpush2.msra.mxu0 0.0
      %3756 = vmatprep.subr.mxu0 0.0
      %3757 = vmatpush2.msra.mxu0 0.0
      %3758 = vmatprep.subr.mxu0 0.0
      %3759 = vmatpush2.msra.mxu0 0.0
      %3760 = vmatprep.subr.mxu0 0.0
      %3761 = vmatpush2.msra.mxu0 0.0
      %3762 = vmatprep.subr.mxu0 0.0
      %3763 = vmatpush2.msra.mxu0 0.0
      %3764 = vmatprep.subr.mxu0 0.0
      %3765 = vmatpush2.msra.mxu0 0.0
      %3766 = vmatprep.mubr.f32.mxu0 0.0
      %3767 = vmatmul.mubr.f32.gmra.mxu0 %v3624
      %v3768 = vpop.f32.mrf.mxu0
      %v3769 = vadd.f32 0.0, %v3768
      %v3770 = vpop.f32.mrf.mxu0
      %3771 = vmatprep.mubr.f32.mxu0 0.0
      %3772 = vmatmul.mubr.f32.gmra.mxu0 %v3629
      %v3773 = vpop.f32.mrf.mxu0
      %v3774 = vadd.f32 0.0, %v3773
      %v3775 = vpop.f32.mrf.mxu0
      %3776 = vmatprep.mubr.f32.mxu0 0.0
      %3777 = vmatmul.mubr.f32.gmra.mxu0 %v3634
      %v3778 = vpop.f32.mrf.mxu0
      %v3779 = vadd.f32 0.0, %v3778
      %v3780 = vpop.f32.mrf.mxu0
      %3781 = vmatprep.mubr.f32.mxu0 0.0
      %3782 = vmatmul.mubr.f32.gmra.mxu0 %v3639
      %v3783 = vpop.f32.mrf.mxu0
      %v3784 = vadd.f32 0.0, %v3783
      %v3785 = vpop.f32.mrf.mxu0
      %3786 = vmatprep.mubr.f32.mxu0 0.0
      %3787 = vmatmul.mubr.f32.gmra.mxu0 %v3644
      %v3788 = vpop.f32.mrf.mxu0
      %v3789 = vadd.f32 0.0, %v3788
      %v3790 = vpop.f32.mrf.mxu0
      %3791 = vmatprep.mubr.f32.mxu0 0.0
      %3792 = vmatmul.mubr.f32.gmra.mxu0 %v3649
      %v3793 = vpop.f32.mrf.mxu0
      %v3794 = vadd.f32 0.0, %v3793
      %v3795 = vpop.f32.mrf.mxu0
      %3796 = vmatprep.mubr.f32.mxu0 0.0
      %3797 = vmatmul.mubr.f32.gmra.mxu0 %v3654
      %v3798 = vpop.f32.mrf.mxu0
      %v3799 = vadd.f32 0.0, %v3798
      %v3800 = vpop.f32.mrf.mxu0
      %3801 = vmatprep.mubr.f32.mxu0 0.0
      %3802 = vmatmul.mubr.f32.gmra.mxu0 %v3659
      %v3803 = vpop.f32.mrf.mxu0
      %v3804 = vadd.f32 0.0, %v3803
      %v3805 = vpop.f32.mrf.mxu0
      %3806 = vmatprep.mubr.f32.mxu0 0.0
      %3807 = vmatmul.mubr.f32.gmra.mxu0 %v3664
      %v3808 = vpop.f32.mrf.mxu0
      %v3809 = vadd.f32 0.0, %v3808
      %v3810 = vpop.f32.mrf.mxu0
      %3811 = vmatprep.mubr.f32.mxu0 0.0
      %3812 = vmatmul.mubr.f32.gmra.mxu0 %v3669
      %v3813 = vpop.f32.mrf.mxu0
      %v3814 = vadd.f32 0.0, %v3813
      %v3815 = vpop.f32.mrf.mxu0
      %3816 = vmatprep.mubr.f32.mxu0 0.0
      %3817 = vmatmul.mubr.f32.gmra.mxu0 %v3674
      %v3818 = vpop.f32.mrf.mxu0
      %v3819 = vadd.f32 0.0, %v3818
      %v3820 = vpop.f32.mrf.mxu0
      %3821 = vmatprep.mubr.f32.mxu0 0.0
      %3822 = vmatmul.mubr.f32.gmra.mxu0 %v3679
      %v3823 = vpop.f32.mrf.mxu0
      %v3824 = vadd.f32 0.0, %v3823
      %v3825 = vpop.f32.mrf.mxu0
      %3826 = vmatprep.mubr.f32.mxu0 0.0
      %3827 = vmatmul.mubr.f32.gmra.mxu0 %v3684
      %v3828 = vpop.f32.mrf.mxu0
      %v3829 = vadd.f32 0.0, %v3828
      %v3830 = vpop.f32.mrf.mxu0
      %3831 = vmatprep.mubr.f32.mxu0 0.0
      %3832 = vmatmul.mubr.f32.gmra.mxu0 %v3689
      %v3833 = vpop.f32.mrf.mxu0
      %v3834 = vadd.f32 0.0, %v3833
      %v3835 = vpop.f32.mrf.mxu0
      %3836 = vmatprep.mubr.f32.mxu0 0.0
      %3837 = vmatmul.mubr.f32.gmra.mxu0 %v3694
      %v3838 = vpop.f32.mrf.mxu0
      %v3839 = vadd.f32 0.0, %v3838
      %v3840 = vpop.f32.mrf.mxu0
      %3841 = vmatprep.mubr.f32.mxu0 0.0
      %3842 = vmatmul.mubr.f32.gmra.mxu0 %v3699
      %v3843 = vpop.f32.mrf.mxu0
      %v3844 = vadd.f32 0.0, %v3843
      %v3845 = vpop.f32.mrf.mxu0
      %3846 = vdwg.mxu0
      %v3847 = vadd.f32 %v2131, %v3769
      %v3848 = vadd.f32 %v2136, %v3774
      %v3849 = vadd.f32 %v2141, %v3779
      %v3850 = vadd.f32 %v2146, %v3784
      %v3851 = vadd.f32 %v2151, %v3789
      %v3852 = vadd.f32 %v2156, %v3794
      %v3853 = vadd.f32 %v2161, %v3799
      %v3854 = vadd.f32 %v2166, %v3804
      %v3855 = vadd.f32 %v2171, %v3809
      %v3856 = vadd.f32 %v2176, %v3814
      %v3857 = vadd.f32 %v2181, %v3819
      %v3858 = vadd.f32 %v2186, %v3824
      %v3859 = vadd.f32 %v2191, %v3829
      %v3860 = vadd.f32 %v2196, %v3834
      %v3861 = vadd.f32 %v2201, %v3839
      %v3862 = vadd.f32 %v2206, %v3844
      %s3863 = scalar_lea.vmem %s8, 16
      %v3864 = vld [vmem:[%s3863] sm:$0xff]
      %v3865 = vld [vmem:[%s3863 + $0x8] sm:$0xff]
      %3866 = vxpose.xlu0.b32.start [1/16] %v935, 128
      %3867 = vxpose.xlu0.b32.cont [2/16] %v940, 128
      %3868 = vxpose.xlu0.b32.cont [3/16] %v945, 128
      %3869 = vxpose.xlu0.b32.cont [4/16] %v950, 128
      %3870 = vxpose.xlu0.b32.cont [5/16] 0.0, 128
      %3871 = vxpose.xlu0.b32.cont [6/16] 0.0, 128
      %3872 = vxpose.xlu0.b32.cont [7/16] 0.0, 128
      %3873 = vxpose.xlu0.b32.cont [8/16] 0.0, 128
      %3874 = vxpose.xlu0.b32.cont [9/16] 0.0, 128
      %3875 = vxpose.xlu0.b32.cont [10/16] 0.0, 128
      %3876 = vxpose.xlu0.b32.cont [11/16] 0.0, 128
      %3877 = vxpose.xlu0.b32.cont [12/16] 0.0, 128
      %3878 = vxpose.xlu0.b32.cont [13/16] 0.0, 128
      %3879 = vxpose.xlu0.b32.cont [14/16] 0.0, 128
      %3880 = vxpose.xlu0.b32.cont [15/16] 0.0, 128
      %3881 = vxpose.xlu0.b32.end [16/16] 0.0, 128
      %v3882 = vpop.trf.xlu0
      %v3883 = vpop.trf.xlu0
      %v3884 = vpop.trf.xlu0
      %v3885 = vpop.trf.xlu0
      %v3886 = vpop.trf.xlu0
      %v3887 = vpop.trf.xlu0
      %v3888 = vpop.trf.xlu0
      %v3889 = vpop.trf.xlu0
      %v3890 = vpop.trf.xlu0
      %v3891 = vpop.trf.xlu0
      %v3892 = vpop.trf.xlu0
      %v3893 = vpop.trf.xlu0
      %v3894 = vpop.trf.xlu0
      %v3895 = vpop.trf.xlu0
      %v3896 = vpop.trf.xlu0
      %v3897 = vpop.trf.xlu0
      %v3899 = vsel %vm2243, %v3882, 0
      %v3902 = vsel %vm2243, %v3883, 0
      %v3905 = vsel %vm2243, %v3884, 0
      %v3908 = vsel %vm2243, %v3885, 0
      %v3911 = vsel %vm2243, %v3886, 0
      %v3914 = vsel %vm2243, %v3887, 0
      %v3917 = vsel %vm2243, %v3888, 0
      %v3920 = vsel %vm2243, %v3889, 0
      %v3923 = vsel %vm2243, %v3890, 0
      %v3926 = vsel %vm2243, %v3891, 0
      %v3929 = vsel %vm2243, %v3892, 0
      %v3932 = vsel %vm2243, %v3893, 0
      %v3935 = vsel %vm2243, %v3894, 0
      %v3938 = vsel %vm2243, %v3895, 0
      %v3941 = vsel %vm2243, %v3896, 0
      %v3944 = vsel %vm2243, %v3897, 0
      %3946 = vmatprep.subr.mxu0 0.0
      %3947 = vmatpush1.msra.mxu0 0.0
      %3948 = vmatprep.subr.mxu0 0.0
      %3949 = vmatpush1.msra.mxu0 0.0
      %3950 = vmatprep.subr.mxu0 0.0
      %3951 = vmatpush1.msra.mxu0 0.0
      %3952 = vmatprep.subr.mxu0 0.0
      %3953 = vmatpush1.msra.mxu0 0.0
      %3954 = vmatprep.subr.mxu0 0.0
      %3955 = vmatpush1.msra.mxu0 0.0
      %3956 = vmatprep.subr.mxu0 0.0
      %3957 = vmatpush1.msra.mxu0 0.0
      %3958 = vmatprep.subr.mxu0 0.0
      %3959 = vmatpush1.msra.mxu0 0.0
      %3960 = vmatprep.subr.mxu0 0.0
      %3961 = vmatpush1.msra.mxu0 0.0
      %3962 = vmatprep.subr.mxu0 0.0
      %3963 = vmatpush1.msra.mxu0 0.0
      %3964 = vmatprep.subr.mxu0 0.0
      %3965 = vmatpush1.msra.mxu0 0.0
      %3966 = vmatprep.subr.mxu0 0.0
      %3967 = vmatpush1.msra.mxu0 0.0
      %3968 = vmatprep.subr.mxu0 0.0
      %3969 = vmatpush1.msra.mxu0 0.0
      %3970 = vmatprep.subr.mxu0 0.0
      %3971 = vmatpush1.msra.mxu0 %v970
      %3972 = vmatprep.subr.mxu0 0.0
      %3973 = vmatpush1.msra.mxu0 %v965
      %3974 = vmatprep.subr.mxu0 0.0
      %3975 = vmatpush1.msra.mxu0 %v960
      %3976 = vmatprep.subr.mxu0 0.0
      %3977 = vmatpush1.msra.mxu0 %v955
      %3978 = vmatprep.subr.mxu0 0.0
      %3979 = vmatpush2.msra.mxu0 0.0
      %3980 = vmatprep.subr.mxu0 0.0
      %3981 = vmatpush2.msra.mxu0 0.0
      %3982 = vmatprep.subr.mxu0 0.0
      %3983 = vmatpush2.msra.mxu0 0.0
      %3984 = vmatprep.subr.mxu0 0.0
      %3985 = vmatpush2.msra.mxu0 0.0
      %3986 = vmatprep.subr.mxu0 0.0
      %3987 = vmatpush2.msra.mxu0 0.0
      %3988 = vmatprep.subr.mxu0 0.0
      %3989 = vmatpush2.msra.mxu0 0.0
      %3990 = vmatprep.subr.mxu0 0.0
      %3991 = vmatpush2.msra.mxu0 0.0
      %3992 = vmatprep.subr.mxu0 0.0
      %3993 = vmatpush2.msra.mxu0 0.0
      %3994 = vmatprep.subr.mxu0 0.0
      %3995 = vmatpush2.msra.mxu0 0.0
      %3996 = vmatprep.subr.mxu0 0.0
      %3997 = vmatpush2.msra.mxu0 0.0
      %3998 = vmatprep.subr.mxu0 0.0
      %3999 = vmatpush2.msra.mxu0 0.0
      %4000 = vmatprep.subr.mxu0 0.0
      %4001 = vmatpush2.msra.mxu0 0.0
      %4002 = vmatprep.subr.mxu0 0.0
      %4003 = vmatpush2.msra.mxu0 0.0
      %4004 = vmatprep.subr.mxu0 0.0
      %4005 = vmatpush2.msra.mxu0 0.0
      %4006 = vmatprep.subr.mxu0 0.0
      %4007 = vmatpush2.msra.mxu0 0.0
      %4008 = vmatprep.subr.mxu0 0.0
      %4009 = vmatpush2.msra.mxu0 0.0
      %4010 = vmatprep.mubr.f32.mxu0 0.0
      %4011 = vmatmul.mubr.f32.gmra.mxu0 %v3899
      %v4012 = vpop.f32.mrf.mxu0
      %v4013 = vadd.f32 0.0, %v4012
      %v4014 = vpop.f32.mrf.mxu0
      %4015 = vmatprep.mubr.f32.mxu0 0.0
      %4016 = vmatmul.mubr.f32.gmra.mxu0 %v3902
      %v4017 = vpop.f32.mrf.mxu0
      %v4018 = vadd.f32 0.0, %v4017
      %v4019 = vpop.f32.mrf.mxu0
      %4020 = vmatprep.mubr.f32.mxu0 0.0
      %4021 = vmatmul.mubr.f32.gmra.mxu0 %v3905
      %v4022 = vpop.f32.mrf.mxu0
      %v4023 = vadd.f32 0.0, %v4022
      %v4024 = vpop.f32.mrf.mxu0
      %4025 = vmatprep.mubr.f32.mxu0 0.0
      %4026 = vmatmul.mubr.f32.gmra.mxu0 %v3908
      %v4027 = vpop.f32.mrf.mxu0
      %v4028 = vadd.f32 0.0, %v4027
      %v4029 = vpop.f32.mrf.mxu0
      %4030 = vmatprep.mubr.f32.mxu0 0.0
      %4031 = vmatmul.mubr.f32.gmra.mxu0 %v3911
      %v4032 = vpop.f32.mrf.mxu0
      %v4033 = vadd.f32 0.0, %v4032
      %v4034 = vpop.f32.mrf.mxu0
      %4035 = vmatprep.mubr.f32.mxu0 0.0
      %4036 = vmatmul.mubr.f32.gmra.mxu0 %v3914
      %v4037 = vpop.f32.mrf.mxu0
      %v4038 = vadd.f32 0.0, %v4037
      %v4039 = vpop.f32.mrf.mxu0
      %4040 = vmatprep.mubr.f32.mxu0 0.0
      %4041 = vmatmul.mubr.f32.gmra.mxu0 %v3917
      %v4042 = vpop.f32.mrf.mxu0
      %v4043 = vadd.f32 0.0, %v4042
      %v4044 = vpop.f32.mrf.mxu0
      %4045 = vmatprep.mubr.f32.mxu0 0.0
      %4046 = vmatmul.mubr.f32.gmra.mxu0 %v3920
      %v4047 = vpop.f32.mrf.mxu0
      %v4048 = vadd.f32 0.0, %v4047
      %v4049 = vpop.f32.mrf.mxu0
      %4050 = vmatprep.mubr.f32.mxu0 0.0
      %4051 = vmatmul.mubr.f32.gmra.mxu0 %v3923
      %v4052 = vpop.f32.mrf.mxu0
      %v4053 = vadd.f32 0.0, %v4052
      %v4054 = vpop.f32.mrf.mxu0
      %4055 = vmatprep.mubr.f32.mxu0 0.0
      %4056 = vmatmul.mubr.f32.gmra.mxu0 %v3926
      %v4057 = vpop.f32.mrf.mxu0
      %v4058 = vadd.f32 0.0, %v4057
      %v4059 = vpop.f32.mrf.mxu0
      %4060 = vmatprep.mubr.f32.mxu0 0.0
      %4061 = vmatmul.mubr.f32.gmra.mxu0 %v3929
      %v4062 = vpop.f32.mrf.mxu0
      %v4063 = vadd.f32 0.0, %v4062
      %v4064 = vpop.f32.mrf.mxu0
      %4065 = vmatprep.mubr.f32.mxu0 0.0
      %4066 = vmatmul.mubr.f32.gmra.mxu0 %v3932
      %v4067 = vpop.f32.mrf.mxu0
      %v4068 = vadd.f32 0.0, %v4067
      %v4069 = vpop.f32.mrf.mxu0
      %4070 = vmatprep.mubr.f32.mxu0 0.0
      %4071 = vmatmul.mubr.f32.gmra.mxu0 %v3935
      %v4072 = vpop.f32.mrf.mxu0
      %v4073 = vadd.f32 0.0, %v4072
      %v4074 = vpop.f32.mrf.mxu0
      %4075 = vmatprep.mubr.f32.mxu0 0.0
      %4076 = vmatmul.mubr.f32.gmra.mxu0 %v3938
      %v4077 = vpop.f32.mrf.mxu0
      %v4078 = vadd.f32 0.0, %v4077
      %v4079 = vpop.f32.mrf.mxu0
      %4080 = vmatprep.mubr.f32.mxu0 0.0
      %4081 = vmatmul.mubr.f32.gmra.mxu0 %v3941
      %v4082 = vpop.f32.mrf.mxu0
      %v4083 = vadd.f32 0.0, %v4082
      %v4084 = vpop.f32.mrf.mxu0
      %4085 = vmatprep.mubr.f32.mxu0 0.0
      %4086 = vmatmul.mubr.f32.gmra.mxu0 %v3944
      %v4087 = vpop.f32.mrf.mxu0
      %v4088 = vadd.f32 0.0, %v4087
      %v4089 = vpop.f32.mrf.mxu0
      %4090 = vdwg.mxu0
      %v4091 = vmul.f32 %v4013, %v2439
      %v4092 = vmul.f32 %v4018, %v2440
      %v4093 = vmul.f32 %v4023, %v2441
      %v4094 = vmul.f32 %v4028, %v2442
      %v4095 = vmul.f32 %v4033, %v2443
      %v4096 = vmul.f32 %v4038, %v2444
      %v4097 = vmul.f32 %v4043, %v2445
      %v4098 = vmul.f32 %v4048, %v2446
      %v4099 = vmul.f32 %v4053, %v2447
      %v4100 = vmul.f32 %v4058, %v2448
      %v4101 = vmul.f32 %v4063, %v2449
      %v4102 = vmul.f32 %v4068, %v2450
      %v4103 = vmul.f32 %v4073, %v2451
      %v4104 = vmul.f32 %v4078, %v2452
      %v4105 = vmul.f32 %v4083, %v2453
      %v4106 = vmul.f32 %v4088, %v2454
      %4107 = vmatprep.subr.mxu0 0.0
      %4108 = vmatpush1.msra.mxu0 %v4106
      %4109 = vmatprep.subr.mxu0 0.0
      %4110 = vmatpush1.msra.mxu0 %v4105
      %4111 = vmatprep.subr.mxu0 0.0
      %4112 = vmatpush1.msra.mxu0 %v4104
      %4113 = vmatprep.subr.mxu0 0.0
      %4114 = vmatpush1.msra.mxu0 %v4103
      %4115 = vmatprep.subr.mxu0 0.0
      %4116 = vmatpush1.msra.mxu0 %v4102
      %4117 = vmatprep.subr.mxu0 0.0
      %4118 = vmatpush1.msra.mxu0 %v4101
      %4119 = vmatprep.subr.mxu0 0.0
      %4120 = vmatpush1.msra.mxu0 %v4100
      %4121 = vmatprep.subr.mxu0 0.0
      %4122 = vmatpush1.msra.mxu0 %v4099
      %4123 = vmatprep.subr.mxu0 0.0
      %4124 = vmatpush1.msra.mxu0 %v4098
      %4125 = vmatprep.subr.mxu0 0.0
      %4126 = vmatpush1.msra.mxu0 %v4097
      %4127 = vmatprep.subr.mxu0 0.0
      %4128 = vmatpush1.msra.mxu0 %v4096
      %4129 = vmatprep.subr.mxu0 0.0
      %4130 = vmatpush1.msra.mxu0 %v4095
      %4131 = vmatprep.subr.mxu0 0.0
      %4132 = vmatpush1.msra.mxu0 %v4094
      %4133 = vmatprep.subr.mxu0 0.0
      %4134 = vmatpush1.msra.mxu0 %v4093
      %4135 = vmatprep.subr.mxu0 0.0
      %4136 = vmatpush1.msra.mxu0 %v4092
      %4137 = vmatprep.subr.mxu0 0.0
      %4138 = vmatpush1.msra.mxu0 %v4091
      %4139 = vmatprep.subr.mxu0 0.0
      %4140 = vmatpush2.msra.mxu0 0.0
      %4141 = vmatprep.subr.mxu0 0.0
      %4142 = vmatpush2.msra.mxu0 0.0
      %4143 = vmatprep.subr.mxu0 0.0
      %4144 = vmatpush2.msra.mxu0 0.0
      %4145 = vmatprep.subr.mxu0 0.0
      %4146 = vmatpush2.msra.mxu0 0.0
      %4147 = vmatprep.subr.mxu0 0.0
      %4148 = vmatpush2.msra.mxu0 0.0
      %4149 = vmatprep.subr.mxu0 0.0
      %4150 = vmatpush2.msra.mxu0 0.0
      %4151 = vmatprep.subr.mxu0 0.0
      %4152 = vmatpush2.msra.mxu0 0.0
      %4153 = vmatprep.subr.mxu0 0.0
      %4154 = vmatpush2.msra.mxu0 0.0
      %4155 = vmatprep.subr.mxu0 0.0
      %4156 = vmatpush2.msra.mxu0 0.0
      %4157 = vmatprep.subr.mxu0 0.0
      %4158 = vmatpush2.msra.mxu0 0.0
      %4159 = vmatprep.subr.mxu0 0.0
      %4160 = vmatpush2.msra.mxu0 0.0
      %4161 = vmatprep.subr.mxu0 0.0
      %4162 = vmatpush2.msra.mxu0 0.0
      %4163 = vmatprep.subr.mxu0 0.0
      %4164 = vmatpush2.msra.mxu0 0.0
      %4165 = vmatprep.subr.mxu0 0.0
      %4166 = vmatpush2.msra.mxu0 0.0
      %4167 = vmatprep.subr.mxu0 0.0
      %4168 = vmatpush2.msra.mxu0 0.0
      %4169 = vmatprep.subr.mxu0 0.0
      %4170 = vmatpush2.msra.mxu0 0.0
      %4171 = vmatprep.mubr.f32.mxu0 0.0
      %4172 = vmatmul.mubr.f32.gmra.mxu0 %v2437
      %v4173 = vpop.f32.mrf.mxu0
      %v4174 = vadd.f32 0.0, %v4173
      %v4175 = vpop.f32.mrf.mxu0
      %4176 = vmatprep.mubr.f32.mxu0 0.0
      %4177 = vmatmul.mubr.f32.gmra.mxu0 %v2438
      %v4178 = vpop.f32.mrf.mxu0
      %v4179 = vadd.f32 0.0, %v4178
      %v4180 = vpop.f32.mrf.mxu0
      %4181 = vdwg.mxu0
      %4182 = vmatprep.subr.mxu0 0.0
      %4183 = vmatpush1.msra.mxu0 %v2561
      %4184 = vmatprep.subr.mxu0 0.0
      %4185 = vmatpush1.msra.mxu0 %v2560
      %4186 = vmatprep.subr.mxu0 0.0
      %4187 = vmatpush1.msra.mxu0 %v2559
      %4188 = vmatprep.subr.mxu0 0.0
      %4189 = vmatpush1.msra.mxu0 %v2558
      %4190 = vmatprep.subr.mxu0 0.0
      %4191 = vmatpush1.msra.mxu0 %v2557
      %4192 = vmatprep.subr.mxu0 0.0
      %4193 = vmatpush1.msra.mxu0 %v2556
      %4194 = vmatprep.subr.mxu0 0.0
      %4195 = vmatpush1.msra.mxu0 %v2555
      %4196 = vmatprep.subr.mxu0 0.0
      %4197 = vmatpush1.msra.mxu0 %v2554
      %4198 = vmatprep.subr.mxu0 0.0
      %4199 = vmatpush1.msra.mxu0 %v2553
      %4200 = vmatprep.subr.mxu0 0.0
      %4201 = vmatpush1.msra.mxu0 %v2552
      %4202 = vmatprep.subr.mxu0 0.0
      %4203 = vmatpush1.msra.mxu0 %v2551
      %4204 = vmatprep.subr.mxu0 0.0
      %4205 = vmatpush1.msra.mxu0 %v2550
      %4206 = vmatprep.subr.mxu0 0.0
      %4207 = vmatpush1.msra.mxu0 %v2549
      %4208 = vmatprep.subr.mxu0 0.0
      %4209 = vmatpush1.msra.mxu0 %v2548
      %4210 = vmatprep.subr.mxu0 0.0
      %4211 = vmatpush1.msra.mxu0 %v2547
      %4212 = vmatprep.subr.mxu0 0.0
      %4213 = vmatpush1.msra.mxu0 %v2546
      %4214 = vmatprep.subr.mxu0 0.0
      %4215 = vmatpush2.msra.mxu0 0.0
      %4216 = vmatprep.subr.mxu0 0.0
      %4217 = vmatpush2.msra.mxu0 0.0
      %4218 = vmatprep.subr.mxu0 0.0
      %4219 = vmatpush2.msra.mxu0 0.0
      %4220 = vmatprep.subr.mxu0 0.0
      %4221 = vmatpush2.msra.mxu0 0.0
      %4222 = vmatprep.subr.mxu0 0.0
      %4223 = vmatpush2.msra.mxu0 0.0
      %4224 = vmatprep.subr.mxu0 0.0
      %4225 = vmatpush2.msra.mxu0 0.0
      %4226 = vmatprep.subr.mxu0 0.0
      %4227 = vmatpush2.msra.mxu0 0.0
      %4228 = vmatprep.subr.mxu0 0.0
      %4229 = vmatpush2.msra.mxu0 0.0
      %4230 = vmatprep.subr.mxu0 0.0
      %4231 = vmatpush2.msra.mxu0 0.0
      %4232 = vmatprep.subr.mxu0 0.0
      %4233 = vmatpush2.msra.mxu0 0.0
      %4234 = vmatprep.subr.mxu0 0.0
      %4235 = vmatpush2.msra.mxu0 0.0
      %4236 = vmatprep.subr.mxu0 0.0
      %4237 = vmatpush2.msra.mxu0 0.0
      %4238 = vmatprep.subr.mxu0 0.0
      %4239 = vmatpush2.msra.mxu0 0.0
      %4240 = vmatprep.subr.mxu0 0.0
      %4241 = vmatpush2.msra.mxu0 0.0
      %4242 = vmatprep.subr.mxu0 0.0
      %4243 = vmatpush2.msra.mxu0 0.0
      %4244 = vmatprep.subr.mxu0 0.0
      %4245 = vmatpush2.msra.mxu0 0.0
      %4246 = vmatprep.mubr.f32.mxu0 0.0
      %4247 = vmatmul.mubr.f32.gmra.mxu0 %v4174
      %v4248 = vpop.f32.mrf.mxu0
      %v4249 = vadd.f32 0.0, %v4248
      %v4250 = vpop.f32.mrf.mxu0
      %4251 = vmatprep.mubr.f32.mxu0 0.0
      %4252 = vmatmul.mubr.f32.gmra.mxu0 %v4179
      %v4253 = vpop.f32.mrf.mxu0
      %v4254 = vadd.f32 0.0, %v4253
      %v4255 = vpop.f32.mrf.mxu0
      %4256 = vdwg.mxu0
      %v4257 = vmul.f32 %v4249, 0.00390625
      %v4258 = vmul.f32 %v4254, 0.00390625
      %v4259 = vsel %vm2639, %v4257, -inf
      %v4260 = vsel %vm2639, %v4258, -inf
      %v4261 = vmax.f32 %v4259, %v4260
      %v4262 = vrot.slane %v4261, 4
      %v4263 = vmax.f32 %v4261, %v4262
      %v4264 = vrot.slane %v4263, 2
      %v4265 = vmax.f32 %v4263, %v4264
      %v4266 = vrot.slane %v4265, 1
      %v4267 = vmax.f32 %v4265, %v4266
      %v4268 = vsub.f32 %v4257, %v4267
      %v4269 = vsub.f32 %v4258, %v4267
      %v4270 = vmul.f32 %v4268, 1.442695
      %v4271 = vpow.pop %v4270
      %v4272 = vmul.f32 %v4269, 1.442695
      %v4273 = vpow.pop %v4272
      %v4274 = vsel %vm2639, %v4271, 0.0
      %v4275 = vsel %vm2639, %v4273, 0.0
      %v4276 = vadd.f32 %v4274, %v4275
      %v4277 = vrot.slane %v4276, 4
      %v4278 = vadd.f32 %v4276, %v4277
      %v4279 = vrot.slane %v4278, 2
      %v4280 = vadd.f32 %v4278, %v4279
      %v4281 = vrot.slane %v4280, 1
      %v4282 = vadd.f32 %v4280, %v4281
      %v4283 = vrcp.pop %v4282
      %v4284 = vmul.f32 %v4271, %v4283
      %v4285 = vmul.f32 %v4273, %v4283
      %v4286 = vadd.f32 %v3864, %v4284
      %v4287 = vadd.f32 %v3865, %v4285
      %4288 = vxpose.xlu0.b32.start [1/16] %v1826, 128
      %4289 = vxpose.xlu0.b32.cont [2/16] %v1831, 128
      %4290 = vxpose.xlu0.b32.cont [3/16] %v1836, 128
      %4291 = vxpose.xlu0.b32.cont [4/16] %v1841, 128
      %4292 = vxpose.xlu0.b32.cont [5/16] 0.0, 128
      %4293 = vxpose.xlu0.b32.cont [6/16] 0.0, 128
      %4294 = vxpose.xlu0.b32.cont [7/16] 0.0, 128
      %4295 = vxpose.xlu0.b32.cont [8/16] 0.0, 128
      %4296 = vxpose.xlu0.b32.cont [9/16] 0.0, 128
      %4297 = vxpose.xlu0.b32.cont [10/16] 0.0, 128
      %4298 = vxpose.xlu0.b32.cont [11/16] 0.0, 128
      %4299 = vxpose.xlu0.b32.cont [12/16] 0.0, 128
      %4300 = vxpose.xlu0.b32.cont [13/16] 0.0, 128
      %4301 = vxpose.xlu0.b32.cont [14/16] 0.0, 128
      %4302 = vxpose.xlu0.b32.cont [15/16] 0.0, 128
      %4303 = vxpose.xlu0.b32.end [16/16] 0.0, 128
      %v4304 = vpop.trf.xlu0
      %v4305 = vpop.trf.xlu0
      %v4306 = vpop.trf.xlu0
      %v4307 = vpop.trf.xlu0
      %v4308 = vpop.trf.xlu0
      %v4309 = vpop.trf.xlu0
      %v4310 = vpop.trf.xlu0
      %v4311 = vpop.trf.xlu0
      %v4312 = vpop.trf.xlu0
      %v4313 = vpop.trf.xlu0
      %v4314 = vpop.trf.xlu0
      %v4315 = vpop.trf.xlu0
      %v4316 = vpop.trf.xlu0
      %v4317 = vpop.trf.xlu0
      %v4318 = vpop.trf.xlu0
      %v4319 = vpop.trf.xlu0
      %v4321 = vsel %vm2243, %v4304, 0
      %v4324 = vsel %vm2243, %v4305, 0
      %v4327 = vsel %vm2243, %v4306, 0
      %v4330 = vsel %vm2243, %v4307, 0
      %v4333 = vsel %vm2243, %v4308, 0
      %v4336 = vsel %vm2243, %v4309, 0
      %v4339 = vsel %vm2243, %v4310, 0
      %v4342 = vsel %vm2243, %v4311, 0
      %v4345 = vsel %vm2243, %v4312, 0
      %v4348 = vsel %vm2243, %v4313, 0
      %v4351 = vsel %vm2243, %v4314, 0
      %v4354 = vsel %vm2243, %v4315, 0
      %v4357 = vsel %vm2243, %v4316, 0
      %v4360 = vsel %vm2243, %v4317, 0
      %v4363 = vsel %vm2243, %v4318, 0
      %v4366 = vsel %vm2243, %v4319, 0
      %4368 = vmatprep.subr.mxu0 0.0
      %4369 = vmatpush1.msra.mxu0 0.0
      %4370 = vmatprep.subr.mxu0 0.0
      %4371 = vmatpush1.msra.mxu0 0.0
      %4372 = vmatprep.subr.mxu0 0.0
      %4373 = vmatpush1.msra.mxu0 0.0
      %4374 = vmatprep.subr.mxu0 0.0
      %4375 = vmatpush1.msra.mxu0 0.0
      %4376 = vmatprep.subr.mxu0 0.0
      %4377 = vmatpush1.msra.mxu0 0.0
      %4378 = vmatprep.subr.mxu0 0.0
      %4379 = vmatpush1.msra.mxu0 0.0
      %4380 = vmatprep.subr.mxu0 0.0
      %4381 = vmatpush1.msra.mxu0 0.0
      %4382 = vmatprep.subr.mxu0 0.0
      %4383 = vmatpush1.msra.mxu0 0.0
      %4384 = vmatprep.subr.mxu0 0.0
      %4385 = vmatpush1.msra.mxu0 0.0
      %4386 = vmatprep.subr.mxu0 0.0
      %4387 = vmatpush1.msra.mxu0 0.0
      %4388 = vmatprep.subr.mxu0 0.0
      %4389 = vmatpush1.msra.mxu0 0.0
      %4390 = vmatprep.subr.mxu0 0.0
      %4391 = vmatpush1.msra.mxu0 0.0
      %4392 = vmatprep.subr.mxu0 0.0
      %4393 = vmatpush1.msra.mxu0 %v1861
      %4394 = vmatprep.subr.mxu0 0.0
      %4395 = vmatpush1.msra.mxu0 %v1856
      %4396 = vmatprep.subr.mxu0 0.0
      %4397 = vmatpush1.msra.mxu0 %v1851
      %4398 = vmatprep.subr.mxu0 0.0
      %4399 = vmatpush1.msra.mxu0 %v1846
      %4400 = vmatprep.subr.mxu0 0.0
      %4401 = vmatpush2.msra.mxu0 0.0
      %4402 = vmatprep.subr.mxu0 0.0
      %4403 = vmatpush2.msra.mxu0 0.0
      %4404 = vmatprep.subr.mxu0 0.0
      %4405 = vmatpush2.msra.mxu0 0.0
      %4406 = vmatprep.subr.mxu0 0.0
      %4407 = vmatpush2.msra.mxu0 0.0
      %4408 = vmatprep.subr.mxu0 0.0
      %4409 = vmatpush2.msra.mxu0 0.0
      %4410 = vmatprep.subr.mxu0 0.0
      %4411 = vmatpush2.msra.mxu0 0.0
      %4412 = vmatprep.subr.mxu0 0.0
      %4413 = vmatpush2.msra.mxu0 0.0
      %4414 = vmatprep.subr.mxu0 0.0
      %4415 = vmatpush2.msra.mxu0 0.0
      %4416 = vmatprep.subr.mxu0 0.0
      %4417 = vmatpush2.msra.mxu0 0.0
      %4418 = vmatprep.subr.mxu0 0.0
      %4419 = vmatpush2.msra.mxu0 0.0
      %4420 = vmatprep.subr.mxu0 0.0
      %4421 = vmatpush2.msra.mxu0 0.0
      %4422 = vmatprep.subr.mxu0 0.0
      %4423 = vmatpush2.msra.mxu0 0.0
      %4424 = vmatprep.subr.mxu0 0.0
      %4425 = vmatpush2.msra.mxu0 0.0
      %4426 = vmatprep.subr.mxu0 0.0
      %4427 = vmatpush2.msra.mxu0 0.0
      %4428 = vmatprep.subr.mxu0 0.0
      %4429 = vmatpush2.msra.mxu0 0.0
      %4430 = vmatprep.subr.mxu0 0.0
      %4431 = vmatpush2.msra.mxu0 0.0
      %4432 = vmatprep.mubr.f32.mxu0 0.0
      %4433 = vmatmul.mubr.f32.gmra.mxu0 %v4321
      %v4434 = vpop.f32.mrf.mxu0
      %v4435 = vadd.f32 0.0, %v4434
      %v4436 = vpop.f32.mrf.mxu0
      %4437 = vmatprep.mubr.f32.mxu0 0.0
      %4438 = vmatmul.mubr.f32.gmra.mxu0 %v4324
      %v4439 = vpop.f32.mrf.mxu0
      %v4440 = vadd.f32 0.0, %v4439
      %v4441 = vpop.f32.mrf.mxu0
      %4442 = vmatprep.mubr.f32.mxu0 0.0
      %4443 = vmatmul.mubr.f32.gmra.mxu0 %v4327
      %v4444 = vpop.f32.mrf.mxu0
      %v4445 = vadd.f32 0.0, %v4444
      %v4446 = vpop.f32.mrf.mxu0
      %4447 = vmatprep.mubr.f32.mxu0 0.0
      %4448 = vmatmul.mubr.f32.gmra.mxu0 %v4330
      %v4449 = vpop.f32.mrf.mxu0
      %v4450 = vadd.f32 0.0, %v4449
      %v4451 = vpop.f32.mrf.mxu0
      %4452 = vmatprep.mubr.f32.mxu0 0.0
      %4453 = vmatmul.mubr.f32.gmra.mxu0 %v4333
      %v4454 = vpop.f32.mrf.mxu0
      %v4455 = vadd.f32 0.0, %v4454
      %v4456 = vpop.f32.mrf.mxu0
      %4457 = vmatprep.mubr.f32.mxu0 0.0
      %4458 = vmatmul.mubr.f32.gmra.mxu0 %v4336
      %v4459 = vpop.f32.mrf.mxu0
      %v4460 = vadd.f32 0.0, %v4459
      %v4461 = vpop.f32.mrf.mxu0
      %4462 = vmatprep.mubr.f32.mxu0 0.0
      %4463 = vmatmul.mubr.f32.gmra.mxu0 %v4339
      %v4464 = vpop.f32.mrf.mxu0
      %v4465 = vadd.f32 0.0, %v4464
      %v4466 = vpop.f32.mrf.mxu0
      %4467 = vmatprep.mubr.f32.mxu0 0.0
      %4468 = vmatmul.mubr.f32.gmra.mxu0 %v4342
      %v4469 = vpop.f32.mrf.mxu0
      %v4470 = vadd.f32 0.0, %v4469
      %v4471 = vpop.f32.mrf.mxu0
      %4472 = vmatprep.mubr.f32.mxu0 0.0
      %4473 = vmatmul.mubr.f32.gmra.mxu0 %v4345
      %v4474 = vpop.f32.mrf.mxu0
      %v4475 = vadd.f32 0.0, %v4474
      %v4476 = vpop.f32.mrf.mxu0
      %4477 = vmatprep.mubr.f32.mxu0 0.0
      %4478 = vmatmul.mubr.f32.gmra.mxu0 %v4348
      %v4479 = vpop.f32.mrf.mxu0
      %v4480 = vadd.f32 0.0, %v4479
      %v4481 = vpop.f32.mrf.mxu0
      %4482 = vmatprep.mubr.f32.mxu0 0.0
      %4483 = vmatmul.mubr.f32.gmra.mxu0 %v4351
      %v4484 = vpop.f32.mrf.mxu0
      %v4485 = vadd.f32 0.0, %v4484
      %v4486 = vpop.f32.mrf.mxu0
      %4487 = vmatprep.mubr.f32.mxu0 0.0
      %4488 = vmatmul.mubr.f32.gmra.mxu0 %v4354
      %v4489 = vpop.f32.mrf.mxu0
      %v4490 = vadd.f32 0.0, %v4489
      %v4491 = vpop.f32.mrf.mxu0
      %4492 = vmatprep.mubr.f32.mxu0 0.0
      %4493 = vmatmul.mubr.f32.gmra.mxu0 %v4357
      %v4494 = vpop.f32.mrf.mxu0
      %v4495 = vadd.f32 0.0, %v4494
      %v4496 = vpop.f32.mrf.mxu0
      %4497 = vmatprep.mubr.f32.mxu0 0.0
      %4498 = vmatmul.mubr.f32.gmra.mxu0 %v4360
      %v4499 = vpop.f32.mrf.mxu0
      %v4500 = vadd.f32 0.0, %v4499
      %v4501 = vpop.f32.mrf.mxu0
      %4502 = vmatprep.mubr.f32.mxu0 0.0
      %4503 = vmatmul.mubr.f32.gmra.mxu0 %v4363
      %v4504 = vpop.f32.mrf.mxu0
      %v4505 = vadd.f32 0.0, %v4504
      %v4506 = vpop.f32.mrf.mxu0
      %4507 = vmatprep.mubr.f32.mxu0 0.0
      %4508 = vmatmul.mubr.f32.gmra.mxu0 %v4366
      %v4509 = vpop.f32.mrf.mxu0
      %v4510 = vadd.f32 0.0, %v4509
      %v4511 = vpop.f32.mrf.mxu0
      %4512 = vdwg.mxu0
      %v4513 = vmul.f32 %v4435, %v2439
      %v4514 = vmul.f32 %v4440, %v2440
      %v4515 = vmul.f32 %v4445, %v2441
      %v4516 = vmul.f32 %v4450, %v2442
      %v4517 = vmul.f32 %v4455, %v2443
      %v4518 = vmul.f32 %v4460, %v2444
      %v4519 = vmul.f32 %v4465, %v2445
      %v4520 = vmul.f32 %v4470, %v2446
      %v4521 = vmul.f32 %v4475, %v2447
      %v4522 = vmul.f32 %v4480, %v2448
      %v4523 = vmul.f32 %v4485, %v2449
      %v4524 = vmul.f32 %v4490, %v2450
      %v4525 = vmul.f32 %v4495, %v2451
      %v4526 = vmul.f32 %v4500, %v2452
      %v4527 = vmul.f32 %v4505, %v2453
      %v4528 = vmul.f32 %v4510, %v2454
      %4529 = vmatprep.subr.mxu0 0.0
      %4530 = vmatpush1.msra.mxu0 %v4528
      %4531 = vmatprep.subr.mxu0 0.0
      %4532 = vmatpush1.msra.mxu0 %v4527
      %4533 = vmatprep.subr.mxu0 0.0
      %4534 = vmatpush1.msra.mxu0 %v4526
      %4535 = vmatprep.subr.mxu0 0.0
      %4536 = vmatpush1.msra.mxu0 %v4525
      %4537 = vmatprep.subr.mxu0 0.0
      %4538 = vmatpush1.msra.mxu0 %v4524
      %4539 = vmatprep.subr.mxu0 0.0
      %4540 = vmatpush1.msra.mxu0 %v4523
      %4541 = vmatprep.subr.mxu0 0.0
      %4542 = vmatpush1.msra.mxu0 %v4522
      %4543 = vmatprep.subr.mxu0 0.0
      %4544 = vmatpush1.msra.mxu0 %v4521
      %4545 = vmatprep.subr.mxu0 0.0
      %4546 = vmatpush1.msra.mxu0 %v4520
      %4547 = vmatprep.subr.mxu0 0.0
      %4548 = vmatpush1.msra.mxu0 %v4519
      %4549 = vmatprep.subr.mxu0 0.0
      %4550 = vmatpush1.msra.mxu0 %v4518
      %4551 = vmatprep.subr.mxu0 0.0
      %4552 = vmatpush1.msra.mxu0 %v4517
      %4553 = vmatprep.subr.mxu0 0.0
      %4554 = vmatpush1.msra.mxu0 %v4516
      %4555 = vmatprep.subr.mxu0 0.0
      %4556 = vmatpush1.msra.mxu0 %v4515
      %4557 = vmatprep.subr.mxu0 0.0
      %4558 = vmatpush1.msra.mxu0 %v4514
      %4559 = vmatprep.subr.mxu0 0.0
      %4560 = vmatpush1.msra.mxu0 %v4513
      %4561 = vmatprep.subr.mxu0 0.0
      %4562 = vmatpush2.msra.mxu0 0.0
      %4563 = vmatprep.subr.mxu0 0.0
      %4564 = vmatpush2.msra.mxu0 0.0
      %4565 = vmatprep.subr.mxu0 0.0
      %4566 = vmatpush2.msra.mxu0 0.0
      %4567 = vmatprep.subr.mxu0 0.0
      %4568 = vmatpush2.msra.mxu0 0.0
      %4569 = vmatprep.subr.mxu0 0.0
      %4570 = vmatpush2.msra.mxu0 0.0
      %4571 = vmatprep.subr.mxu0 0.0
      %4572 = vmatpush2.msra.mxu0 0.0
      %4573 = vmatprep.subr.mxu0 0.0
      %4574 = vmatpush2.msra.mxu0 0.0
      %4575 = vmatprep.subr.mxu0 0.0
      %4576 = vmatpush2.msra.mxu0 0.0
      %4577 = vmatprep.subr.mxu0 0.0
      %4578 = vmatpush2.msra.mxu0 0.0
      %4579 = vmatprep.subr.mxu0 0.0
      %4580 = vmatpush2.msra.mxu0 0.0
      %4581 = vmatprep.subr.mxu0 0.0
      %4582 = vmatpush2.msra.mxu0 0.0
      %4583 = vmatprep.subr.mxu0 0.0
      %4584 = vmatpush2.msra.mxu0 0.0
      %4585 = vmatprep.subr.mxu0 0.0
      %4586 = vmatpush2.msra.mxu0 0.0
      %4587 = vmatprep.subr.mxu0 0.0
      %4588 = vmatpush2.msra.mxu0 0.0
      %4589 = vmatprep.subr.mxu0 0.0
      %4590 = vmatpush2.msra.mxu0 0.0
      %4591 = vmatprep.subr.mxu0 0.0
      %4592 = vmatpush2.msra.mxu0 0.0
      %4593 = vmatprep.mubr.f32.mxu0 0.0
      %4594 = vmatmul.mubr.f32.gmra.mxu0 %v2437
      %v4595 = vpop.f32.mrf.mxu0
      %v4596 = vadd.f32 0.0, %v4595
      %v4597 = vpop.f32.mrf.mxu0
      %4598 = vmatprep.mubr.f32.mxu0 0.0
      %4599 = vmatmul.mubr.f32.gmra.mxu0 %v2438
      %v4600 = vpop.f32.mrf.mxu0
      %v4601 = vadd.f32 0.0, %v4600
      %v4602 = vpop.f32.mrf.mxu0
      %4603 = vdwg.mxu0
      %4604 = vmatprep.subr.mxu0 0.0
      %4605 = vmatpush1.msra.mxu0 %v2561
      %4606 = vmatprep.subr.mxu0 0.0
      %4607 = vmatpush1.msra.mxu0 %v2560
      %4608 = vmatprep.subr.mxu0 0.0
      %4609 = vmatpush1.msra.mxu0 %v2559
      %4610 = vmatprep.subr.mxu0 0.0
      %4611 = vmatpush1.msra.mxu0 %v2558
      %4612 = vmatprep.subr.mxu0 0.0
      %4613 = vmatpush1.msra.mxu0 %v2557
      %4614 = vmatprep.subr.mxu0 0.0
      %4615 = vmatpush1.msra.mxu0 %v2556
      %4616 = vmatprep.subr.mxu0 0.0
      %4617 = vmatpush1.msra.mxu0 %v2555
      %4618 = vmatprep.subr.mxu0 0.0
      %4619 = vmatpush1.msra.mxu0 %v2554
      %4620 = vmatprep.subr.mxu0 0.0
      %4621 = vmatpush1.msra.mxu0 %v2553
      %4622 = vmatprep.subr.mxu0 0.0
      %4623 = vmatpush1.msra.mxu0 %v2552
      %4624 = vmatprep.subr.mxu0 0.0
      %4625 = vmatpush1.msra.mxu0 %v2551
      %4626 = vmatprep.subr.mxu0 0.0
      %4627 = vmatpush1.msra.mxu0 %v2550
      %4628 = vmatprep.subr.mxu0 0.0
      %4629 = vmatpush1.msra.mxu0 %v2549
      %4630 = vmatprep.subr.mxu0 0.0
      %4631 = vmatpush1.msra.mxu0 %v2548
      %4632 = vmatprep.subr.mxu0 0.0
      %4633 = vmatpush1.msra.mxu0 %v2547
      %4634 = vmatprep.subr.mxu0 0.0
      %4635 = vmatpush1.msra.mxu0 %v2546
      %4636 = vmatprep.subr.mxu0 0.0
      %4637 = vmatpush2.msra.mxu0 0.0
      %4638 = vmatprep.subr.mxu0 0.0
      %4639 = vmatpush2.msra.mxu0 0.0
      %4640 = vmatprep.subr.mxu0 0.0
      %4641 = vmatpush2.msra.mxu0 0.0
      %4642 = vmatprep.subr.mxu0 0.0
      %4643 = vmatpush2.msra.mxu0 0.0
      %4644 = vmatprep.subr.mxu0 0.0
      %4645 = vmatpush2.msra.mxu0 0.0
      %4646 = vmatprep.subr.mxu0 0.0
      %4647 = vmatpush2.msra.mxu0 0.0
      %4648 = vmatprep.subr.mxu0 0.0
      %4649 = vmatpush2.msra.mxu0 0.0
      %4650 = vmatprep.subr.mxu0 0.0
      %4651 = vmatpush2.msra.mxu0 0.0
      %4652 = vmatprep.subr.mxu0 0.0
      %4653 = vmatpush2.msra.mxu0 0.0
      %4654 = vmatprep.subr.mxu0 0.0
      %4655 = vmatpush2.msra.mxu0 0.0
      %4656 = vmatprep.subr.mxu0 0.0
      %4657 = vmatpush2.msra.mxu0 0.0
      %4658 = vmatprep.subr.mxu0 0.0
      %4659 = vmatpush2.msra.mxu0 0.0
      %4660 = vmatprep.subr.mxu0 0.0
      %4661 = vmatpush2.msra.mxu0 0.0
      %4662 = vmatprep.subr.mxu0 0.0
      %4663 = vmatpush2.msra.mxu0 0.0
      %4664 = vmatprep.subr.mxu0 0.0
      %4665 = vmatpush2.msra.mxu0 0.0
      %4666 = vmatprep.subr.mxu0 0.0
      %4667 = vmatpush2.msra.mxu0 0.0
      %4668 = vmatprep.mubr.f32.mxu0 0.0
      %4669 = vmatmul.mubr.f32.gmra.mxu0 %v4596
      %v4670 = vpop.f32.mrf.mxu0
      %v4671 = vadd.f32 0.0, %v4670
      %v4672 = vpop.f32.mrf.mxu0
      %4673 = vmatprep.mubr.f32.mxu0 0.0
      %4674 = vmatmul.mubr.f32.gmra.mxu0 %v4601
      %v4675 = vpop.f32.mrf.mxu0
      %v4676 = vadd.f32 0.0, %v4675
      %v4677 = vpop.f32.mrf.mxu0
      %4678 = vdwg.mxu0
      %v4679 = vmul.f32 %v4671, 0.00390625
      %v4680 = vmul.f32 %v4676, 0.00390625
      %v4681 = vsel %vm2639, %v4679, -inf
      %v4682 = vsel %vm2639, %v4680, -inf
      %v4683 = vmax.f32 %v4681, %v4682
      %v4684 = vrot.slane %v4683, 4
      %v4685 = vmax.f32 %v4683, %v4684
      %v4686 = vrot.slane %v4685, 2
      %v4687 = vmax.f32 %v4685, %v4686
      %v4688 = vrot.slane %v4687, 1
      %v4689 = vmax.f32 %v4687, %v4688
      %v4690 = vsub.f32 %v4679, %v4689
      %v4691 = vsub.f32 %v4680, %v4689
      %v4692 = vmul.f32 %v4690, 1.442695
      %v4693 = vpow.pop %v4692
      %v4694 = vmul.f32 %v4691, 1.442695
      %v4695 = vpow.pop %v4694
      %v4696 = vsel %vm2639, %v4693, 0.0
      %v4697 = vsel %vm2639, %v4695, 0.0
      %v4698 = vadd.f32 %v4696, %v4697
      %v4699 = vrot.slane %v4698, 4
      %v4700 = vadd.f32 %v4698, %v4699
      %v4701 = vrot.slane %v4700, 2
      %v4702 = vadd.f32 %v4700, %v4701
      %v4703 = vrot.slane %v4702, 1
      %v4704 = vadd.f32 %v4702, %v4703
      %v4705 = vrcp.pop %v4704
      %v4706 = vmul.f32 %v4693, %v4705
      %v4707 = vmul.f32 %v4695, %v4705
      %v4708 = vadd.f32 %v4286, %v4706
      %v4709 = vadd.f32 %v4287, %v4707
      %4710 = vmatprep.subr.mxu0 0.0
      %4711 = vmatpush1.msra.mxu0 0.0
      %4712 = vmatprep.subr.mxu0 0.0
      %4713 = vmatpush1.msra.mxu0 0.0
      %4714 = vmatprep.subr.mxu0 0.0
      %4715 = vmatpush1.msra.mxu0 0.0
      %4716 = vmatprep.subr.mxu0 0.0
      %4717 = vmatpush1.msra.mxu0 0.0
      %4718 = vmatprep.subr.mxu0 0.0
      %4719 = vmatpush1.msra.mxu0 0.0
      %4720 = vmatprep.subr.mxu0 0.0
      %4721 = vmatpush1.msra.mxu0 0.0
      %4722 = vmatprep.subr.mxu0 0.0
      %4723 = vmatpush1.msra.mxu0 0.0
      %4724 = vmatprep.subr.mxu0 0.0
      %4725 = vmatpush1.msra.mxu0 0.0
      %4726 = vmatprep.subr.mxu0 0.0
      %4727 = vmatpush1.msra.mxu0 0.0
      %4728 = vmatprep.subr.mxu0 0.0
      %4729 = vmatpush1.msra.mxu0 0.0
      %4730 = vmatprep.subr.mxu0 0.0
      %4731 = vmatpush1.msra.mxu0 0.0
      %4732 = vmatprep.subr.mxu0 0.0
      %4733 = vmatpush1.msra.mxu0 0.0
      %4734 = vmatprep.subr.mxu0 0.0
      %4735 = vmatpush1.msra.mxu0 0.0
      %4736 = vmatprep.subr.mxu0 0.0
      %4737 = vmatpush1.msra.mxu0 0.0
      %4738 = vmatprep.subr.mxu0 0.0
      %4739 = vmatpush1.msra.mxu0 %v4709
      %4740 = vmatprep.subr.mxu0 0.0
      %4741 = vmatpush1.msra.mxu0 %v4708
      %4742 = vmatprep.subr.mxu0 0.0
      %4743 = vmatpush2.msra.mxu0 0.0
      %4744 = vmatprep.subr.mxu0 0.0
      %4745 = vmatpush2.msra.mxu0 0.0
      %4746 = vmatprep.subr.mxu0 0.0
      %4747 = vmatpush2.msra.mxu0 0.0
      %4748 = vmatprep.subr.mxu0 0.0
      %4749 = vmatpush2.msra.mxu0 0.0
      %4750 = vmatprep.subr.mxu0 0.0
      %4751 = vmatpush2.msra.mxu0 0.0
      %4752 = vmatprep.subr.mxu0 0.0
      %4753 = vmatpush2.msra.mxu0 0.0
      %4754 = vmatprep.subr.mxu0 0.0
      %4755 = vmatpush2.msra.mxu0 0.0
      %4756 = vmatprep.subr.mxu0 0.0
      %4757 = vmatpush2.msra.mxu0 0.0
      %4758 = vmatprep.subr.mxu0 0.0
      %4759 = vmatpush2.msra.mxu0 0.0
      %4760 = vmatprep.subr.mxu0 0.0
      %4761 = vmatpush2.msra.mxu0 0.0
      %4762 = vmatprep.subr.mxu0 0.0
      %4763 = vmatpush2.msra.mxu0 0.0
      %4764 = vmatprep.subr.mxu0 0.0
      %4765 = vmatpush2.msra.mxu0 0.0
      %4766 = vmatprep.subr.mxu0 0.0
      %4767 = vmatpush2.msra.mxu0 0.0
      %4768 = vmatprep.subr.mxu0 0.0
      %4769 = vmatpush2.msra.mxu0 0.0
      %4770 = vmatprep.subr.mxu0 0.0
      %4771 = vmatpush2.msra.mxu0 0.0
      %4772 = vmatprep.subr.mxu0 0.0
      %4773 = vmatpush2.msra.mxu0 0.0
      %4774 = vmatprep.mubr.f32.mxu0 0.0
      %4775 = vmatmul.mubr.f32.gmra.mxu0 %v3092
      %v4776 = vpop.f32.mrf.mxu0
      %v4777 = vadd.f32 0.0, %v4776
      %v4778 = vpop.f32.mrf.mxu0
      %4779 = vmatprep.mubr.f32.mxu0 0.0
      %4780 = vmatmul.mubr.f32.gmra.mxu0 %v3095
      %v4781 = vpop.f32.mrf.mxu0
      %v4782 = vadd.f32 0.0, %v4781
      %v4783 = vpop.f32.mrf.mxu0
      %4784 = vmatprep.mubr.f32.mxu0 0.0
      %4785 = vmatmul.mubr.f32.gmra.mxu0 %v3098
      %v4786 = vpop.f32.mrf.mxu0
      %v4787 = vadd.f32 0.0, %v4786
      %v4788 = vpop.f32.mrf.mxu0
      %4789 = vmatprep.mubr.f32.mxu0 0.0
      %4790 = vmatmul.mubr.f32.gmra.mxu0 %v3101
      %v4791 = vpop.f32.mrf.mxu0
      %v4792 = vadd.f32 0.0, %v4791
      %v4793 = vpop.f32.mrf.mxu0
      %4794 = vmatprep.mubr.f32.mxu0 0.0
      %4795 = vmatmul.mubr.f32.gmra.mxu0 %v3104
      %v4796 = vpop.f32.mrf.mxu0
      %v4797 = vadd.f32 0.0, %v4796
      %v4798 = vpop.f32.mrf.mxu0
      %4799 = vmatprep.mubr.f32.mxu0 0.0
      %4800 = vmatmul.mubr.f32.gmra.mxu0 %v3107
      %v4801 = vpop.f32.mrf.mxu0
      %v4802 = vadd.f32 0.0, %v4801
      %v4803 = vpop.f32.mrf.mxu0
      %4804 = vmatprep.mubr.f32.mxu0 0.0
      %4805 = vmatmul.mubr.f32.gmra.mxu0 %v3110
      %v4806 = vpop.f32.mrf.mxu0
      %v4807 = vadd.f32 0.0, %v4806
      %v4808 = vpop.f32.mrf.mxu0
      %4809 = vmatprep.mubr.f32.mxu0 0.0
      %4810 = vmatmul.mubr.f32.gmra.mxu0 %v3113
      %v4811 = vpop.f32.mrf.mxu0
      %v4812 = vadd.f32 0.0, %v4811
      %v4813 = vpop.f32.mrf.mxu0
      %4814 = vmatprep.mubr.f32.mxu0 0.0
      %4815 = vmatmul.mubr.f32.gmra.mxu0 %v3116
      %v4816 = vpop.f32.mrf.mxu0
      %v4817 = vadd.f32 0.0, %v4816
      %v4818 = vpop.f32.mrf.mxu0
      %4819 = vmatprep.mubr.f32.mxu0 0.0
      %4820 = vmatmul.mubr.f32.gmra.mxu0 %v3119
      %v4821 = vpop.f32.mrf.mxu0
      %v4822 = vadd.f32 0.0, %v4821
      %v4823 = vpop.f32.mrf.mxu0
      %4824 = vmatprep.mubr.f32.mxu0 0.0
      %4825 = vmatmul.mubr.f32.gmra.mxu0 %v3122
      %v4826 = vpop.f32.mrf.mxu0
      %v4827 = vadd.f32 0.0, %v4826
      %v4828 = vpop.f32.mrf.mxu0
      %4829 = vmatprep.mubr.f32.mxu0 0.0
      %4830 = vmatmul.mubr.f32.gmra.mxu0 %v3125
      %v4831 = vpop.f32.mrf.mxu0
      %v4832 = vadd.f32 0.0, %v4831
      %v4833 = vpop.f32.mrf.mxu0
      %4834 = vmatprep.mubr.f32.mxu0 0.0
      %4835 = vmatmul.mubr.f32.gmra.mxu0 %v3128
      %v4836 = vpop.f32.mrf.mxu0
      %v4837 = vadd.f32 0.0, %v4836
      %v4838 = vpop.f32.mrf.mxu0
      %4839 = vmatprep.mubr.f32.mxu0 0.0
      %4840 = vmatmul.mubr.f32.gmra.mxu0 %v3131
      %v4841 = vpop.f32.mrf.mxu0
      %v4842 = vadd.f32 0.0, %v4841
      %v4843 = vpop.f32.mrf.mxu0
      %4844 = vmatprep.mubr.f32.mxu0 0.0
      %4845 = vmatmul.mubr.f32.gmra.mxu0 %v3134
      %v4846 = vpop.f32.mrf.mxu0
      %v4847 = vadd.f32 0.0, %v4846
      %v4848 = vpop.f32.mrf.mxu0
      %4849 = vmatprep.mubr.f32.mxu0 0.0
      %4850 = vmatmul.mubr.f32.gmra.mxu0 %v3137
      %v4851 = vpop.f32.mrf.mxu0
      %v4852 = vadd.f32 0.0, %v4851
      %v4853 = vpop.f32.mrf.mxu0
      %4854 = vdwg.mxu0
      %v4856 = vsel %vm2639, %v4777, 0
      %v4859 = vsel %vm2639, %v4782, 0
      %v4862 = vsel %vm2639, %v4787, 0
      %v4865 = vsel %vm2639, %v4792, 0
      %v4868 = vsel %vm2639, %v4797, 0
      %v4871 = vsel %vm2639, %v4802, 0
      %v4874 = vsel %vm2639, %v4807, 0
      %v4877 = vsel %vm2639, %v4812, 0
      %v4880 = vsel %vm2639, %v4817, 0
      %v4883 = vsel %vm2639, %v4822, 0
      %v4886 = vsel %vm2639, %v4827, 0
      %v4889 = vsel %vm2639, %v4832, 0
      %v4892 = vsel %vm2639, %v4837, 0
      %v4895 = vsel %vm2639, %v4842, 0
      %v4898 = vsel %vm2639, %v4847, 0
      %v4901 = vsel %vm2639, %v4852, 0
      %4903 = vmatprep.subr.mxu0 0.0
      %4904 = vmatpush1.msra.mxu0 0.0
      %4905 = vmatprep.subr.mxu0 0.0
      %4906 = vmatpush1.msra.mxu0 0.0
      %4907 = vmatprep.subr.mxu0 0.0
      %4908 = vmatpush1.msra.mxu0 0.0
      %4909 = vmatprep.subr.mxu0 0.0
      %4910 = vmatpush1.msra.mxu0 0.0
      %4911 = vmatprep.subr.mxu0 0.0
      %4912 = vmatpush1.msra.mxu0 0.0
      %4913 = vmatprep.subr.mxu0 0.0
      %4914 = vmatpush1.msra.mxu0 0.0
      %4915 = vmatprep.subr.mxu0 0.0
      %4916 = vmatpush1.msra.mxu0 0.0
      %4917 = vmatprep.subr.mxu0 0.0
      %4918 = vmatpush1.msra.mxu0 0.0
      %4919 = vmatprep.subr.mxu0 0.0
      %4920 = vmatpush1.msra.mxu0 0.0
      %4921 = vmatprep.subr.mxu0 0.0
      %4922 = vmatpush1.msra.mxu0 0.0
      %4923 = vmatprep.subr.mxu0 0.0
      %4924 = vmatpush1.msra.mxu0 0.0
      %4925 = vmatprep.subr.mxu0 0.0
      %4926 = vmatpush1.msra.mxu0 0.0
      %4927 = vmatprep.subr.mxu0 0.0
      %4928 = vmatpush1.msra.mxu0 0.0
      %4929 = vmatprep.subr.mxu0 0.0
      %4930 = vmatpush1.msra.mxu0 0.0
      %4931 = vmatprep.subr.mxu0 0.0
      %4932 = vmatpush1.msra.mxu0 %v2438
      %4933 = vmatprep.subr.mxu0 0.0
      %4934 = vmatpush1.msra.mxu0 %v2437
      %4935 = vmatprep.subr.mxu0 0.0
      %4936 = vmatpush2.msra.mxu0 0.0
      %4937 = vmatprep.subr.mxu0 0.0
      %4938 = vmatpush2.msra.mxu0 0.0
      %4939 = vmatprep.subr.mxu0 0.0
      %4940 = vmatpush2.msra.mxu0 0.0
      %4941 = vmatprep.subr.mxu0 0.0
      %4942 = vmatpush2.msra.mxu0 0.0
      %4943 = vmatprep.subr.mxu0 0.0
      %4944 = vmatpush2.msra.mxu0 0.0
      %4945 = vmatprep.subr.mxu0 0.0
      %4946 = vmatpush2.msra.mxu0 0.0
      %4947 = vmatprep.subr.mxu0 0.0
      %4948 = vmatpush2.msra.mxu0 0.0
      %4949 = vmatprep.subr.mxu0 0.0
      %4950 = vmatpush2.msra.mxu0 0.0
      %4951 = vmatprep.subr.mxu0 0.0
      %4952 = vmatpush2.msra.mxu0 0.0
      %4953 = vmatprep.subr.mxu0 0.0
      %4954 = vmatpush2.msra.mxu0 0.0
      %4955 = vmatprep.subr.mxu0 0.0
      %4956 = vmatpush2.msra.mxu0 0.0
      %4957 = vmatprep.subr.mxu0 0.0
      %4958 = vmatpush2.msra.mxu0 0.0
      %4959 = vmatprep.subr.mxu0 0.0
      %4960 = vmatpush2.msra.mxu0 0.0
      %4961 = vmatprep.subr.mxu0 0.0
      %4962 = vmatpush2.msra.mxu0 0.0
      %4963 = vmatprep.subr.mxu0 0.0
      %4964 = vmatpush2.msra.mxu0 0.0
      %4965 = vmatprep.subr.mxu0 0.0
      %4966 = vmatpush2.msra.mxu0 0.0
      %4967 = vmatprep.mubr.f32.mxu0 0.0
      %4968 = vmatmul.mubr.f32.gmra.mxu0 %v4856
      %v4969 = vpop.f32.mrf.mxu0
      %v4970 = vadd.f32 0.0, %v4969
      %v4971 = vpop.f32.mrf.mxu0
      %4972 = vmatprep.mubr.f32.mxu0 0.0
      %4973 = vmatmul.mubr.f32.gmra.mxu0 %v4859
      %v4974 = vpop.f32.mrf.mxu0
      %v4975 = vadd.f32 0.0, %v4974
      %v4976 = vpop.f32.mrf.mxu0
      %4977 = vmatprep.mubr.f32.mxu0 0.0
      %4978 = vmatmul.mubr.f32.gmra.mxu0 %v4862
      %v4979 = vpop.f32.mrf.mxu0
      %v4980 = vadd.f32 0.0, %v4979
      %v4981 = vpop.f32.mrf.mxu0
      %4982 = vmatprep.mubr.f32.mxu0 0.0
      %4983 = vmatmul.mubr.f32.gmra.mxu0 %v4865
      %v4984 = vpop.f32.mrf.mxu0
      %v4985 = vadd.f32 0.0, %v4984
      %v4986 = vpop.f32.mrf.mxu0
      %4987 = vmatprep.mubr.f32.mxu0 0.0
      %4988 = vmatmul.mubr.f32.gmra.mxu0 %v4868
      %v4989 = vpop.f32.mrf.mxu0
      %v4990 = vadd.f32 0.0, %v4989
      %v4991 = vpop.f32.mrf.mxu0
      %4992 = vmatprep.mubr.f32.mxu0 0.0
      %4993 = vmatmul.mubr.f32.gmra.mxu0 %v4871
      %v4994 = vpop.f32.mrf.mxu0
      %v4995 = vadd.f32 0.0, %v4994
      %v4996 = vpop.f32.mrf.mxu0
      %4997 = vmatprep.mubr.f32.mxu0 0.0
      %4998 = vmatmul.mubr.f32.gmra.mxu0 %v4874
      %v4999 = vpop.f32.mrf.mxu0
      %v5000 = vadd.f32 0.0, %v4999
      %v5001 = vpop.f32.mrf.mxu0
      %5002 = vmatprep.mubr.f32.mxu0 0.0
      %5003 = vmatmul.mubr.f32.gmra.mxu0 %v4877
      %v5004 = vpop.f32.mrf.mxu0
      %v5005 = vadd.f32 0.0, %v5004
      %v5006 = vpop.f32.mrf.mxu0
      %5007 = vmatprep.mubr.f32.mxu0 0.0
      %5008 = vmatmul.mubr.f32.gmra.mxu0 %v4880
      %v5009 = vpop.f32.mrf.mxu0
      %v5010 = vadd.f32 0.0, %v5009
      %v5011 = vpop.f32.mrf.mxu0
      %5012 = vmatprep.mubr.f32.mxu0 0.0
      %5013 = vmatmul.mubr.f32.gmra.mxu0 %v4883
      %v5014 = vpop.f32.mrf.mxu0
      %v5015 = vadd.f32 0.0, %v5014
      %v5016 = vpop.f32.mrf.mxu0
      %5017 = vmatprep.mubr.f32.mxu0 0.0
      %5018 = vmatmul.mubr.f32.gmra.mxu0 %v4886
      %v5019 = vpop.f32.mrf.mxu0
      %v5020 = vadd.f32 0.0, %v5019
      %v5021 = vpop.f32.mrf.mxu0
      %5022 = vmatprep.mubr.f32.mxu0 0.0
      %5023 = vmatmul.mubr.f32.gmra.mxu0 %v4889
      %v5024 = vpop.f32.mrf.mxu0
      %v5025 = vadd.f32 0.0, %v5024
      %v5026 = vpop.f32.mrf.mxu0
      %5027 = vmatprep.mubr.f32.mxu0 0.0
      %5028 = vmatmul.mubr.f32.gmra.mxu0 %v4892
      %v5029 = vpop.f32.mrf.mxu0
      %v5030 = vadd.f32 0.0, %v5029
      %v5031 = vpop.f32.mrf.mxu0
      %5032 = vmatprep.mubr.f32.mxu0 0.0
      %5033 = vmatmul.mubr.f32.gmra.mxu0 %v4895
      %v5034 = vpop.f32.mrf.mxu0
      %v5035 = vadd.f32 0.0, %v5034
      %v5036 = vpop.f32.mrf.mxu0
      %5037 = vmatprep.mubr.f32.mxu0 0.0
      %5038 = vmatmul.mubr.f32.gmra.mxu0 %v4898
      %v5039 = vpop.f32.mrf.mxu0
      %v5040 = vadd.f32 0.0, %v5039
      %v5041 = vpop.f32.mrf.mxu0
      %5042 = vmatprep.mubr.f32.mxu0 0.0
      %5043 = vmatmul.mubr.f32.gmra.mxu0 %v4901
      %v5044 = vpop.f32.mrf.mxu0
      %v5045 = vadd.f32 0.0, %v5044
      %v5046 = vpop.f32.mrf.mxu0
      %5047 = vdwg.mxu0
      %v5048 = vmul.f32 %v4970, %v2439
      %v5049 = vmul.f32 %v4975, %v2440
      %v5050 = vmul.f32 %v4980, %v2441
      %v5051 = vmul.f32 %v4985, %v2442
      %v5052 = vmul.f32 %v4990, %v2443
      %v5053 = vmul.f32 %v4995, %v2444
      %v5054 = vmul.f32 %v5000, %v2445
      %v5055 = vmul.f32 %v5005, %v2446
      %v5056 = vmul.f32 %v5010, %v2447
      %v5057 = vmul.f32 %v5015, %v2448
      %v5058 = vmul.f32 %v5020, %v2449
      %v5059 = vmul.f32 %v5025, %v2450
      %v5060 = vmul.f32 %v5030, %v2451
      %v5061 = vmul.f32 %v5035, %v2452
      %v5062 = vmul.f32 %v5040, %v2453
      %v5063 = vmul.f32 %v5045, %v2454
      %v5064 = vld [vmem:[%s6 + $0x80] sm:$0xff]
      %v5065 = vld [vmem:[%s6 + $0x88] sm:$0xff]
      %v5066 = vld [vmem:[%s6 + $0x90] sm:$0xff]
      %v5067 = vld [vmem:[%s6 + $0x98] sm:$0xff]
      %v5068 = vld [vmem:[%s6 + $0xa0] sm:$0xff]
      %v5069 = vld [vmem:[%s6 + $0xa8] sm:$0xff]
      %v5070 = vld [vmem:[%s6 + $0xb0] sm:$0xff]
      %v5071 = vld [vmem:[%s6 + $0xb8] sm:$0xff]
      %v5072 = vld [vmem:[%s6 + $0xc0] sm:$0xff]
      %v5073 = vld [vmem:[%s6 + $0xc8] sm:$0xff]
      %v5074 = vld [vmem:[%s6 + $0xd0] sm:$0xff]
      %v5075 = vld [vmem:[%s6 + $0xd8] sm:$0xff]
      %v5076 = vld [vmem:[%s6 + $0xe0] sm:$0xff]
      %v5077 = vld [vmem:[%s6 + $0xe8] sm:$0xff]
      %v5078 = vld [vmem:[%s6 + $0xf0] sm:$0xff]
      %v5079 = vld [vmem:[%s6 + $0xf8] sm:$0xff]
      %v5081 = vsel %vm755, %v5064, 0
      %v5084 = vsel %vm755, %v5065, 0
      %v5087 = vsel %vm755, %v5066, 0
      %v5090 = vsel %vm755, %v5067, 0
      %v5093 = vsel %vm755, %v5068, 0
      %v5096 = vsel %vm755, %v5069, 0
      %v5099 = vsel %vm755, %v5070, 0
      %v5102 = vsel %vm755, %v5071, 0
      %v5105 = vsel %vm755, %v5072, 0
      %v5108 = vsel %vm755, %v5073, 0
      %v5111 = vsel %vm755, %v5074, 0
      %v5114 = vsel %vm755, %v5075, 0
      %v5117 = vsel %vm755, %v5076, 0
      %v5120 = vsel %vm755, %v5077, 0
      %v5123 = vsel %vm755, %v5078, 0
      %v5126 = vsel %vm755, %v5079, 0
      %5128 = vmatprep.subr.mxu0 0.0
      %5129 = vmatpush1.msra.mxu0 0.0
      %5130 = vmatprep.subr.mxu0 0.0
      %5131 = vmatpush1.msra.mxu0 0.0
      %5132 = vmatprep.subr.mxu0 0.0
      %5133 = vmatpush1.msra.mxu0 0.0
      %5134 = vmatprep.subr.mxu0 0.0
      %5135 = vmatpush1.msra.mxu0 0.0
      %5136 = vmatprep.subr.mxu0 0.0
      %5137 = vmatpush1.msra.mxu0 0.0
      %5138 = vmatprep.subr.mxu0 0.0
      %5139 = vmatpush1.msra.mxu0 0.0
      %5140 = vmatprep.subr.mxu0 0.0
      %5141 = vmatpush1.msra.mxu0 0.0
      %5142 = vmatprep.subr.mxu0 0.0
      %5143 = vmatpush1.msra.mxu0 0.0
      %5144 = vmatprep.subr.mxu0 0.0
      %5145 = vmatpush1.msra.mxu0 %v554
      %5146 = vmatprep.subr.mxu0 0.0
      %5147 = vmatpush1.msra.mxu0 %v553
      %5148 = vmatprep.subr.mxu0 0.0
      %5149 = vmatpush1.msra.mxu0 %v552
      %5150 = vmatprep.subr.mxu0 0.0
      %5151 = vmatpush1.msra.mxu0 %v551
      %5152 = vmatprep.subr.mxu0 0.0
      %5153 = vmatpush1.msra.mxu0 %v550
      %5154 = vmatprep.subr.mxu0 0.0
      %5155 = vmatpush1.msra.mxu0 %v549
      %5156 = vmatprep.subr.mxu0 0.0
      %5157 = vmatpush1.msra.mxu0 %v548
      %5158 = vmatprep.subr.mxu0 0.0
      %5159 = vmatpush1.msra.mxu0 %v547
      %5160 = vmatprep.subr.mxu0 0.0
      %5161 = vmatpush2.msra.mxu0 0.0
      %5162 = vmatprep.subr.mxu0 0.0
      %5163 = vmatpush2.msra.mxu0 0.0
      %5164 = vmatprep.subr.mxu0 0.0
      %5165 = vmatpush2.msra.mxu0 0.0
      %5166 = vmatprep.subr.mxu0 0.0
      %5167 = vmatpush2.msra.mxu0 0.0
      %5168 = vmatprep.subr.mxu0 0.0
      %5169 = vmatpush2.msra.mxu0 0.0
      %5170 = vmatprep.subr.mxu0 0.0
      %5171 = vmatpush2.msra.mxu0 0.0
      %5172 = vmatprep.subr.mxu0 0.0
      %5173 = vmatpush2.msra.mxu0 0.0
      %5174 = vmatprep.subr.mxu0 0.0
      %5175 = vmatpush2.msra.mxu0 0.0
      %5176 = vmatprep.subr.mxu0 0.0
      %5177 = vmatpush2.msra.mxu0 0.0
      %5178 = vmatprep.subr.mxu0 0.0
      %5179 = vmatpush2.msra.mxu0 0.0
      %5180 = vmatprep.subr.mxu0 0.0
      %5181 = vmatpush2.msra.mxu0 0.0
      %5182 = vmatprep.subr.mxu0 0.0
      %5183 = vmatpush2.msra.mxu0 0.0
      %5184 = vmatprep.subr.mxu0 0.0
      %5185 = vmatpush2.msra.mxu0 0.0
      %5186 = vmatprep.subr.mxu0 0.0
      %5187 = vmatpush2.msra.mxu0 0.0
      %5188 = vmatprep.subr.mxu0 0.0
      %5189 = vmatpush2.msra.mxu0 0.0
      %5190 = vmatprep.subr.mxu0 0.0
      %5191 = vmatpush2.msra.mxu0 0.0
      %5192 = vmatprep.mubr.f32.mxu0 0.0
      %5193 = vmatmul.mubr.f32.gmra.mxu0 %v5081
      %v5194 = vpop.f32.mrf.mxu0
      %v5195 = vadd.f32 0.0, %v5194
      %v5196 = vpop.f32.mrf.mxu0
      %5197 = vmatprep.mubr.f32.mxu0 0.0
      %5198 = vmatmul.mubr.f32.gmra.mxu0 %v5084
      %v5199 = vpop.f32.mrf.mxu0
      %v5200 = vadd.f32 0.0, %v5199
      %v5201 = vpop.f32.mrf.mxu0
      %5202 = vmatprep.mubr.f32.mxu0 0.0
      %5203 = vmatmul.mubr.f32.gmra.mxu0 %v5087
      %v5204 = vpop.f32.mrf.mxu0
      %v5205 = vadd.f32 0.0, %v5204
      %v5206 = vpop.f32.mrf.mxu0
      %5207 = vmatprep.mubr.f32.mxu0 0.0
      %5208 = vmatmul.mubr.f32.gmra.mxu0 %v5090
      %v5209 = vpop.f32.mrf.mxu0
      %v5210 = vadd.f32 0.0, %v5209
      %v5211 = vpop.f32.mrf.mxu0
      %5212 = vmatprep.mubr.f32.mxu0 0.0
      %5213 = vmatmul.mubr.f32.gmra.mxu0 %v5093
      %v5214 = vpop.f32.mrf.mxu0
      %v5215 = vadd.f32 0.0, %v5214
      %v5216 = vpop.f32.mrf.mxu0
      %5217 = vmatprep.mubr.f32.mxu0 0.0
      %5218 = vmatmul.mubr.f32.gmra.mxu0 %v5096
      %v5219 = vpop.f32.mrf.mxu0
      %v5220 = vadd.f32 0.0, %v5219
      %v5221 = vpop.f32.mrf.mxu0
      %5222 = vmatprep.mubr.f32.mxu0 0.0
      %5223 = vmatmul.mubr.f32.gmra.mxu0 %v5099
      %v5224 = vpop.f32.mrf.mxu0
      %v5225 = vadd.f32 0.0, %v5224
      %v5226 = vpop.f32.mrf.mxu0
      %5227 = vmatprep.mubr.f32.mxu0 0.0
      %5228 = vmatmul.mubr.f32.gmra.mxu0 %v5102
      %v5229 = vpop.f32.mrf.mxu0
      %v5230 = vadd.f32 0.0, %v5229
      %v5231 = vpop.f32.mrf.mxu0
      %5232 = vmatprep.mubr.f32.mxu0 0.0
      %5233 = vmatmul.mubr.f32.gmra.mxu0 %v5105
      %v5234 = vpop.f32.mrf.mxu0
      %v5235 = vadd.f32 0.0, %v5234
      %v5236 = vpop.f32.mrf.mxu0
      %5237 = vmatprep.mubr.f32.mxu0 0.0
      %5238 = vmatmul.mubr.f32.gmra.mxu0 %v5108
      %v5239 = vpop.f32.mrf.mxu0
      %v5240 = vadd.f32 0.0, %v5239
      %v5241 = vpop.f32.mrf.mxu0
      %5242 = vmatprep.mubr.f32.mxu0 0.0
      %5243 = vmatmul.mubr.f32.gmra.mxu0 %v5111
      %v5244 = vpop.f32.mrf.mxu0
      %v5245 = vadd.f32 0.0, %v5244
      %v5246 = vpop.f32.mrf.mxu0
      %5247 = vmatprep.mubr.f32.mxu0 0.0
      %5248 = vmatmul.mubr.f32.gmra.mxu0 %v5114
      %v5249 = vpop.f32.mrf.mxu0
      %v5250 = vadd.f32 0.0, %v5249
      %v5251 = vpop.f32.mrf.mxu0
      %5252 = vmatprep.mubr.f32.mxu0 0.0
      %5253 = vmatmul.mubr.f32.gmra.mxu0 %v5117
      %v5254 = vpop.f32.mrf.mxu0
      %v5255 = vadd.f32 0.0, %v5254
      %v5256 = vpop.f32.mrf.mxu0
      %5257 = vmatprep.mubr.f32.mxu0 0.0
      %5258 = vmatmul.mubr.f32.gmra.mxu0 %v5120
      %v5259 = vpop.f32.mrf.mxu0
      %v5260 = vadd.f32 0.0, %v5259
      %v5261 = vpop.f32.mrf.mxu0
      %5262 = vmatprep.mubr.f32.mxu0 0.0
      %5263 = vmatmul.mubr.f32.gmra.mxu0 %v5123
      %v5264 = vpop.f32.mrf.mxu0
      %v5265 = vadd.f32 0.0, %v5264
      %v5266 = vpop.f32.mrf.mxu0
      %5267 = vmatprep.mubr.f32.mxu0 0.0
      %5268 = vmatmul.mubr.f32.gmra.mxu0 %v5126
      %v5269 = vpop.f32.mrf.mxu0
      %v5270 = vadd.f32 0.0, %v5269
      %v5271 = vpop.f32.mrf.mxu0
      %5272 = vdwg.mxu0
      %5273 = vmatprep.subr.mxu0 0.0
      %5274 = vmatpush1.msra.mxu0 %v5063
      %5275 = vmatprep.subr.mxu0 0.0
      %5276 = vmatpush1.msra.mxu0 %v5062
      %5277 = vmatprep.subr.mxu0 0.0
      %5278 = vmatpush1.msra.mxu0 %v5061
      %5279 = vmatprep.subr.mxu0 0.0
      %5280 = vmatpush1.msra.mxu0 %v5060
      %5281 = vmatprep.subr.mxu0 0.0
      %5282 = vmatpush1.msra.mxu0 %v5059
      %5283 = vmatprep.subr.mxu0 0.0
      %5284 = vmatpush1.msra.mxu0 %v5058
      %5285 = vmatprep.subr.mxu0 0.0
      %5286 = vmatpush1.msra.mxu0 %v5057
      %5287 = vmatprep.subr.mxu0 0.0
      %5288 = vmatpush1.msra.mxu0 %v5056
      %5289 = vmatprep.subr.mxu0 0.0
      %5290 = vmatpush1.msra.mxu0 %v5055
      %5291 = vmatprep.subr.mxu0 0.0
      %5292 = vmatpush1.msra.mxu0 %v5054
      %5293 = vmatprep.subr.mxu0 0.0
      %5294 = vmatpush1.msra.mxu0 %v5053
      %5295 = vmatprep.subr.mxu0 0.0
      %5296 = vmatpush1.msra.mxu0 %v5052
      %5297 = vmatprep.subr.mxu0 0.0
      %5298 = vmatpush1.msra.mxu0 %v5051
      %5299 = vmatprep.subr.mxu0 0.0
      %5300 = vmatpush1.msra.mxu0 %v5050
      %5301 = vmatprep.subr.mxu0 0.0
      %5302 = vmatpush1.msra.mxu0 %v5049
      %5303 = vmatprep.subr.mxu0 0.0
      %5304 = vmatpush1.msra.mxu0 %v5048
      %5305 = vmatprep.subr.mxu0 0.0
      %5306 = vmatpush2.msra.mxu0 0.0
      %5307 = vmatprep.subr.mxu0 0.0
      %5308 = vmatpush2.msra.mxu0 0.0
      %5309 = vmatprep.subr.mxu0 0.0
      %5310 = vmatpush2.msra.mxu0 0.0
      %5311 = vmatprep.subr.mxu0 0.0
      %5312 = vmatpush2.msra.mxu0 0.0
      %5313 = vmatprep.subr.mxu0 0.0
      %5314 = vmatpush2.msra.mxu0 0.0
      %5315 = vmatprep.subr.mxu0 0.0
      %5316 = vmatpush2.msra.mxu0 0.0
      %5317 = vmatprep.subr.mxu0 0.0
      %5318 = vmatpush2.msra.mxu0 0.0
      %5319 = vmatprep.subr.mxu0 0.0
      %5320 = vmatpush2.msra.mxu0 0.0
      %5321 = vmatprep.subr.mxu0 0.0
      %5322 = vmatpush2.msra.mxu0 0.0
      %5323 = vmatprep.subr.mxu0 0.0
      %5324 = vmatpush2.msra.mxu0 0.0
      %5325 = vmatprep.subr.mxu0 0.0
      %5326 = vmatpush2.msra.mxu0 0.0
      %5327 = vmatprep.subr.mxu0 0.0
      %5328 = vmatpush2.msra.mxu0 0.0
      %5329 = vmatprep.subr.mxu0 0.0
      %5330 = vmatpush2.msra.mxu0 0.0
      %5331 = vmatprep.subr.mxu0 0.0
      %5332 = vmatpush2.msra.mxu0 0.0
      %5333 = vmatprep.subr.mxu0 0.0
      %5334 = vmatpush2.msra.mxu0 0.0
      %5335 = vmatprep.subr.mxu0 0.0
      %5336 = vmatpush2.msra.mxu0 0.0
      %5337 = vmatprep.mubr.f32.mxu0 0.0
      %5338 = vmatmul.mubr.f32.gmra.mxu0 %v5195
      %v5339 = vpop.f32.mrf.mxu0
      %v5340 = vadd.f32 0.0, %v5339
      %v5341 = vpop.f32.mrf.mxu0
      %5342 = vmatprep.mubr.f32.mxu0 0.0
      %5343 = vmatmul.mubr.f32.gmra.mxu0 %v5200
      %v5344 = vpop.f32.mrf.mxu0
      %v5345 = vadd.f32 0.0, %v5344
      %v5346 = vpop.f32.mrf.mxu0
      %5347 = vmatprep.mubr.f32.mxu0 0.0
      %5348 = vmatmul.mubr.f32.gmra.mxu0 %v5205
      %v5349 = vpop.f32.mrf.mxu0
      %v5350 = vadd.f32 0.0, %v5349
      %v5351 = vpop.f32.mrf.mxu0
      %5352 = vmatprep.mubr.f32.mxu0 0.0
      %5353 = vmatmul.mubr.f32.gmra.mxu0 %v5210
      %v5354 = vpop.f32.mrf.mxu0
      %v5355 = vadd.f32 0.0, %v5354
      %v5356 = vpop.f32.mrf.mxu0
      %5357 = vmatprep.mubr.f32.mxu0 0.0
      %5358 = vmatmul.mubr.f32.gmra.mxu0 %v5215
      %v5359 = vpop.f32.mrf.mxu0
      %v5360 = vadd.f32 0.0, %v5359
      %v5361 = vpop.f32.mrf.mxu0
      %5362 = vmatprep.mubr.f32.mxu0 0.0
      %5363 = vmatmul.mubr.f32.gmra.mxu0 %v5220
      %v5364 = vpop.f32.mrf.mxu0
      %v5365 = vadd.f32 0.0, %v5364
      %v5366 = vpop.f32.mrf.mxu0
      %5367 = vmatprep.mubr.f32.mxu0 0.0
      %5368 = vmatmul.mubr.f32.gmra.mxu0 %v5225
      %v5369 = vpop.f32.mrf.mxu0
      %v5370 = vadd.f32 0.0, %v5369
      %v5371 = vpop.f32.mrf.mxu0
      %5372 = vmatprep.mubr.f32.mxu0 0.0
      %5373 = vmatmul.mubr.f32.gmra.mxu0 %v5230
      %v5374 = vpop.f32.mrf.mxu0
      %v5375 = vadd.f32 0.0, %v5374
      %v5376 = vpop.f32.mrf.mxu0
      %5377 = vmatprep.mubr.f32.mxu0 0.0
      %5378 = vmatmul.mubr.f32.gmra.mxu0 %v5235
      %v5379 = vpop.f32.mrf.mxu0
      %v5380 = vadd.f32 0.0, %v5379
      %v5381 = vpop.f32.mrf.mxu0
      %5382 = vmatprep.mubr.f32.mxu0 0.0
      %5383 = vmatmul.mubr.f32.gmra.mxu0 %v5240
      %v5384 = vpop.f32.mrf.mxu0
      %v5385 = vadd.f32 0.0, %v5384
      %v5386 = vpop.f32.mrf.mxu0
      %5387 = vmatprep.mubr.f32.mxu0 0.0
      %5388 = vmatmul.mubr.f32.gmra.mxu0 %v5245
      %v5389 = vpop.f32.mrf.mxu0
      %v5390 = vadd.f32 0.0, %v5389
      %v5391 = vpop.f32.mrf.mxu0
      %5392 = vmatprep.mubr.f32.mxu0 0.0
      %5393 = vmatmul.mubr.f32.gmra.mxu0 %v5250
      %v5394 = vpop.f32.mrf.mxu0
      %v5395 = vadd.f32 0.0, %v5394
      %v5396 = vpop.f32.mrf.mxu0
      %5397 = vmatprep.mubr.f32.mxu0 0.0
      %5398 = vmatmul.mubr.f32.gmra.mxu0 %v5255
      %v5399 = vpop.f32.mrf.mxu0
      %v5400 = vadd.f32 0.0, %v5399
      %v5401 = vpop.f32.mrf.mxu0
      %5402 = vmatprep.mubr.f32.mxu0 0.0
      %5403 = vmatmul.mubr.f32.gmra.mxu0 %v5260
      %v5404 = vpop.f32.mrf.mxu0
      %v5405 = vadd.f32 0.0, %v5404
      %v5406 = vpop.f32.mrf.mxu0
      %5407 = vmatprep.mubr.f32.mxu0 0.0
      %5408 = vmatmul.mubr.f32.gmra.mxu0 %v5265
      %v5409 = vpop.f32.mrf.mxu0
      %v5410 = vadd.f32 0.0, %v5409
      %v5411 = vpop.f32.mrf.mxu0
      %5412 = vmatprep.mubr.f32.mxu0 0.0
      %5413 = vmatmul.mubr.f32.gmra.mxu0 %v5270
      %v5414 = vpop.f32.mrf.mxu0
      %v5415 = vadd.f32 0.0, %v5414
      %v5416 = vpop.f32.mrf.mxu0
      %5417 = vdwg.mxu0
      %v5418 = vadd.f32 %v3847, %v5340
      %v5419 = vadd.f32 %v3848, %v5345
      %v5420 = vadd.f32 %v3849, %v5350
      %v5421 = vadd.f32 %v3850, %v5355
      %v5422 = vadd.f32 %v3851, %v5360
      %v5423 = vadd.f32 %v3852, %v5365
      %v5424 = vadd.f32 %v3853, %v5370
      %v5425 = vadd.f32 %v3854, %v5375
      %v5426 = vadd.f32 %v3855, %v5380
      %v5427 = vadd.f32 %v3856, %v5385
      %v5428 = vadd.f32 %v3857, %v5390
      %v5429 = vadd.f32 %v3858, %v5395
      %v5430 = vadd.f32 %v3859, %v5400
      %v5431 = vadd.f32 %v3860, %v5405
      %v5432 = vadd.f32 %v3861, %v5410
      %v5433 = vadd.f32 %v3862, %v5415
      %s5434 = scalar_lea.vmem %s8, 32
      %v5435 = vld [vmem:[%s5434] sm:$0xff]
      %v5436 = vld [vmem:[%s5434 + $0x8] sm:$0xff]
      %5437 = vxpose.xlu0.b32.start [1/16] %v975, 128
      %5438 = vxpose.xlu0.b32.cont [2/16] %v980, 128
      %5439 = vxpose.xlu0.b32.cont [3/16] %v985, 128
      %5440 = vxpose.xlu0.b32.cont [4/16] %v990, 128
      %5441 = vxpose.xlu0.b32.cont [5/16] 0.0, 128
      %5442 = vxpose.xlu0.b32.cont [6/16] 0.0, 128
      %5443 = vxpose.xlu0.b32.cont [7/16] 0.0, 128
      %5444 = vxpose.xlu0.b32.cont [8/16] 0.0, 128
      %5445 = vxpose.xlu0.b32.cont [9/16] 0.0, 128
      %5446 = vxpose.xlu0.b32.cont [10/16] 0.0, 128
      %5447 = vxpose.xlu0.b32.cont [11/16] 0.0, 128
      %5448 = vxpose.xlu0.b32.cont [12/16] 0.0, 128
      %5449 = vxpose.xlu0.b32.cont [13/16] 0.0, 128
      %5450 = vxpose.xlu0.b32.cont [14/16] 0.0, 128
      %5451 = vxpose.xlu0.b32.cont [15/16] 0.0, 128
      %5452 = vxpose.xlu0.b32.end [16/16] 0.0, 128
      %v5453 = vpop.trf.xlu0
      %v5454 = vpop.trf.xlu0
      %v5455 = vpop.trf.xlu0
      %v5456 = vpop.trf.xlu0
      %v5457 = vpop.trf.xlu0
      %v5458 = vpop.trf.xlu0
      %v5459 = vpop.trf.xlu0
      %v5460 = vpop.trf.xlu0
      %v5461 = vpop.trf.xlu0
      %v5462 = vpop.trf.xlu0
      %v5463 = vpop.trf.xlu0
      %v5464 = vpop.trf.xlu0
      %v5465 = vpop.trf.xlu0
      %v5466 = vpop.trf.xlu0
      %v5467 = vpop.trf.xlu0
      %v5468 = vpop.trf.xlu0
      %v5470 = vsel %vm2243, %v5453, 0
      %v5473 = vsel %vm2243, %v5454, 0
      %v5476 = vsel %vm2243, %v5455, 0
      %v5479 = vsel %vm2243, %v5456, 0
      %v5482 = vsel %vm2243, %v5457, 0
      %v5485 = vsel %vm2243, %v5458, 0
      %v5488 = vsel %vm2243, %v5459, 0
      %v5491 = vsel %vm2243, %v5460, 0
      %v5494 = vsel %vm2243, %v5461, 0
      %v5497 = vsel %vm2243, %v5462, 0
      %v5500 = vsel %vm2243, %v5463, 0
      %v5503 = vsel %vm2243, %v5464, 0
      %v5506 = vsel %vm2243, %v5465, 0
      %v5509 = vsel %vm2243, %v5466, 0
      %v5512 = vsel %vm2243, %v5467, 0
      %v5515 = vsel %vm2243, %v5468, 0
      %5517 = vmatprep.subr.mxu0 0.0
      %5518 = vmatpush1.msra.mxu0 0.0
      %5519 = vmatprep.subr.mxu0 0.0
      %5520 = vmatpush1.msra.mxu0 0.0
      %5521 = vmatprep.subr.mxu0 0.0
      %5522 = vmatpush1.msra.mxu0 0.0
      %5523 = vmatprep.subr.mxu0 0.0
      %5524 = vmatpush1.msra.mxu0 0.0
      %5525 = vmatprep.subr.mxu0 0.0
      %5526 = vmatpush1.msra.mxu0 0.0
      %5527 = vmatprep.subr.mxu0 0.0
      %5528 = vmatpush1.msra.mxu0 0.0
      %5529 = vmatprep.subr.mxu0 0.0
      %5530 = vmatpush1.msra.mxu0 0.0
      %5531 = vmatprep.subr.mxu0 0.0
      %5532 = vmatpush1.msra.mxu0 0.0
      %5533 = vmatprep.subr.mxu0 0.0
      %5534 = vmatpush1.msra.mxu0 0.0
      %5535 = vmatprep.subr.mxu0 0.0
      %5536 = vmatpush1.msra.mxu0 0.0
      %5537 = vmatprep.subr.mxu0 0.0
      %5538 = vmatpush1.msra.mxu0 0.0
      %5539 = vmatprep.subr.mxu0 0.0
      %5540 = vmatpush1.msra.mxu0 0.0
      %5541 = vmatprep.subr.mxu0 0.0
      %5542 = vmatpush1.msra.mxu0 %v1010
      %5543 = vmatprep.subr.mxu0 0.0
      %5544 = vmatpush1.msra.mxu0 %v1005
      %5545 = vmatprep.subr.mxu0 0.0
      %5546 = vmatpush1.msra.mxu0 %v1000
      %5547 = vmatprep.subr.mxu0 0.0
      %5548 = vmatpush1.msra.mxu0 %v995
      %5549 = vmatprep.subr.mxu0 0.0
      %5550 = vmatpush2.msra.mxu0 0.0
      %5551 = vmatprep.subr.mxu0 0.0
      %5552 = vmatpush2.msra.mxu0 0.0
      %5553 = vmatprep.subr.mxu0 0.0
      %5554 = vmatpush2.msra.mxu0 0.0
      %5555 = vmatprep.subr.mxu0 0.0
      %5556 = vmatpush2.msra.mxu0 0.0
      %5557 = vmatprep.subr.mxu0 0.0
      %5558 = vmatpush2.msra.mxu0 0.0
      %5559 = vmatprep.subr.mxu0 0.0
      %5560 = vmatpush2.msra.mxu0 0.0
      %5561 = vmatprep.subr.mxu0 0.0
      %5562 = vmatpush2.msra.mxu0 0.0
      %5563 = vmatprep.subr.mxu0 0.0
      %5564 = vmatpush2.msra.mxu0 0.0
      %5565 = vmatprep.subr.mxu0 0.0
      %5566 = vmatpush2.msra.mxu0 0.0
      %5567 = vmatprep.subr.mxu0 0.0
      %5568 = vmatpush2.msra.mxu0 0.0
      %5569 = vmatprep.subr.mxu0 0.0
      %5570 = vmatpush2.msra.mxu0 0.0
      %5571 = vmatprep.subr.mxu0 0.0
      %5572 = vmatpush2.msra.mxu0 0.0
      %5573 = vmatprep.subr.mxu0 0.0
      %5574 = vmatpush2.msra.mxu0 0.0
      %5575 = vmatprep.subr.mxu0 0.0
      %5576 = vmatpush2.msra.mxu0 0.0
      %5577 = vmatprep.subr.mxu0 0.0
      %5578 = vmatpush2.msra.mxu0 0.0
      %5579 = vmatprep.subr.mxu0 0.0
      %5580 = vmatpush2.msra.mxu0 0.0
      %5581 = vmatprep.mubr.f32.mxu0 0.0
      %5582 = vmatmul.mubr.f32.gmra.mxu0 %v5470
      %v5583 = vpop.f32.mrf.mxu0
      %v5584 = vadd.f32 0.0, %v5583
      %v5585 = vpop.f32.mrf.mxu0
      %5586 = vmatprep.mubr.f32.mxu0 0.0
      %5587 = vmatmul.mubr.f32.gmra.mxu0 %v5473
      %v5588 = vpop.f32.mrf.mxu0
      %v5589 = vadd.f32 0.0, %v5588
      %v5590 = vpop.f32.mrf.mxu0
      %5591 = vmatprep.mubr.f32.mxu0 0.0
      %5592 = vmatmul.mubr.f32.gmra.mxu0 %v5476
      %v5593 = vpop.f32.mrf.mxu0
      %v5594 = vadd.f32 0.0, %v5593
      %v5595 = vpop.f32.mrf.mxu0
      %5596 = vmatprep.mubr.f32.mxu0 0.0
      %5597 = vmatmul.mubr.f32.gmra.mxu0 %v5479
      %v5598 = vpop.f32.mrf.mxu0
      %v5599 = vadd.f32 0.0, %v5598
      %v5600 = vpop.f32.mrf.mxu0
      %5601 = vmatprep.mubr.f32.mxu0 0.0
      %5602 = vmatmul.mubr.f32.gmra.mxu0 %v5482
      %v5603 = vpop.f32.mrf.mxu0
      %v5604 = vadd.f32 0.0, %v5603
      %v5605 = vpop.f32.mrf.mxu0
      %5606 = vmatprep.mubr.f32.mxu0 0.0
      %5607 = vmatmul.mubr.f32.gmra.mxu0 %v5485
      %v5608 = vpop.f32.mrf.mxu0
      %v5609 = vadd.f32 0.0, %v5608
      %v5610 = vpop.f32.mrf.mxu0
      %5611 = vmatprep.mubr.f32.mxu0 0.0
      %5612 = vmatmul.mubr.f32.gmra.mxu0 %v5488
      %v5613 = vpop.f32.mrf.mxu0
      %v5614 = vadd.f32 0.0, %v5613
      %v5615 = vpop.f32.mrf.mxu0
      %5616 = vmatprep.mubr.f32.mxu0 0.0
      %5617 = vmatmul.mubr.f32.gmra.mxu0 %v5491
      %v5618 = vpop.f32.mrf.mxu0
      %v5619 = vadd.f32 0.0, %v5618
      %v5620 = vpop.f32.mrf.mxu0
      %5621 = vmatprep.mubr.f32.mxu0 0.0
      %5622 = vmatmul.mubr.f32.gmra.mxu0 %v5494
      %v5623 = vpop.f32.mrf.mxu0
      %v5624 = vadd.f32 0.0, %v5623
      %v5625 = vpop.f32.mrf.mxu0
      %5626 = vmatprep.mubr.f32.mxu0 0.0
      %5627 = vmatmul.mubr.f32.gmra.mxu0 %v5497
      %v5628 = vpop.f32.mrf.mxu0
      %v5629 = vadd.f32 0.0, %v5628
      %v5630 = vpop.f32.mrf.mxu0
      %5631 = vmatprep.mubr.f32.mxu0 0.0
      %5632 = vmatmul.mubr.f32.gmra.mxu0 %v5500
      %v5633 = vpop.f32.mrf.mxu0
      %v5634 = vadd.f32 0.0, %v5633
      %v5635 = vpop.f32.mrf.mxu0
      %5636 = vmatprep.mubr.f32.mxu0 0.0
      %5637 = vmatmul.mubr.f32.gmra.mxu0 %v5503
      %v5638 = vpop.f32.mrf.mxu0
      %v5639 = vadd.f32 0.0, %v5638
      %v5640 = vpop.f32.mrf.mxu0
      %5641 = vmatprep.mubr.f32.mxu0 0.0
      %5642 = vmatmul.mubr.f32.gmra.mxu0 %v5506
      %v5643 = vpop.f32.mrf.mxu0
      %v5644 = vadd.f32 0.0, %v5643
      %v5645 = vpop.f32.mrf.mxu0
      %5646 = vmatprep.mubr.f32.mxu0 0.0
      %5647 = vmatmul.mubr.f32.gmra.mxu0 %v5509
      %v5648 = vpop.f32.mrf.mxu0
      %v5649 = vadd.f32 0.0, %v5648
      %v5650 = vpop.f32.mrf.mxu0
      %5651 = vmatprep.mubr.f32.mxu0 0.0
      %5652 = vmatmul.mubr.f32.gmra.mxu0 %v5512
      %v5653 = vpop.f32.mrf.mxu0
      %v5654 = vadd.f32 0.0, %v5653
      %v5655 = vpop.f32.mrf.mxu0
      %5656 = vmatprep.mubr.f32.mxu0 0.0
      %5657 = vmatmul.mubr.f32.gmra.mxu0 %v5515
      %v5658 = vpop.f32.mrf.mxu0
      %v5659 = vadd.f32 0.0, %v5658
      %v5660 = vpop.f32.mrf.mxu0
      %5661 = vdwg.mxu0
      %v5662 = vmul.f32 %v5584, %v2439
      %v5663 = vmul.f32 %v5589, %v2440
      %v5664 = vmul.f32 %v5594, %v2441
      %v5665 = vmul.f32 %v5599, %v2442
      %v5666 = vmul.f32 %v5604, %v2443
      %v5667 = vmul.f32 %v5609, %v2444
      %v5668 = vmul.f32 %v5614, %v2445
      %v5669 = vmul.f32 %v5619, %v2446
      %v5670 = vmul.f32 %v5624, %v2447
      %v5671 = vmul.f32 %v5629, %v2448
      %v5672 = vmul.f32 %v5634, %v2449
      %v5673 = vmul.f32 %v5639, %v2450
      %v5674 = vmul.f32 %v5644, %v2451
      %v5675 = vmul.f32 %v5649, %v2452
      %v5676 = vmul.f32 %v5654, %v2453
      %v5677 = vmul.f32 %v5659, %v2454
      %5678 = vmatprep.subr.mxu0 0.0
      %5679 = vmatpush1.msra.mxu0 %v5677
      %5680 = vmatprep.subr.mxu0 0.0
      %5681 = vmatpush1.msra.mxu0 %v5676
      %5682 = vmatprep.subr.mxu0 0.0
      %5683 = vmatpush1.msra.mxu0 %v5675
      %5684 = vmatprep.subr.mxu0 0.0
      %5685 = vmatpush1.msra.mxu0 %v5674
      %5686 = vmatprep.subr.mxu0 0.0
      %5687 = vmatpush1.msra.mxu0 %v5673
      %5688 = vmatprep.subr.mxu0 0.0
      %5689 = vmatpush1.msra.mxu0 %v5672
      %5690 = vmatprep.subr.mxu0 0.0
      %5691 = vmatpush1.msra.mxu0 %v5671
      %5692 = vmatprep.subr.mxu0 0.0
      %5693 = vmatpush1.msra.mxu0 %v5670
      %5694 = vmatprep.subr.mxu0 0.0
      %5695 = vmatpush1.msra.mxu0 %v5669
      %5696 = vmatprep.subr.mxu0 0.0
      %5697 = vmatpush1.msra.mxu0 %v5668
      %5698 = vmatprep.subr.mxu0 0.0
      %5699 = vmatpush1.msra.mxu0 %v5667
      %5700 = vmatprep.subr.mxu0 0.0
      %5701 = vmatpush1.msra.mxu0 %v5666
      %5702 = vmatprep.subr.mxu0 0.0
      %5703 = vmatpush1.msra.mxu0 %v5665
      %5704 = vmatprep.subr.mxu0 0.0
      %5705 = vmatpush1.msra.mxu0 %v5664
      %5706 = vmatprep.subr.mxu0 0.0
      %5707 = vmatpush1.msra.mxu0 %v5663
      %5708 = vmatprep.subr.mxu0 0.0
      %5709 = vmatpush1.msra.mxu0 %v5662
      %5710 = vmatprep.subr.mxu0 0.0
      %5711 = vmatpush2.msra.mxu0 0.0
      %5712 = vmatprep.subr.mxu0 0.0
      %5713 = vmatpush2.msra.mxu0 0.0
      %5714 = vmatprep.subr.mxu0 0.0
      %5715 = vmatpush2.msra.mxu0 0.0
      %5716 = vmatprep.subr.mxu0 0.0
      %5717 = vmatpush2.msra.mxu0 0.0
      %5718 = vmatprep.subr.mxu0 0.0
      %5719 = vmatpush2.msra.mxu0 0.0
      %5720 = vmatprep.subr.mxu0 0.0
      %5721 = vmatpush2.msra.mxu0 0.0
      %5722 = vmatprep.subr.mxu0 0.0
      %5723 = vmatpush2.msra.mxu0 0.0
      %5724 = vmatprep.subr.mxu0 0.0
      %5725 = vmatpush2.msra.mxu0 0.0
      %5726 = vmatprep.subr.mxu0 0.0
      %5727 = vmatpush2.msra.mxu0 0.0
      %5728 = vmatprep.subr.mxu0 0.0
      %5729 = vmatpush2.msra.mxu0 0.0
      %5730 = vmatprep.subr.mxu0 0.0
      %5731 = vmatpush2.msra.mxu0 0.0
      %5732 = vmatprep.subr.mxu0 0.0
      %5733 = vmatpush2.msra.mxu0 0.0
      %5734 = vmatprep.subr.mxu0 0.0
      %5735 = vmatpush2.msra.mxu0 0.0
      %5736 = vmatprep.subr.mxu0 0.0
      %5737 = vmatpush2.msra.mxu0 0.0
      %5738 = vmatprep.subr.mxu0 0.0
      %5739 = vmatpush2.msra.mxu0 0.0
      %5740 = vmatprep.subr.mxu0 0.0
      %5741 = vmatpush2.msra.mxu0 0.0
      %5742 = vmatprep.mubr.f32.mxu0 0.0
      %5743 = vmatmul.mubr.f32.gmra.mxu0 %v2437
      %v5744 = vpop.f32.mrf.mxu0
      %v5745 = vadd.f32 0.0, %v5744
      %v5746 = vpop.f32.mrf.mxu0
      %5747 = vmatprep.mubr.f32.mxu0 0.0
      %5748 = vmatmul.mubr.f32.gmra.mxu0 %v2438
      %v5749 = vpop.f32.mrf.mxu0
      %v5750 = vadd.f32 0.0, %v5749
      %v5751 = vpop.f32.mrf.mxu0
      %5752 = vdwg.mxu0
      %5753 = vmatprep.subr.mxu0 0.0
      %5754 = vmatpush1.msra.mxu0 %v2561
      %5755 = vmatprep.subr.mxu0 0.0
      %5756 = vmatpush1.msra.mxu0 %v2560
      %5757 = vmatprep.subr.mxu0 0.0
      %5758 = vmatpush1.msra.mxu0 %v2559
      %5759 = vmatprep.subr.mxu0 0.0
      %5760 = vmatpush1.msra.mxu0 %v2558
      %5761 = vmatprep.subr.mxu0 0.0
      %5762 = vmatpush1.msra.mxu0 %v2557
      %5763 = vmatprep.subr.mxu0 0.0
      %5764 = vmatpush1.msra.mxu0 %v2556
      %5765 = vmatprep.subr.mxu0 0.0
      %5766 = vmatpush1.msra.mxu0 %v2555
      %5767 = vmatprep.subr.mxu0 0.0
      %5768 = vmatpush1.msra.mxu0 %v2554
      %5769 = vmatprep.subr.mxu0 0.0
      %5770 = vmatpush1.msra.mxu0 %v2553
      %5771 = vmatprep.subr.mxu0 0.0
      %5772 = vmatpush1.msra.mxu0 %v2552
      %5773 = vmatprep.subr.mxu0 0.0
      %5774 = vmatpush1.msra.mxu0 %v2551
      %5775 = vmatprep.subr.mxu0 0.0
      %5776 = vmatpush1.msra.mxu0 %v2550
      %5777 = vmatprep.subr.mxu0 0.0
      %5778 = vmatpush1.msra.mxu0 %v2549
      %5779 = vmatprep.subr.mxu0 0.0
      %5780 = vmatpush1.msra.mxu0 %v2548
      %5781 = vmatprep.subr.mxu0 0.0
      %5782 = vmatpush1.msra.mxu0 %v2547
      %5783 = vmatprep.subr.mxu0 0.0
      %5784 = vmatpush1.msra.mxu0 %v2546
      %5785 = vmatprep.subr.mxu0 0.0
      %5786 = vmatpush2.msra.mxu0 0.0
      %5787 = vmatprep.subr.mxu0 0.0
      %5788 = vmatpush2.msra.mxu0 0.0
      %5789 = vmatprep.subr.mxu0 0.0
      %5790 = vmatpush2.msra.mxu0 0.0
      %5791 = vmatprep.subr.mxu0 0.0
      %5792 = vmatpush2.msra.mxu0 0.0
      %5793 = vmatprep.subr.mxu0 0.0
      %5794 = vmatpush2.msra.mxu0 0.0
      %5795 = vmatprep.subr.mxu0 0.0
      %5796 = vmatpush2.msra.mxu0 0.0
      %5797 = vmatprep.subr.mxu0 0.0
      %5798 = vmatpush2.msra.mxu0 0.0
      %5799 = vmatprep.subr.mxu0 0.0
      %5800 = vmatpush2.msra.mxu0 0.0
      %5801 = vmatprep.subr.mxu0 0.0
      %5802 = vmatpush2.msra.mxu0 0.0
      %5803 = vmatprep.subr.mxu0 0.0
      %5804 = vmatpush2.msra.mxu0 0.0
      %5805 = vmatprep.subr.mxu0 0.0
      %5806 = vmatpush2.msra.mxu0 0.0
      %5807 = vmatprep.subr.mxu0 0.0
      %5808 = vmatpush2.msra.mxu0 0.0
      %5809 = vmatprep.subr.mxu0 0.0
      %5810 = vmatpush2.msra.mxu0 0.0
      %5811 = vmatprep.subr.mxu0 0.0
      %5812 = vmatpush2.msra.mxu0 0.0
      %5813 = vmatprep.subr.mxu0 0.0
      %5814 = vmatpush2.msra.mxu0 0.0
      %5815 = vmatprep.subr.mxu0 0.0
      %5816 = vmatpush2.msra.mxu0 0.0
      %5817 = vmatprep.mubr.f32.mxu0 0.0
      %5818 = vmatmul.mubr.f32.gmra.mxu0 %v5745
      %v5819 = vpop.f32.mrf.mxu0
      %v5820 = vadd.f32 0.0, %v5819
      %v5821 = vpop.f32.mrf.mxu0
      %5822 = vmatprep.mubr.f32.mxu0 0.0
      %5823 = vmatmul.mubr.f32.gmra.mxu0 %v5750
      %v5824 = vpop.f32.mrf.mxu0
      %v5825 = vadd.f32 0.0, %v5824
      %v5826 = vpop.f32.mrf.mxu0
      %5827 = vdwg.mxu0
      %v5828 = vmul.f32 %v5820, 0.00390625
      %v5829 = vmul.f32 %v5825, 0.00390625
      %v5830 = vsel %vm2639, %v5828, -inf
      %v5831 = vsel %vm2639, %v5829, -inf
      %v5832 = vmax.f32 %v5830, %v5831
      %v5833 = vrot.slane %v5832, 4
      %v5834 = vmax.f32 %v5832, %v5833
      %v5835 = vrot.slane %v5834, 2
      %v5836 = vmax.f32 %v5834, %v5835
      %v5837 = vrot.slane %v5836, 1
      %v5838 = vmax.f32 %v5836, %v5837
      %v5839 = vsub.f32 %v5828, %v5838
      %v5840 = vsub.f32 %v5829, %v5838
      %v5841 = vmul.f32 %v5839, 1.442695
      %v5842 = vpow.pop %v5841
      %v5843 = vmul.f32 %v5840, 1.442695
      %v5844 = vpow.pop %v5843
      %v5845 = vsel %vm2639, %v5842, 0.0
      %v5846 = vsel %vm2639, %v5844, 0.0
      %v5847 = vadd.f32 %v5845, %v5846
      %v5848 = vrot.slane %v5847, 4
      %v5849 = vadd.f32 %v5847, %v5848
      %v5850 = vrot.slane %v5849, 2
      %v5851 = vadd.f32 %v5849, %v5850
      %v5852 = vrot.slane %v5851, 1
      %v5853 = vadd.f32 %v5851, %v5852
      %v5854 = vrcp.pop %v5853
      %v5855 = vmul.f32 %v5842, %v5854
      %v5856 = vmul.f32 %v5844, %v5854
      %v5857 = vadd.f32 %v5435, %v5855
      %v5858 = vadd.f32 %v5436, %v5856
      %5859 = vxpose.xlu0.b32.start [1/16] %v1866, 128
      %5860 = vxpose.xlu0.b32.cont [2/16] %v1871, 128
      %5861 = vxpose.xlu0.b32.cont [3/16] %v1876, 128
      %5862 = vxpose.xlu0.b32.cont [4/16] %v1881, 128
      %5863 = vxpose.xlu0.b32.cont [5/16] 0.0, 128
      %5864 = vxpose.xlu0.b32.cont [6/16] 0.0, 128
      %5865 = vxpose.xlu0.b32.cont [7/16] 0.0, 128
      %5866 = vxpose.xlu0.b32.cont [8/16] 0.0, 128
      %5867 = vxpose.xlu0.b32.cont [9/16] 0.0, 128
      %5868 = vxpose.xlu0.b32.cont [10/16] 0.0, 128
      %5869 = vxpose.xlu0.b32.cont [11/16] 0.0, 128
      %5870 = vxpose.xlu0.b32.cont [12/16] 0.0, 128
      %5871 = vxpose.xlu0.b32.cont [13/16] 0.0, 128
      %5872 = vxpose.xlu0.b32.cont [14/16] 0.0, 128
      %5873 = vxpose.xlu0.b32.cont [15/16] 0.0, 128
      %5874 = vxpose.xlu0.b32.end [16/16] 0.0, 128
      %v5875 = vpop.trf.xlu0
      %v5876 = vpop.trf.xlu0
      %v5877 = vpop.trf.xlu0
      %v5878 = vpop.trf.xlu0
      %v5879 = vpop.trf.xlu0
      %v5880 = vpop.trf.xlu0
      %v5881 = vpop.trf.xlu0
      %v5882 = vpop.trf.xlu0
      %v5883 = vpop.trf.xlu0
      %v5884 = vpop.trf.xlu0
      %v5885 = vpop.trf.xlu0
      %v5886 = vpop.trf.xlu0
      %v5887 = vpop.trf.xlu0
      %v5888 = vpop.trf.xlu0
      %v5889 = vpop.trf.xlu0
      %v5890 = vpop.trf.xlu0
      %v5892 = vsel %vm2243, %v5875, 0
      %v5895 = vsel %vm2243, %v5876, 0
      %v5898 = vsel %vm2243, %v5877, 0
      %v5901 = vsel %vm2243, %v5878, 0
      %v5904 = vsel %vm2243, %v5879, 0
      %v5907 = vsel %vm2243, %v5880, 0
      %v5910 = vsel %vm2243, %v5881, 0
      %v5913 = vsel %vm2243, %v5882, 0
      %v5916 = vsel %vm2243, %v5883, 0
      %v5919 = vsel %vm2243, %v5884, 0
      %v5922 = vsel %vm2243, %v5885, 0
      %v5925 = vsel %vm2243, %v5886, 0
      %v5928 = vsel %vm2243, %v5887, 0
      %v5931 = vsel %vm2243, %v5888, 0
      %v5934 = vsel %vm2243, %v5889, 0
      %v5937 = vsel %vm2243, %v5890, 0
      %5939 = vmatprep.subr.mxu0 0.0
      %5940 = vmatpush1.msra.mxu0 0.0
      %5941 = vmatprep.subr.mxu0 0.0
      %5942 = vmatpush1.msra.mxu0 0.0
      %5943 = vmatprep.subr.mxu0 0.0
      %5944 = vmatpush1.msra.mxu0 0.0
      %5945 = vmatprep.subr.mxu0 0.0
      %5946 = vmatpush1.msra.mxu0 0.0
      %5947 = vmatprep.subr.mxu0 0.0
      %5948 = vmatpush1.msra.mxu0 0.0
      %5949 = vmatprep.subr.mxu0 0.0
      %5950 = vmatpush1.msra.mxu0 0.0
      %5951 = vmatprep.subr.mxu0 0.0
      %5952 = vmatpush1.msra.mxu0 0.0
      %5953 = vmatprep.subr.mxu0 0.0
      %5954 = vmatpush1.msra.mxu0 0.0
      %5955 = vmatprep.subr.mxu0 0.0
      %5956 = vmatpush1.msra.mxu0 0.0
      %5957 = vmatprep.subr.mxu0 0.0
      %5958 = vmatpush1.msra.mxu0 0.0
      %5959 = vmatprep.subr.mxu0 0.0
      %5960 = vmatpush1.msra.mxu0 0.0
      %5961 = vmatprep.subr.mxu0 0.0
      %5962 = vmatpush1.msra.mxu0 0.0
      %5963 = vmatprep.subr.mxu0 0.0
      %5964 = vmatpush1.msra.mxu0 %v1901
      %5965 = vmatprep.subr.mxu0 0.0
      %5966 = vmatpush1.msra.mxu0 %v1896
      %5967 = vmatprep.subr.mxu0 0.0
      %5968 = vmatpush1.msra.mxu0 %v1891
      %5969 = vmatprep.subr.mxu0 0.0
      %5970 = vmatpush1.msra.mxu0 %v1886
      %5971 = vmatprep.subr.mxu0 0.0
      %5972 = vmatpush2.msra.mxu0 0.0
      %5973 = vmatprep.subr.mxu0 0.0
      %5974 = vmatpush2.msra.mxu0 0.0
      %5975 = vmatprep.subr.mxu0 0.0
      %5976 = vmatpush2.msra.mxu0 0.0
      %5977 = vmatprep.subr.mxu0 0.0
      %5978 = vmatpush2.msra.mxu0 0.0
      %5979 = vmatprep.subr.mxu0 0.0
      %5980 = vmatpush2.msra.mxu0 0.0
      %5981 = vmatprep.subr.mxu0 0.0
      %5982 = vmatpush2.msra.mxu0 0.0
      %5983 = vmatprep.subr.mxu0 0.0
      %5984 = vmatpush2.msra.mxu0 0.0
      %5985 = vmatprep.subr.mxu0 0.0
      %5986 = vmatpush2.msra.mxu0 0.0
      %5987 = vmatprep.subr.mxu0 0.0
      %5988 = vmatpush2.msra.mxu0 0.0
      %5989 = vmatprep.subr.mxu0 0.0
      %5990 = vmatpush2.msra.mxu0 0.0
      %5991 = vmatprep.subr.mxu0 0.0
      %5992 = vmatpush2.msra.mxu0 0.0
      %5993 = vmatprep.subr.mxu0 0.0
      %5994 = vmatpush2.msra.mxu0 0.0
      %5995 = vmatprep.subr.mxu0 0.0
      %5996 = vmatpush2.msra.mxu0 0.0
      %5997 = vmatprep.subr.mxu0 0.0
      %5998 = vmatpush2.msra.mxu0 0.0
      %5999 = vmatprep.subr.mxu0 0.0
      %6000 = vmatpush2.msra.mxu0 0.0
      %6001 = vmatprep.subr.mxu0 0.0
      %6002 = vmatpush2.msra.mxu0 0.0
      %6003 = vmatprep.mubr.f32.mxu0 0.0
      %6004 = vmatmul.mubr.f32.gmra.mxu0 %v5892
      %v6005 = vpop.f32.mrf.mxu0
      %v6006 = vadd.f32 0.0, %v6005
      %v6007 = vpop.f32.mrf.mxu0
      %6008 = vmatprep.mubr.f32.mxu0 0.0
      %6009 = vmatmul.mubr.f32.gmra.mxu0 %v5895
      %v6010 = vpop.f32.mrf.mxu0
      %v6011 = vadd.f32 0.0, %v6010
      %v6012 = vpop.f32.mrf.mxu0
      %6013 = vmatprep.mubr.f32.mxu0 0.0
      %6014 = vmatmul.mubr.f32.gmra.mxu0 %v5898
      %v6015 = vpop.f32.mrf.mxu0
      %v6016 = vadd.f32 0.0, %v6015
      %v6017 = vpop.f32.mrf.mxu0
      %6018 = vmatprep.mubr.f32.mxu0 0.0
      %6019 = vmatmul.mubr.f32.gmra.mxu0 %v5901
      %v6020 = vpop.f32.mrf.mxu0
      %v6021 = vadd.f32 0.0, %v6020
      %v6022 = vpop.f32.mrf.mxu0
      %6023 = vmatprep.mubr.f32.mxu0 0.0
      %6024 = vmatmul.mubr.f32.gmra.mxu0 %v5904
      %v6025 = vpop.f32.mrf.mxu0
      %v6026 = vadd.f32 0.0, %v6025
      %v6027 = vpop.f32.mrf.mxu0
      %6028 = vmatprep.mubr.f32.mxu0 0.0
      %6029 = vmatmul.mubr.f32.gmra.mxu0 %v5907
      %v6030 = vpop.f32.mrf.mxu0
      %v6031 = vadd.f32 0.0, %v6030
      %v6032 = vpop.f32.mrf.mxu0
      %6033 = vmatprep.mubr.f32.mxu0 0.0
      %6034 = vmatmul.mubr.f32.gmra.mxu0 %v5910
      %v6035 = vpop.f32.mrf.mxu0
      %v6036 = vadd.f32 0.0, %v6035
      %v6037 = vpop.f32.mrf.mxu0
      %6038 = vmatprep.mubr.f32.mxu0 0.0
      %6039 = vmatmul.mubr.f32.gmra.mxu0 %v5913
      %v6040 = vpop.f32.mrf.mxu0
      %v6041 = vadd.f32 0.0, %v6040
      %v6042 = vpop.f32.mrf.mxu0
      %6043 = vmatprep.mubr.f32.mxu0 0.0
      %6044 = vmatmul.mubr.f32.gmra.mxu0 %v5916
      %v6045 = vpop.f32.mrf.mxu0
      %v6046 = vadd.f32 0.0, %v6045
      %v6047 = vpop.f32.mrf.mxu0
      %6048 = vmatprep.mubr.f32.mxu0 0.0
      %6049 = vmatmul.mubr.f32.gmra.mxu0 %v5919
      %v6050 = vpop.f32.mrf.mxu0
      %v6051 = vadd.f32 0.0, %v6050
      %v6052 = vpop.f32.mrf.mxu0
      %6053 = vmatprep.mubr.f32.mxu0 0.0
      %6054 = vmatmul.mubr.f32.gmra.mxu0 %v5922
      %v6055 = vpop.f32.mrf.mxu0
      %v6056 = vadd.f32 0.0, %v6055
      %v6057 = vpop.f32.mrf.mxu0
      %6058 = vmatprep.mubr.f32.mxu0 0.0
      %6059 = vmatmul.mubr.f32.gmra.mxu0 %v5925
      %v6060 = vpop.f32.mrf.mxu0
      %v6061 = vadd.f32 0.0, %v6060
      %v6062 = vpop.f32.mrf.mxu0
      %6063 = vmatprep.mubr.f32.mxu0 0.0
      %6064 = vmatmul.mubr.f32.gmra.mxu0 %v5928
      %v6065 = vpop.f32.mrf.mxu0
      %v6066 = vadd.f32 0.0, %v6065
      %v6067 = vpop.f32.mrf.mxu0
      %6068 = vmatprep.mubr.f32.mxu0 0.0
      %6069 = vmatmul.mubr.f32.gmra.mxu0 %v5931
      %v6070 = vpop.f32.mrf.mxu0
      %v6071 = vadd.f32 0.0, %v6070
      %v6072 = vpop.f32.mrf.mxu0
      %6073 = vmatprep.mubr.f32.mxu0 0.0
      %6074 = vmatmul.mubr.f32.gmra.mxu0 %v5934
      %v6075 = vpop.f32.mrf.mxu0
      %v6076 = vadd.f32 0.0, %v6075
      %v6077 = vpop.f32.mrf.mxu0
      %6078 = vmatprep.mubr.f32.mxu0 0.0
      %6079 = vmatmul.mubr.f32.gmra.mxu0 %v5937
      %v6080 = vpop.f32.mrf.mxu0
      %v6081 = vadd.f32 0.0, %v6080
      %v6082 = vpop.f32.mrf.mxu0
      %6083 = vdwg.mxu0
      %v6084 = vmul.f32 %v6006, %v2439
      %v6085 = vmul.f32 %v6011, %v2440
      %v6086 = vmul.f32 %v6016, %v2441
      %v6087 = vmul.f32 %v6021, %v2442
      %v6088 = vmul.f32 %v6026, %v2443
      %v6089 = vmul.f32 %v6031, %v2444
      %v6090 = vmul.f32 %v6036, %v2445
      %v6091 = vmul.f32 %v6041, %v2446
      %v6092 = vmul.f32 %v6046, %v2447
      %v6093 = vmul.f32 %v6051, %v2448
      %v6094 = vmul.f32 %v6056, %v2449
      %v6095 = vmul.f32 %v6061, %v2450
      %v6096 = vmul.f32 %v6066, %v2451
      %v6097 = vmul.f32 %v6071, %v2452
      %v6098 = vmul.f32 %v6076, %v2453
      %v6099 = vmul.f32 %v6081, %v2454
      %6100 = vmatprep.subr.mxu0 0.0
      %6101 = vmatpush1.msra.mxu0 %v6099
      %6102 = vmatprep.subr.mxu0 0.0
      %6103 = vmatpush1.msra.mxu0 %v6098
      %6104 = vmatprep.subr.mxu0 0.0
      %6105 = vmatpush1.msra.mxu0 %v6097
      %6106 = vmatprep.subr.mxu0 0.0
      %6107 = vmatpush1.msra.mxu0 %v6096
      %6108 = vmatprep.subr.mxu0 0.0
      %6109 = vmatpush1.msra.mxu0 %v6095
      %6110 = vmatprep.subr.mxu0 0.0
      %6111 = vmatpush1.msra.mxu0 %v6094
      %6112 = vmatprep.subr.mxu0 0.0
      %6113 = vmatpush1.msra.mxu0 %v6093
      %6114 = vmatprep.subr.mxu0 0.0
      %6115 = vmatpush1.msra.mxu0 %v6092
      %6116 = vmatprep.subr.mxu0 0.0
      %6117 = vmatpush1.msra.mxu0 %v6091
      %6118 = vmatprep.subr.mxu0 0.0
      %6119 = vmatpush1.msra.mxu0 %v6090
      %6120 = vmatprep.subr.mxu0 0.0
      %6121 = vmatpush1.msra.mxu0 %v6089
      %6122 = vmatprep.subr.mxu0 0.0
      %6123 = vmatpush1.msra.mxu0 %v6088
      %6124 = vmatprep.subr.mxu0 0.0
      %6125 = vmatpush1.msra.mxu0 %v6087
      %6126 = vmatprep.subr.mxu0 0.0
      %6127 = vmatpush1.msra.mxu0 %v6086
      %6128 = vmatprep.subr.mxu0 0.0
      %6129 = vmatpush1.msra.mxu0 %v6085
      %6130 = vmatprep.subr.mxu0 0.0
      %6131 = vmatpush1.msra.mxu0 %v6084
      %6132 = vmatprep.subr.mxu0 0.0
      %6133 = vmatpush2.msra.mxu0 0.0
      %6134 = vmatprep.subr.mxu0 0.0
      %6135 = vmatpush2.msra.mxu0 0.0
      %6136 = vmatprep.subr.mxu0 0.0
      %6137 = vmatpush2.msra.mxu0 0.0
      %6138 = vmatprep.subr.mxu0 0.0
      %6139 = vmatpush2.msra.mxu0 0.0
      %6140 = vmatprep.subr.mxu0 0.0
      %6141 = vmatpush2.msra.mxu0 0.0
      %6142 = vmatprep.subr.mxu0 0.0
      %6143 = vmatpush2.msra.mxu0 0.0
      %6144 = vmatprep.subr.mxu0 0.0
      %6145 = vmatpush2.msra.mxu0 0.0
      %6146 = vmatprep.subr.mxu0 0.0
      %6147 = vmatpush2.msra.mxu0 0.0
      %6148 = vmatprep.subr.mxu0 0.0
      %6149 = vmatpush2.msra.mxu0 0.0
      %6150 = vmatprep.subr.mxu0 0.0
      %6151 = vmatpush2.msra.mxu0 0.0
      %6152 = vmatprep.subr.mxu0 0.0
      %6153 = vmatpush2.msra.mxu0 0.0
      %6154 = vmatprep.subr.mxu0 0.0
      %6155 = vmatpush2.msra.mxu0 0.0
      %6156 = vmatprep.subr.mxu0 0.0
      %6157 = vmatpush2.msra.mxu0 0.0
      %6158 = vmatprep.subr.mxu0 0.0
      %6159 = vmatpush2.msra.mxu0 0.0
      %6160 = vmatprep.subr.mxu0 0.0
      %6161 = vmatpush2.msra.mxu0 0.0
      %6162 = vmatprep.subr.mxu0 0.0
      %6163 = vmatpush2.msra.mxu0 0.0
      %6164 = vmatprep.mubr.f32.mxu0 0.0
      %6165 = vmatmul.mubr.f32.gmra.mxu0 %v2437
      %v6166 = vpop.f32.mrf.mxu0
      %v6167 = vadd.f32 0.0, %v6166
      %v6168 = vpop.f32.mrf.mxu0
      %6169 = vmatprep.mubr.f32.mxu0 0.0
      %6170 = vmatmul.mubr.f32.gmra.mxu0 %v2438
      %v6171 = vpop.f32.mrf.mxu0
      %v6172 = vadd.f32 0.0, %v6171
      %v6173 = vpop.f32.mrf.mxu0
      %6174 = vdwg.mxu0
      %6175 = vmatprep.subr.mxu0 0.0
      %6176 = vmatpush1.msra.mxu0 %v2561
      %6177 = vmatprep.subr.mxu0 0.0
      %6178 = vmatpush1.msra.mxu0 %v2560
      %6179 = vmatprep.subr.mxu0 0.0
      %6180 = vmatpush1.msra.mxu0 %v2559
      %6181 = vmatprep.subr.mxu0 0.0
      %6182 = vmatpush1.msra.mxu0 %v2558
      %6183 = vmatprep.subr.mxu0 0.0
      %6184 = vmatpush1.msra.mxu0 %v2557
      %6185 = vmatprep.subr.mxu0 0.0
      %6186 = vmatpush1.msra.mxu0 %v2556
      %6187 = vmatprep.subr.mxu0 0.0
      %6188 = vmatpush1.msra.mxu0 %v2555
      %6189 = vmatprep.subr.mxu0 0.0
      %6190 = vmatpush1.msra.mxu0 %v2554
      %6191 = vmatprep.subr.mxu0 0.0
      %6192 = vmatpush1.msra.mxu0 %v2553
      %6193 = vmatprep.subr.mxu0 0.0
      %6194 = vmatpush1.msra.mxu0 %v2552
      %6195 = vmatprep.subr.mxu0 0.0
      %6196 = vmatpush1.msra.mxu0 %v2551
      %6197 = vmatprep.subr.mxu0 0.0
      %6198 = vmatpush1.msra.mxu0 %v2550
      %6199 = vmatprep.subr.mxu0 0.0
      %6200 = vmatpush1.msra.mxu0 %v2549
      %6201 = vmatprep.subr.mxu0 0.0
      %6202 = vmatpush1.msra.mxu0 %v2548
      %6203 = vmatprep.subr.mxu0 0.0
      %6204 = vmatpush1.msra.mxu0 %v2547
      %6205 = vmatprep.subr.mxu0 0.0
      %6206 = vmatpush1.msra.mxu0 %v2546
      %6207 = vmatprep.subr.mxu0 0.0
      %6208 = vmatpush2.msra.mxu0 0.0
      %6209 = vmatprep.subr.mxu0 0.0
      %6210 = vmatpush2.msra.mxu0 0.0
      %6211 = vmatprep.subr.mxu0 0.0
      %6212 = vmatpush2.msra.mxu0 0.0
      %6213 = vmatprep.subr.mxu0 0.0
      %6214 = vmatpush2.msra.mxu0 0.0
      %6215 = vmatprep.subr.mxu0 0.0
      %6216 = vmatpush2.msra.mxu0 0.0
      %6217 = vmatprep.subr.mxu0 0.0
      %6218 = vmatpush2.msra.mxu0 0.0
      %6219 = vmatprep.subr.mxu0 0.0
      %6220 = vmatpush2.msra.mxu0 0.0
      %6221 = vmatprep.subr.mxu0 0.0
      %6222 = vmatpush2.msra.mxu0 0.0
      %6223 = vmatprep.subr.mxu0 0.0
      %6224 = vmatpush2.msra.mxu0 0.0
      %6225 = vmatprep.subr.mxu0 0.0
      %6226 = vmatpush2.msra.mxu0 0.0
      %6227 = vmatprep.subr.mxu0 0.0
      %6228 = vmatpush2.msra.mxu0 0.0
      %6229 = vmatprep.subr.mxu0 0.0
      %6230 = vmatpush2.msra.mxu0 0.0
      %6231 = vmatprep.subr.mxu0 0.0
      %6232 = vmatpush2.msra.mxu0 0.0
      %6233 = vmatprep.subr.mxu0 0.0
      %6234 = vmatpush2.msra.mxu0 0.0
      %6235 = vmatprep.subr.mxu0 0.0
      %6236 = vmatpush2.msra.mxu0 0.0
      %6237 = vmatprep.subr.mxu0 0.0
      %6238 = vmatpush2.msra.mxu0 0.0
      %6239 = vmatprep.mubr.f32.mxu0 0.0
      %6240 = vmatmul.mubr.f32.gmra.mxu0 %v6167
      %v6241 = vpop.f32.mrf.mxu0
      %v6242 = vadd.f32 0.0, %v6241
      %v6243 = vpop.f32.mrf.mxu0
      %6244 = vmatprep.mubr.f32.mxu0 0.0
      %6245 = vmatmul.mubr.f32.gmra.mxu0 %v6172
      %v6246 = vpop.f32.mrf.mxu0
      %v6247 = vadd.f32 0.0, %v6246
      %v6248 = vpop.f32.mrf.mxu0
      %6249 = vdwg.mxu0
      %v6250 = vmul.f32 %v6242, 0.00390625
      %v6251 = vmul.f32 %v6247, 0.00390625
      %v6252 = vsel %vm2639, %v6250, -inf
      %v6253 = vsel %vm2639, %v6251, -inf
      %v6254 = vmax.f32 %v6252, %v6253
      %v6255 = vrot.slane %v6254, 4
      %v6256 = vmax.f32 %v6254, %v6255
      %v6257 = vrot.slane %v6256, 2
      %v6258 = vmax.f32 %v6256, %v6257
      %v6259 = vrot.slane %v6258, 1
      %v6260 = vmax.f32 %v6258, %v6259
      %v6261 = vsub.f32 %v6250, %v6260
      %v6262 = vsub.f32 %v6251, %v6260
      %v6263 = vmul.f32 %v6261, 1.442695
      %v6264 = vpow.pop %v6263
      %v6265 = vmul.f32 %v6262, 1.442695
      %v6266 = vpow.pop %v6265
      %v6267 = vsel %vm2639, %v6264, 0.0
      %v6268 = vsel %vm2639, %v6266, 0.0
      %v6269 = vadd.f32 %v6267, %v6268
      %v6270 = vrot.slane %v6269, 4
      %v6271 = vadd.f32 %v6269, %v6270
      %v6272 = vrot.slane %v6271, 2
      %v6273 = vadd.f32 %v6271, %v6272
      %v6274 = vrot.slane %v6273, 1
      %v6275 = vadd.f32 %v6273, %v6274
      %v6276 = vrcp.pop %v6275
      %v6277 = vmul.f32 %v6264, %v6276
      %v6278 = vmul.f32 %v6266, %v6276
      %v6279 = vadd.f32 %v5857, %v6277
      %v6280 = vadd.f32 %v5858, %v6278
      %6281 = vmatprep.subr.mxu0 0.0
      %6282 = vmatpush1.msra.mxu0 0.0
      %6283 = vmatprep.subr.mxu0 0.0
      %6284 = vmatpush1.msra.mxu0 0.0
      %6285 = vmatprep.subr.mxu0 0.0
      %6286 = vmatpush1.msra.mxu0 0.0
      %6287 = vmatprep.subr.mxu0 0.0
      %6288 = vmatpush1.msra.mxu0 0.0
      %6289 = vmatprep.subr.mxu0 0.0
      %6290 = vmatpush1.msra.mxu0 0.0
      %6291 = vmatprep.subr.mxu0 0.0
      %6292 = vmatpush1.msra.mxu0 0.0
      %6293 = vmatprep.subr.mxu0 0.0
      %6294 = vmatpush1.msra.mxu0 0.0
      %6295 = vmatprep.subr.mxu0 0.0
      %6296 = vmatpush1.msra.mxu0 0.0
      %6297 = vmatprep.subr.mxu0 0.0
      %6298 = vmatpush1.msra.mxu0 0.0
      %6299 = vmatprep.subr.mxu0 0.0
      %6300 = vmatpush1.msra.mxu0 0.0
      %6301 = vmatprep.subr.mxu0 0.0
      %6302 = vmatpush1.msra.mxu0 0.0
      %6303 = vmatprep.subr.mxu0 0.0
      %6304 = vmatpush1.msra.mxu0 0.0
      %6305 = vmatprep.subr.mxu0 0.0
      %6306 = vmatpush1.msra.mxu0 0.0
      %6307 = vmatprep.subr.mxu0 0.0
      %6308 = vmatpush1.msra.mxu0 0.0
      %6309 = vmatprep.subr.mxu0 0.0
      %6310 = vmatpush1.msra.mxu0 %v6280
      %6311 = vmatprep.subr.mxu0 0.0
      %6312 = vmatpush1.msra.mxu0 %v6279
      %6313 = vmatprep.subr.mxu0 0.0
      %6314 = vmatpush2.msra.mxu0 0.0
      %6315 = vmatprep.subr.mxu0 0.0
      %6316 = vmatpush2.msra.mxu0 0.0
      %6317 = vmatprep.subr.mxu0 0.0
      %6318 = vmatpush2.msra.mxu0 0.0
      %6319 = vmatprep.subr.mxu0 0.0
      %6320 = vmatpush2.msra.mxu0 0.0
      %6321 = vmatprep.subr.mxu0 0.0
      %6322 = vmatpush2.msra.mxu0 0.0
      %6323 = vmatprep.subr.mxu0 0.0
      %6324 = vmatpush2.msra.mxu0 0.0
      %6325 = vmatprep.subr.mxu0 0.0
      %6326 = vmatpush2.msra.mxu0 0.0
      %6327 = vmatprep.subr.mxu0 0.0
      %6328 = vmatpush2.msra.mxu0 0.0
      %6329 = vmatprep.subr.mxu0 0.0
      %6330 = vmatpush2.msra.mxu0 0.0
      %6331 = vmatprep.subr.mxu0 0.0
      %6332 = vmatpush2.msra.mxu0 0.0
      %6333 = vmatprep.subr.mxu0 0.0
      %6334 = vmatpush2.msra.mxu0 0.0
      %6335 = vmatprep.subr.mxu0 0.0
      %6336 = vmatpush2.msra.mxu0 0.0
      %6337 = vmatprep.subr.mxu0 0.0
      %6338 = vmatpush2.msra.mxu0 0.0
      %6339 = vmatprep.subr.mxu0 0.0
      %6340 = vmatpush2.msra.mxu0 0.0
      %6341 = vmatprep.subr.mxu0 0.0
      %6342 = vmatpush2.msra.mxu0 0.0
      %6343 = vmatprep.subr.mxu0 0.0
      %6344 = vmatpush2.msra.mxu0 0.0
      %6345 = vmatprep.mubr.f32.mxu0 0.0
      %6346 = vmatmul.mubr.f32.gmra.mxu0 %v3092
      %v6347 = vpop.f32.mrf.mxu0
      %v6348 = vadd.f32 0.0, %v6347
      %v6349 = vpop.f32.mrf.mxu0
      %6350 = vmatprep.mubr.f32.mxu0 0.0
      %6351 = vmatmul.mubr.f32.gmra.mxu0 %v3095
      %v6352 = vpop.f32.mrf.mxu0
      %v6353 = vadd.f32 0.0, %v6352
      %v6354 = vpop.f32.mrf.mxu0
      %6355 = vmatprep.mubr.f32.mxu0 0.0
      %6356 = vmatmul.mubr.f32.gmra.mxu0 %v3098
      %v6357 = vpop.f32.mrf.mxu0
      %v6358 = vadd.f32 0.0, %v6357
      %v6359 = vpop.f32.mrf.mxu0
      %6360 = vmatprep.mubr.f32.mxu0 0.0
      %6361 = vmatmul.mubr.f32.gmra.mxu0 %v3101
      %v6362 = vpop.f32.mrf.mxu0
      %v6363 = vadd.f32 0.0, %v6362
      %v6364 = vpop.f32.mrf.mxu0
      %6365 = vmatprep.mubr.f32.mxu0 0.0
      %6366 = vmatmul.mubr.f32.gmra.mxu0 %v3104
      %v6367 = vpop.f32.mrf.mxu0
      %v6368 = vadd.f32 0.0, %v6367
      %v6369 = vpop.f32.mrf.mxu0
      %6370 = vmatprep.mubr.f32.mxu0 0.0
      %6371 = vmatmul.mubr.f32.gmra.mxu0 %v3107
      %v6372 = vpop.f32.mrf.mxu0
      %v6373 = vadd.f32 0.0, %v6372
      %v6374 = vpop.f32.mrf.mxu0
      %6375 = vmatprep.mubr.f32.mxu0 0.0
      %6376 = vmatmul.mubr.f32.gmra.mxu0 %v3110
      %v6377 = vpop.f32.mrf.mxu0
      %v6378 = vadd.f32 0.0, %v6377
      %v6379 = vpop.f32.mrf.mxu0
      %6380 = vmatprep.mubr.f32.mxu0 0.0
      %6381 = vmatmul.mubr.f32.gmra.mxu0 %v3113
      %v6382 = vpop.f32.mrf.mxu0
      %v6383 = vadd.f32 0.0, %v6382
      %v6384 = vpop.f32.mrf.mxu0
      %6385 = vmatprep.mubr.f32.mxu0 0.0
      %6386 = vmatmul.mubr.f32.gmra.mxu0 %v3116
      %v6387 = vpop.f32.mrf.mxu0
      %v6388 = vadd.f32 0.0, %v6387
      %v6389 = vpop.f32.mrf.mxu0
      %6390 = vmatprep.mubr.f32.mxu0 0.0
      %6391 = vmatmul.mubr.f32.gmra.mxu0 %v3119
      %v6392 = vpop.f32.mrf.mxu0
      %v6393 = vadd.f32 0.0, %v6392
      %v6394 = vpop.f32.mrf.mxu0
      %6395 = vmatprep.mubr.f32.mxu0 0.0
      %6396 = vmatmul.mubr.f32.gmra.mxu0 %v3122
      %v6397 = vpop.f32.mrf.mxu0
      %v6398 = vadd.f32 0.0, %v6397
      %v6399 = vpop.f32.mrf.mxu0
      %6400 = vmatprep.mubr.f32.mxu0 0.0
      %6401 = vmatmul.mubr.f32.gmra.mxu0 %v3125
      %v6402 = vpop.f32.mrf.mxu0
      %v6403 = vadd.f32 0.0, %v6402
      %v6404 = vpop.f32.mrf.mxu0
      %6405 = vmatprep.mubr.f32.mxu0 0.0
      %6406 = vmatmul.mubr.f32.gmra.mxu0 %v3128
      %v6407 = vpop.f32.mrf.mxu0
      %v6408 = vadd.f32 0.0, %v6407
      %v6409 = vpop.f32.mrf.mxu0
      %6410 = vmatprep.mubr.f32.mxu0 0.0
      %6411 = vmatmul.mubr.f32.gmra.mxu0 %v3131
      %v6412 = vpop.f32.mrf.mxu0
      %v6413 = vadd.f32 0.0, %v6412
      %v6414 = vpop.f32.mrf.mxu0
      %6415 = vmatprep.mubr.f32.mxu0 0.0
      %6416 = vmatmul.mubr.f32.gmra.mxu0 %v3134
      %v6417 = vpop.f32.mrf.mxu0
      %v6418 = vadd.f32 0.0, %v6417
      %v6419 = vpop.f32.mrf.mxu0
      %6420 = vmatprep.mubr.f32.mxu0 0.0
      %6421 = vmatmul.mubr.f32.gmra.mxu0 %v3137
      %v6422 = vpop.f32.mrf.mxu0
      %v6423 = vadd.f32 0.0, %v6422
      %v6424 = vpop.f32.mrf.mxu0
      %6425 = vdwg.mxu0
      %v6427 = vsel %vm2639, %v6348, 0
      %v6430 = vsel %vm2639, %v6353, 0
      %v6433 = vsel %vm2639, %v6358, 0
      %v6436 = vsel %vm2639, %v6363, 0
      %v6439 = vsel %vm2639, %v6368, 0
      %v6442 = vsel %vm2639, %v6373, 0
      %v6445 = vsel %vm2639, %v6378, 0
      %v6448 = vsel %vm2639, %v6383, 0
      %v6451 = vsel %vm2639, %v6388, 0
      %v6454 = vsel %vm2639, %v6393, 0
      %v6457 = vsel %vm2639, %v6398, 0
      %v6460 = vsel %vm2639, %v6403, 0
      %v6463 = vsel %vm2639, %v6408, 0
      %v6466 = vsel %vm2639, %v6413, 0
      %v6469 = vsel %vm2639, %v6418, 0
      %v6472 = vsel %vm2639, %v6423, 0
      %6474 = vmatprep.subr.mxu0 0.0
      %6475 = vmatpush1.msra.mxu0 0.0
      %6476 = vmatprep.subr.mxu0 0.0
      %6477 = vmatpush1.msra.mxu0 0.0
      %6478 = vmatprep.subr.mxu0 0.0
      %6479 = vmatpush1.msra.mxu0 0.0
      %6480 = vmatprep.subr.mxu0 0.0
      %6481 = vmatpush1.msra.mxu0 0.0
      %6482 = vmatprep.subr.mxu0 0.0
      %6483 = vmatpush1.msra.mxu0 0.0
      %6484 = vmatprep.subr.mxu0 0.0
      %6485 = vmatpush1.msra.mxu0 0.0
      %6486 = vmatprep.subr.mxu0 0.0
      %6487 = vmatpush1.msra.mxu0 0.0
      %6488 = vmatprep.subr.mxu0 0.0
      %6489 = vmatpush1.msra.mxu0 0.0
      %6490 = vmatprep.subr.mxu0 0.0
      %6491 = vmatpush1.msra.mxu0 0.0
      %6492 = vmatprep.subr.mxu0 0.0
      %6493 = vmatpush1.msra.mxu0 0.0
      %6494 = vmatprep.subr.mxu0 0.0
      %6495 = vmatpush1.msra.mxu0 0.0
      %6496 = vmatprep.subr.mxu0 0.0
      %6497 = vmatpush1.msra.mxu0 0.0
      %6498 = vmatprep.subr.mxu0 0.0
      %6499 = vmatpush1.msra.mxu0 0.0
      %6500 = vmatprep.subr.mxu0 0.0
      %6501 = vmatpush1.msra.mxu0 0.0
      %6502 = vmatprep.subr.mxu0 0.0
      %6503 = vmatpush1.msra.mxu0 %v2438
      %6504 = vmatprep.subr.mxu0 0.0
      %6505 = vmatpush1.msra.mxu0 %v2437
      %6506 = vmatprep.subr.mxu0 0.0
      %6507 = vmatpush2.msra.mxu0 0.0
      %6508 = vmatprep.subr.mxu0 0.0
      %6509 = vmatpush2.msra.mxu0 0.0
      %6510 = vmatprep.subr.mxu0 0.0
      %6511 = vmatpush2.msra.mxu0 0.0
      %6512 = vmatprep.subr.mxu0 0.0
      %6513 = vmatpush2.msra.mxu0 0.0
      %6514 = vmatprep.subr.mxu0 0.0
      %6515 = vmatpush2.msra.mxu0 0.0
      %6516 = vmatprep.subr.mxu0 0.0
      %6517 = vmatpush2.msra.mxu0 0.0
      %6518 = vmatprep.subr.mxu0 0.0
      %6519 = vmatpush2.msra.mxu0 0.0
      %6520 = vmatprep.subr.mxu0 0.0
      %6521 = vmatpush2.msra.mxu0 0.0
      %6522 = vmatprep.subr.mxu0 0.0
      %6523 = vmatpush2.msra.mxu0 0.0
      %6524 = vmatprep.subr.mxu0 0.0
      %6525 = vmatpush2.msra.mxu0 0.0
      %6526 = vmatprep.subr.mxu0 0.0
      %6527 = vmatpush2.msra.mxu0 0.0
      %6528 = vmatprep.subr.mxu0 0.0
      %6529 = vmatpush2.msra.mxu0 0.0
      %6530 = vmatprep.subr.mxu0 0.0
      %6531 = vmatpush2.msra.mxu0 0.0
      %6532 = vmatprep.subr.mxu0 0.0
      %6533 = vmatpush2.msra.mxu0 0.0
      %6534 = vmatprep.subr.mxu0 0.0
      %6535 = vmatpush2.msra.mxu0 0.0
      %6536 = vmatprep.subr.mxu0 0.0
      %6537 = vmatpush2.msra.mxu0 0.0
      %6538 = vmatprep.mubr.f32.mxu0 0.0
      %6539 = vmatmul.mubr.f32.gmra.mxu0 %v6427
      %v6540 = vpop.f32.mrf.mxu0
      %v6541 = vadd.f32 0.0, %v6540
      %v6542 = vpop.f32.mrf.mxu0
      %6543 = vmatprep.mubr.f32.mxu0 0.0
      %6544 = vmatmul.mubr.f32.gmra.mxu0 %v6430
      %v6545 = vpop.f32.mrf.mxu0
      %v6546 = vadd.f32 0.0, %v6545
      %v6547 = vpop.f32.mrf.mxu0
      %6548 = vmatprep.mubr.f32.mxu0 0.0
      %6549 = vmatmul.mubr.f32.gmra.mxu0 %v6433
      %v6550 = vpop.f32.mrf.mxu0
      %v6551 = vadd.f32 0.0, %v6550
      %v6552 = vpop.f32.mrf.mxu0
      %6553 = vmatprep.mubr.f32.mxu0 0.0
      %6554 = vmatmul.mubr.f32.gmra.mxu0 %v6436
      %v6555 = vpop.f32.mrf.mxu0
      %v6556 = vadd.f32 0.0, %v6555
      %v6557 = vpop.f32.mrf.mxu0
      %6558 = vmatprep.mubr.f32.mxu0 0.0
      %6559 = vmatmul.mubr.f32.gmra.mxu0 %v6439
      %v6560 = vpop.f32.mrf.mxu0
      %v6561 = vadd.f32 0.0, %v6560
      %v6562 = vpop.f32.mrf.mxu0
      %6563 = vmatprep.mubr.f32.mxu0 0.0
      %6564 = vmatmul.mubr.f32.gmra.mxu0 %v6442
      %v6565 = vpop.f32.mrf.mxu0
      %v6566 = vadd.f32 0.0, %v6565
      %v6567 = vpop.f32.mrf.mxu0
      %6568 = vmatprep.mubr.f32.mxu0 0.0
      %6569 = vmatmul.mubr.f32.gmra.mxu0 %v6445
      %v6570 = vpop.f32.mrf.mxu0
      %v6571 = vadd.f32 0.0, %v6570
      %v6572 = vpop.f32.mrf.mxu0
      %6573 = vmatprep.mubr.f32.mxu0 0.0
      %6574 = vmatmul.mubr.f32.gmra.mxu0 %v6448
      %v6575 = vpop.f32.mrf.mxu0
      %v6576 = vadd.f32 0.0, %v6575
      %v6577 = vpop.f32.mrf.mxu0
      %6578 = vmatprep.mubr.f32.mxu0 0.0
      %6579 = vmatmul.mubr.f32.gmra.mxu0 %v6451
      %v6580 = vpop.f32.mrf.mxu0
      %v6581 = vadd.f32 0.0, %v6580
      %v6582 = vpop.f32.mrf.mxu0
      %6583 = vmatprep.mubr.f32.mxu0 0.0
      %6584 = vmatmul.mubr.f32.gmra.mxu0 %v6454
      %v6585 = vpop.f32.mrf.mxu0
      %v6586 = vadd.f32 0.0, %v6585
      %v6587 = vpop.f32.mrf.mxu0
      %6588 = vmatprep.mubr.f32.mxu0 0.0
      %6589 = vmatmul.mubr.f32.gmra.mxu0 %v6457
      %v6590 = vpop.f32.mrf.mxu0
      %v6591 = vadd.f32 0.0, %v6590
      %v6592 = vpop.f32.mrf.mxu0
      %6593 = vmatprep.mubr.f32.mxu0 0.0
      %6594 = vmatmul.mubr.f32.gmra.mxu0 %v6460
      %v6595 = vpop.f32.mrf.mxu0
      %v6596 = vadd.f32 0.0, %v6595
      %v6597 = vpop.f32.mrf.mxu0
      %6598 = vmatprep.mubr.f32.mxu0 0.0
      %6599 = vmatmul.mubr.f32.gmra.mxu0 %v6463
      %v6600 = vpop.f32.mrf.mxu0
      %v6601 = vadd.f32 0.0, %v6600
      %v6602 = vpop.f32.mrf.mxu0
      %6603 = vmatprep.mubr.f32.mxu0 0.0
      %6604 = vmatmul.mubr.f32.gmra.mxu0 %v6466
      %v6605 = vpop.f32.mrf.mxu0
      %v6606 = vadd.f32 0.0, %v6605
      %v6607 = vpop.f32.mrf.mxu0
      %6608 = vmatprep.mubr.f32.mxu0 0.0
      %6609 = vmatmul.mubr.f32.gmra.mxu0 %v6469
      %v6610 = vpop.f32.mrf.mxu0
      %v6611 = vadd.f32 0.0, %v6610
      %v6612 = vpop.f32.mrf.mxu0
      %6613 = vmatprep.mubr.f32.mxu0 0.0
      %6614 = vmatmul.mubr.f32.gmra.mxu0 %v6472
      %v6615 = vpop.f32.mrf.mxu0
      %v6616 = vadd.f32 0.0, %v6615
      %v6617 = vpop.f32.mrf.mxu0
      %6618 = vdwg.mxu0
      %v6619 = vmul.f32 %v6541, %v2439
      %v6620 = vmul.f32 %v6546, %v2440
      %v6621 = vmul.f32 %v6551, %v2441
      %v6622 = vmul.f32 %v6556, %v2442
      %v6623 = vmul.f32 %v6561, %v2443
      %v6624 = vmul.f32 %v6566, %v2444
      %v6625 = vmul.f32 %v6571, %v2445
      %v6626 = vmul.f32 %v6576, %v2446
      %v6627 = vmul.f32 %v6581, %v2447
      %v6628 = vmul.f32 %v6586, %v2448
      %v6629 = vmul.f32 %v6591, %v2449
      %v6630 = vmul.f32 %v6596, %v2450
      %v6631 = vmul.f32 %v6601, %v2451
      %v6632 = vmul.f32 %v6606, %v2452
      %v6633 = vmul.f32 %v6611, %v2453
      %v6634 = vmul.f32 %v6616, %v2454
      %v6635 = vld [vmem:[%s6 + $0x100] sm:$0xff]
      %v6636 = vld [vmem:[%s6 + $0x108] sm:$0xff]
      %v6637 = vld [vmem:[%s6 + $0x110] sm:$0xff]
      %v6638 = vld [vmem:[%s6 + $0x118] sm:$0xff]
      %v6639 = vld [vmem:[%s6 + $0x120] sm:$0xff]
      %v6640 = vld [vmem:[%s6 + $0x128] sm:$0xff]
      %v6641 = vld [vmem:[%s6 + $0x130] sm:$0xff]
      %v6642 = vld [vmem:[%s6 + $0x138] sm:$0xff]
      %v6643 = vld [vmem:[%s6 + $0x140] sm:$0xff]
      %v6644 = vld [vmem:[%s6 + $0x148] sm:$0xff]
      %v6645 = vld [vmem:[%s6 + $0x150] sm:$0xff]
      %v6646 = vld [vmem:[%s6 + $0x158] sm:$0xff]
      %v6647 = vld [vmem:[%s6 + $0x160] sm:$0xff]
      %v6648 = vld [vmem:[%s6 + $0x168] sm:$0xff]
      %v6649 = vld [vmem:[%s6 + $0x170] sm:$0xff]
      %v6650 = vld [vmem:[%s6 + $0x178] sm:$0xff]
      %v6652 = vsel %vm755, %v6635, 0
      %v6655 = vsel %vm755, %v6636, 0
      %v6658 = vsel %vm755, %v6637, 0
      %v6661 = vsel %vm755, %v6638, 0
      %v6664 = vsel %vm755, %v6639, 0
      %v6667 = vsel %vm755, %v6640, 0
      %v6670 = vsel %vm755, %v6641, 0
      %v6673 = vsel %vm755, %v6642, 0
      %v6676 = vsel %vm755, %v6643, 0
      %v6679 = vsel %vm755, %v6644, 0
      %v6682 = vsel %vm755, %v6645, 0
      %v6685 = vsel %vm755, %v6646, 0
      %v6688 = vsel %vm755, %v6647, 0
      %v6691 = vsel %vm755, %v6648, 0
      %v6694 = vsel %vm755, %v6649, 0
      %v6697 = vsel %vm755, %v6650, 0
      %6699 = vmatprep.subr.mxu0 0.0
      %6700 = vmatpush1.msra.mxu0 0.0
      %6701 = vmatprep.subr.mxu0 0.0
      %6702 = vmatpush1.msra.mxu0 0.0
      %6703 = vmatprep.subr.mxu0 0.0
      %6704 = vmatpush1.msra.mxu0 0.0
      %6705 = vmatprep.subr.mxu0 0.0
      %6706 = vmatpush1.msra.mxu0 0.0
      %6707 = vmatprep.subr.mxu0 0.0
      %6708 = vmatpush1.msra.mxu0 0.0
      %6709 = vmatprep.subr.mxu0 0.0
      %6710 = vmatpush1.msra.mxu0 0.0
      %6711 = vmatprep.subr.mxu0 0.0
      %6712 = vmatpush1.msra.mxu0 0.0
      %6713 = vmatprep.subr.mxu0 0.0
      %6714 = vmatpush1.msra.mxu0 0.0
      %6715 = vmatprep.subr.mxu0 0.0
      %6716 = vmatpush1.msra.mxu0 %v554
      %6717 = vmatprep.subr.mxu0 0.0
      %6718 = vmatpush1.msra.mxu0 %v553
      %6719 = vmatprep.subr.mxu0 0.0
      %6720 = vmatpush1.msra.mxu0 %v552
      %6721 = vmatprep.subr.mxu0 0.0
      %6722 = vmatpush1.msra.mxu0 %v551
      %6723 = vmatprep.subr.mxu0 0.0
      %6724 = vmatpush1.msra.mxu0 %v550
      %6725 = vmatprep.subr.mxu0 0.0
      %6726 = vmatpush1.msra.mxu0 %v549
      %6727 = vmatprep.subr.mxu0 0.0
      %6728 = vmatpush1.msra.mxu0 %v548
      %6729 = vmatprep.subr.mxu0 0.0
      %6730 = vmatpush1.msra.mxu0 %v547
      %6731 = vmatprep.subr.mxu0 0.0
      %6732 = vmatpush2.msra.mxu0 0.0
      %6733 = vmatprep.subr.mxu0 0.0
      %6734 = vmatpush2.msra.mxu0 0.0
      %6735 = vmatprep.subr.mxu0 0.0
      %6736 = vmatpush2.msra.mxu0 0.0
      %6737 = vmatprep.subr.mxu0 0.0
      %6738 = vmatpush2.msra.mxu0 0.0
      %6739 = vmatprep.subr.mxu0 0.0
      %6740 = vmatpush2.msra.mxu0 0.0
      %6741 = vmatprep.subr.mxu0 0.0
      %6742 = vmatpush2.msra.mxu0 0.0
      %6743 = vmatprep.subr.mxu0 0.0
      %6744 = vmatpush2.msra.mxu0 0.0
      %6745 = vmatprep.subr.mxu0 0.0
      %6746 = vmatpush2.msra.mxu0 0.0
      %6747 = vmatprep.subr.mxu0 0.0
      %6748 = vmatpush2.msra.mxu0 0.0
      %6749 = vmatprep.subr.mxu0 0.0
      %6750 = vmatpush2.msra.mxu0 0.0
      %6751 = vmatprep.subr.mxu0 0.0
      %6752 = vmatpush2.msra.mxu0 0.0
      %6753 = vmatprep.subr.mxu0 0.0
      %6754 = vmatpush2.msra.mxu0 0.0
      %6755 = vmatprep.subr.mxu0 0.0
      %6756 = vmatpush2.msra.mxu0 0.0
      %6757 = vmatprep.subr.mxu0 0.0
      %6758 = vmatpush2.msra.mxu0 0.0
      %6759 = vmatprep.subr.mxu0 0.0
      %6760 = vmatpush2.msra.mxu0 0.0
      %6761 = vmatprep.subr.mxu0 0.0
      %6762 = vmatpush2.msra.mxu0 0.0
      %6763 = vmatprep.mubr.f32.mxu0 0.0
      %6764 = vmatmul.mubr.f32.gmra.mxu0 %v6652
      %v6765 = vpop.f32.mrf.mxu0
      %v6766 = vadd.f32 0.0, %v6765
      %v6767 = vpop.f32.mrf.mxu0
      %6768 = vmatprep.mubr.f32.mxu0 0.0
      %6769 = vmatmul.mubr.f32.gmra.mxu0 %v6655
      %v6770 = vpop.f32.mrf.mxu0
      %v6771 = vadd.f32 0.0, %v6770
      %v6772 = vpop.f32.mrf.mxu0
      %6773 = vmatprep.mubr.f32.mxu0 0.0
      %6774 = vmatmul.mubr.f32.gmra.mxu0 %v6658
      %v6775 = vpop.f32.mrf.mxu0
      %v6776 = vadd.f32 0.0, %v6775
      %v6777 = vpop.f32.mrf.mxu0
      %6778 = vmatprep.mubr.f32.mxu0 0.0
      %6779 = vmatmul.mubr.f32.gmra.mxu0 %v6661
      %v6780 = vpop.f32.mrf.mxu0
      %v6781 = vadd.f32 0.0, %v6780
      %v6782 = vpop.f32.mrf.mxu0
      %6783 = vmatprep.mubr.f32.mxu0 0.0
      %6784 = vmatmul.mubr.f32.gmra.mxu0 %v6664
      %v6785 = vpop.f32.mrf.mxu0
      %v6786 = vadd.f32 0.0, %v6785
      %v6787 = vpop.f32.mrf.mxu0
      %6788 = vmatprep.mubr.f32.mxu0 0.0
      %6789 = vmatmul.mubr.f32.gmra.mxu0 %v6667
      %v6790 = vpop.f32.mrf.mxu0
      %v6791 = vadd.f32 0.0, %v6790
      %v6792 = vpop.f32.mrf.mxu0
      %6793 = vmatprep.mubr.f32.mxu0 0.0
      %6794 = vmatmul.mubr.f32.gmra.mxu0 %v6670
      %v6795 = vpop.f32.mrf.mxu0
      %v6796 = vadd.f32 0.0, %v6795
      %v6797 = vpop.f32.mrf.mxu0
      %6798 = vmatprep.mubr.f32.mxu0 0.0
      %6799 = vmatmul.mubr.f32.gmra.mxu0 %v6673
      %v6800 = vpop.f32.mrf.mxu0
      %v6801 = vadd.f32 0.0, %v6800
      %v6802 = vpop.f32.mrf.mxu0
      %6803 = vmatprep.mubr.f32.mxu0 0.0
      %6804 = vmatmul.mubr.f32.gmra.mxu0 %v6676
      %v6805 = vpop.f32.mrf.mxu0
      %v6806 = vadd.f32 0.0, %v6805
      %v6807 = vpop.f32.mrf.mxu0
      %6808 = vmatprep.mubr.f32.mxu0 0.0
      %6809 = vmatmul.mubr.f32.gmra.mxu0 %v6679
      %v6810 = vpop.f32.mrf.mxu0
      %v6811 = vadd.f32 0.0, %v6810
      %v6812 = vpop.f32.mrf.mxu0
      %6813 = vmatprep.mubr.f32.mxu0 0.0
      %6814 = vmatmul.mubr.f32.gmra.mxu0 %v6682
      %v6815 = vpop.f32.mrf.mxu0
      %v6816 = vadd.f32 0.0, %v6815
      %v6817 = vpop.f32.mrf.mxu0
      %6818 = vmatprep.mubr.f32.mxu0 0.0
      %6819 = vmatmul.mubr.f32.gmra.mxu0 %v6685
      %v6820 = vpop.f32.mrf.mxu0
      %v6821 = vadd.f32 0.0, %v6820
      %v6822 = vpop.f32.mrf.mxu0
      %6823 = vmatprep.mubr.f32.mxu0 0.0
      %6824 = vmatmul.mubr.f32.gmra.mxu0 %v6688
      %v6825 = vpop.f32.mrf.mxu0
      %v6826 = vadd.f32 0.0, %v6825
      %v6827 = vpop.f32.mrf.mxu0
      %6828 = vmatprep.mubr.f32.mxu0 0.0
      %6829 = vmatmul.mubr.f32.gmra.mxu0 %v6691
      %v6830 = vpop.f32.mrf.mxu0
      %v6831 = vadd.f32 0.0, %v6830
      %v6832 = vpop.f32.mrf.mxu0
      %6833 = vmatprep.mubr.f32.mxu0 0.0
      %6834 = vmatmul.mubr.f32.gmra.mxu0 %v6694
      %v6835 = vpop.f32.mrf.mxu0
      %v6836 = vadd.f32 0.0, %v6835
      %v6837 = vpop.f32.mrf.mxu0
      %6838 = vmatprep.mubr.f32.mxu0 0.0
      %6839 = vmatmul.mubr.f32.gmra.mxu0 %v6697
      %v6840 = vpop.f32.mrf.mxu0
      %v6841 = vadd.f32 0.0, %v6840
      %v6842 = vpop.f32.mrf.mxu0
      %6843 = vdwg.mxu0
      %6844 = vmatprep.subr.mxu0 0.0
      %6845 = vmatpush1.msra.mxu0 %v6634
      %6846 = vmatprep.subr.mxu0 0.0
      %6847 = vmatpush1.msra.mxu0 %v6633
      %6848 = vmatprep.subr.mxu0 0.0
      %6849 = vmatpush1.msra.mxu0 %v6632
      %6850 = vmatprep.subr.mxu0 0.0
      %6851 = vmatpush1.msra.mxu0 %v6631
      %6852 = vmatprep.subr.mxu0 0.0
      %6853 = vmatpush1.msra.mxu0 %v6630
      %6854 = vmatprep.subr.mxu0 0.0
      %6855 = vmatpush1.msra.mxu0 %v6629
      %6856 = vmatprep.subr.mxu0 0.0
      %6857 = vmatpush1.msra.mxu0 %v6628
      %6858 = vmatprep.subr.mxu0 0.0
      %6859 = vmatpush1.msra.mxu0 %v6627
      %6860 = vmatprep.subr.mxu0 0.0
      %6861 = vmatpush1.msra.mxu0 %v6626
      %6862 = vmatprep.subr.mxu0 0.0
      %6863 = vmatpush1.msra.mxu0 %v6625
      %6864 = vmatprep.subr.mxu0 0.0
      %6865 = vmatpush1.msra.mxu0 %v6624
      %6866 = vmatprep.subr.mxu0 0.0
      %6867 = vmatpush1.msra.mxu0 %v6623
      %6868 = vmatprep.subr.mxu0 0.0
      %6869 = vmatpush1.msra.mxu0 %v6622
      %6870 = vmatprep.subr.mxu0 0.0
      %6871 = vmatpush1.msra.mxu0 %v6621
      %6872 = vmatprep.subr.mxu0 0.0
      %6873 = vmatpush1.msra.mxu0 %v6620
      %6874 = vmatprep.subr.mxu0 0.0
      %6875 = vmatpush1.msra.mxu0 %v6619
      %6876 = vmatprep.subr.mxu0 0.0
      %6877 = vmatpush2.msra.mxu0 0.0
      %6878 = vmatprep.subr.mxu0 0.0
      %6879 = vmatpush2.msra.mxu0 0.0
      %6880 = vmatprep.subr.mxu0 0.0
      %6881 = vmatpush2.msra.mxu0 0.0
      %6882 = vmatprep.subr.mxu0 0.0
      %6883 = vmatpush2.msra.mxu0 0.0
      %6884 = vmatprep.subr.mxu0 0.0
      %6885 = vmatpush2.msra.mxu0 0.0
      %6886 = vmatprep.subr.mxu0 0.0
      %6887 = vmatpush2.msra.mxu0 0.0
      %6888 = vmatprep.subr.mxu0 0.0
      %6889 = vmatpush2.msra.mxu0 0.0
      %6890 = vmatprep.subr.mxu0 0.0
      %6891 = vmatpush2.msra.mxu0 0.0
      %6892 = vmatprep.subr.mxu0 0.0
      %6893 = vmatpush2.msra.mxu0 0.0
      %6894 = vmatprep.subr.mxu0 0.0
      %6895 = vmatpush2.msra.mxu0 0.0
      %6896 = vmatprep.subr.mxu0 0.0
      %6897 = vmatpush2.msra.mxu0 0.0
      %6898 = vmatprep.subr.mxu0 0.0
      %6899 = vmatpush2.msra.mxu0 0.0
      %6900 = vmatprep.subr.mxu0 0.0
      %6901 = vmatpush2.msra.mxu0 0.0
      %6902 = vmatprep.subr.mxu0 0.0
      %6903 = vmatpush2.msra.mxu0 0.0
      %6904 = vmatprep.subr.mxu0 0.0
      %6905 = vmatpush2.msra.mxu0 0.0
      %6906 = vmatprep.subr.mxu0 0.0
      %6907 = vmatpush2.msra.mxu0 0.0
      %6908 = vmatprep.mubr.f32.mxu0 0.0
      %6909 = vmatmul.mubr.f32.gmra.mxu0 %v6766
      %v6910 = vpop.f32.mrf.mxu0
      %v6911 = vadd.f32 0.0, %v6910
      %v6912 = vpop.f32.mrf.mxu0
      %6913 = vmatprep.mubr.f32.mxu0 0.0
      %6914 = vmatmul.mubr.f32.gmra.mxu0 %v6771
      %v6915 = vpop.f32.mrf.mxu0
      %v6916 = vadd.f32 0.0, %v6915
      %v6917 = vpop.f32.mrf.mxu0
      %6918 = vmatprep.mubr.f32.mxu0 0.0
      %6919 = vmatmul.mubr.f32.gmra.mxu0 %v6776
      %v6920 = vpop.f32.mrf.mxu0
      %v6921 = vadd.f32 0.0, %v6920
      %v6922 = vpop.f32.mrf.mxu0
      %6923 = vmatprep.mubr.f32.mxu0 0.0
      %6924 = vmatmul.mubr.f32.gmra.mxu0 %v6781
      %v6925 = vpop.f32.mrf.mxu0
      %v6926 = vadd.f32 0.0, %v6925
      %v6927 = vpop.f32.mrf.mxu0
      %6928 = vmatprep.mubr.f32.mxu0 0.0
      %6929 = vmatmul.mubr.f32.gmra.mxu0 %v6786
      %v6930 = vpop.f32.mrf.mxu0
      %v6931 = vadd.f32 0.0, %v6930
      %v6932 = vpop.f32.mrf.mxu0
      %6933 = vmatprep.mubr.f32.mxu0 0.0
      %6934 = vmatmul.mubr.f32.gmra.mxu0 %v6791
      %v6935 = vpop.f32.mrf.mxu0
      %v6936 = vadd.f32 0.0, %v6935
      %v6937 = vpop.f32.mrf.mxu0
      %6938 = vmatprep.mubr.f32.mxu0 0.0
      %6939 = vmatmul.mubr.f32.gmra.mxu0 %v6796
      %v6940 = vpop.f32.mrf.mxu0
      %v6941 = vadd.f32 0.0, %v6940
      %v6942 = vpop.f32.mrf.mxu0
      %6943 = vmatprep.mubr.f32.mxu0 0.0
      %6944 = vmatmul.mubr.f32.gmra.mxu0 %v6801
      %v6945 = vpop.f32.mrf.mxu0
      %v6946 = vadd.f32 0.0, %v6945
      %v6947 = vpop.f32.mrf.mxu0
      %6948 = vmatprep.mubr.f32.mxu0 0.0
      %6949 = vmatmul.mubr.f32.gmra.mxu0 %v6806
      %v6950 = vpop.f32.mrf.mxu0
      %v6951 = vadd.f32 0.0, %v6950
      %v6952 = vpop.f32.mrf.mxu0
      %6953 = vmatprep.mubr.f32.mxu0 0.0
      %6954 = vmatmul.mubr.f32.gmra.mxu0 %v6811
      %v6955 = vpop.f32.mrf.mxu0
      %v6956 = vadd.f32 0.0, %v6955
      %v6957 = vpop.f32.mrf.mxu0
      %6958 = vmatprep.mubr.f32.mxu0 0.0
      %6959 = vmatmul.mubr.f32.gmra.mxu0 %v6816
      %v6960 = vpop.f32.mrf.mxu0
      %v6961 = vadd.f32 0.0, %v6960
      %v6962 = vpop.f32.mrf.mxu0
      %6963 = vmatprep.mubr.f32.mxu0 0.0
      %6964 = vmatmul.mubr.f32.gmra.mxu0 %v6821
      %v6965 = vpop.f32.mrf.mxu0
      %v6966 = vadd.f32 0.0, %v6965
      %v6967 = vpop.f32.mrf.mxu0
      %6968 = vmatprep.mubr.f32.mxu0 0.0
      %6969 = vmatmul.mubr.f32.gmra.mxu0 %v6826
      %v6970 = vpop.f32.mrf.mxu0
      %v6971 = vadd.f32 0.0, %v6970
      %v6972 = vpop.f32.mrf.mxu0
      %6973 = vmatprep.mubr.f32.mxu0 0.0
      %6974 = vmatmul.mubr.f32.gmra.mxu0 %v6831
      %v6975 = vpop.f32.mrf.mxu0
      %v6976 = vadd.f32 0.0, %v6975
      %v6977 = vpop.f32.mrf.mxu0
      %6978 = vmatprep.mubr.f32.mxu0 0.0
      %6979 = vmatmul.mubr.f32.gmra.mxu0 %v6836
      %v6980 = vpop.f32.mrf.mxu0
      %v6981 = vadd.f32 0.0, %v6980
      %v6982 = vpop.f32.mrf.mxu0
      %6983 = vmatprep.mubr.f32.mxu0 0.0
      %6984 = vmatmul.mubr.f32.gmra.mxu0 %v6841
      %v6985 = vpop.f32.mrf.mxu0
      %v6986 = vadd.f32 0.0, %v6985
      %v6987 = vpop.f32.mrf.mxu0
      %6988 = vdwg.mxu0
      %v6989 = vadd.f32 %v5418, %v6911
      %v6990 = vadd.f32 %v5419, %v6916
      %v6991 = vadd.f32 %v5420, %v6921
      %v6992 = vadd.f32 %v5421, %v6926
      %v6993 = vadd.f32 %v5422, %v6931
      %v6994 = vadd.f32 %v5423, %v6936
      %v6995 = vadd.f32 %v5424, %v6941
      %v6996 = vadd.f32 %v5425, %v6946
      %v6997 = vadd.f32 %v5426, %v6951
      %v6998 = vadd.f32 %v5427, %v6956
      %v6999 = vadd.f32 %v5428, %v6961
      %v7000 = vadd.f32 %v5429, %v6966
      %v7001 = vadd.f32 %v5430, %v6971
      %v7002 = vadd.f32 %v5431, %v6976
      %v7003 = vadd.f32 %v5432, %v6981
      %v7004 = vadd.f32 %v5433, %v6986
      %v7005 = vmax.f32 %v6989, 0.0
      %v7006 = vmax.f32 %v6990, 0.0
      %v7007 = vmax.f32 %v6991, 0.0
      %v7008 = vmax.f32 %v6992, 0.0
      %v7009 = vmax.f32 %v6993, 0.0
      %v7010 = vmax.f32 %v6994, 0.0
      %v7011 = vmax.f32 %v6995, 0.0
      %v7012 = vmax.f32 %v6996, 0.0
      %v7013 = vmax.f32 %v6997, 0.0
      %v7014 = vmax.f32 %v6998, 0.0
      %v7015 = vmax.f32 %v6999, 0.0
      %v7016 = vmax.f32 %v7000, 0.0
      %v7017 = vmax.f32 %v7001, 0.0
      %v7018 = vmax.f32 %v7002, 0.0
      %v7019 = vmax.f32 %v7003, 0.0
      %v7020 = vmax.f32 %v7004, 0.0
      %v7021 = vld [vmem:[%s509] sm:$0xff]
      %v7022 = vld [vmem:[%s509 + $0x8] sm:$0xff]
      %v7023 = vld [vmem:[%s509 + $0x10] sm:$0xff]
      %v7024 = vld [vmem:[%s509 + $0x18] sm:$0xff]
      %v7025 = vld [vmem:[%s509 + $0x20] sm:$0xff]
      %v7026 = vld [vmem:[%s509 + $0x28] sm:$0xff]
      %v7027 = vld [vmem:[%s509 + $0x30] sm:$0xff]
      %v7028 = vld [vmem:[%s509 + $0x38] sm:$0xff]
      %v7029 = vld [vmem:[%s509 + $0x40] sm:$0xff]
      %v7030 = vld [vmem:[%s509 + $0x48] sm:$0xff]
      %v7031 = vld [vmem:[%s509 + $0x50] sm:$0xff]
      %v7032 = vld [vmem:[%s509 + $0x58] sm:$0xff]
      %v7033 = vld [vmem:[%s509 + $0x60] sm:$0xff]
      %v7034 = vld [vmem:[%s509 + $0x68] sm:$0xff]
      %v7035 = vld [vmem:[%s509 + $0x70] sm:$0xff]
      %v7036 = vld [vmem:[%s509 + $0x78] sm:$0xff]
      %v7037 = vld [vmem:[%s14] sm:$0xff]
      %v7038 = vld [vmem:[%s14 + $0x8] sm:$0xff]
      %v7039 = vld [vmem:[%s14 + $0x10] sm:$0xff]
      %v7040 = vld [vmem:[%s14 + $0x18] sm:$0xff]
      %v7041 = vld [vmem:[%s14 + $0x20] sm:$0xff]
      %v7042 = vld [vmem:[%s14 + $0x28] sm:$0xff]
      %v7043 = vld [vmem:[%s14 + $0x30] sm:$0xff]
      %v7044 = vld [vmem:[%s14 + $0x38] sm:$0xff]
      %v7045 = vld [vmem:[%s14 + $0x40] sm:$0xff]
      %v7046 = vld [vmem:[%s14 + $0x48] sm:$0xff]
      %v7047 = vld [vmem:[%s14 + $0x50] sm:$0xff]
      %v7048 = vld [vmem:[%s14 + $0x58] sm:$0xff]
      %v7049 = vld [vmem:[%s14 + $0x60] sm:$0xff]
      %v7050 = vld [vmem:[%s14 + $0x68] sm:$0xff]
      %v7051 = vld [vmem:[%s14 + $0x70] sm:$0xff]
      %v7052 = vld [vmem:[%s14 + $0x78] sm:$0xff]
      %7054 = vset.pattern.permute.xlu0 0
      %7055 = vperm.xlu0 %7054, %v7037
      %v7056 = vpop.permute.xlu0 %7055
      %7059 = vset.pattern.permute.xlu0 0
      %7060 = vperm.xlu0 %7059, %v7038
      %v7061 = vpop.permute.xlu0 %7060
      %7064 = vset.pattern.permute.xlu0 0
      %7065 = vperm.xlu0 %7064, %v7039
      %v7066 = vpop.permute.xlu0 %7065
      %7069 = vset.pattern.permute.xlu0 0
      %7070 = vperm.xlu0 %7069, %v7040
      %v7071 = vpop.permute.xlu0 %7070
      %7074 = vset.pattern.permute.xlu0 0
      %7075 = vperm.xlu0 %7074, %v7041
      %v7076 = vpop.permute.xlu0 %7075
      %7079 = vset.pattern.permute.xlu0 0
      %7080 = vperm.xlu0 %7079, %v7042
      %v7081 = vpop.permute.xlu0 %7080
      %7084 = vset.pattern.permute.xlu0 0
      %7085 = vperm.xlu0 %7084, %v7043
      %v7086 = vpop.permute.xlu0 %7085
      %7089 = vset.pattern.permute.xlu0 0
      %7090 = vperm.xlu0 %7089, %v7044
      %v7091 = vpop.permute.xlu0 %7090
      %7094 = vset.pattern.permute.xlu0 0
      %7095 = vperm.xlu0 %7094, %v7045
      %v7096 = vpop.permute.xlu0 %7095
      %7099 = vset.pattern.permute.xlu0 0
      %7100 = vperm.xlu0 %7099, %v7046
      %v7101 = vpop.permute.xlu0 %7100
      %7104 = vset.pattern.permute.xlu0 0
      %7105 = vperm.xlu0 %7104, %v7047
      %v7106 = vpop.permute.xlu0 %7105
      %7109 = vset.pattern.permute.xlu0 0
      %7110 = vperm.xlu0 %7109, %v7048
      %v7111 = vpop.permute.xlu0 %7110
      %7114 = vset.pattern.permute.xlu0 0
      %7115 = vperm.xlu0 %7114, %v7049
      %v7116 = vpop.permute.xlu0 %7115
      %7119 = vset.pattern.permute.xlu0 0
      %7120 = vperm.xlu0 %7119, %v7050
      %v7121 = vpop.permute.xlu0 %7120
      %7124 = vset.pattern.permute.xlu0 0
      %7125 = vperm.xlu0 %7124, %v7051
      %v7126 = vpop.permute.xlu0 %7125
      %7129 = vset.pattern.permute.xlu0 0
      %7130 = vperm.xlu0 %7129, %v7052
      %v7131 = vpop.permute.xlu0 %7130
      %v7133 = vadd.f32 %v7021, %v7056
      %v7134 = vadd.f32 %v7022, %v7061
      %v7135 = vadd.f32 %v7023, %v7066
      %v7136 = vadd.f32 %v7024, %v7071
      %v7137 = vadd.f32 %v7025, %v7076
      %v7138 = vadd.f32 %v7026, %v7081
      %v7139 = vadd.f32 %v7027, %v7086
      %v7140 = vadd.f32 %v7028, %v7091
      %v7141 = vadd.f32 %v7029, %v7096
      %v7142 = vadd.f32 %v7030, %v7101
      %v7143 = vadd.f32 %v7031, %v7106
      %v7144 = vadd.f32 %v7032, %v7111
      %v7145 = vadd.f32 %v7033, %v7116
      %v7146 = vadd.f32 %v7034, %v7121
      %v7147 = vadd.f32 %v7035, %v7126
      %v7148 = vadd.f32 %v7036, %v7131
      %v7149 = vld [vmem:[%s12] sm:$0xff]
      %v7150 = vld [vmem:[%s12 + $0x8] sm:$0xff]
      %v7151 = vld [vmem:[%s12 + $0x10] sm:$0xff]
      %v7152 = vld [vmem:[%s12 + $0x18] sm:$0xff]
      %v7153 = vld [vmem:[%s12 + $0x20] sm:$0xff]
      %v7154 = vld [vmem:[%s12 + $0x28] sm:$0xff]
      %v7155 = vld [vmem:[%s12 + $0x30] sm:$0xff]
      %v7156 = vld [vmem:[%s12 + $0x38] sm:$0xff]
      %v7157 = vld [vmem:[%s12 + $0x40] sm:$0xff]
      %v7158 = vld [vmem:[%s12 + $0x48] sm:$0xff]
      %v7159 = vld [vmem:[%s12 + $0x50] sm:$0xff]
      %v7160 = vld [vmem:[%s12 + $0x58] sm:$0xff]
      %v7161 = vld [vmem:[%s12 + $0x60] sm:$0xff]
      %v7162 = vld [vmem:[%s12 + $0x68] sm:$0xff]
      %v7163 = vld [vmem:[%s12 + $0x70] sm:$0xff]
      %v7164 = vld [vmem:[%s12 + $0x78] sm:$0xff]
      %7165 = vmatprep.subr.mxu0 0.0
      %7166 = vmatpush1.msra.mxu0 %v7164
      %7167 = vmatprep.subr.mxu0 0.0
      %7168 = vmatpush1.msra.mxu0 %v7163
      %7169 = vmatprep.subr.mxu0 0.0
      %7170 = vmatpush1.msra.mxu0 %v7162
      %7171 = vmatprep.subr.mxu0 0.0
      %7172 = vmatpush1.msra.mxu0 %v7161
      %7173 = vmatprep.subr.mxu0 0.0
      %7174 = vmatpush1.msra.mxu0 %v7160
      %7175 = vmatprep.subr.mxu0 0.0
      %7176 = vmatpush1.msra.mxu0 %v7159
      %7177 = vmatprep.subr.mxu0 0.0
      %7178 = vmatpush1.msra.mxu0 %v7158
      %7179 = vmatprep.subr.mxu0 0.0
      %7180 = vmatpush1.msra.mxu0 %v7157
      %7181 = vmatprep.subr.mxu0 0.0
      %7182 = vmatpush1.msra.mxu0 %v7156
      %7183 = vmatprep.subr.mxu0 0.0
      %7184 = vmatpush1.msra.mxu0 %v7155
      %7185 = vmatprep.subr.mxu0 0.0
      %7186 = vmatpush1.msra.mxu0 %v7154
      %7187 = vmatprep.subr.mxu0 0.0
      %7188 = vmatpush1.msra.mxu0 %v7153
      %7189 = vmatprep.subr.mxu0 0.0
      %7190 = vmatpush1.msra.mxu0 %v7152
      %7191 = vmatprep.subr.mxu0 0.0
      %7192 = vmatpush1.msra.mxu0 %v7151
      %7193 = vmatprep.subr.mxu0 0.0
      %7194 = vmatpush1.msra.mxu0 %v7150
      %7195 = vmatprep.subr.mxu0 0.0
      %7196 = vmatpush1.msra.mxu0 %v7149
      %7197 = vmatprep.subr.mxu0 0.0
      %7198 = vmatpush2.msra.mxu0 0.0
      %7199 = vmatprep.subr.mxu0 0.0
      %7200 = vmatpush2.msra.mxu0 0.0
      %7201 = vmatprep.subr.mxu0 0.0
      %7202 = vmatpush2.msra.mxu0 0.0
      %7203 = vmatprep.subr.mxu0 0.0
      %7204 = vmatpush2.msra.mxu0 0.0
      %7205 = vmatprep.subr.mxu0 0.0
      %7206 = vmatpush2.msra.mxu0 0.0
      %7207 = vmatprep.subr.mxu0 0.0
      %7208 = vmatpush2.msra.mxu0 0.0
      %7209 = vmatprep.subr.mxu0 0.0
      %7210 = vmatpush2.msra.mxu0 0.0
      %7211 = vmatprep.subr.mxu0 0.0
      %7212 = vmatpush2.msra.mxu0 0.0
      %7213 = vmatprep.subr.mxu0 0.0
      %7214 = vmatpush2.msra.mxu0 0.0
      %7215 = vmatprep.subr.mxu0 0.0
      %7216 = vmatpush2.msra.mxu0 0.0
      %7217 = vmatprep.subr.mxu0 0.0
      %7218 = vmatpush2.msra.mxu0 0.0
      %7219 = vmatprep.subr.mxu0 0.0
      %7220 = vmatpush2.msra.mxu0 0.0
      %7221 = vmatprep.subr.mxu0 0.0
      %7222 = vmatpush2.msra.mxu0 0.0
      %7223 = vmatprep.subr.mxu0 0.0
      %7224 = vmatpush2.msra.mxu0 0.0
      %7225 = vmatprep.subr.mxu0 0.0
      %7226 = vmatpush2.msra.mxu0 0.0
      %7227 = vmatprep.subr.mxu0 0.0
      %7228 = vmatpush2.msra.mxu0 0.0
      %7229 = vmatprep.mubr.f32.mxu0 0.0
      %7230 = vmatmul.mubr.f32.gmra.mxu0 %v7005
      %v7231 = vpop.f32.mrf.mxu0
      %v7232 = vadd.f32 0.0, %v7231
      %v7233 = vpop.f32.mrf.mxu0
      %7234 = vmatprep.mubr.f32.mxu0 0.0
      %7235 = vmatmul.mubr.f32.gmra.mxu0 %v7006
      %v7236 = vpop.f32.mrf.mxu0
      %v7237 = vadd.f32 0.0, %v7236
      %v7238 = vpop.f32.mrf.mxu0
      %7239 = vmatprep.mubr.f32.mxu0 0.0
      %7240 = vmatmul.mubr.f32.gmra.mxu0 %v7007
      %v7241 = vpop.f32.mrf.mxu0
      %v7242 = vadd.f32 0.0, %v7241
      %v7243 = vpop.f32.mrf.mxu0
      %7244 = vmatprep.mubr.f32.mxu0 0.0
      %7245 = vmatmul.mubr.f32.gmra.mxu0 %v7008
      %v7246 = vpop.f32.mrf.mxu0
      %v7247 = vadd.f32 0.0, %v7246
      %v7248 = vpop.f32.mrf.mxu0
      %7249 = vmatprep.mubr.f32.mxu0 0.0
      %7250 = vmatmul.mubr.f32.gmra.mxu0 %v7009
      %v7251 = vpop.f32.mrf.mxu0
      %v7252 = vadd.f32 0.0, %v7251
      %v7253 = vpop.f32.mrf.mxu0
      %7254 = vmatprep.mubr.f32.mxu0 0.0
      %7255 = vmatmul.mubr.f32.gmra.mxu0 %v7010
      %v7256 = vpop.f32.mrf.mxu0
      %v7257 = vadd.f32 0.0, %v7256
      %v7258 = vpop.f32.mrf.mxu0
      %7259 = vmatprep.mubr.f32.mxu0 0.0
      %7260 = vmatmul.mubr.f32.gmra.mxu0 %v7011
      %v7261 = vpop.f32.mrf.mxu0
      %v7262 = vadd.f32 0.0, %v7261
      %v7263 = vpop.f32.mrf.mxu0
      %7264 = vmatprep.mubr.f32.mxu0 0.0
      %7265 = vmatmul.mubr.f32.gmra.mxu0 %v7012
      %v7266 = vpop.f32.mrf.mxu0
      %v7267 = vadd.f32 0.0, %v7266
      %v7268 = vpop.f32.mrf.mxu0
      %7269 = vmatprep.mubr.f32.mxu0 0.0
      %7270 = vmatmul.mubr.f32.gmra.mxu0 %v7013
      %v7271 = vpop.f32.mrf.mxu0
      %v7272 = vadd.f32 0.0, %v7271
      %v7273 = vpop.f32.mrf.mxu0
      %7274 = vmatprep.mubr.f32.mxu0 0.0
      %7275 = vmatmul.mubr.f32.gmra.mxu0 %v7014
      %v7276 = vpop.f32.mrf.mxu0
      %v7277 = vadd.f32 0.0, %v7276
      %v7278 = vpop.f32.mrf.mxu0
      %7279 = vmatprep.mubr.f32.mxu0 0.0
      %7280 = vmatmul.mubr.f32.gmra.mxu0 %v7015
      %v7281 = vpop.f32.mrf.mxu0
      %v7282 = vadd.f32 0.0, %v7281
      %v7283 = vpop.f32.mrf.mxu0
      %7284 = vmatprep.mubr.f32.mxu0 0.0
      %7285 = vmatmul.mubr.f32.gmra.mxu0 %v7016
      %v7286 = vpop.f32.mrf.mxu0
      %v7287 = vadd.f32 0.0, %v7286
      %v7288 = vpop.f32.mrf.mxu0
      %7289 = vmatprep.mubr.f32.mxu0 0.0
      %7290 = vmatmul.mubr.f32.gmra.mxu0 %v7017
      %v7291 = vpop.f32.mrf.mxu0
      %v7292 = vadd.f32 0.0, %v7291
      %v7293 = vpop.f32.mrf.mxu0
      %7294 = vmatprep.mubr.f32.mxu0 0.0
      %7295 = vmatmul.mubr.f32.gmra.mxu0 %v7018
      %v7296 = vpop.f32.mrf.mxu0
      %v7297 = vadd.f32 0.0, %v7296
      %v7298 = vpop.f32.mrf.mxu0
      %7299 = vmatprep.mubr.f32.mxu0 0.0
      %7300 = vmatmul.mubr.f32.gmra.mxu0 %v7019
      %v7301 = vpop.f32.mrf.mxu0
      %v7302 = vadd.f32 0.0, %v7301
      %v7303 = vpop.f32.mrf.mxu0
      %7304 = vmatprep.mubr.f32.mxu0 0.0
      %7305 = vmatmul.mubr.f32.gmra.mxu0 %v7020
      %v7306 = vpop.f32.mrf.mxu0
      %v7307 = vadd.f32 0.0, %v7306
      %v7308 = vpop.f32.mrf.mxu0
      %7309 = vdwg.mxu0
      %v7310 = vld [vmem:[%s13] sm:$0xff]
      %v7311 = vld [vmem:[%s13 + $0x8] sm:$0xff]
      %v7312 = vld [vmem:[%s13 + $0x10] sm:$0xff]
      %v7313 = vld [vmem:[%s13 + $0x18] sm:$0xff]
      %v7314 = vld [vmem:[%s13 + $0x20] sm:$0xff]
      %v7315 = vld [vmem:[%s13 + $0x28] sm:$0xff]
      %v7316 = vld [vmem:[%s13 + $0x30] sm:$0xff]
      %v7317 = vld [vmem:[%s13 + $0x38] sm:$0xff]
      %v7318 = vld [vmem:[%s13 + $0x40] sm:$0xff]
      %v7319 = vld [vmem:[%s13 + $0x48] sm:$0xff]
      %v7320 = vld [vmem:[%s13 + $0x50] sm:$0xff]
      %v7321 = vld [vmem:[%s13 + $0x58] sm:$0xff]
      %v7322 = vld [vmem:[%s13 + $0x60] sm:$0xff]
      %v7323 = vld [vmem:[%s13 + $0x68] sm:$0xff]
      %v7324 = vld [vmem:[%s13 + $0x70] sm:$0xff]
      %v7325 = vld [vmem:[%s13 + $0x78] sm:$0xff]
      %7326 = vmatprep.subr.mxu0 0.0
      %7327 = vmatpush1.msra.mxu0 %v7307
      %7328 = vmatprep.subr.mxu0 0.0
      %7329 = vmatpush1.msra.mxu0 %v7302
      %7330 = vmatprep.subr.mxu0 0.0
      %7331 = vmatpush1.msra.mxu0 %v7297
      %7332 = vmatprep.subr.mxu0 0.0
      %7333 = vmatpush1.msra.mxu0 %v7292
      %7334 = vmatprep.subr.mxu0 0.0
      %7335 = vmatpush1.msra.mxu0 %v7287
      %7336 = vmatprep.subr.mxu0 0.0
      %7337 = vmatpush1.msra.mxu0 %v7282
      %7338 = vmatprep.subr.mxu0 0.0
      %7339 = vmatpush1.msra.mxu0 %v7277
      %7340 = vmatprep.subr.mxu0 0.0
      %7341 = vmatpush1.msra.mxu0 %v7272
      %7342 = vmatprep.subr.mxu0 0.0
      %7343 = vmatpush1.msra.mxu0 %v7267
      %7344 = vmatprep.subr.mxu0 0.0
      %7345 = vmatpush1.msra.mxu0 %v7262
      %7346 = vmatprep.subr.mxu0 0.0
      %7347 = vmatpush1.msra.mxu0 %v7257
      %7348 = vmatprep.subr.mxu0 0.0
      %7349 = vmatpush1.msra.mxu0 %v7252
      %7350 = vmatprep.subr.mxu0 0.0
      %7351 = vmatpush1.msra.mxu0 %v7247
      %7352 = vmatprep.subr.mxu0 0.0
      %7353 = vmatpush1.msra.mxu0 %v7242
      %7354 = vmatprep.subr.mxu0 0.0
      %7355 = vmatpush1.msra.mxu0 %v7237
      %7356 = vmatprep.subr.mxu0 0.0
      %7357 = vmatpush1.msra.mxu0 %v7232
      %7358 = vmatprep.subr.mxu0 0.0
      %7359 = vmatpush2.msra.mxu0 0.0
      %7360 = vmatprep.subr.mxu0 0.0
      %7361 = vmatpush2.msra.mxu0 0.0
      %7362 = vmatprep.subr.mxu0 0.0
      %7363 = vmatpush2.msra.mxu0 0.0
      %7364 = vmatprep.subr.mxu0 0.0
      %7365 = vmatpush2.msra.mxu0 0.0
      %7366 = vmatprep.subr.mxu0 0.0
      %7367 = vmatpush2.msra.mxu0 0.0
      %7368 = vmatprep.subr.mxu0 0.0
      %7369 = vmatpush2.msra.mxu0 0.0
      %7370 = vmatprep.subr.mxu0 0.0
      %7371 = vmatpush2.msra.mxu0 0.0
      %7372 = vmatprep.subr.mxu0 0.0
      %7373 = vmatpush2.msra.mxu0 0.0
      %7374 = vmatprep.subr.mxu0 0.0
      %7375 = vmatpush2.msra.mxu0 0.0
      %7376 = vmatprep.subr.mxu0 0.0
      %7377 = vmatpush2.msra.mxu0 0.0
      %7378 = vmatprep.subr.mxu0 0.0
      %7379 = vmatpush2.msra.mxu0 0.0
      %7380 = vmatprep.subr.mxu0 0.0
      %7381 = vmatpush2.msra.mxu0 0.0
      %7382 = vmatprep.subr.mxu0 0.0
      %7383 = vmatpush2.msra.mxu0 0.0
      %7384 = vmatprep.subr.mxu0 0.0
      %7385 = vmatpush2.msra.mxu0 0.0
      %7386 = vmatprep.subr.mxu0 0.0
      %7387 = vmatpush2.msra.mxu0 0.0
      %7388 = vmatprep.subr.mxu0 0.0
      %7389 = vmatpush2.msra.mxu0 0.0
      %7390 = vmatprep.mubr.f32.mxu0 0.0
      %7391 = vmatmul.mubr.f32.gmra.mxu0 %v7310
      %v7392 = vpop.f32.mrf.mxu0
      %v7393 = vadd.f32 0.0, %v7392
      %v7394 = vpop.f32.mrf.mxu0
      %7395 = vmatprep.mubr.f32.mxu0 0.0
      %7396 = vmatmul.mubr.f32.gmra.mxu0 %v7311
      %v7397 = vpop.f32.mrf.mxu0
      %v7398 = vadd.f32 0.0, %v7397
      %v7399 = vpop.f32.mrf.mxu0
      %7400 = vmatprep.mubr.f32.mxu0 0.0
      %7401 = vmatmul.mubr.f32.gmra.mxu0 %v7312
      %v7402 = vpop.f32.mrf.mxu0
      %v7403 = vadd.f32 0.0, %v7402
      %v7404 = vpop.f32.mrf.mxu0
      %7405 = vmatprep.mubr.f32.mxu0 0.0
      %7406 = vmatmul.mubr.f32.gmra.mxu0 %v7313
      %v7407 = vpop.f32.mrf.mxu0
      %v7408 = vadd.f32 0.0, %v7407
      %v7409 = vpop.f32.mrf.mxu0
      %7410 = vmatprep.mubr.f32.mxu0 0.0
      %7411 = vmatmul.mubr.f32.gmra.mxu0 %v7314
      %v7412 = vpop.f32.mrf.mxu0
      %v7413 = vadd.f32 0.0, %v7412
      %v7414 = vpop.f32.mrf.mxu0
      %7415 = vmatprep.mubr.f32.mxu0 0.0
      %7416 = vmatmul.mubr.f32.gmra.mxu0 %v7315
      %v7417 = vpop.f32.mrf.mxu0
      %v7418 = vadd.f32 0.0, %v7417
      %v7419 = vpop.f32.mrf.mxu0
      %7420 = vmatprep.mubr.f32.mxu0 0.0
      %7421 = vmatmul.mubr.f32.gmra.mxu0 %v7316
      %v7422 = vpop.f32.mrf.mxu0
      %v7423 = vadd.f32 0.0, %v7422
      %v7424 = vpop.f32.mrf.mxu0
      %7425 = vmatprep.mubr.f32.mxu0 0.0
      %7426 = vmatmul.mubr.f32.gmra.mxu0 %v7317
      %v7427 = vpop.f32.mrf.mxu0
      %v7428 = vadd.f32 0.0, %v7427
      %v7429 = vpop.f32.mrf.mxu0
      %7430 = vmatprep.mubr.f32.mxu0 0.0
      %7431 = vmatmul.mubr.f32.gmra.mxu0 %v7318
      %v7432 = vpop.f32.mrf.mxu0
      %v7433 = vadd.f32 0.0, %v7432
      %v7434 = vpop.f32.mrf.mxu0
      %7435 = vmatprep.mubr.f32.mxu0 0.0
      %7436 = vmatmul.mubr.f32.gmra.mxu0 %v7319
      %v7437 = vpop.f32.mrf.mxu0
      %v7438 = vadd.f32 0.0, %v7437
      %v7439 = vpop.f32.mrf.mxu0
      %7440 = vmatprep.mubr.f32.mxu0 0.0
      %7441 = vmatmul.mubr.f32.gmra.mxu0 %v7320
      %v7442 = vpop.f32.mrf.mxu0
      %v7443 = vadd.f32 0.0, %v7442
      %v7444 = vpop.f32.mrf.mxu0
      %7445 = vmatprep.mubr.f32.mxu0 0.0
      %7446 = vmatmul.mubr.f32.gmra.mxu0 %v7321
      %v7447 = vpop.f32.mrf.mxu0
      %v7448 = vadd.f32 0.0, %v7447
      %v7449 = vpop.f32.mrf.mxu0
      %7450 = vmatprep.mubr.f32.mxu0 0.0
      %7451 = vmatmul.mubr.f32.gmra.mxu0 %v7322
      %v7452 = vpop.f32.mrf.mxu0
      %v7453 = vadd.f32 0.0, %v7452
      %v7454 = vpop.f32.mrf.mxu0
      %7455 = vmatprep.mubr.f32.mxu0 0.0
      %7456 = vmatmul.mubr.f32.gmra.mxu0 %v7323
      %v7457 = vpop.f32.mrf.mxu0
      %v7458 = vadd.f32 0.0, %v7457
      %v7459 = vpop.f32.mrf.mxu0
      %7460 = vmatprep.mubr.f32.mxu0 0.0
      %7461 = vmatmul.mubr.f32.gmra.mxu0 %v7324
      %v7462 = vpop.f32.mrf.mxu0
      %v7463 = vadd.f32 0.0, %v7462
      %v7464 = vpop.f32.mrf.mxu0
      %7465 = vmatprep.mubr.f32.mxu0 0.0
      %7466 = vmatmul.mubr.f32.gmra.mxu0 %v7325
      %v7467 = vpop.f32.mrf.mxu0
      %v7468 = vadd.f32 0.0, %v7467
      %v7469 = vpop.f32.mrf.mxu0
      %7470 = vdwg.mxu0
      %v7471 = vadd.f32 %v7133, %v7393
      %v7472 = vadd.f32 %v7134, %v7398
      %v7473 = vadd.f32 %v7135, %v7403
      %v7474 = vadd.f32 %v7136, %v7408
      %v7475 = vadd.f32 %v7137, %v7413
      %v7476 = vadd.f32 %v7138, %v7418
      %v7477 = vadd.f32 %v7139, %v7423
      %v7478 = vadd.f32 %v7140, %v7428
      %v7479 = vadd.f32 %v7141, %v7433
      %v7480 = vadd.f32 %v7142, %v7438
      %v7481 = vadd.f32 %v7143, %v7443
      %v7482 = vadd.f32 %v7144, %v7448
      %v7483 = vadd.f32 %v7145, %v7453
      %v7484 = vadd.f32 %v7146, %v7458
      %v7485 = vadd.f32 %v7147, %v7463
      %v7486 = vadd.f32 %v7148, %v7468
      %s7487 = scalar_lea.vmem %s12, 128
      %v7488 = vld [vmem:[%s7487] sm:$0xff]
      %v7489 = vld [vmem:[%s7487 + $0x8] sm:$0xff]
      %v7490 = vld [vmem:[%s7487 + $0x10] sm:$0xff]
      %v7491 = vld [vmem:[%s7487 + $0x18] sm:$0xff]
      %v7492 = vld [vmem:[%s7487 + $0x20] sm:$0xff]
      %v7493 = vld [vmem:[%s7487 + $0x28] sm:$0xff]
      %v7494 = vld [vmem:[%s7487 + $0x30] sm:$0xff]
      %v7495 = vld [vmem:[%s7487 + $0x38] sm:$0xff]
      %v7496 = vld [vmem:[%s7487 + $0x40] sm:$0xff]
      %v7497 = vld [vmem:[%s7487 + $0x48] sm:$0xff]
      %v7498 = vld [vmem:[%s7487 + $0x50] sm:$0xff]
      %v7499 = vld [vmem:[%s7487 + $0x58] sm:$0xff]
      %v7500 = vld [vmem:[%s7487 + $0x60] sm:$0xff]
      %v7501 = vld [vmem:[%s7487 + $0x68] sm:$0xff]
      %v7502 = vld [vmem:[%s7487 + $0x70] sm:$0xff]
      %v7503 = vld [vmem:[%s7487 + $0x78] sm:$0xff]
      %7504 = vmatprep.subr.mxu0 0.0
      %7505 = vmatpush1.msra.mxu0 %v7503
      %7506 = vmatprep.subr.mxu0 0.0
      %7507 = vmatpush1.msra.mxu0 %v7502
      %7508 = vmatprep.subr.mxu0 0.0
      %7509 = vmatpush1.msra.mxu0 %v7501
      %7510 = vmatprep.subr.mxu0 0.0
      %7511 = vmatpush1.msra.mxu0 %v7500
      %7512 = vmatprep.subr.mxu0 0.0
      %7513 = vmatpush1.msra.mxu0 %v7499
      %7514 = vmatprep.subr.mxu0 0.0
      %7515 = vmatpush1.msra.mxu0 %v7498
      %7516 = vmatprep.subr.mxu0 0.0
      %7517 = vmatpush1.msra.mxu0 %v7497
      %7518 = vmatprep.subr.mxu0 0.0
      %7519 = vmatpush1.msra.mxu0 %v7496
      %7520 = vmatprep.subr.mxu0 0.0
      %7521 = vmatpush1.msra.mxu0 %v7495
      %7522 = vmatprep.subr.mxu0 0.0
      %7523 = vmatpush1.msra.mxu0 %v7494
      %7524 = vmatprep.subr.mxu0 0.0
      %7525 = vmatpush1.msra.mxu0 %v7493
      %7526 = vmatprep.subr.mxu0 0.0
      %7527 = vmatpush1.msra.mxu0 %v7492
      %7528 = vmatprep.subr.mxu0 0.0
      %7529 = vmatpush1.msra.mxu0 %v7491
      %7530 = vmatprep.subr.mxu0 0.0
      %7531 = vmatpush1.msra.mxu0 %v7490
      %7532 = vmatprep.subr.mxu0 0.0
      %7533 = vmatpush1.msra.mxu0 %v7489
      %7534 = vmatprep.subr.mxu0 0.0
      %7535 = vmatpush1.msra.mxu0 %v7488
      %7536 = vmatprep.subr.mxu0 0.0
      %7537 = vmatpush2.msra.mxu0 0.0
      %7538 = vmatprep.subr.mxu0 0.0
      %7539 = vmatpush2.msra.mxu0 0.0
      %7540 = vmatprep.subr.mxu0 0.0
      %7541 = vmatpush2.msra.mxu0 0.0
      %7542 = vmatprep.subr.mxu0 0.0
      %7543 = vmatpush2.msra.mxu0 0.0
      %7544 = vmatprep.subr.mxu0 0.0
      %7545 = vmatpush2.msra.mxu0 0.0
      %7546 = vmatprep.subr.mxu0 0.0
      %7547 = vmatpush2.msra.mxu0 0.0
      %7548 = vmatprep.subr.mxu0 0.0
      %7549 = vmatpush2.msra.mxu0 0.0
      %7550 = vmatprep.subr.mxu0 0.0
      %7551 = vmatpush2.msra.mxu0 0.0
      %7552 = vmatprep.subr.mxu0 0.0
      %7553 = vmatpush2.msra.mxu0 0.0
      %7554 = vmatprep.subr.mxu0 0.0
      %7555 = vmatpush2.msra.mxu0 0.0
      %7556 = vmatprep.subr.mxu0 0.0
      %7557 = vmatpush2.msra.mxu0 0.0
      %7558 = vmatprep.subr.mxu0 0.0
      %7559 = vmatpush2.msra.mxu0 0.0
      %7560 = vmatprep.subr.mxu0 0.0
      %7561 = vmatpush2.msra.mxu0 0.0
      %7562 = vmatprep.subr.mxu0 0.0
      %7563 = vmatpush2.msra.mxu0 0.0
      %7564 = vmatprep.subr.mxu0 0.0
      %7565 = vmatpush2.msra.mxu0 0.0
      %7566 = vmatprep.subr.mxu0 0.0
      %7567 = vmatpush2.msra.mxu0 0.0
      %7568 = vmatprep.mubr.f32.mxu0 0.0
      %7569 = vmatmul.mubr.f32.gmra.mxu0 %v7005
      %v7570 = vpop.f32.mrf.mxu0
      %v7571 = vadd.f32 0.0, %v7570
      %v7572 = vpop.f32.mrf.mxu0
      %7573 = vmatprep.mubr.f32.mxu0 0.0
      %7574 = vmatmul.mubr.f32.gmra.mxu0 %v7006
      %v7575 = vpop.f32.mrf.mxu0
      %v7576 = vadd.f32 0.0, %v7575
      %v7577 = vpop.f32.mrf.mxu0
      %7578 = vmatprep.mubr.f32.mxu0 0.0
      %7579 = vmatmul.mubr.f32.gmra.mxu0 %v7007
      %v7580 = vpop.f32.mrf.mxu0
      %v7581 = vadd.f32 0.0, %v7580
      %v7582 = vpop.f32.mrf.mxu0
      %7583 = vmatprep.mubr.f32.mxu0 0.0
      %7584 = vmatmul.mubr.f32.gmra.mxu0 %v7008
      %v7585 = vpop.f32.mrf.mxu0
      %v7586 = vadd.f32 0.0, %v7585
      %v7587 = vpop.f32.mrf.mxu0
      %7588 = vmatprep.mubr.f32.mxu0 0.0
      %7589 = vmatmul.mubr.f32.gmra.mxu0 %v7009
      %v7590 = vpop.f32.mrf.mxu0
      %v7591 = vadd.f32 0.0, %v7590
      %v7592 = vpop.f32.mrf.mxu0
      %7593 = vmatprep.mubr.f32.mxu0 0.0
      %7594 = vmatmul.mubr.f32.gmra.mxu0 %v7010
      %v7595 = vpop.f32.mrf.mxu0
      %v7596 = vadd.f32 0.0, %v7595
      %v7597 = vpop.f32.mrf.mxu0
      %7598 = vmatprep.mubr.f32.mxu0 0.0
      %7599 = vmatmul.mubr.f32.gmra.mxu0 %v7011
      %v7600 = vpop.f32.mrf.mxu0
      %v7601 = vadd.f32 0.0, %v7600
      %v7602 = vpop.f32.mrf.mxu0
      %7603 = vmatprep.mubr.f32.mxu0 0.0
      %7604 = vmatmul.mubr.f32.gmra.mxu0 %v7012
      %v7605 = vpop.f32.mrf.mxu0
      %v7606 = vadd.f32 0.0, %v7605
      %v7607 = vpop.f32.mrf.mxu0
      %7608 = vmatprep.mubr.f32.mxu0 0.0
      %7609 = vmatmul.mubr.f32.gmra.mxu0 %v7013
      %v7610 = vpop.f32.mrf.mxu0
      %v7611 = vadd.f32 0.0, %v7610
      %v7612 = vpop.f32.mrf.mxu0
      %7613 = vmatprep.mubr.f32.mxu0 0.0
      %7614 = vmatmul.mubr.f32.gmra.mxu0 %v7014
      %v7615 = vpop.f32.mrf.mxu0
      %v7616 = vadd.f32 0.0, %v7615
      %v7617 = vpop.f32.mrf.mxu0
      %7618 = vmatprep.mubr.f32.mxu0 0.0
      %7619 = vmatmul.mubr.f32.gmra.mxu0 %v7015
      %v7620 = vpop.f32.mrf.mxu0
      %v7621 = vadd.f32 0.0, %v7620
      %v7622 = vpop.f32.mrf.mxu0
      %7623 = vmatprep.mubr.f32.mxu0 0.0
      %7624 = vmatmul.mubr.f32.gmra.mxu0 %v7016
      %v7625 = vpop.f32.mrf.mxu0
      %v7626 = vadd.f32 0.0, %v7625
      %v7627 = vpop.f32.mrf.mxu0
      %7628 = vmatprep.mubr.f32.mxu0 0.0
      %7629 = vmatmul.mubr.f32.gmra.mxu0 %v7017
      %v7630 = vpop.f32.mrf.mxu0
      %v7631 = vadd.f32 0.0, %v7630
      %v7632 = vpop.f32.mrf.mxu0
      %7633 = vmatprep.mubr.f32.mxu0 0.0
      %7634 = vmatmul.mubr.f32.gmra.mxu0 %v7018
      %v7635 = vpop.f32.mrf.mxu0
      %v7636 = vadd.f32 0.0, %v7635
      %v7637 = vpop.f32.mrf.mxu0
      %7638 = vmatprep.mubr.f32.mxu0 0.0
      %7639 = vmatmul.mubr.f32.gmra.mxu0 %v7019
      %v7640 = vpop.f32.mrf.mxu0
      %v7641 = vadd.f32 0.0, %v7640
      %v7642 = vpop.f32.mrf.mxu0
      %7643 = vmatprep.mubr.f32.mxu0 0.0
      %7644 = vmatmul.mubr.f32.gmra.mxu0 %v7020
      %v7645 = vpop.f32.mrf.mxu0
      %v7646 = vadd.f32 0.0, %v7645
      %v7647 = vpop.f32.mrf.mxu0
      %7648 = vdwg.mxu0
      %s7649 = scalar_lea.vmem %s13, 128
      %v7650 = vld [vmem:[%s7649] sm:$0xff]
      %v7651 = vld [vmem:[%s7649 + $0x8] sm:$0xff]
      %v7652 = vld [vmem:[%s7649 + $0x10] sm:$0xff]
      %v7653 = vld [vmem:[%s7649 + $0x18] sm:$0xff]
      %v7654 = vld [vmem:[%s7649 + $0x20] sm:$0xff]
      %v7655 = vld [vmem:[%s7649 + $0x28] sm:$0xff]
      %v7656 = vld [vmem:[%s7649 + $0x30] sm:$0xff]
      %v7657 = vld [vmem:[%s7649 + $0x38] sm:$0xff]
      %v7658 = vld [vmem:[%s7649 + $0x40] sm:$0xff]
      %v7659 = vld [vmem:[%s7649 + $0x48] sm:$0xff]
      %v7660 = vld [vmem:[%s7649 + $0x50] sm:$0xff]
      %v7661 = vld [vmem:[%s7649 + $0x58] sm:$0xff]
      %v7662 = vld [vmem:[%s7649 + $0x60] sm:$0xff]
      %v7663 = vld [vmem:[%s7649 + $0x68] sm:$0xff]
      %v7664 = vld [vmem:[%s7649 + $0x70] sm:$0xff]
      %v7665 = vld [vmem:[%s7649 + $0x78] sm:$0xff]
      %7666 = vmatprep.subr.mxu0 0.0
      %7667 = vmatpush1.msra.mxu0 %v7646
      %7668 = vmatprep.subr.mxu0 0.0
      %7669 = vmatpush1.msra.mxu0 %v7641
      %7670 = vmatprep.subr.mxu0 0.0
      %7671 = vmatpush1.msra.mxu0 %v7636
      %7672 = vmatprep.subr.mxu0 0.0
      %7673 = vmatpush1.msra.mxu0 %v7631
      %7674 = vmatprep.subr.mxu0 0.0
      %7675 = vmatpush1.msra.mxu0 %v7626
      %7676 = vmatprep.subr.mxu0 0.0
      %7677 = vmatpush1.msra.mxu0 %v7621
      %7678 = vmatprep.subr.mxu0 0.0
      %7679 = vmatpush1.msra.mxu0 %v7616
      %7680 = vmatprep.subr.mxu0 0.0
      %7681 = vmatpush1.msra.mxu0 %v7611
      %7682 = vmatprep.subr.mxu0 0.0
      %7683 = vmatpush1.msra.mxu0 %v7606
      %7684 = vmatprep.subr.mxu0 0.0
      %7685 = vmatpush1.msra.mxu0 %v7601
      %7686 = vmatprep.subr.mxu0 0.0
      %7687 = vmatpush1.msra.mxu0 %v7596
      %7688 = vmatprep.subr.mxu0 0.0
      %7689 = vmatpush1.msra.mxu0 %v7591
      %7690 = vmatprep.subr.mxu0 0.0
      %7691 = vmatpush1.msra.mxu0 %v7586
      %7692 = vmatprep.subr.mxu0 0.0
      %7693 = vmatpush1.msra.mxu0 %v7581
      %7694 = vmatprep.subr.mxu0 0.0
      %7695 = vmatpush1.msra.mxu0 %v7576
      %7696 = vmatprep.subr.mxu0 0.0
      %7697 = vmatpush1.msra.mxu0 %v7571
      %7698 = vmatprep.subr.mxu0 0.0
      %7699 = vmatpush2.msra.mxu0 0.0
      %7700 = vmatprep.subr.mxu0 0.0
      %7701 = vmatpush2.msra.mxu0 0.0
      %7702 = vmatprep.subr.mxu0 0.0
      %7703 = vmatpush2.msra.mxu0 0.0
      %7704 = vmatprep.subr.mxu0 0.0
      %7705 = vmatpush2.msra.mxu0 0.0
      %7706 = vmatprep.subr.mxu0 0.0
      %7707 = vmatpush2.msra.mxu0 0.0
      %7708 = vmatprep.subr.mxu0 0.0
      %7709 = vmatpush2.msra.mxu0 0.0
      %7710 = vmatprep.subr.mxu0 0.0
      %7711 = vmatpush2.msra.mxu0 0.0
      %7712 = vmatprep.subr.mxu0 0.0
      %7713 = vmatpush2.msra.mxu0 0.0
      %7714 = vmatprep.subr.mxu0 0.0
      %7715 = vmatpush2.msra.mxu0 0.0
      %7716 = vmatprep.subr.mxu0 0.0
      %7717 = vmatpush2.msra.mxu0 0.0
      %7718 = vmatprep.subr.mxu0 0.0
      %7719 = vmatpush2.msra.mxu0 0.0
      %7720 = vmatprep.subr.mxu0 0.0
      %7721 = vmatpush2.msra.mxu0 0.0
      %7722 = vmatprep.subr.mxu0 0.0
      %7723 = vmatpush2.msra.mxu0 0.0
      %7724 = vmatprep.subr.mxu0 0.0
      %7725 = vmatpush2.msra.mxu0 0.0
      %7726 = vmatprep.subr.mxu0 0.0
      %7727 = vmatpush2.msra.mxu0 0.0
      %7728 = vmatprep.subr.mxu0 0.0
      %7729 = vmatpush2.msra.mxu0 0.0
      %7730 = vmatprep.mubr.f32.mxu0 0.0
      %7731 = vmatmul.mubr.f32.gmra.mxu0 %v7650
      %v7732 = vpop.f32.mrf.mxu0
      %v7733 = vadd.f32 0.0, %v7732
      %v7734 = vpop.f32.mrf.mxu0
      %7735 = vmatprep.mubr.f32.mxu0 0.0
      %7736 = vmatmul.mubr.f32.gmra.mxu0 %v7651
      %v7737 = vpop.f32.mrf.mxu0
      %v7738 = vadd.f32 0.0, %v7737
      %v7739 = vpop.f32.mrf.mxu0
      %7740 = vmatprep.mubr.f32.mxu0 0.0
      %7741 = vmatmul.mubr.f32.gmra.mxu0 %v7652
      %v7742 = vpop.f32.mrf.mxu0
      %v7743 = vadd.f32 0.0, %v7742
      %v7744 = vpop.f32.mrf.mxu0
      %7745 = vmatprep.mubr.f32.mxu0 0.0
      %7746 = vmatmul.mubr.f32.gmra.mxu0 %v7653
      %v7747 = vpop.f32.mrf.mxu0
      %v7748 = vadd.f32 0.0, %v7747
      %v7749 = vpop.f32.mrf.mxu0
      %7750 = vmatprep.mubr.f32.mxu0 0.0
      %7751 = vmatmul.mubr.f32.gmra.mxu0 %v7654
      %v7752 = vpop.f32.mrf.mxu0
      %v7753 = vadd.f32 0.0, %v7752
      %v7754 = vpop.f32.mrf.mxu0
      %7755 = vmatprep.mubr.f32.mxu0 0.0
      %7756 = vmatmul.mubr.f32.gmra.mxu0 %v7655
      %v7757 = vpop.f32.mrf.mxu0
      %v7758 = vadd.f32 0.0, %v7757
      %v7759 = vpop.f32.mrf.mxu0
      %7760 = vmatprep.mubr.f32.mxu0 0.0
      %7761 = vmatmul.mubr.f32.gmra.mxu0 %v7656
      %v7762 = vpop.f32.mrf.mxu0
      %v7763 = vadd.f32 0.0, %v7762
      %v7764 = vpop.f32.mrf.mxu0
      %7765 = vmatprep.mubr.f32.mxu0 0.0
      %7766 = vmatmul.mubr.f32.gmra.mxu0 %v7657
      %v7767 = vpop.f32.mrf.mxu0
      %v7768 = vadd.f32 0.0, %v7767
      %v7769 = vpop.f32.mrf.mxu0
      %7770 = vmatprep.mubr.f32.mxu0 0.0
      %7771 = vmatmul.mubr.f32.gmra.mxu0 %v7658
      %v7772 = vpop.f32.mrf.mxu0
      %v7773 = vadd.f32 0.0, %v7772
      %v7774 = vpop.f32.mrf.mxu0
      %7775 = vmatprep.mubr.f32.mxu0 0.0
      %7776 = vmatmul.mubr.f32.gmra.mxu0 %v7659
      %v7777 = vpop.f32.mrf.mxu0
      %v7778 = vadd.f32 0.0, %v7777
      %v7779 = vpop.f32.mrf.mxu0
      %7780 = vmatprep.mubr.f32.mxu0 0.0
      %7781 = vmatmul.mubr.f32.gmra.mxu0 %v7660
      %v7782 = vpop.f32.mrf.mxu0
      %v7783 = vadd.f32 0.0, %v7782
      %v7784 = vpop.f32.mrf.mxu0
      %7785 = vmatprep.mubr.f32.mxu0 0.0
      %7786 = vmatmul.mubr.f32.gmra.mxu0 %v7661
      %v7787 = vpop.f32.mrf.mxu0
      %v7788 = vadd.f32 0.0, %v7787
      %v7789 = vpop.f32.mrf.mxu0
      %7790 = vmatprep.mubr.f32.mxu0 0.0
      %7791 = vmatmul.mubr.f32.gmra.mxu0 %v7662
      %v7792 = vpop.f32.mrf.mxu0
      %v7793 = vadd.f32 0.0, %v7792
      %v7794 = vpop.f32.mrf.mxu0
      %7795 = vmatprep.mubr.f32.mxu0 0.0
      %7796 = vmatmul.mubr.f32.gmra.mxu0 %v7663
      %v7797 = vpop.f32.mrf.mxu0
      %v7798 = vadd.f32 0.0, %v7797
      %v7799 = vpop.f32.mrf.mxu0
      %7800 = vmatprep.mubr.f32.mxu0 0.0
      %7801 = vmatmul.mubr.f32.gmra.mxu0 %v7664
      %v7802 = vpop.f32.mrf.mxu0
      %v7803 = vadd.f32 0.0, %v7802
      %v7804 = vpop.f32.mrf.mxu0
      %7805 = vmatprep.mubr.f32.mxu0 0.0
      %7806 = vmatmul.mubr.f32.gmra.mxu0 %v7665
      %v7807 = vpop.f32.mrf.mxu0
      %v7808 = vadd.f32 0.0, %v7807
      %v7809 = vpop.f32.mrf.mxu0
      %7810 = vdwg.mxu0
      %v7811 = vadd.f32 %v7471, %v7733
      %v7812 = vadd.f32 %v7472, %v7738
      %v7813 = vadd.f32 %v7473, %v7743
      %v7814 = vadd.f32 %v7474, %v7748
      %v7815 = vadd.f32 %v7475, %v7753
      %v7816 = vadd.f32 %v7476, %v7758
      %v7817 = vadd.f32 %v7477, %v7763
      %v7818 = vadd.f32 %v7478, %v7768
      %v7819 = vadd.f32 %v7479, %v7773
      %v7820 = vadd.f32 %v7480, %v7778
      %v7821 = vadd.f32 %v7481, %v7783
      %v7822 = vadd.f32 %v7482, %v7788
      %v7823 = vadd.f32 %v7483, %v7793
      %v7824 = vadd.f32 %v7484, %v7798
      %v7825 = vadd.f32 %v7485, %v7803
      %v7826 = vadd.f32 %v7486, %v7808
      %s7827 = scalar_lea.vmem %s12, 256
      %v7828 = vld [vmem:[%s7827] sm:$0xff]
      %v7829 = vld [vmem:[%s7827 + $0x8] sm:$0xff]
      %v7830 = vld [vmem:[%s7827 + $0x10] sm:$0xff]
      %v7831 = vld [vmem:[%s7827 + $0x18] sm:$0xff]
      %v7832 = vld [vmem:[%s7827 + $0x20] sm:$0xff]
      %v7833 = vld [vmem:[%s7827 + $0x28] sm:$0xff]
      %v7834 = vld [vmem:[%s7827 + $0x30] sm:$0xff]
      %v7835 = vld [vmem:[%s7827 + $0x38] sm:$0xff]
      %v7836 = vld [vmem:[%s7827 + $0x40] sm:$0xff]
      %v7837 = vld [vmem:[%s7827 + $0x48] sm:$0xff]
      %v7838 = vld [vmem:[%s7827 + $0x50] sm:$0xff]
      %v7839 = vld [vmem:[%s7827 + $0x58] sm:$0xff]
      %v7840 = vld [vmem:[%s7827 + $0x60] sm:$0xff]
      %v7841 = vld [vmem:[%s7827 + $0x68] sm:$0xff]
      %v7842 = vld [vmem:[%s7827 + $0x70] sm:$0xff]
      %v7843 = vld [vmem:[%s7827 + $0x78] sm:$0xff]
      %7844 = vmatprep.subr.mxu0 0.0
      %7845 = vmatpush1.msra.mxu0 %v7843
      %7846 = vmatprep.subr.mxu0 0.0
      %7847 = vmatpush1.msra.mxu0 %v7842
      %7848 = vmatprep.subr.mxu0 0.0
      %7849 = vmatpush1.msra.mxu0 %v7841
      %7850 = vmatprep.subr.mxu0 0.0
      %7851 = vmatpush1.msra.mxu0 %v7840
      %7852 = vmatprep.subr.mxu0 0.0
      %7853 = vmatpush1.msra.mxu0 %v7839
      %7854 = vmatprep.subr.mxu0 0.0
      %7855 = vmatpush1.msra.mxu0 %v7838
      %7856 = vmatprep.subr.mxu0 0.0
      %7857 = vmatpush1.msra.mxu0 %v7837
      %7858 = vmatprep.subr.mxu0 0.0
      %7859 = vmatpush1.msra.mxu0 %v7836
      %7860 = vmatprep.subr.mxu0 0.0
      %7861 = vmatpush1.msra.mxu0 %v7835
      %7862 = vmatprep.subr.mxu0 0.0
      %7863 = vmatpush1.msra.mxu0 %v7834
      %7864 = vmatprep.subr.mxu0 0.0
      %7865 = vmatpush1.msra.mxu0 %v7833
      %7866 = vmatprep.subr.mxu0 0.0
      %7867 = vmatpush1.msra.mxu0 %v7832
      %7868 = vmatprep.subr.mxu0 0.0
      %7869 = vmatpush1.msra.mxu0 %v7831
      %7870 = vmatprep.subr.mxu0 0.0
      %7871 = vmatpush1.msra.mxu0 %v7830
      %7872 = vmatprep.subr.mxu0 0.0
      %7873 = vmatpush1.msra.mxu0 %v7829
      %7874 = vmatprep.subr.mxu0 0.0
      %7875 = vmatpush1.msra.mxu0 %v7828
      %7876 = vmatprep.subr.mxu0 0.0
      %7877 = vmatpush2.msra.mxu0 0.0
      %7878 = vmatprep.subr.mxu0 0.0
      %7879 = vmatpush2.msra.mxu0 0.0
      %7880 = vmatprep.subr.mxu0 0.0
      %7881 = vmatpush2.msra.mxu0 0.0
      %7882 = vmatprep.subr.mxu0 0.0
      %7883 = vmatpush2.msra.mxu0 0.0
      %7884 = vmatprep.subr.mxu0 0.0
      %7885 = vmatpush2.msra.mxu0 0.0
      %7886 = vmatprep.subr.mxu0 0.0
      %7887 = vmatpush2.msra.mxu0 0.0
      %7888 = vmatprep.subr.mxu0 0.0
      %7889 = vmatpush2.msra.mxu0 0.0
      %7890 = vmatprep.subr.mxu0 0.0
      %7891 = vmatpush2.msra.mxu0 0.0
      %7892 = vmatprep.subr.mxu0 0.0
      %7893 = vmatpush2.msra.mxu0 0.0
      %7894 = vmatprep.subr.mxu0 0.0
      %7895 = vmatpush2.msra.mxu0 0.0
      %7896 = vmatprep.subr.mxu0 0.0
      %7897 = vmatpush2.msra.mxu0 0.0
      %7898 = vmatprep.subr.mxu0 0.0
      %7899 = vmatpush2.msra.mxu0 0.0
      %7900 = vmatprep.subr.mxu0 0.0
      %7901 = vmatpush2.msra.mxu0 0.0
      %7902 = vmatprep.subr.mxu0 0.0
      %7903 = vmatpush2.msra.mxu0 0.0
      %7904 = vmatprep.subr.mxu0 0.0
      %7905 = vmatpush2.msra.mxu0 0.0
      %7906 = vmatprep.subr.mxu0 0.0
      %7907 = vmatpush2.msra.mxu0 0.0
      %7908 = vmatprep.mubr.f32.mxu0 0.0
      %7909 = vmatmul.mubr.f32.gmra.mxu0 %v7005
      %v7910 = vpop.f32.mrf.mxu0
      %v7911 = vadd.f32 0.0, %v7910
      %v7912 = vpop.f32.mrf.mxu0
      %7913 = vmatprep.mubr.f32.mxu0 0.0
      %7914 = vmatmul.mubr.f32.gmra.mxu0 %v7006
      %v7915 = vpop.f32.mrf.mxu0
      %v7916 = vadd.f32 0.0, %v7915
      %v7917 = vpop.f32.mrf.mxu0
      %7918 = vmatprep.mubr.f32.mxu0 0.0
      %7919 = vmatmul.mubr.f32.gmra.mxu0 %v7007
      %v7920 = vpop.f32.mrf.mxu0
      %v7921 = vadd.f32 0.0, %v7920
      %v7922 = vpop.f32.mrf.mxu0
      %7923 = vmatprep.mubr.f32.mxu0 0.0
      %7924 = vmatmul.mubr.f32.gmra.mxu0 %v7008
      %v7925 = vpop.f32.mrf.mxu0
      %v7926 = vadd.f32 0.0, %v7925
      %v7927 = vpop.f32.mrf.mxu0
      %7928 = vmatprep.mubr.f32.mxu0 0.0
      %7929 = vmatmul.mubr.f32.gmra.mxu0 %v7009
      %v7930 = vpop.f32.mrf.mxu0
      %v7931 = vadd.f32 0.0, %v7930
      %v7932 = vpop.f32.mrf.mxu0
      %7933 = vmatprep.mubr.f32.mxu0 0.0
      %7934 = vmatmul.mubr.f32.gmra.mxu0 %v7010
      %v7935 = vpop.f32.mrf.mxu0
      %v7936 = vadd.f32 0.0, %v7935
      %v7937 = vpop.f32.mrf.mxu0
      %7938 = vmatprep.mubr.f32.mxu0 0.0
      %7939 = vmatmul.mubr.f32.gmra.mxu0 %v7011
      %v7940 = vpop.f32.mrf.mxu0
      %v7941 = vadd.f32 0.0, %v7940
      %v7942 = vpop.f32.mrf.mxu0
      %7943 = vmatprep.mubr.f32.mxu0 0.0
      %7944 = vmatmul.mubr.f32.gmra.mxu0 %v7012
      %v7945 = vpop.f32.mrf.mxu0
      %v7946 = vadd.f32 0.0, %v7945
      %v7947 = vpop.f32.mrf.mxu0
      %7948 = vmatprep.mubr.f32.mxu0 0.0
      %7949 = vmatmul.mubr.f32.gmra.mxu0 %v7013
      %v7950 = vpop.f32.mrf.mxu0
      %v7951 = vadd.f32 0.0, %v7950
      %v7952 = vpop.f32.mrf.mxu0
      %7953 = vmatprep.mubr.f32.mxu0 0.0
      %7954 = vmatmul.mubr.f32.gmra.mxu0 %v7014
      %v7955 = vpop.f32.mrf.mxu0
      %v7956 = vadd.f32 0.0, %v7955
      %v7957 = vpop.f32.mrf.mxu0
      %7958 = vmatprep.mubr.f32.mxu0 0.0
      %7959 = vmatmul.mubr.f32.gmra.mxu0 %v7015
      %v7960 = vpop.f32.mrf.mxu0
      %v7961 = vadd.f32 0.0, %v7960
      %v7962 = vpop.f32.mrf.mxu0
      %7963 = vmatprep.mubr.f32.mxu0 0.0
      %7964 = vmatmul.mubr.f32.gmra.mxu0 %v7016
      %v7965 = vpop.f32.mrf.mxu0
      %v7966 = vadd.f32 0.0, %v7965
      %v7967 = vpop.f32.mrf.mxu0
      %7968 = vmatprep.mubr.f32.mxu0 0.0
      %7969 = vmatmul.mubr.f32.gmra.mxu0 %v7017
      %v7970 = vpop.f32.mrf.mxu0
      %v7971 = vadd.f32 0.0, %v7970
      %v7972 = vpop.f32.mrf.mxu0
      %7973 = vmatprep.mubr.f32.mxu0 0.0
      %7974 = vmatmul.mubr.f32.gmra.mxu0 %v7018
      %v7975 = vpop.f32.mrf.mxu0
      %v7976 = vadd.f32 0.0, %v7975
      %v7977 = vpop.f32.mrf.mxu0
      %7978 = vmatprep.mubr.f32.mxu0 0.0
      %7979 = vmatmul.mubr.f32.gmra.mxu0 %v7019
      %v7980 = vpop.f32.mrf.mxu0
      %v7981 = vadd.f32 0.0, %v7980
      %v7982 = vpop.f32.mrf.mxu0
      %7983 = vmatprep.mubr.f32.mxu0 0.0
      %7984 = vmatmul.mubr.f32.gmra.mxu0 %v7020
      %v7985 = vpop.f32.mrf.mxu0
      %v7986 = vadd.f32 0.0, %v7985
      %v7987 = vpop.f32.mrf.mxu0
      %7988 = vdwg.mxu0
      %s7989 = scalar_lea.vmem %s13, 256
      %v7990 = vld [vmem:[%s7989] sm:$0xff]
      %v7991 = vld [vmem:[%s7989 + $0x8] sm:$0xff]
      %v7992 = vld [vmem:[%s7989 + $0x10] sm:$0xff]
      %v7993 = vld [vmem:[%s7989 + $0x18] sm:$0xff]
      %v7994 = vld [vmem:[%s7989 + $0x20] sm:$0xff]
      %v7995 = vld [vmem:[%s7989 + $0x28] sm:$0xff]
      %v7996 = vld [vmem:[%s7989 + $0x30] sm:$0xff]
      %v7997 = vld [vmem:[%s7989 + $0x38] sm:$0xff]
      %v7998 = vld [vmem:[%s7989 + $0x40] sm:$0xff]
      %v7999 = vld [vmem:[%s7989 + $0x48] sm:$0xff]
      %v8000 = vld [vmem:[%s7989 + $0x50] sm:$0xff]
      %v8001 = vld [vmem:[%s7989 + $0x58] sm:$0xff]
      %v8002 = vld [vmem:[%s7989 + $0x60] sm:$0xff]
      %v8003 = vld [vmem:[%s7989 + $0x68] sm:$0xff]
      %v8004 = vld [vmem:[%s7989 + $0x70] sm:$0xff]
      %v8005 = vld [vmem:[%s7989 + $0x78] sm:$0xff]
      %8006 = vmatprep.subr.mxu0 0.0
      %8007 = vmatpush1.msra.mxu0 %v7986
      %8008 = vmatprep.subr.mxu0 0.0
      %8009 = vmatpush1.msra.mxu0 %v7981
      %8010 = vmatprep.subr.mxu0 0.0
      %8011 = vmatpush1.msra.mxu0 %v7976
      %8012 = vmatprep.subr.mxu0 0.0
      %8013 = vmatpush1.msra.mxu0 %v7971
      %8014 = vmatprep.subr.mxu0 0.0
      %8015 = vmatpush1.msra.mxu0 %v7966
      %8016 = vmatprep.subr.mxu0 0.0
      %8017 = vmatpush1.msra.mxu0 %v7961
      %8018 = vmatprep.subr.mxu0 0.0
      %8019 = vmatpush1.msra.mxu0 %v7956
      %8020 = vmatprep.subr.mxu0 0.0
      %8021 = vmatpush1.msra.mxu0 %v7951
      %8022 = vmatprep.subr.mxu0 0.0
      %8023 = vmatpush1.msra.mxu0 %v7946
      %8024 = vmatprep.subr.mxu0 0.0
      %8025 = vmatpush1.msra.mxu0 %v7941
      %8026 = vmatprep.subr.mxu0 0.0
      %8027 = vmatpush1.msra.mxu0 %v7936
      %8028 = vmatprep.subr.mxu0 0.0
      %8029 = vmatpush1.msra.mxu0 %v7931
      %8030 = vmatprep.subr.mxu0 0.0
      %8031 = vmatpush1.msra.mxu0 %v7926
      %8032 = vmatprep.subr.mxu0 0.0
      %8033 = vmatpush1.msra.mxu0 %v7921
      %8034 = vmatprep.subr.mxu0 0.0
      %8035 = vmatpush1.msra.mxu0 %v7916
      %8036 = vmatprep.subr.mxu0 0.0
      %8037 = vmatpush1.msra.mxu0 %v7911
      %8038 = vmatprep.subr.mxu0 0.0
      %8039 = vmatpush2.msra.mxu0 0.0
      %8040 = vmatprep.subr.mxu0 0.0
      %8041 = vmatpush2.msra.mxu0 0.0
      %8042 = vmatprep.subr.mxu0 0.0
      %8043 = vmatpush2.msra.mxu0 0.0
      %8044 = vmatprep.subr.mxu0 0.0
      %8045 = vmatpush2.msra.mxu0 0.0
      %8046 = vmatprep.subr.mxu0 0.0
      %8047 = vmatpush2.msra.mxu0 0.0
      %8048 = vmatprep.subr.mxu0 0.0
      %8049 = vmatpush2.msra.mxu0 0.0
      %8050 = vmatprep.subr.mxu0 0.0
      %8051 = vmatpush2.msra.mxu0 0.0
      %8052 = vmatprep.subr.mxu0 0.0
      %8053 = vmatpush2.msra.mxu0 0.0
      %8054 = vmatprep.subr.mxu0 0.0
      %8055 = vmatpush2.msra.mxu0 0.0
      %8056 = vmatprep.subr.mxu0 0.0
      %8057 = vmatpush2.msra.mxu0 0.0
      %8058 = vmatprep.subr.mxu0 0.0
      %8059 = vmatpush2.msra.mxu0 0.0
      %8060 = vmatprep.subr.mxu0 0.0
      %8061 = vmatpush2.msra.mxu0 0.0
      %8062 = vmatprep.subr.mxu0 0.0
      %8063 = vmatpush2.msra.mxu0 0.0
      %8064 = vmatprep.subr.mxu0 0.0
      %8065 = vmatpush2.msra.mxu0 0.0
      %8066 = vmatprep.subr.mxu0 0.0
      %8067 = vmatpush2.msra.mxu0 0.0
      %8068 = vmatprep.subr.mxu0 0.0
      %8069 = vmatpush2.msra.mxu0 0.0
      %8070 = vmatprep.mubr.f32.mxu0 0.0
      %8071 = vmatmul.mubr.f32.gmra.mxu0 %v7990
      %v8072 = vpop.f32.mrf.mxu0
      %v8073 = vadd.f32 0.0, %v8072
      %v8074 = vpop.f32.mrf.mxu0
      %8075 = vmatprep.mubr.f32.mxu0 0.0
      %8076 = vmatmul.mubr.f32.gmra.mxu0 %v7991
      %v8077 = vpop.f32.mrf.mxu0
      %v8078 = vadd.f32 0.0, %v8077
      %v8079 = vpop.f32.mrf.mxu0
      %8080 = vmatprep.mubr.f32.mxu0 0.0
      %8081 = vmatmul.mubr.f32.gmra.mxu0 %v7992
      %v8082 = vpop.f32.mrf.mxu0
      %v8083 = vadd.f32 0.0, %v8082
      %v8084 = vpop.f32.mrf.mxu0
      %8085 = vmatprep.mubr.f32.mxu0 0.0
      %8086 = vmatmul.mubr.f32.gmra.mxu0 %v7993
      %v8087 = vpop.f32.mrf.mxu0
      %v8088 = vadd.f32 0.0, %v8087
      %v8089 = vpop.f32.mrf.mxu0
      %8090 = vmatprep.mubr.f32.mxu0 0.0
      %8091 = vmatmul.mubr.f32.gmra.mxu0 %v7994
      %v8092 = vpop.f32.mrf.mxu0
      %v8093 = vadd.f32 0.0, %v8092
      %v8094 = vpop.f32.mrf.mxu0
      %8095 = vmatprep.mubr.f32.mxu0 0.0
      %8096 = vmatmul.mubr.f32.gmra.mxu0 %v7995
      %v8097 = vpop.f32.mrf.mxu0
      %v8098 = vadd.f32 0.0, %v8097
      %v8099 = vpop.f32.mrf.mxu0
      %8100 = vmatprep.mubr.f32.mxu0 0.0
      %8101 = vmatmul.mubr.f32.gmra.mxu0 %v7996
      %v8102 = vpop.f32.mrf.mxu0
      %v8103 = vadd.f32 0.0, %v8102
      %v8104 = vpop.f32.mrf.mxu0
      %8105 = vmatprep.mubr.f32.mxu0 0.0
      %8106 = vmatmul.mubr.f32.gmra.mxu0 %v7997
      %v8107 = vpop.f32.mrf.mxu0
      %v8108 = vadd.f32 0.0, %v8107
      %v8109 = vpop.f32.mrf.mxu0
      %8110 = vmatprep.mubr.f32.mxu0 0.0
      %8111 = vmatmul.mubr.f32.gmra.mxu0 %v7998
      %v8112 = vpop.f32.mrf.mxu0
      %v8113 = vadd.f32 0.0, %v8112
      %v8114 = vpop.f32.mrf.mxu0
      %8115 = vmatprep.mubr.f32.mxu0 0.0
      %8116 = vmatmul.mubr.f32.gmra.mxu0 %v7999
      %v8117 = vpop.f32.mrf.mxu0
      %v8118 = vadd.f32 0.0, %v8117
      %v8119 = vpop.f32.mrf.mxu0
      %8120 = vmatprep.mubr.f32.mxu0 0.0
      %8121 = vmatmul.mubr.f32.gmra.mxu0 %v8000
      %v8122 = vpop.f32.mrf.mxu0
      %v8123 = vadd.f32 0.0, %v8122
      %v8124 = vpop.f32.mrf.mxu0
      %8125 = vmatprep.mubr.f32.mxu0 0.0
      %8126 = vmatmul.mubr.f32.gmra.mxu0 %v8001
      %v8127 = vpop.f32.mrf.mxu0
      %v8128 = vadd.f32 0.0, %v8127
      %v8129 = vpop.f32.mrf.mxu0
      %8130 = vmatprep.mubr.f32.mxu0 0.0
      %8131 = vmatmul.mubr.f32.gmra.mxu0 %v8002
      %v8132 = vpop.f32.mrf.mxu0
      %v8133 = vadd.f32 0.0, %v8132
      %v8134 = vpop.f32.mrf.mxu0
      %8135 = vmatprep.mubr.f32.mxu0 0.0
      %8136 = vmatmul.mubr.f32.gmra.mxu0 %v8003
      %v8137 = vpop.f32.mrf.mxu0
      %v8138 = vadd.f32 0.0, %v8137
      %v8139 = vpop.f32.mrf.mxu0
      %8140 = vmatprep.mubr.f32.mxu0 0.0
      %8141 = vmatmul.mubr.f32.gmra.mxu0 %v8004
      %v8142 = vpop.f32.mrf.mxu0
      %v8143 = vadd.f32 0.0, %v8142
      %v8144 = vpop.f32.mrf.mxu0
      %8145 = vmatprep.mubr.f32.mxu0 0.0
      %8146 = vmatmul.mubr.f32.gmra.mxu0 %v8005
      %v8147 = vpop.f32.mrf.mxu0
      %v8148 = vadd.f32 0.0, %v8147
      %v8149 = vpop.f32.mrf.mxu0
      %8150 = vdwg.mxu0
      %v8151 = vadd.f32 %v7811, %v8073
      %v8152 = vadd.f32 %v7812, %v8078
      %v8153 = vadd.f32 %v7813, %v8083
      %v8154 = vadd.f32 %v7814, %v8088
      %v8155 = vadd.f32 %v7815, %v8093
      %v8156 = vadd.f32 %v7816, %v8098
      %v8157 = vadd.f32 %v7817, %v8103
      %v8158 = vadd.f32 %v7818, %v8108
      %v8159 = vadd.f32 %v7819, %v8113
      %v8160 = vadd.f32 %v7820, %v8118
      %v8161 = vadd.f32 %v7821, %v8123
      %v8162 = vadd.f32 %v7822, %v8128
      %v8163 = vadd.f32 %v7823, %v8133
      %v8164 = vadd.f32 %v7824, %v8138
      %v8165 = vadd.f32 %v7825, %v8143
      %v8166 = vadd.f32 %v7826, %v8148
      %s8167 = scalar_lea.vmem %s12, 384
      %v8168 = vld [vmem:[%s8167] sm:$0xff]
      %v8169 = vld [vmem:[%s8167 + $0x8] sm:$0xff]
      %v8170 = vld [vmem:[%s8167 + $0x10] sm:$0xff]
      %v8171 = vld [vmem:[%s8167 + $0x18] sm:$0xff]
      %v8172 = vld [vmem:[%s8167 + $0x20] sm:$0xff]
      %v8173 = vld [vmem:[%s8167 + $0x28] sm:$0xff]
      %v8174 = vld [vmem:[%s8167 + $0x30] sm:$0xff]
      %v8175 = vld [vmem:[%s8167 + $0x38] sm:$0xff]
      %v8176 = vld [vmem:[%s8167 + $0x40] sm:$0xff]
      %v8177 = vld [vmem:[%s8167 + $0x48] sm:$0xff]
      %v8178 = vld [vmem:[%s8167 + $0x50] sm:$0xff]
      %v8179 = vld [vmem:[%s8167 + $0x58] sm:$0xff]
      %v8180 = vld [vmem:[%s8167 + $0x60] sm:$0xff]
      %v8181 = vld [vmem:[%s8167 + $0x68] sm:$0xff]
      %v8182 = vld [vmem:[%s8167 + $0x70] sm:$0xff]
      %v8183 = vld [vmem:[%s8167 + $0x78] sm:$0xff]
      %8184 = vmatprep.subr.mxu0 0.0
      %8185 = vmatpush1.msra.mxu0 %v8183
      %8186 = vmatprep.subr.mxu0 0.0
      %8187 = vmatpush1.msra.mxu0 %v8182
      %8188 = vmatprep.subr.mxu0 0.0
      %8189 = vmatpush1.msra.mxu0 %v8181
      %8190 = vmatprep.subr.mxu0 0.0
      %8191 = vmatpush1.msra.mxu0 %v8180
      %8192 = vmatprep.subr.mxu0 0.0
      %8193 = vmatpush1.msra.mxu0 %v8179
      %8194 = vmatprep.subr.mxu0 0.0
      %8195 = vmatpush1.msra.mxu0 %v8178
      %8196 = vmatprep.subr.mxu0 0.0
      %8197 = vmatpush1.msra.mxu0 %v8177
      %8198 = vmatprep.subr.mxu0 0.0
      %8199 = vmatpush1.msra.mxu0 %v8176
      %8200 = vmatprep.subr.mxu0 0.0
      %8201 = vmatpush1.msra.mxu0 %v8175
      %8202 = vmatprep.subr.mxu0 0.0
      %8203 = vmatpush1.msra.mxu0 %v8174
      %8204 = vmatprep.subr.mxu0 0.0
      %8205 = vmatpush1.msra.mxu0 %v8173
      %8206 = vmatprep.subr.mxu0 0.0
      %8207 = vmatpush1.msra.mxu0 %v8172
      %8208 = vmatprep.subr.mxu0 0.0
      %8209 = vmatpush1.msra.mxu0 %v8171
      %8210 = vmatprep.subr.mxu0 0.0
      %8211 = vmatpush1.msra.mxu0 %v8170
      %8212 = vmatprep.subr.mxu0 0.0
      %8213 = vmatpush1.msra.mxu0 %v8169
      %8214 = vmatprep.subr.mxu0 0.0
      %8215 = vmatpush1.msra.mxu0 %v8168
      %8216 = vmatprep.subr.mxu0 0.0
      %8217 = vmatpush2.msra.mxu0 0.0
      %8218 = vmatprep.subr.mxu0 0.0
      %8219 = vmatpush2.msra.mxu0 0.0
      %8220 = vmatprep.subr.mxu0 0.0
      %8221 = vmatpush2.msra.mxu0 0.0
      %8222 = vmatprep.subr.mxu0 0.0
      %8223 = vmatpush2.msra.mxu0 0.0
      %8224 = vmatprep.subr.mxu0 0.0
      %8225 = vmatpush2.msra.mxu0 0.0
      %8226 = vmatprep.subr.mxu0 0.0
      %8227 = vmatpush2.msra.mxu0 0.0
      %8228 = vmatprep.subr.mxu0 0.0
      %8229 = vmatpush2.msra.mxu0 0.0
      %8230 = vmatprep.subr.mxu0 0.0
      %8231 = vmatpush2.msra.mxu0 0.0
      %8232 = vmatprep.subr.mxu0 0.0
      %8233 = vmatpush2.msra.mxu0 0.0
      %8234 = vmatprep.subr.mxu0 0.0
      %8235 = vmatpush2.msra.mxu0 0.0
      %8236 = vmatprep.subr.mxu0 0.0
      %8237 = vmatpush2.msra.mxu0 0.0
      %8238 = vmatprep.subr.mxu0 0.0
      %8239 = vmatpush2.msra.mxu0 0.0
      %8240 = vmatprep.subr.mxu0 0.0
      %8241 = vmatpush2.msra.mxu0 0.0
      %8242 = vmatprep.subr.mxu0 0.0
      %8243 = vmatpush2.msra.mxu0 0.0
      %8244 = vmatprep.subr.mxu0 0.0
      %8245 = vmatpush2.msra.mxu0 0.0
      %8246 = vmatprep.subr.mxu0 0.0
      %8247 = vmatpush2.msra.mxu0 0.0
      %8248 = vmatprep.mubr.f32.mxu0 0.0
      %8249 = vmatmul.mubr.f32.gmra.mxu0 %v7005
      %v8250 = vpop.f32.mrf.mxu0
      %v8251 = vadd.f32 0.0, %v8250
      %v8252 = vpop.f32.mrf.mxu0
      %8253 = vmatprep.mubr.f32.mxu0 0.0
      %8254 = vmatmul.mubr.f32.gmra.mxu0 %v7006
      %v8255 = vpop.f32.mrf.mxu0
      %v8256 = vadd.f32 0.0, %v8255
      %v8257 = vpop.f32.mrf.mxu0
      %8258 = vmatprep.mubr.f32.mxu0 0.0
      %8259 = vmatmul.mubr.f32.gmra.mxu0 %v7007
      %v8260 = vpop.f32.mrf.mxu0
      %v8261 = vadd.f32 0.0, %v8260
      %v8262 = vpop.f32.mrf.mxu0
      %8263 = vmatprep.mubr.f32.mxu0 0.0
      %8264 = vmatmul.mubr.f32.gmra.mxu0 %v7008
      %v8265 = vpop.f32.mrf.mxu0
      %v8266 = vadd.f32 0.0, %v8265
      %v8267 = vpop.f32.mrf.mxu0
      %8268 = vmatprep.mubr.f32.mxu0 0.0
      %8269 = vmatmul.mubr.f32.gmra.mxu0 %v7009
      %v8270 = vpop.f32.mrf.mxu0
      %v8271 = vadd.f32 0.0, %v8270
      %v8272 = vpop.f32.mrf.mxu0
      %8273 = vmatprep.mubr.f32.mxu0 0.0
      %8274 = vmatmul.mubr.f32.gmra.mxu0 %v7010
      %v8275 = vpop.f32.mrf.mxu0
      %v8276 = vadd.f32 0.0, %v8275
      %v8277 = vpop.f32.mrf.mxu0
      %8278 = vmatprep.mubr.f32.mxu0 0.0
      %8279 = vmatmul.mubr.f32.gmra.mxu0 %v7011
      %v8280 = vpop.f32.mrf.mxu0
      %v8281 = vadd.f32 0.0, %v8280
      %v8282 = vpop.f32.mrf.mxu0
      %8283 = vmatprep.mubr.f32.mxu0 0.0
      %8284 = vmatmul.mubr.f32.gmra.mxu0 %v7012
      %v8285 = vpop.f32.mrf.mxu0
      %v8286 = vadd.f32 0.0, %v8285
      %v8287 = vpop.f32.mrf.mxu0
      %8288 = vmatprep.mubr.f32.mxu0 0.0
      %8289 = vmatmul.mubr.f32.gmra.mxu0 %v7013
      %v8290 = vpop.f32.mrf.mxu0
      %v8291 = vadd.f32 0.0, %v8290
      %v8292 = vpop.f32.mrf.mxu0
      %8293 = vmatprep.mubr.f32.mxu0 0.0
      %8294 = vmatmul.mubr.f32.gmra.mxu0 %v7014
      %v8295 = vpop.f32.mrf.mxu0
      %v8296 = vadd.f32 0.0, %v8295
      %v8297 = vpop.f32.mrf.mxu0
      %8298 = vmatprep.mubr.f32.mxu0 0.0
      %8299 = vmatmul.mubr.f32.gmra.mxu0 %v7015
      %v8300 = vpop.f32.mrf.mxu0
      %v8301 = vadd.f32 0.0, %v8300
      %v8302 = vpop.f32.mrf.mxu0
      %8303 = vmatprep.mubr.f32.mxu0 0.0
      %8304 = vmatmul.mubr.f32.gmra.mxu0 %v7016
      %v8305 = vpop.f32.mrf.mxu0
      %v8306 = vadd.f32 0.0, %v8305
      %v8307 = vpop.f32.mrf.mxu0
      %8308 = vmatprep.mubr.f32.mxu0 0.0
      %8309 = vmatmul.mubr.f32.gmra.mxu0 %v7017
      %v8310 = vpop.f32.mrf.mxu0
      %v8311 = vadd.f32 0.0, %v8310
      %v8312 = vpop.f32.mrf.mxu0
      %8313 = vmatprep.mubr.f32.mxu0 0.0
      %8314 = vmatmul.mubr.f32.gmra.mxu0 %v7018
      %v8315 = vpop.f32.mrf.mxu0
      %v8316 = vadd.f32 0.0, %v8315
      %v8317 = vpop.f32.mrf.mxu0
      %8318 = vmatprep.mubr.f32.mxu0 0.0
      %8319 = vmatmul.mubr.f32.gmra.mxu0 %v7019
      %v8320 = vpop.f32.mrf.mxu0
      %v8321 = vadd.f32 0.0, %v8320
      %v8322 = vpop.f32.mrf.mxu0
      %8323 = vmatprep.mubr.f32.mxu0 0.0
      %8324 = vmatmul.mubr.f32.gmra.mxu0 %v7020
      %v8325 = vpop.f32.mrf.mxu0
      %v8326 = vadd.f32 0.0, %v8325
      %v8327 = vpop.f32.mrf.mxu0
      %8328 = vdwg.mxu0
      %s8329 = scalar_lea.vmem %s13, 384
      %v8330 = vld [vmem:[%s8329] sm:$0xff]
      %v8331 = vld [vmem:[%s8329 + $0x8] sm:$0xff]
      %v8332 = vld [vmem:[%s8329 + $0x10] sm:$0xff]
      %v8333 = vld [vmem:[%s8329 + $0x18] sm:$0xff]
      %v8334 = vld [vmem:[%s8329 + $0x20] sm:$0xff]
      %v8335 = vld [vmem:[%s8329 + $0x28] sm:$0xff]
      %v8336 = vld [vmem:[%s8329 + $0x30] sm:$0xff]
      %v8337 = vld [vmem:[%s8329 + $0x38] sm:$0xff]
      %v8338 = vld [vmem:[%s8329 + $0x40] sm:$0xff]
      %v8339 = vld [vmem:[%s8329 + $0x48] sm:$0xff]
      %v8340 = vld [vmem:[%s8329 + $0x50] sm:$0xff]
      %v8341 = vld [vmem:[%s8329 + $0x58] sm:$0xff]
      %v8342 = vld [vmem:[%s8329 + $0x60] sm:$0xff]
      %v8343 = vld [vmem:[%s8329 + $0x68] sm:$0xff]
      %v8344 = vld [vmem:[%s8329 + $0x70] sm:$0xff]
      %v8345 = vld [vmem:[%s8329 + $0x78] sm:$0xff]
      %8346 = vmatprep.subr.mxu0 0.0
      %8347 = vmatpush1.msra.mxu0 %v8326
      %8348 = vmatprep.subr.mxu0 0.0
      %8349 = vmatpush1.msra.mxu0 %v8321
      %8350 = vmatprep.subr.mxu0 0.0
      %8351 = vmatpush1.msra.mxu0 %v8316
      %8352 = vmatprep.subr.mxu0 0.0
      %8353 = vmatpush1.msra.mxu0 %v8311
      %8354 = vmatprep.subr.mxu0 0.0
      %8355 = vmatpush1.msra.mxu0 %v8306
      %8356 = vmatprep.subr.mxu0 0.0
      %8357 = vmatpush1.msra.mxu0 %v8301
      %8358 = vmatprep.subr.mxu0 0.0
      %8359 = vmatpush1.msra.mxu0 %v8296
      %8360 = vmatprep.subr.mxu0 0.0
      %8361 = vmatpush1.msra.mxu0 %v8291
      %8362 = vmatprep.subr.mxu0 0.0
      %8363 = vmatpush1.msra.mxu0 %v8286
      %8364 = vmatprep.subr.mxu0 0.0
      %8365 = vmatpush1.msra.mxu0 %v8281
      %8366 = vmatprep.subr.mxu0 0.0
      %8367 = vmatpush1.msra.mxu0 %v8276
      %8368 = vmatprep.subr.mxu0 0.0
      %8369 = vmatpush1.msra.mxu0 %v8271
      %8370 = vmatprep.subr.mxu0 0.0
      %8371 = vmatpush1.msra.mxu0 %v8266
      %8372 = vmatprep.subr.mxu0 0.0
      %8373 = vmatpush1.msra.mxu0 %v8261
      %8374 = vmatprep.subr.mxu0 0.0
      %8375 = vmatpush1.msra.mxu0 %v8256
      %8376 = vmatprep.subr.mxu0 0.0
      %8377 = vmatpush1.msra.mxu0 %v8251
      %8378 = vmatprep.subr.mxu0 0.0
      %8379 = vmatpush2.msra.mxu0 0.0
      %8380 = vmatprep.subr.mxu0 0.0
      %8381 = vmatpush2.msra.mxu0 0.0
      %8382 = vmatprep.subr.mxu0 0.0
      %8383 = vmatpush2.msra.mxu0 0.0
      %8384 = vmatprep.subr.mxu0 0.0
      %8385 = vmatpush2.msra.mxu0 0.0
      %8386 = vmatprep.subr.mxu0 0.0
      %8387 = vmatpush2.msra.mxu0 0.0
      %8388 = vmatprep.subr.mxu0 0.0
      %8389 = vmatpush2.msra.mxu0 0.0
      %8390 = vmatprep.subr.mxu0 0.0
      %8391 = vmatpush2.msra.mxu0 0.0
      %8392 = vmatprep.subr.mxu0 0.0
      %8393 = vmatpush2.msra.mxu0 0.0
      %8394 = vmatprep.subr.mxu0 0.0
      %8395 = vmatpush2.msra.mxu0 0.0
      %8396 = vmatprep.subr.mxu0 0.0
      %8397 = vmatpush2.msra.mxu0 0.0
      %8398 = vmatprep.subr.mxu0 0.0
      %8399 = vmatpush2.msra.mxu0 0.0
      %8400 = vmatprep.subr.mxu0 0.0
      %8401 = vmatpush2.msra.mxu0 0.0
      %8402 = vmatprep.subr.mxu0 0.0
      %8403 = vmatpush2.msra.mxu0 0.0
      %8404 = vmatprep.subr.mxu0 0.0
      %8405 = vmatpush2.msra.mxu0 0.0
      %8406 = vmatprep.subr.mxu0 0.0
      %8407 = vmatpush2.msra.mxu0 0.0
      %8408 = vmatprep.subr.mxu0 0.0
      %8409 = vmatpush2.msra.mxu0 0.0
      %8410 = vmatprep.mubr.f32.mxu0 0.0
      %8411 = vmatmul.mubr.f32.gmra.mxu0 %v8330
      %v8412 = vpop.f32.mrf.mxu0
      %v8413 = vadd.f32 0.0, %v8412
      %v8414 = vpop.f32.mrf.mxu0
      %8415 = vmatprep.mubr.f32.mxu0 0.0
      %8416 = vmatmul.mubr.f32.gmra.mxu0 %v8331
      %v8417 = vpop.f32.mrf.mxu0
      %v8418 = vadd.f32 0.0, %v8417
      %v8419 = vpop.f32.mrf.mxu0
      %8420 = vmatprep.mubr.f32.mxu0 0.0
      %8421 = vmatmul.mubr.f32.gmra.mxu0 %v8332
      %v8422 = vpop.f32.mrf.mxu0
      %v8423 = vadd.f32 0.0, %v8422
      %v8424 = vpop.f32.mrf.mxu0
      %8425 = vmatprep.mubr.f32.mxu0 0.0
      %8426 = vmatmul.mubr.f32.gmra.mxu0 %v8333
      %v8427 = vpop.f32.mrf.mxu0
      %v8428 = vadd.f32 0.0, %v8427
      %v8429 = vpop.f32.mrf.mxu0
      %8430 = vmatprep.mubr.f32.mxu0 0.0
      %8431 = vmatmul.mubr.f32.gmra.mxu0 %v8334
      %v8432 = vpop.f32.mrf.mxu0
      %v8433 = vadd.f32 0.0, %v8432
      %v8434 = vpop.f32.mrf.mxu0
      %8435 = vmatprep.mubr.f32.mxu0 0.0
      %8436 = vmatmul.mubr.f32.gmra.mxu0 %v8335
      %v8437 = vpop.f32.mrf.mxu0
      %v8438 = vadd.f32 0.0, %v8437
      %v8439 = vpop.f32.mrf.mxu0
      %8440 = vmatprep.mubr.f32.mxu0 0.0
      %8441 = vmatmul.mubr.f32.gmra.mxu0 %v8336
      %v8442 = vpop.f32.mrf.mxu0
      %v8443 = vadd.f32 0.0, %v8442
      %v8444 = vpop.f32.mrf.mxu0
      %8445 = vmatprep.mubr.f32.mxu0 0.0
      %8446 = vmatmul.mubr.f32.gmra.mxu0 %v8337
      %v8447 = vpop.f32.mrf.mxu0
      %v8448 = vadd.f32 0.0, %v8447
      %v8449 = vpop.f32.mrf.mxu0
      %8450 = vmatprep.mubr.f32.mxu0 0.0
      %8451 = vmatmul.mubr.f32.gmra.mxu0 %v8338
      %v8452 = vpop.f32.mrf.mxu0
      %v8453 = vadd.f32 0.0, %v8452
      %v8454 = vpop.f32.mrf.mxu0
      %8455 = vmatprep.mubr.f32.mxu0 0.0
      %8456 = vmatmul.mubr.f32.gmra.mxu0 %v8339
      %v8457 = vpop.f32.mrf.mxu0
      %v8458 = vadd.f32 0.0, %v8457
      %v8459 = vpop.f32.mrf.mxu0
      %8460 = vmatprep.mubr.f32.mxu0 0.0
      %8461 = vmatmul.mubr.f32.gmra.mxu0 %v8340
      %v8462 = vpop.f32.mrf.mxu0
      %v8463 = vadd.f32 0.0, %v8462
      %v8464 = vpop.f32.mrf.mxu0
      %8465 = vmatprep.mubr.f32.mxu0 0.0
      %8466 = vmatmul.mubr.f32.gmra.mxu0 %v8341
      %v8467 = vpop.f32.mrf.mxu0
      %v8468 = vadd.f32 0.0, %v8467
      %v8469 = vpop.f32.mrf.mxu0
      %8470 = vmatprep.mubr.f32.mxu0 0.0
      %8471 = vmatmul.mubr.f32.gmra.mxu0 %v8342
      %v8472 = vpop.f32.mrf.mxu0
      %v8473 = vadd.f32 0.0, %v8472
      %v8474 = vpop.f32.mrf.mxu0
      %8475 = vmatprep.mubr.f32.mxu0 0.0
      %8476 = vmatmul.mubr.f32.gmra.mxu0 %v8343
      %v8477 = vpop.f32.mrf.mxu0
      %v8478 = vadd.f32 0.0, %v8477
      %v8479 = vpop.f32.mrf.mxu0
      %8480 = vmatprep.mubr.f32.mxu0 0.0
      %8481 = vmatmul.mubr.f32.gmra.mxu0 %v8344
      %v8482 = vpop.f32.mrf.mxu0
      %v8483 = vadd.f32 0.0, %v8482
      %v8484 = vpop.f32.mrf.mxu0
      %8485 = vmatprep.mubr.f32.mxu0 0.0
      %8486 = vmatmul.mubr.f32.gmra.mxu0 %v8345
      %v8487 = vpop.f32.mrf.mxu0
      %v8488 = vadd.f32 0.0, %v8487
      %v8489 = vpop.f32.mrf.mxu0
      %8490 = vdwg.mxu0
      %v8491 = vadd.f32 %v8151, %v8413
      %v8492 = vadd.f32 %v8152, %v8418
      %v8493 = vadd.f32 %v8153, %v8423
      %v8494 = vadd.f32 %v8154, %v8428
      %v8495 = vadd.f32 %v8155, %v8433
      %v8496 = vadd.f32 %v8156, %v8438
      %v8497 = vadd.f32 %v8157, %v8443
      %v8498 = vadd.f32 %v8158, %v8448
      %v8499 = vadd.f32 %v8159, %v8453
      %v8500 = vadd.f32 %v8160, %v8458
      %v8501 = vadd.f32 %v8161, %v8463
      %v8502 = vadd.f32 %v8162, %v8468
      %v8503 = vadd.f32 %v8163, %v8473
      %v8504 = vadd.f32 %v8164, %v8478
      %v8505 = vadd.f32 %v8165, %v8483
      %v8506 = vadd.f32 %v8166, %v8488
      %s8507 = scalar_lea.vmem %s12, 512
      %v8508 = vld [vmem:[%s8507] sm:$0xff]
      %v8509 = vld [vmem:[%s8507 + $0x8] sm:$0xff]
      %v8510 = vld [vmem:[%s8507 + $0x10] sm:$0xff]
      %v8511 = vld [vmem:[%s8507 + $0x18] sm:$0xff]
      %v8512 = vld [vmem:[%s8507 + $0x20] sm:$0xff]
      %v8513 = vld [vmem:[%s8507 + $0x28] sm:$0xff]
      %v8514 = vld [vmem:[%s8507 + $0x30] sm:$0xff]
      %v8515 = vld [vmem:[%s8507 + $0x38] sm:$0xff]
      %v8516 = vld [vmem:[%s8507 + $0x40] sm:$0xff]
      %v8517 = vld [vmem:[%s8507 + $0x48] sm:$0xff]
      %v8518 = vld [vmem:[%s8507 + $0x50] sm:$0xff]
      %v8519 = vld [vmem:[%s8507 + $0x58] sm:$0xff]
      %v8520 = vld [vmem:[%s8507 + $0x60] sm:$0xff]
      %v8521 = vld [vmem:[%s8507 + $0x68] sm:$0xff]
      %v8522 = vld [vmem:[%s8507 + $0x70] sm:$0xff]
      %v8523 = vld [vmem:[%s8507 + $0x78] sm:$0xff]
      %8524 = vmatprep.subr.mxu0 0.0
      %8525 = vmatpush1.msra.mxu0 %v8523
      %8526 = vmatprep.subr.mxu0 0.0
      %8527 = vmatpush1.msra.mxu0 %v8522
      %8528 = vmatprep.subr.mxu0 0.0
      %8529 = vmatpush1.msra.mxu0 %v8521
      %8530 = vmatprep.subr.mxu0 0.0
      %8531 = vmatpush1.msra.mxu0 %v8520
      %8532 = vmatprep.subr.mxu0 0.0
      %8533 = vmatpush1.msra.mxu0 %v8519
      %8534 = vmatprep.subr.mxu0 0.0
      %8535 = vmatpush1.msra.mxu0 %v8518
      %8536 = vmatprep.subr.mxu0 0.0
      %8537 = vmatpush1.msra.mxu0 %v8517
      %8538 = vmatprep.subr.mxu0 0.0
      %8539 = vmatpush1.msra.mxu0 %v8516
      %8540 = vmatprep.subr.mxu0 0.0
      %8541 = vmatpush1.msra.mxu0 %v8515
      %8542 = vmatprep.subr.mxu0 0.0
      %8543 = vmatpush1.msra.mxu0 %v8514
      %8544 = vmatprep.subr.mxu0 0.0
      %8545 = vmatpush1.msra.mxu0 %v8513
      %8546 = vmatprep.subr.mxu0 0.0
      %8547 = vmatpush1.msra.mxu0 %v8512
      %8548 = vmatprep.subr.mxu0 0.0
      %8549 = vmatpush1.msra.mxu0 %v8511
      %8550 = vmatprep.subr.mxu0 0.0
      %8551 = vmatpush1.msra.mxu0 %v8510
      %8552 = vmatprep.subr.mxu0 0.0
      %8553 = vmatpush1.msra.mxu0 %v8509
      %8554 = vmatprep.subr.mxu0 0.0
      %8555 = vmatpush1.msra.mxu0 %v8508
      %8556 = vmatprep.subr.mxu0 0.0
      %8557 = vmatpush2.msra.mxu0 0.0
      %8558 = vmatprep.subr.mxu0 0.0
      %8559 = vmatpush2.msra.mxu0 0.0
      %8560 = vmatprep.subr.mxu0 0.0
      %8561 = vmatpush2.msra.mxu0 0.0
      %8562 = vmatprep.subr.mxu0 0.0
      %8563 = vmatpush2.msra.mxu0 0.0
      %8564 = vmatprep.subr.mxu0 0.0
      %8565 = vmatpush2.msra.mxu0 0.0
      %8566 = vmatprep.subr.mxu0 0.0
      %8567 = vmatpush2.msra.mxu0 0.0
      %8568 = vmatprep.subr.mxu0 0.0
      %8569 = vmatpush2.msra.mxu0 0.0
      %8570 = vmatprep.subr.mxu0 0.0
      %8571 = vmatpush2.msra.mxu0 0.0
      %8572 = vmatprep.subr.mxu0 0.0
      %8573 = vmatpush2.msra.mxu0 0.0
      %8574 = vmatprep.subr.mxu0 0.0
      %8575 = vmatpush2.msra.mxu0 0.0
      %8576 = vmatprep.subr.mxu0 0.0
      %8577 = vmatpush2.msra.mxu0 0.0
      %8578 = vmatprep.subr.mxu0 0.0
      %8579 = vmatpush2.msra.mxu0 0.0
      %8580 = vmatprep.subr.mxu0 0.0
      %8581 = vmatpush2.msra.mxu0 0.0
      %8582 = vmatprep.subr.mxu0 0.0
      %8583 = vmatpush2.msra.mxu0 0.0
      %8584 = vmatprep.subr.mxu0 0.0
      %8585 = vmatpush2.msra.mxu0 0.0
      %8586 = vmatprep.subr.mxu0 0.0
      %8587 = vmatpush2.msra.mxu0 0.0
      %8588 = vmatprep.mubr.f32.mxu0 0.0
      %8589 = vmatmul.mubr.f32.gmra.mxu0 %v7005
      %v8590 = vpop.f32.mrf.mxu0
      %v8591 = vadd.f32 0.0, %v8590
      %v8592 = vpop.f32.mrf.mxu0
      %8593 = vmatprep.mubr.f32.mxu0 0.0
      %8594 = vmatmul.mubr.f32.gmra.mxu0 %v7006
      %v8595 = vpop.f32.mrf.mxu0
      %v8596 = vadd.f32 0.0, %v8595
      %v8597 = vpop.f32.mrf.mxu0
      %8598 = vmatprep.mubr.f32.mxu0 0.0
      %8599 = vmatmul.mubr.f32.gmra.mxu0 %v7007
      %v8600 = vpop.f32.mrf.mxu0
      %v8601 = vadd.f32 0.0, %v8600
      %v8602 = vpop.f32.mrf.mxu0
      %8603 = vmatprep.mubr.f32.mxu0 0.0
      %8604 = vmatmul.mubr.f32.gmra.mxu0 %v7008
      %v8605 = vpop.f32.mrf.mxu0
      %v8606 = vadd.f32 0.0, %v8605
      %v8607 = vpop.f32.mrf.mxu0
      %8608 = vmatprep.mubr.f32.mxu0 0.0
      %8609 = vmatmul.mubr.f32.gmra.mxu0 %v7009
      %v8610 = vpop.f32.mrf.mxu0
      %v8611 = vadd.f32 0.0, %v8610
      %v8612 = vpop.f32.mrf.mxu0
      %8613 = vmatprep.mubr.f32.mxu0 0.0
      %8614 = vmatmul.mubr.f32.gmra.mxu0 %v7010
      %v8615 = vpop.f32.mrf.mxu0
      %v8616 = vadd.f32 0.0, %v8615
      %v8617 = vpop.f32.mrf.mxu0
      %8618 = vmatprep.mubr.f32.mxu0 0.0
      %8619 = vmatmul.mubr.f32.gmra.mxu0 %v7011
      %v8620 = vpop.f32.mrf.mxu0
      %v8621 = vadd.f32 0.0, %v8620
      %v8622 = vpop.f32.mrf.mxu0
      %8623 = vmatprep.mubr.f32.mxu0 0.0
      %8624 = vmatmul.mubr.f32.gmra.mxu0 %v7012
      %v8625 = vpop.f32.mrf.mxu0
      %v8626 = vadd.f32 0.0, %v8625
      %v8627 = vpop.f32.mrf.mxu0
      %8628 = vmatprep.mubr.f32.mxu0 0.0
      %8629 = vmatmul.mubr.f32.gmra.mxu0 %v7013
      %v8630 = vpop.f32.mrf.mxu0
      %v8631 = vadd.f32 0.0, %v8630
      %v8632 = vpop.f32.mrf.mxu0
      %8633 = vmatprep.mubr.f32.mxu0 0.0
      %8634 = vmatmul.mubr.f32.gmra.mxu0 %v7014
      %v8635 = vpop.f32.mrf.mxu0
      %v8636 = vadd.f32 0.0, %v8635
      %v8637 = vpop.f32.mrf.mxu0
      %8638 = vmatprep.mubr.f32.mxu0 0.0
      %8639 = vmatmul.mubr.f32.gmra.mxu0 %v7015
      %v8640 = vpop.f32.mrf.mxu0
      %v8641 = vadd.f32 0.0, %v8640
      %v8642 = vpop.f32.mrf.mxu0
      %8643 = vmatprep.mubr.f32.mxu0 0.0
      %8644 = vmatmul.mubr.f32.gmra.mxu0 %v7016
      %v8645 = vpop.f32.mrf.mxu0
      %v8646 = vadd.f32 0.0, %v8645
      %v8647 = vpop.f32.mrf.mxu0
      %8648 = vmatprep.mubr.f32.mxu0 0.0
      %8649 = vmatmul.mubr.f32.gmra.mxu0 %v7017
      %v8650 = vpop.f32.mrf.mxu0
      %v8651 = vadd.f32 0.0, %v8650
      %v8652 = vpop.f32.mrf.mxu0
      %8653 = vmatprep.mubr.f32.mxu0 0.0
      %8654 = vmatmul.mubr.f32.gmra.mxu0 %v7018
      %v8655 = vpop.f32.mrf.mxu0
      %v8656 = vadd.f32 0.0, %v8655
      %v8657 = vpop.f32.mrf.mxu0
      %8658 = vmatprep.mubr.f32.mxu0 0.0
      %8659 = vmatmul.mubr.f32.gmra.mxu0 %v7019
      %v8660 = vpop.f32.mrf.mxu0
      %v8661 = vadd.f32 0.0, %v8660
      %v8662 = vpop.f32.mrf.mxu0
      %8663 = vmatprep.mubr.f32.mxu0 0.0
      %8664 = vmatmul.mubr.f32.gmra.mxu0 %v7020
      %v8665 = vpop.f32.mrf.mxu0
      %v8666 = vadd.f32 0.0, %v8665
      %v8667 = vpop.f32.mrf.mxu0
      %8668 = vdwg.mxu0
      %s8669 = scalar_lea.vmem %s13, 512
      %v8670 = vld [vmem:[%s8669] sm:$0xff]
      %v8671 = vld [vmem:[%s8669 + $0x8] sm:$0xff]
      %v8672 = vld [vmem:[%s8669 + $0x10] sm:$0xff]
      %v8673 = vld [vmem:[%s8669 + $0x18] sm:$0xff]
      %v8674 = vld [vmem:[%s8669 + $0x20] sm:$0xff]
      %v8675 = vld [vmem:[%s8669 + $0x28] sm:$0xff]
      %v8676 = vld [vmem:[%s8669 + $0x30] sm:$0xff]
      %v8677 = vld [vmem:[%s8669 + $0x38] sm:$0xff]
      %v8678 = vld [vmem:[%s8669 + $0x40] sm:$0xff]
      %v8679 = vld [vmem:[%s8669 + $0x48] sm:$0xff]
      %v8680 = vld [vmem:[%s8669 + $0x50] sm:$0xff]
      %v8681 = vld [vmem:[%s8669 + $0x58] sm:$0xff]
      %v8682 = vld [vmem:[%s8669 + $0x60] sm:$0xff]
      %v8683 = vld [vmem:[%s8669 + $0x68] sm:$0xff]
      %v8684 = vld [vmem:[%s8669 + $0x70] sm:$0xff]
      %v8685 = vld [vmem:[%s8669 + $0x78] sm:$0xff]
      %8686 = vmatprep.subr.mxu0 0.0
      %8687 = vmatpush1.msra.mxu0 %v8666
      %8688 = vmatprep.subr.mxu0 0.0
      %8689 = vmatpush1.msra.mxu0 %v8661
      %8690 = vmatprep.subr.mxu0 0.0
      %8691 = vmatpush1.msra.mxu0 %v8656
      %8692 = vmatprep.subr.mxu0 0.0
      %8693 = vmatpush1.msra.mxu0 %v8651
      %8694 = vmatprep.subr.mxu0 0.0
      %8695 = vmatpush1.msra.mxu0 %v8646
      %8696 = vmatprep.subr.mxu0 0.0
      %8697 = vmatpush1.msra.mxu0 %v8641
      %8698 = vmatprep.subr.mxu0 0.0
      %8699 = vmatpush1.msra.mxu0 %v8636
      %8700 = vmatprep.subr.mxu0 0.0
      %8701 = vmatpush1.msra.mxu0 %v8631
      %8702 = vmatprep.subr.mxu0 0.0
      %8703 = vmatpush1.msra.mxu0 %v8626
      %8704 = vmatprep.subr.mxu0 0.0
      %8705 = vmatpush1.msra.mxu0 %v8621
      %8706 = vmatprep.subr.mxu0 0.0
      %8707 = vmatpush1.msra.mxu0 %v8616
      %8708 = vmatprep.subr.mxu0 0.0
      %8709 = vmatpush1.msra.mxu0 %v8611
      %8710 = vmatprep.subr.mxu0 0.0
      %8711 = vmatpush1.msra.mxu0 %v8606
      %8712 = vmatprep.subr.mxu0 0.0
      %8713 = vmatpush1.msra.mxu0 %v8601
      %8714 = vmatprep.subr.mxu0 0.0
      %8715 = vmatpush1.msra.mxu0 %v8596
      %8716 = vmatprep.subr.mxu0 0.0
      %8717 = vmatpush1.msra.mxu0 %v8591
      %8718 = vmatprep.subr.mxu0 0.0
      %8719 = vmatpush2.msra.mxu0 0.0
      %8720 = vmatprep.subr.mxu0 0.0
      %8721 = vmatpush2.msra.mxu0 0.0
      %8722 = vmatprep.subr.mxu0 0.0
      %8723 = vmatpush2.msra.mxu0 0.0
      %8724 = vmatprep.subr.mxu0 0.0
      %8725 = vmatpush2.msra.mxu0 0.0
      %8726 = vmatprep.subr.mxu0 0.0
      %8727 = vmatpush2.msra.mxu0 0.0
      %8728 = vmatprep.subr.mxu0 0.0
      %8729 = vmatpush2.msra.mxu0 0.0
      %8730 = vmatprep.subr.mxu0 0.0
      %8731 = vmatpush2.msra.mxu0 0.0
      %8732 = vmatprep.subr.mxu0 0.0
      %8733 = vmatpush2.msra.mxu0 0.0
      %8734 = vmatprep.subr.mxu0 0.0
      %8735 = vmatpush2.msra.mxu0 0.0
      %8736 = vmatprep.subr.mxu0 0.0
      %8737 = vmatpush2.msra.mxu0 0.0
      %8738 = vmatprep.subr.mxu0 0.0
      %8739 = vmatpush2.msra.mxu0 0.0
      %8740 = vmatprep.subr.mxu0 0.0
      %8741 = vmatpush2.msra.mxu0 0.0
      %8742 = vmatprep.subr.mxu0 0.0
      %8743 = vmatpush2.msra.mxu0 0.0
      %8744 = vmatprep.subr.mxu0 0.0
      %8745 = vmatpush2.msra.mxu0 0.0
      %8746 = vmatprep.subr.mxu0 0.0
      %8747 = vmatpush2.msra.mxu0 0.0
      %8748 = vmatprep.subr.mxu0 0.0
      %8749 = vmatpush2.msra.mxu0 0.0
      %8750 = vmatprep.mubr.f32.mxu0 0.0
      %8751 = vmatmul.mubr.f32.gmra.mxu0 %v8670
      %v8752 = vpop.f32.mrf.mxu0
      %v8753 = vadd.f32 0.0, %v8752
      %v8754 = vpop.f32.mrf.mxu0
      %8755 = vmatprep.mubr.f32.mxu0 0.0
      %8756 = vmatmul.mubr.f32.gmra.mxu0 %v8671
      %v8757 = vpop.f32.mrf.mxu0
      %v8758 = vadd.f32 0.0, %v8757
      %v8759 = vpop.f32.mrf.mxu0
      %8760 = vmatprep.mubr.f32.mxu0 0.0
      %8761 = vmatmul.mubr.f32.gmra.mxu0 %v8672
      %v8762 = vpop.f32.mrf.mxu0
      %v8763 = vadd.f32 0.0, %v8762
      %v8764 = vpop.f32.mrf.mxu0
      %8765 = vmatprep.mubr.f32.mxu0 0.0
      %8766 = vmatmul.mubr.f32.gmra.mxu0 %v8673
      %v8767 = vpop.f32.mrf.mxu0
      %v8768 = vadd.f32 0.0, %v8767
      %v8769 = vpop.f32.mrf.mxu0
      %8770 = vmatprep.mubr.f32.mxu0 0.0
      %8771 = vmatmul.mubr.f32.gmra.mxu0 %v8674
      %v8772 = vpop.f32.mrf.mxu0
      %v8773 = vadd.f32 0.0, %v8772
      %v8774 = vpop.f32.mrf.mxu0
      %8775 = vmatprep.mubr.f32.mxu0 0.0
      %8776 = vmatmul.mubr.f32.gmra.mxu0 %v8675
      %v8777 = vpop.f32.mrf.mxu0
      %v8778 = vadd.f32 0.0, %v8777
      %v8779 = vpop.f32.mrf.mxu0
      %8780 = vmatprep.mubr.f32.mxu0 0.0
      %8781 = vmatmul.mubr.f32.gmra.mxu0 %v8676
      %v8782 = vpop.f32.mrf.mxu0
      %v8783 = vadd.f32 0.0, %v8782
      %v8784 = vpop.f32.mrf.mxu0
      %8785 = vmatprep.mubr.f32.mxu0 0.0
      %8786 = vmatmul.mubr.f32.gmra.mxu0 %v8677
      %v8787 = vpop.f32.mrf.mxu0
      %v8788 = vadd.f32 0.0, %v8787
      %v8789 = vpop.f32.mrf.mxu0
      %8790 = vmatprep.mubr.f32.mxu0 0.0
      %8791 = vmatmul.mubr.f32.gmra.mxu0 %v8678
      %v8792 = vpop.f32.mrf.mxu0
      %v8793 = vadd.f32 0.0, %v8792
      %v8794 = vpop.f32.mrf.mxu0
      %8795 = vmatprep.mubr.f32.mxu0 0.0
      %8796 = vmatmul.mubr.f32.gmra.mxu0 %v8679
      %v8797 = vpop.f32.mrf.mxu0
      %v8798 = vadd.f32 0.0, %v8797
      %v8799 = vpop.f32.mrf.mxu0
      %8800 = vmatprep.mubr.f32.mxu0 0.0
      %8801 = vmatmul.mubr.f32.gmra.mxu0 %v8680
      %v8802 = vpop.f32.mrf.mxu0
      %v8803 = vadd.f32 0.0, %v8802
      %v8804 = vpop.f32.mrf.mxu0
      %8805 = vmatprep.mubr.f32.mxu0 0.0
      %8806 = vmatmul.mubr.f32.gmra.mxu0 %v8681
      %v8807 = vpop.f32.mrf.mxu0
      %v8808 = vadd.f32 0.0, %v8807
      %v8809 = vpop.f32.mrf.mxu0
      %8810 = vmatprep.mubr.f32.mxu0 0.0
      %8811 = vmatmul.mubr.f32.gmra.mxu0 %v8682
      %v8812 = vpop.f32.mrf.mxu0
      %v8813 = vadd.f32 0.0, %v8812
      %v8814 = vpop.f32.mrf.mxu0
      %8815 = vmatprep.mubr.f32.mxu0 0.0
      %8816 = vmatmul.mubr.f32.gmra.mxu0 %v8683
      %v8817 = vpop.f32.mrf.mxu0
      %v8818 = vadd.f32 0.0, %v8817
      %v8819 = vpop.f32.mrf.mxu0
      %8820 = vmatprep.mubr.f32.mxu0 0.0
      %8821 = vmatmul.mubr.f32.gmra.mxu0 %v8684
      %v8822 = vpop.f32.mrf.mxu0
      %v8823 = vadd.f32 0.0, %v8822
      %v8824 = vpop.f32.mrf.mxu0
      %8825 = vmatprep.mubr.f32.mxu0 0.0
      %8826 = vmatmul.mubr.f32.gmra.mxu0 %v8685
      %v8827 = vpop.f32.mrf.mxu0
      %v8828 = vadd.f32 0.0, %v8827
      %v8829 = vpop.f32.mrf.mxu0
      %8830 = vdwg.mxu0
      %v8831 = vadd.f32 %v8491, %v8753
      %v8832 = vadd.f32 %v8492, %v8758
      %v8833 = vadd.f32 %v8493, %v8763
      %v8834 = vadd.f32 %v8494, %v8768
      %v8835 = vadd.f32 %v8495, %v8773
      %v8836 = vadd.f32 %v8496, %v8778
      %v8837 = vadd.f32 %v8497, %v8783
      %v8838 = vadd.f32 %v8498, %v8788
      %v8839 = vadd.f32 %v8499, %v8793
      %v8840 = vadd.f32 %v8500, %v8798
      %v8841 = vadd.f32 %v8501, %v8803
      %v8842 = vadd.f32 %v8502, %v8808
      %v8843 = vadd.f32 %v8503, %v8813
      %v8844 = vadd.f32 %v8504, %v8818
      %v8845 = vadd.f32 %v8505, %v8823
      %v8846 = vadd.f32 %v8506, %v8828
      %s8847 = scalar_lea.vmem %s12, 640
      %v8848 = vld [vmem:[%s8847] sm:$0xff]
      %v8849 = vld [vmem:[%s8847 + $0x8] sm:$0xff]
      %v8850 = vld [vmem:[%s8847 + $0x10] sm:$0xff]
      %v8851 = vld [vmem:[%s8847 + $0x18] sm:$0xff]
      %v8852 = vld [vmem:[%s8847 + $0x20] sm:$0xff]
      %v8853 = vld [vmem:[%s8847 + $0x28] sm:$0xff]
      %v8854 = vld [vmem:[%s8847 + $0x30] sm:$0xff]
      %v8855 = vld [vmem:[%s8847 + $0x38] sm:$0xff]
      %v8856 = vld [vmem:[%s8847 + $0x40] sm:$0xff]
      %v8857 = vld [vmem:[%s8847 + $0x48] sm:$0xff]
      %v8858 = vld [vmem:[%s8847 + $0x50] sm:$0xff]
      %v8859 = vld [vmem:[%s8847 + $0x58] sm:$0xff]
      %v8860 = vld [vmem:[%s8847 + $0x60] sm:$0xff]
      %v8861 = vld [vmem:[%s8847 + $0x68] sm:$0xff]
      %v8862 = vld [vmem:[%s8847 + $0x70] sm:$0xff]
      %v8863 = vld [vmem:[%s8847 + $0x78] sm:$0xff]
      %8864 = vmatprep.subr.mxu0 0.0
      %8865 = vmatpush1.msra.mxu0 %v8863
      %8866 = vmatprep.subr.mxu0 0.0
      %8867 = vmatpush1.msra.mxu0 %v8862
      %8868 = vmatprep.subr.mxu0 0.0
      %8869 = vmatpush1.msra.mxu0 %v8861
      %8870 = vmatprep.subr.mxu0 0.0
      %8871 = vmatpush1.msra.mxu0 %v8860
      %8872 = vmatprep.subr.mxu0 0.0
      %8873 = vmatpush1.msra.mxu0 %v8859
      %8874 = vmatprep.subr.mxu0 0.0
      %8875 = vmatpush1.msra.mxu0 %v8858
      %8876 = vmatprep.subr.mxu0 0.0
      %8877 = vmatpush1.msra.mxu0 %v8857
      %8878 = vmatprep.subr.mxu0 0.0
      %8879 = vmatpush1.msra.mxu0 %v8856
      %8880 = vmatprep.subr.mxu0 0.0
      %8881 = vmatpush1.msra.mxu0 %v8855
      %8882 = vmatprep.subr.mxu0 0.0
      %8883 = vmatpush1.msra.mxu0 %v8854
      %8884 = vmatprep.subr.mxu0 0.0
      %8885 = vmatpush1.msra.mxu0 %v8853
      %8886 = vmatprep.subr.mxu0 0.0
      %8887 = vmatpush1.msra.mxu0 %v8852
      %8888 = vmatprep.subr.mxu0 0.0
      %8889 = vmatpush1.msra.mxu0 %v8851
      %8890 = vmatprep.subr.mxu0 0.0
      %8891 = vmatpush1.msra.mxu0 %v8850
      %8892 = vmatprep.subr.mxu0 0.0
      %8893 = vmatpush1.msra.mxu0 %v8849
      %8894 = vmatprep.subr.mxu0 0.0
      %8895 = vmatpush1.msra.mxu0 %v8848
      %8896 = vmatprep.subr.mxu0 0.0
      %8897 = vmatpush2.msra.mxu0 0.0
      %8898 = vmatprep.subr.mxu0 0.0
      %8899 = vmatpush2.msra.mxu0 0.0
      %8900 = vmatprep.subr.mxu0 0.0
      %8901 = vmatpush2.msra.mxu0 0.0
      %8902 = vmatprep.subr.mxu0 0.0
      %8903 = vmatpush2.msra.mxu0 0.0
      %8904 = vmatprep.subr.mxu0 0.0
      %8905 = vmatpush2.msra.mxu0 0.0
      %8906 = vmatprep.subr.mxu0 0.0
      %8907 = vmatpush2.msra.mxu0 0.0
      %8908 = vmatprep.subr.mxu0 0.0
      %8909 = vmatpush2.msra.mxu0 0.0
      %8910 = vmatprep.subr.mxu0 0.0
      %8911 = vmatpush2.msra.mxu0 0.0
      %8912 = vmatprep.subr.mxu0 0.0
      %8913 = vmatpush2.msra.mxu0 0.0
      %8914 = vmatprep.subr.mxu0 0.0
      %8915 = vmatpush2.msra.mxu0 0.0
      %8916 = vmatprep.subr.mxu0 0.0
      %8917 = vmatpush2.msra.mxu0 0.0
      %8918 = vmatprep.subr.mxu0 0.0
      %8919 = vmatpush2.msra.mxu0 0.0
      %8920 = vmatprep.subr.mxu0 0.0
      %8921 = vmatpush2.msra.mxu0 0.0
      %8922 = vmatprep.subr.mxu0 0.0
      %8923 = vmatpush2.msra.mxu0 0.0
      %8924 = vmatprep.subr.mxu0 0.0
      %8925 = vmatpush2.msra.mxu0 0.0
      %8926 = vmatprep.subr.mxu0 0.0
      %8927 = vmatpush2.msra.mxu0 0.0
      %8928 = vmatprep.mubr.f32.mxu0 0.0
      %8929 = vmatmul.mubr.f32.gmra.mxu0 %v7005
      %v8930 = vpop.f32.mrf.mxu0
      %v8931 = vadd.f32 0.0, %v8930
      %v8932 = vpop.f32.mrf.mxu0
      %8933 = vmatprep.mubr.f32.mxu0 0.0
      %8934 = vmatmul.mubr.f32.gmra.mxu0 %v7006
      %v8935 = vpop.f32.mrf.mxu0
      %v8936 = vadd.f32 0.0, %v8935
      %v8937 = vpop.f32.mrf.mxu0
      %8938 = vmatprep.mubr.f32.mxu0 0.0
      %8939 = vmatmul.mubr.f32.gmra.mxu0 %v7007
      %v8940 = vpop.f32.mrf.mxu0
      %v8941 = vadd.f32 0.0, %v8940
      %v8942 = vpop.f32.mrf.mxu0
      %8943 = vmatprep.mubr.f32.mxu0 0.0
      %8944 = vmatmul.mubr.f32.gmra.mxu0 %v7008
      %v8945 = vpop.f32.mrf.mxu0
      %v8946 = vadd.f32 0.0, %v8945
      %v8947 = vpop.f32.mrf.mxu0
      %8948 = vmatprep.mubr.f32.mxu0 0.0
      %8949 = vmatmul.mubr.f32.gmra.mxu0 %v7009
      %v8950 = vpop.f32.mrf.mxu0
      %v8951 = vadd.f32 0.0, %v8950
      %v8952 = vpop.f32.mrf.mxu0
      %8953 = vmatprep.mubr.f32.mxu0 0.0
      %8954 = vmatmul.mubr.f32.gmra.mxu0 %v7010
      %v8955 = vpop.f32.mrf.mxu0
      %v8956 = vadd.f32 0.0, %v8955
      %v8957 = vpop.f32.mrf.mxu0
      %8958 = vmatprep.mubr.f32.mxu0 0.0
      %8959 = vmatmul.mubr.f32.gmra.mxu0 %v7011
      %v8960 = vpop.f32.mrf.mxu0
      %v8961 = vadd.f32 0.0, %v8960
      %v8962 = vpop.f32.mrf.mxu0
      %8963 = vmatprep.mubr.f32.mxu0 0.0
      %8964 = vmatmul.mubr.f32.gmra.mxu0 %v7012
      %v8965 = vpop.f32.mrf.mxu0
      %v8966 = vadd.f32 0.0, %v8965
      %v8967 = vpop.f32.mrf.mxu0
      %8968 = vmatprep.mubr.f32.mxu0 0.0
      %8969 = vmatmul.mubr.f32.gmra.mxu0 %v7013
      %v8970 = vpop.f32.mrf.mxu0
      %v8971 = vadd.f32 0.0, %v8970
      %v8972 = vpop.f32.mrf.mxu0
      %8973 = vmatprep.mubr.f32.mxu0 0.0
      %8974 = vmatmul.mubr.f32.gmra.mxu0 %v7014
      %v8975 = vpop.f32.mrf.mxu0
      %v8976 = vadd.f32 0.0, %v8975
      %v8977 = vpop.f32.mrf.mxu0
      %8978 = vmatprep.mubr.f32.mxu0 0.0
      %8979 = vmatmul.mubr.f32.gmra.mxu0 %v7015
      %v8980 = vpop.f32.mrf.mxu0
      %v8981 = vadd.f32 0.0, %v8980
      %v8982 = vpop.f32.mrf.mxu0
      %8983 = vmatprep.mubr.f32.mxu0 0.0
      %8984 = vmatmul.mubr.f32.gmra.mxu0 %v7016
      %v8985 = vpop.f32.mrf.mxu0
      %v8986 = vadd.f32 0.0, %v8985
      %v8987 = vpop.f32.mrf.mxu0
      %8988 = vmatprep.mubr.f32.mxu0 0.0
      %8989 = vmatmul.mubr.f32.gmra.mxu0 %v7017
      %v8990 = vpop.f32.mrf.mxu0
      %v8991 = vadd.f32 0.0, %v8990
      %v8992 = vpop.f32.mrf.mxu0
      %8993 = vmatprep.mubr.f32.mxu0 0.0
      %8994 = vmatmul.mubr.f32.gmra.mxu0 %v7018
      %v8995 = vpop.f32.mrf.mxu0
      %v8996 = vadd.f32 0.0, %v8995
      %v8997 = vpop.f32.mrf.mxu0
      %8998 = vmatprep.mubr.f32.mxu0 0.0
      %8999 = vmatmul.mubr.f32.gmra.mxu0 %v7019
      %v9000 = vpop.f32.mrf.mxu0
      %v9001 = vadd.f32 0.0, %v9000
      %v9002 = vpop.f32.mrf.mxu0
      %9003 = vmatprep.mubr.f32.mxu0 0.0
      %9004 = vmatmul.mubr.f32.gmra.mxu0 %v7020
      %v9005 = vpop.f32.mrf.mxu0
      %v9006 = vadd.f32 0.0, %v9005
      %v9007 = vpop.f32.mrf.mxu0
      %9008 = vdwg.mxu0
      %s9009 = scalar_lea.vmem %s13, 640
      %v9010 = vld [vmem:[%s9009] sm:$0xff]
      %v9011 = vld [vmem:[%s9009 + $0x8] sm:$0xff]
      %v9012 = vld [vmem:[%s9009 + $0x10] sm:$0xff]
      %v9013 = vld [vmem:[%s9009 + $0x18] sm:$0xff]
      %v9014 = vld [vmem:[%s9009 + $0x20] sm:$0xff]
      %v9015 = vld [vmem:[%s9009 + $0x28] sm:$0xff]
      %v9016 = vld [vmem:[%s9009 + $0x30] sm:$0xff]
      %v9017 = vld [vmem:[%s9009 + $0x38] sm:$0xff]
      %v9018 = vld [vmem:[%s9009 + $0x40] sm:$0xff]
      %v9019 = vld [vmem:[%s9009 + $0x48] sm:$0xff]
      %v9020 = vld [vmem:[%s9009 + $0x50] sm:$0xff]
      %v9021 = vld [vmem:[%s9009 + $0x58] sm:$0xff]
      %v9022 = vld [vmem:[%s9009 + $0x60] sm:$0xff]
      %v9023 = vld [vmem:[%s9009 + $0x68] sm:$0xff]
      %v9024 = vld [vmem:[%s9009 + $0x70] sm:$0xff]
      %v9025 = vld [vmem:[%s9009 + $0x78] sm:$0xff]
      %9026 = vmatprep.subr.mxu0 0.0
      %9027 = vmatpush1.msra.mxu0 %v9006
      %9028 = vmatprep.subr.mxu0 0.0
      %9029 = vmatpush1.msra.mxu0 %v9001
      %9030 = vmatprep.subr.mxu0 0.0
      %9031 = vmatpush1.msra.mxu0 %v8996
      %9032 = vmatprep.subr.mxu0 0.0
      %9033 = vmatpush1.msra.mxu0 %v8991
      %9034 = vmatprep.subr.mxu0 0.0
      %9035 = vmatpush1.msra.mxu0 %v8986
      %9036 = vmatprep.subr.mxu0 0.0
      %9037 = vmatpush1.msra.mxu0 %v8981
      %9038 = vmatprep.subr.mxu0 0.0
      %9039 = vmatpush1.msra.mxu0 %v8976
      %9040 = vmatprep.subr.mxu0 0.0
      %9041 = vmatpush1.msra.mxu0 %v8971
      %9042 = vmatprep.subr.mxu0 0.0
      %9043 = vmatpush1.msra.mxu0 %v8966
      %9044 = vmatprep.subr.mxu0 0.0
      %9045 = vmatpush1.msra.mxu0 %v8961
      %9046 = vmatprep.subr.mxu0 0.0
      %9047 = vmatpush1.msra.mxu0 %v8956
      %9048 = vmatprep.subr.mxu0 0.0
      %9049 = vmatpush1.msra.mxu0 %v8951
      %9050 = vmatprep.subr.mxu0 0.0
      %9051 = vmatpush1.msra.mxu0 %v8946
      %9052 = vmatprep.subr.mxu0 0.0
      %9053 = vmatpush1.msra.mxu0 %v8941
      %9054 = vmatprep.subr.mxu0 0.0
      %9055 = vmatpush1.msra.mxu0 %v8936
      %9056 = vmatprep.subr.mxu0 0.0
      %9057 = vmatpush1.msra.mxu0 %v8931
      %9058 = vmatprep.subr.mxu0 0.0
      %9059 = vmatpush2.msra.mxu0 0.0
      %9060 = vmatprep.subr.mxu0 0.0
      %9061 = vmatpush2.msra.mxu0 0.0
      %9062 = vmatprep.subr.mxu0 0.0
      %9063 = vmatpush2.msra.mxu0 0.0
      %9064 = vmatprep.subr.mxu0 0.0
      %9065 = vmatpush2.msra.mxu0 0.0
      %9066 = vmatprep.subr.mxu0 0.0
      %9067 = vmatpush2.msra.mxu0 0.0
      %9068 = vmatprep.subr.mxu0 0.0
      %9069 = vmatpush2.msra.mxu0 0.0
      %9070 = vmatprep.subr.mxu0 0.0
      %9071 = vmatpush2.msra.mxu0 0.0
      %9072 = vmatprep.subr.mxu0 0.0
      %9073 = vmatpush2.msra.mxu0 0.0
      %9074 = vmatprep.subr.mxu0 0.0
      %9075 = vmatpush2.msra.mxu0 0.0
      %9076 = vmatprep.subr.mxu0 0.0
      %9077 = vmatpush2.msra.mxu0 0.0
      %9078 = vmatprep.subr.mxu0 0.0
      %9079 = vmatpush2.msra.mxu0 0.0
      %9080 = vmatprep.subr.mxu0 0.0
      %9081 = vmatpush2.msra.mxu0 0.0
      %9082 = vmatprep.subr.mxu0 0.0
      %9083 = vmatpush2.msra.mxu0 0.0
      %9084 = vmatprep.subr.mxu0 0.0
      %9085 = vmatpush2.msra.mxu0 0.0
      %9086 = vmatprep.subr.mxu0 0.0
      %9087 = vmatpush2.msra.mxu0 0.0
      %9088 = vmatprep.subr.mxu0 0.0
      %9089 = vmatpush2.msra.mxu0 0.0
      %9090 = vmatprep.mubr.f32.mxu0 0.0
      %9091 = vmatmul.mubr.f32.gmra.mxu0 %v9010
      %v9092 = vpop.f32.mrf.mxu0
      %v9093 = vadd.f32 0.0, %v9092
      %v9094 = vpop.f32.mrf.mxu0
      %9095 = vmatprep.mubr.f32.mxu0 0.0
      %9096 = vmatmul.mubr.f32.gmra.mxu0 %v9011
      %v9097 = vpop.f32.mrf.mxu0
      %v9098 = vadd.f32 0.0, %v9097
      %v9099 = vpop.f32.mrf.mxu0
      %9100 = vmatprep.mubr.f32.mxu0 0.0
      %9101 = vmatmul.mubr.f32.gmra.mxu0 %v9012
      %v9102 = vpop.f32.mrf.mxu0
      %v9103 = vadd.f32 0.0, %v9102
      %v9104 = vpop.f32.mrf.mxu0
      %9105 = vmatprep.mubr.f32.mxu0 0.0
      %9106 = vmatmul.mubr.f32.gmra.mxu0 %v9013
      %v9107 = vpop.f32.mrf.mxu0
      %v9108 = vadd.f32 0.0, %v9107
      %v9109 = vpop.f32.mrf.mxu0
      %9110 = vmatprep.mubr.f32.mxu0 0.0
      %9111 = vmatmul.mubr.f32.gmra.mxu0 %v9014
      %v9112 = vpop.f32.mrf.mxu0
      %v9113 = vadd.f32 0.0, %v9112
      %v9114 = vpop.f32.mrf.mxu0
      %9115 = vmatprep.mubr.f32.mxu0 0.0
      %9116 = vmatmul.mubr.f32.gmra.mxu0 %v9015
      %v9117 = vpop.f32.mrf.mxu0
      %v9118 = vadd.f32 0.0, %v9117
      %v9119 = vpop.f32.mrf.mxu0
      %9120 = vmatprep.mubr.f32.mxu0 0.0
      %9121 = vmatmul.mubr.f32.gmra.mxu0 %v9016
      %v9122 = vpop.f32.mrf.mxu0
      %v9123 = vadd.f32 0.0, %v9122
      %v9124 = vpop.f32.mrf.mxu0
      %9125 = vmatprep.mubr.f32.mxu0 0.0
      %9126 = vmatmul.mubr.f32.gmra.mxu0 %v9017
      %v9127 = vpop.f32.mrf.mxu0
      %v9128 = vadd.f32 0.0, %v9127
      %v9129 = vpop.f32.mrf.mxu0
      %9130 = vmatprep.mubr.f32.mxu0 0.0
      %9131 = vmatmul.mubr.f32.gmra.mxu0 %v9018
      %v9132 = vpop.f32.mrf.mxu0
      %v9133 = vadd.f32 0.0, %v9132
      %v9134 = vpop.f32.mrf.mxu0
      %9135 = vmatprep.mubr.f32.mxu0 0.0
      %9136 = vmatmul.mubr.f32.gmra.mxu0 %v9019
      %v9137 = vpop.f32.mrf.mxu0
      %v9138 = vadd.f32 0.0, %v9137
      %v9139 = vpop.f32.mrf.mxu0
      %9140 = vmatprep.mubr.f32.mxu0 0.0
      %9141 = vmatmul.mubr.f32.gmra.mxu0 %v9020
      %v9142 = vpop.f32.mrf.mxu0
      %v9143 = vadd.f32 0.0, %v9142
      %v9144 = vpop.f32.mrf.mxu0
      %9145 = vmatprep.mubr.f32.mxu0 0.0
      %9146 = vmatmul.mubr.f32.gmra.mxu0 %v9021
      %v9147 = vpop.f32.mrf.mxu0
      %v9148 = vadd.f32 0.0, %v9147
      %v9149 = vpop.f32.mrf.mxu0
      %9150 = vmatprep.mubr.f32.mxu0 0.0
      %9151 = vmatmul.mubr.f32.gmra.mxu0 %v9022
      %v9152 = vpop.f32.mrf.mxu0
      %v9153 = vadd.f32 0.0, %v9152
      %v9154 = vpop.f32.mrf.mxu0
      %9155 = vmatprep.mubr.f32.mxu0 0.0
      %9156 = vmatmul.mubr.f32.gmra.mxu0 %v9023
      %v9157 = vpop.f32.mrf.mxu0
      %v9158 = vadd.f32 0.0, %v9157
      %v9159 = vpop.f32.mrf.mxu0
      %9160 = vmatprep.mubr.f32.mxu0 0.0
      %9161 = vmatmul.mubr.f32.gmra.mxu0 %v9024
      %v9162 = vpop.f32.mrf.mxu0
      %v9163 = vadd.f32 0.0, %v9162
      %v9164 = vpop.f32.mrf.mxu0
      %9165 = vmatprep.mubr.f32.mxu0 0.0
      %9166 = vmatmul.mubr.f32.gmra.mxu0 %v9025
      %v9167 = vpop.f32.mrf.mxu0
      %v9168 = vadd.f32 0.0, %v9167
      %v9169 = vpop.f32.mrf.mxu0
      %9170 = vdwg.mxu0
      %v9171 = vadd.f32 %v8831, %v9093
      %v9172 = vadd.f32 %v8832, %v9098
      %v9173 = vadd.f32 %v8833, %v9103
      %v9174 = vadd.f32 %v8834, %v9108
      %v9175 = vadd.f32 %v8835, %v9113
      %v9176 = vadd.f32 %v8836, %v9118
      %v9177 = vadd.f32 %v8837, %v9123
      %v9178 = vadd.f32 %v8838, %v9128
      %v9179 = vadd.f32 %v8839, %v9133
      %v9180 = vadd.f32 %v8840, %v9138
      %v9181 = vadd.f32 %v8841, %v9143
      %v9182 = vadd.f32 %v8842, %v9148
      %v9183 = vadd.f32 %v8843, %v9153
      %v9184 = vadd.f32 %v8844, %v9158
      %v9185 = vadd.f32 %v8845, %v9163
      %v9186 = vadd.f32 %v8846, %v9168
      %s9187 = scalar_lea.vmem %s12, 768
      %v9188 = vld [vmem:[%s9187] sm:$0xff]
      %v9189 = vld [vmem:[%s9187 + $0x8] sm:$0xff]
      %v9190 = vld [vmem:[%s9187 + $0x10] sm:$0xff]
      %v9191 = vld [vmem:[%s9187 + $0x18] sm:$0xff]
      %v9192 = vld [vmem:[%s9187 + $0x20] sm:$0xff]
      %v9193 = vld [vmem:[%s9187 + $0x28] sm:$0xff]
      %v9194 = vld [vmem:[%s9187 + $0x30] sm:$0xff]
      %v9195 = vld [vmem:[%s9187 + $0x38] sm:$0xff]
      %v9196 = vld [vmem:[%s9187 + $0x40] sm:$0xff]
      %v9197 = vld [vmem:[%s9187 + $0x48] sm:$0xff]
      %v9198 = vld [vmem:[%s9187 + $0x50] sm:$0xff]
      %v9199 = vld [vmem:[%s9187 + $0x58] sm:$0xff]
      %v9200 = vld [vmem:[%s9187 + $0x60] sm:$0xff]
      %v9201 = vld [vmem:[%s9187 + $0x68] sm:$0xff]
      %v9202 = vld [vmem:[%s9187 + $0x70] sm:$0xff]
      %v9203 = vld [vmem:[%s9187 + $0x78] sm:$0xff]
      %9204 = vmatprep.subr.mxu0 0.0
      %9205 = vmatpush1.msra.mxu0 %v9203
      %9206 = vmatprep.subr.mxu0 0.0
      %9207 = vmatpush1.msra.mxu0 %v9202
      %9208 = vmatprep.subr.mxu0 0.0
      %9209 = vmatpush1.msra.mxu0 %v9201
      %9210 = vmatprep.subr.mxu0 0.0
      %9211 = vmatpush1.msra.mxu0 %v9200
      %9212 = vmatprep.subr.mxu0 0.0
      %9213 = vmatpush1.msra.mxu0 %v9199
      %9214 = vmatprep.subr.mxu0 0.0
      %9215 = vmatpush1.msra.mxu0 %v9198
      %9216 = vmatprep.subr.mxu0 0.0
      %9217 = vmatpush1.msra.mxu0 %v9197
      %9218 = vmatprep.subr.mxu0 0.0
      %9219 = vmatpush1.msra.mxu0 %v9196
      %9220 = vmatprep.subr.mxu0 0.0
      %9221 = vmatpush1.msra.mxu0 %v9195
      %9222 = vmatprep.subr.mxu0 0.0
      %9223 = vmatpush1.msra.mxu0 %v9194
      %9224 = vmatprep.subr.mxu0 0.0
      %9225 = vmatpush1.msra.mxu0 %v9193
      %9226 = vmatprep.subr.mxu0 0.0
      %9227 = vmatpush1.msra.mxu0 %v9192
      %9228 = vmatprep.subr.mxu0 0.0
      %9229 = vmatpush1.msra.mxu0 %v9191
      %9230 = vmatprep.subr.mxu0 0.0
      %9231 = vmatpush1.msra.mxu0 %v9190
      %9232 = vmatprep.subr.mxu0 0.0
      %9233 = vmatpush1.msra.mxu0 %v9189
      %9234 = vmatprep.subr.mxu0 0.0
      %9235 = vmatpush1.msra.mxu0 %v9188
      %9236 = vmatprep.subr.mxu0 0.0
      %9237 = vmatpush2.msra.mxu0 0.0
      %9238 = vmatprep.subr.mxu0 0.0
      %9239 = vmatpush2.msra.mxu0 0.0
      %9240 = vmatprep.subr.mxu0 0.0
      %9241 = vmatpush2.msra.mxu0 0.0
      %9242 = vmatprep.subr.mxu0 0.0
      %9243 = vmatpush2.msra.mxu0 0.0
      %9244 = vmatprep.subr.mxu0 0.0
      %9245 = vmatpush2.msra.mxu0 0.0
      %9246 = vmatprep.subr.mxu0 0.0
      %9247 = vmatpush2.msra.mxu0 0.0
      %9248 = vmatprep.subr.mxu0 0.0
      %9249 = vmatpush2.msra.mxu0 0.0
      %9250 = vmatprep.subr.mxu0 0.0
      %9251 = vmatpush2.msra.mxu0 0.0
      %9252 = vmatprep.subr.mxu0 0.0
      %9253 = vmatpush2.msra.mxu0 0.0
      %9254 = vmatprep.subr.mxu0 0.0
      %9255 = vmatpush2.msra.mxu0 0.0
      %9256 = vmatprep.subr.mxu0 0.0
      %9257 = vmatpush2.msra.mxu0 0.0
      %9258 = vmatprep.subr.mxu0 0.0
      %9259 = vmatpush2.msra.mxu0 0.0
      %9260 = vmatprep.subr.mxu0 0.0
      %9261 = vmatpush2.msra.mxu0 0.0
      %9262 = vmatprep.subr.mxu0 0.0
      %9263 = vmatpush2.msra.mxu0 0.0
      %9264 = vmatprep.subr.mxu0 0.0
      %9265 = vmatpush2.msra.mxu0 0.0
      %9266 = vmatprep.subr.mxu0 0.0
      %9267 = vmatpush2.msra.mxu0 0.0
      %9268 = vmatprep.mubr.f32.mxu0 0.0
      %9269 = vmatmul.mubr.f32.gmra.mxu0 %v7005
      %v9270 = vpop.f32.mrf.mxu0
      %v9271 = vadd.f32 0.0, %v9270
      %v9272 = vpop.f32.mrf.mxu0
      %9273 = vmatprep.mubr.f32.mxu0 0.0
      %9274 = vmatmul.mubr.f32.gmra.mxu0 %v7006
      %v9275 = vpop.f32.mrf.mxu0
      %v9276 = vadd.f32 0.0, %v9275
      %v9277 = vpop.f32.mrf.mxu0
      %9278 = vmatprep.mubr.f32.mxu0 0.0
      %9279 = vmatmul.mubr.f32.gmra.mxu0 %v7007
      %v9280 = vpop.f32.mrf.mxu0
      %v9281 = vadd.f32 0.0, %v9280
      %v9282 = vpop.f32.mrf.mxu0
      %9283 = vmatprep.mubr.f32.mxu0 0.0
      %9284 = vmatmul.mubr.f32.gmra.mxu0 %v7008
      %v9285 = vpop.f32.mrf.mxu0
      %v9286 = vadd.f32 0.0, %v9285
      %v9287 = vpop.f32.mrf.mxu0
      %9288 = vmatprep.mubr.f32.mxu0 0.0
      %9289 = vmatmul.mubr.f32.gmra.mxu0 %v7009
      %v9290 = vpop.f32.mrf.mxu0
      %v9291 = vadd.f32 0.0, %v9290
      %v9292 = vpop.f32.mrf.mxu0
      %9293 = vmatprep.mubr.f32.mxu0 0.0
      %9294 = vmatmul.mubr.f32.gmra.mxu0 %v7010
      %v9295 = vpop.f32.mrf.mxu0
      %v9296 = vadd.f32 0.0, %v9295
      %v9297 = vpop.f32.mrf.mxu0
      %9298 = vmatprep.mubr.f32.mxu0 0.0
      %9299 = vmatmul.mubr.f32.gmra.mxu0 %v7011
      %v9300 = vpop.f32.mrf.mxu0
      %v9301 = vadd.f32 0.0, %v9300
      %v9302 = vpop.f32.mrf.mxu0
      %9303 = vmatprep.mubr.f32.mxu0 0.0
      %9304 = vmatmul.mubr.f32.gmra.mxu0 %v7012
      %v9305 = vpop.f32.mrf.mxu0
      %v9306 = vadd.f32 0.0, %v9305
      %v9307 = vpop.f32.mrf.mxu0
      %9308 = vmatprep.mubr.f32.mxu0 0.0
      %9309 = vmatmul.mubr.f32.gmra.mxu0 %v7013
      %v9310 = vpop.f32.mrf.mxu0
      %v9311 = vadd.f32 0.0, %v9310
      %v9312 = vpop.f32.mrf.mxu0
      %9313 = vmatprep.mubr.f32.mxu0 0.0
      %9314 = vmatmul.mubr.f32.gmra.mxu0 %v7014
      %v9315 = vpop.f32.mrf.mxu0
      %v9316 = vadd.f32 0.0, %v9315
      %v9317 = vpop.f32.mrf.mxu0
      %9318 = vmatprep.mubr.f32.mxu0 0.0
      %9319 = vmatmul.mubr.f32.gmra.mxu0 %v7015
      %v9320 = vpop.f32.mrf.mxu0
      %v9321 = vadd.f32 0.0, %v9320
      %v9322 = vpop.f32.mrf.mxu0
      %9323 = vmatprep.mubr.f32.mxu0 0.0
      %9324 = vmatmul.mubr.f32.gmra.mxu0 %v7016
      %v9325 = vpop.f32.mrf.mxu0
      %v9326 = vadd.f32 0.0, %v9325
      %v9327 = vpop.f32.mrf.mxu0
      %9328 = vmatprep.mubr.f32.mxu0 0.0
      %9329 = vmatmul.mubr.f32.gmra.mxu0 %v7017
      %v9330 = vpop.f32.mrf.mxu0
      %v9331 = vadd.f32 0.0, %v9330
      %v9332 = vpop.f32.mrf.mxu0
      %9333 = vmatprep.mubr.f32.mxu0 0.0
      %9334 = vmatmul.mubr.f32.gmra.mxu0 %v7018
      %v9335 = vpop.f32.mrf.mxu0
      %v9336 = vadd.f32 0.0, %v9335
      %v9337 = vpop.f32.mrf.mxu0
      %9338 = vmatprep.mubr.f32.mxu0 0.0
      %9339 = vmatmul.mubr.f32.gmra.mxu0 %v7019
      %v9340 = vpop.f32.mrf.mxu0
      %v9341 = vadd.f32 0.0, %v9340
      %v9342 = vpop.f32.mrf.mxu0
      %9343 = vmatprep.mubr.f32.mxu0 0.0
      %9344 = vmatmul.mubr.f32.gmra.mxu0 %v7020
      %v9345 = vpop.f32.mrf.mxu0
      %v9346 = vadd.f32 0.0, %v9345
      %v9347 = vpop.f32.mrf.mxu0
      %9348 = vdwg.mxu0
      %s9349 = scalar_lea.vmem %s13, 768
      %v9350 = vld [vmem:[%s9349] sm:$0xff]
      %v9351 = vld [vmem:[%s9349 + $0x8] sm:$0xff]
      %v9352 = vld [vmem:[%s9349 + $0x10] sm:$0xff]
      %v9353 = vld [vmem:[%s9349 + $0x18] sm:$0xff]
      %v9354 = vld [vmem:[%s9349 + $0x20] sm:$0xff]
      %v9355 = vld [vmem:[%s9349 + $0x28] sm:$0xff]
      %v9356 = vld [vmem:[%s9349 + $0x30] sm:$0xff]
      %v9357 = vld [vmem:[%s9349 + $0x38] sm:$0xff]
      %v9358 = vld [vmem:[%s9349 + $0x40] sm:$0xff]
      %v9359 = vld [vmem:[%s9349 + $0x48] sm:$0xff]
      %v9360 = vld [vmem:[%s9349 + $0x50] sm:$0xff]
      %v9361 = vld [vmem:[%s9349 + $0x58] sm:$0xff]
      %v9362 = vld [vmem:[%s9349 + $0x60] sm:$0xff]
      %v9363 = vld [vmem:[%s9349 + $0x68] sm:$0xff]
      %v9364 = vld [vmem:[%s9349 + $0x70] sm:$0xff]
      %v9365 = vld [vmem:[%s9349 + $0x78] sm:$0xff]
      %9366 = vmatprep.subr.mxu0 0.0
      %9367 = vmatpush1.msra.mxu0 %v9346
      %9368 = vmatprep.subr.mxu0 0.0
      %9369 = vmatpush1.msra.mxu0 %v9341
      %9370 = vmatprep.subr.mxu0 0.0
      %9371 = vmatpush1.msra.mxu0 %v9336
      %9372 = vmatprep.subr.mxu0 0.0
      %9373 = vmatpush1.msra.mxu0 %v9331
      %9374 = vmatprep.subr.mxu0 0.0
      %9375 = vmatpush1.msra.mxu0 %v9326
      %9376 = vmatprep.subr.mxu0 0.0
      %9377 = vmatpush1.msra.mxu0 %v9321
      %9378 = vmatprep.subr.mxu0 0.0
      %9379 = vmatpush1.msra.mxu0 %v9316
      %9380 = vmatprep.subr.mxu0 0.0
      %9381 = vmatpush1.msra.mxu0 %v9311
      %9382 = vmatprep.subr.mxu0 0.0
      %9383 = vmatpush1.msra.mxu0 %v9306
      %9384 = vmatprep.subr.mxu0 0.0
      %9385 = vmatpush1.msra.mxu0 %v9301
      %9386 = vmatprep.subr.mxu0 0.0
      %9387 = vmatpush1.msra.mxu0 %v9296
      %9388 = vmatprep.subr.mxu0 0.0
      %9389 = vmatpush1.msra.mxu0 %v9291
      %9390 = vmatprep.subr.mxu0 0.0
      %9391 = vmatpush1.msra.mxu0 %v9286
      %9392 = vmatprep.subr.mxu0 0.0
      %9393 = vmatpush1.msra.mxu0 %v9281
      %9394 = vmatprep.subr.mxu0 0.0
      %9395 = vmatpush1.msra.mxu0 %v9276
      %9396 = vmatprep.subr.mxu0 0.0
      %9397 = vmatpush1.msra.mxu0 %v9271
      %9398 = vmatprep.subr.mxu0 0.0
      %9399 = vmatpush2.msra.mxu0 0.0
      %9400 = vmatprep.subr.mxu0 0.0
      %9401 = vmatpush2.msra.mxu0 0.0
      %9402 = vmatprep.subr.mxu0 0.0
      %9403 = vmatpush2.msra.mxu0 0.0
      %9404 = vmatprep.subr.mxu0 0.0
      %9405 = vmatpush2.msra.mxu0 0.0
      %9406 = vmatprep.subr.mxu0 0.0
      %9407 = vmatpush2.msra.mxu0 0.0
      %9408 = vmatprep.subr.mxu0 0.0
      %9409 = vmatpush2.msra.mxu0 0.0
      %9410 = vmatprep.subr.mxu0 0.0
      %9411 = vmatpush2.msra.mxu0 0.0
      %9412 = vmatprep.subr.mxu0 0.0
      %9413 = vmatpush2.msra.mxu0 0.0
      %9414 = vmatprep.subr.mxu0 0.0
      %9415 = vmatpush2.msra.mxu0 0.0
      %9416 = vmatprep.subr.mxu0 0.0
      %9417 = vmatpush2.msra.mxu0 0.0
      %9418 = vmatprep.subr.mxu0 0.0
      %9419 = vmatpush2.msra.mxu0 0.0
      %9420 = vmatprep.subr.mxu0 0.0
      %9421 = vmatpush2.msra.mxu0 0.0
      %9422 = vmatprep.subr.mxu0 0.0
      %9423 = vmatpush2.msra.mxu0 0.0
      %9424 = vmatprep.subr.mxu0 0.0
      %9425 = vmatpush2.msra.mxu0 0.0
      %9426 = vmatprep.subr.mxu0 0.0
      %9427 = vmatpush2.msra.mxu0 0.0
      %9428 = vmatprep.subr.mxu0 0.0
      %9429 = vmatpush2.msra.mxu0 0.0
      %9430 = vmatprep.mubr.f32.mxu0 0.0
      %9431 = vmatmul.mubr.f32.gmra.mxu0 %v9350
      %v9432 = vpop.f32.mrf.mxu0
      %v9433 = vadd.f32 0.0, %v9432
      %v9434 = vpop.f32.mrf.mxu0
      %9435 = vmatprep.mubr.f32.mxu0 0.0
      %9436 = vmatmul.mubr.f32.gmra.mxu0 %v9351
      %v9437 = vpop.f32.mrf.mxu0
      %v9438 = vadd.f32 0.0, %v9437
      %v9439 = vpop.f32.mrf.mxu0
      %9440 = vmatprep.mubr.f32.mxu0 0.0
      %9441 = vmatmul.mubr.f32.gmra.mxu0 %v9352
      %v9442 = vpop.f32.mrf.mxu0
      %v9443 = vadd.f32 0.0, %v9442
      %v9444 = vpop.f32.mrf.mxu0
      %9445 = vmatprep.mubr.f32.mxu0 0.0
      %9446 = vmatmul.mubr.f32.gmra.mxu0 %v9353
      %v9447 = vpop.f32.mrf.mxu0
      %v9448 = vadd.f32 0.0, %v9447
      %v9449 = vpop.f32.mrf.mxu0
      %9450 = vmatprep.mubr.f32.mxu0 0.0
      %9451 = vmatmul.mubr.f32.gmra.mxu0 %v9354
      %v9452 = vpop.f32.mrf.mxu0
      %v9453 = vadd.f32 0.0, %v9452
      %v9454 = vpop.f32.mrf.mxu0
      %9455 = vmatprep.mubr.f32.mxu0 0.0
      %9456 = vmatmul.mubr.f32.gmra.mxu0 %v9355
      %v9457 = vpop.f32.mrf.mxu0
      %v9458 = vadd.f32 0.0, %v9457
      %v9459 = vpop.f32.mrf.mxu0
      %9460 = vmatprep.mubr.f32.mxu0 0.0
      %9461 = vmatmul.mubr.f32.gmra.mxu0 %v9356
      %v9462 = vpop.f32.mrf.mxu0
      %v9463 = vadd.f32 0.0, %v9462
      %v9464 = vpop.f32.mrf.mxu0
      %9465 = vmatprep.mubr.f32.mxu0 0.0
      %9466 = vmatmul.mubr.f32.gmra.mxu0 %v9357
      %v9467 = vpop.f32.mrf.mxu0
      %v9468 = vadd.f32 0.0, %v9467
      %v9469 = vpop.f32.mrf.mxu0
      %9470 = vmatprep.mubr.f32.mxu0 0.0
      %9471 = vmatmul.mubr.f32.gmra.mxu0 %v9358
      %v9472 = vpop.f32.mrf.mxu0
      %v9473 = vadd.f32 0.0, %v9472
      %v9474 = vpop.f32.mrf.mxu0
      %9475 = vmatprep.mubr.f32.mxu0 0.0
      %9476 = vmatmul.mubr.f32.gmra.mxu0 %v9359
      %v9477 = vpop.f32.mrf.mxu0
      %v9478 = vadd.f32 0.0, %v9477
      %v9479 = vpop.f32.mrf.mxu0
      %9480 = vmatprep.mubr.f32.mxu0 0.0
      %9481 = vmatmul.mubr.f32.gmra.mxu0 %v9360
      %v9482 = vpop.f32.mrf.mxu0
      %v9483 = vadd.f32 0.0, %v9482
      %v9484 = vpop.f32.mrf.mxu0
      %9485 = vmatprep.mubr.f32.mxu0 0.0
      %9486 = vmatmul.mubr.f32.gmra.mxu0 %v9361
      %v9487 = vpop.f32.mrf.mxu0
      %v9488 = vadd.f32 0.0, %v9487
      %v9489 = vpop.f32.mrf.mxu0
      %9490 = vmatprep.mubr.f32.mxu0 0.0
      %9491 = vmatmul.mubr.f32.gmra.mxu0 %v9362
      %v9492 = vpop.f32.mrf.mxu0
      %v9493 = vadd.f32 0.0, %v9492
      %v9494 = vpop.f32.mrf.mxu0
      %9495 = vmatprep.mubr.f32.mxu0 0.0
      %9496 = vmatmul.mubr.f32.gmra.mxu0 %v9363
      %v9497 = vpop.f32.mrf.mxu0
      %v9498 = vadd.f32 0.0, %v9497
      %v9499 = vpop.f32.mrf.mxu0
      %9500 = vmatprep.mubr.f32.mxu0 0.0
      %9501 = vmatmul.mubr.f32.gmra.mxu0 %v9364
      %v9502 = vpop.f32.mrf.mxu0
      %v9503 = vadd.f32 0.0, %v9502
      %v9504 = vpop.f32.mrf.mxu0
      %9505 = vmatprep.mubr.f32.mxu0 0.0
      %9506 = vmatmul.mubr.f32.gmra.mxu0 %v9365
      %v9507 = vpop.f32.mrf.mxu0
      %v9508 = vadd.f32 0.0, %v9507
      %v9509 = vpop.f32.mrf.mxu0
      %9510 = vdwg.mxu0
      %v9511 = vadd.f32 %v9171, %v9433
      %v9512 = vadd.f32 %v9172, %v9438
      %v9513 = vadd.f32 %v9173, %v9443
      %v9514 = vadd.f32 %v9174, %v9448
      %v9515 = vadd.f32 %v9175, %v9453
      %v9516 = vadd.f32 %v9176, %v9458
      %v9517 = vadd.f32 %v9177, %v9463
      %v9518 = vadd.f32 %v9178, %v9468
      %v9519 = vadd.f32 %v9179, %v9473
      %v9520 = vadd.f32 %v9180, %v9478
      %v9521 = vadd.f32 %v9181, %v9483
      %v9522 = vadd.f32 %v9182, %v9488
      %v9523 = vadd.f32 %v9183, %v9493
      %v9524 = vadd.f32 %v9184, %v9498
      %v9525 = vadd.f32 %v9185, %v9503
      %v9526 = vadd.f32 %v9186, %v9508
      %s9527 = scalar_lea.vmem %s12, 896
      %v9528 = vld [vmem:[%s9527] sm:$0xff]
      %v9529 = vld [vmem:[%s9527 + $0x8] sm:$0xff]
      %v9530 = vld [vmem:[%s9527 + $0x10] sm:$0xff]
      %v9531 = vld [vmem:[%s9527 + $0x18] sm:$0xff]
      %v9532 = vld [vmem:[%s9527 + $0x20] sm:$0xff]
      %v9533 = vld [vmem:[%s9527 + $0x28] sm:$0xff]
      %v9534 = vld [vmem:[%s9527 + $0x30] sm:$0xff]
      %v9535 = vld [vmem:[%s9527 + $0x38] sm:$0xff]
      %v9536 = vld [vmem:[%s9527 + $0x40] sm:$0xff]
      %v9537 = vld [vmem:[%s9527 + $0x48] sm:$0xff]
      %v9538 = vld [vmem:[%s9527 + $0x50] sm:$0xff]
      %v9539 = vld [vmem:[%s9527 + $0x58] sm:$0xff]
      %v9540 = vld [vmem:[%s9527 + $0x60] sm:$0xff]
      %v9541 = vld [vmem:[%s9527 + $0x68] sm:$0xff]
      %v9542 = vld [vmem:[%s9527 + $0x70] sm:$0xff]
      %v9543 = vld [vmem:[%s9527 + $0x78] sm:$0xff]
      %9544 = vmatprep.subr.mxu0 0.0
      %9545 = vmatpush1.msra.mxu0 %v9543
      %9546 = vmatprep.subr.mxu0 0.0
      %9547 = vmatpush1.msra.mxu0 %v9542
      %9548 = vmatprep.subr.mxu0 0.0
      %9549 = vmatpush1.msra.mxu0 %v9541
      %9550 = vmatprep.subr.mxu0 0.0
      %9551 = vmatpush1.msra.mxu0 %v9540
      %9552 = vmatprep.subr.mxu0 0.0
      %9553 = vmatpush1.msra.mxu0 %v9539
      %9554 = vmatprep.subr.mxu0 0.0
      %9555 = vmatpush1.msra.mxu0 %v9538
      %9556 = vmatprep.subr.mxu0 0.0
      %9557 = vmatpush1.msra.mxu0 %v9537
      %9558 = vmatprep.subr.mxu0 0.0
      %9559 = vmatpush1.msra.mxu0 %v9536
      %9560 = vmatprep.subr.mxu0 0.0
      %9561 = vmatpush1.msra.mxu0 %v9535
      %9562 = vmatprep.subr.mxu0 0.0
      %9563 = vmatpush1.msra.mxu0 %v9534
      %9564 = vmatprep.subr.mxu0 0.0
      %9565 = vmatpush1.msra.mxu0 %v9533
      %9566 = vmatprep.subr.mxu0 0.0
      %9567 = vmatpush1.msra.mxu0 %v9532
      %9568 = vmatprep.subr.mxu0 0.0
      %9569 = vmatpush1.msra.mxu0 %v9531
      %9570 = vmatprep.subr.mxu0 0.0
      %9571 = vmatpush1.msra.mxu0 %v9530
      %9572 = vmatprep.subr.mxu0 0.0
      %9573 = vmatpush1.msra.mxu0 %v9529
      %9574 = vmatprep.subr.mxu0 0.0
      %9575 = vmatpush1.msra.mxu0 %v9528
      %9576 = vmatprep.subr.mxu0 0.0
      %9577 = vmatpush2.msra.mxu0 0.0
      %9578 = vmatprep.subr.mxu0 0.0
      %9579 = vmatpush2.msra.mxu0 0.0
      %9580 = vmatprep.subr.mxu0 0.0
      %9581 = vmatpush2.msra.mxu0 0.0
      %9582 = vmatprep.subr.mxu0 0.0
      %9583 = vmatpush2.msra.mxu0 0.0
      %9584 = vmatprep.subr.mxu0 0.0
      %9585 = vmatpush2.msra.mxu0 0.0
      %9586 = vmatprep.subr.mxu0 0.0
      %9587 = vmatpush2.msra.mxu0 0.0
      %9588 = vmatprep.subr.mxu0 0.0
      %9589 = vmatpush2.msra.mxu0 0.0
      %9590 = vmatprep.subr.mxu0 0.0
      %9591 = vmatpush2.msra.mxu0 0.0
      %9592 = vmatprep.subr.mxu0 0.0
      %9593 = vmatpush2.msra.mxu0 0.0
      %9594 = vmatprep.subr.mxu0 0.0
      %9595 = vmatpush2.msra.mxu0 0.0
      %9596 = vmatprep.subr.mxu0 0.0
      %9597 = vmatpush2.msra.mxu0 0.0
      %9598 = vmatprep.subr.mxu0 0.0
      %9599 = vmatpush2.msra.mxu0 0.0
      %9600 = vmatprep.subr.mxu0 0.0
      %9601 = vmatpush2.msra.mxu0 0.0
      %9602 = vmatprep.subr.mxu0 0.0
      %9603 = vmatpush2.msra.mxu0 0.0
      %9604 = vmatprep.subr.mxu0 0.0
      %9605 = vmatpush2.msra.mxu0 0.0
      %9606 = vmatprep.subr.mxu0 0.0
      %9607 = vmatpush2.msra.mxu0 0.0
      %9608 = vmatprep.mubr.f32.mxu0 0.0
      %9609 = vmatmul.mubr.f32.gmra.mxu0 %v7005
      %v9610 = vpop.f32.mrf.mxu0
      %v9611 = vadd.f32 0.0, %v9610
      %v9612 = vpop.f32.mrf.mxu0
      %9613 = vmatprep.mubr.f32.mxu0 0.0
      %9614 = vmatmul.mubr.f32.gmra.mxu0 %v7006
      %v9615 = vpop.f32.mrf.mxu0
      %v9616 = vadd.f32 0.0, %v9615
      %v9617 = vpop.f32.mrf.mxu0
      %9618 = vmatprep.mubr.f32.mxu0 0.0
      %9619 = vmatmul.mubr.f32.gmra.mxu0 %v7007
      %v9620 = vpop.f32.mrf.mxu0
      %v9621 = vadd.f32 0.0, %v9620
      %v9622 = vpop.f32.mrf.mxu0
      %9623 = vmatprep.mubr.f32.mxu0 0.0
      %9624 = vmatmul.mubr.f32.gmra.mxu0 %v7008
      %v9625 = vpop.f32.mrf.mxu0
      %v9626 = vadd.f32 0.0, %v9625
      %v9627 = vpop.f32.mrf.mxu0
      %9628 = vmatprep.mubr.f32.mxu0 0.0
      %9629 = vmatmul.mubr.f32.gmra.mxu0 %v7009
      %v9630 = vpop.f32.mrf.mxu0
      %v9631 = vadd.f32 0.0, %v9630
      %v9632 = vpop.f32.mrf.mxu0
      %9633 = vmatprep.mubr.f32.mxu0 0.0
      %9634 = vmatmul.mubr.f32.gmra.mxu0 %v7010
      %v9635 = vpop.f32.mrf.mxu0
      %v9636 = vadd.f32 0.0, %v9635
      %v9637 = vpop.f32.mrf.mxu0
      %9638 = vmatprep.mubr.f32.mxu0 0.0
      %9639 = vmatmul.mubr.f32.gmra.mxu0 %v7011
      %v9640 = vpop.f32.mrf.mxu0
      %v9641 = vadd.f32 0.0, %v9640
      %v9642 = vpop.f32.mrf.mxu0
      %9643 = vmatprep.mubr.f32.mxu0 0.0
      %9644 = vmatmul.mubr.f32.gmra.mxu0 %v7012
      %v9645 = vpop.f32.mrf.mxu0
      %v9646 = vadd.f32 0.0, %v9645
      %v9647 = vpop.f32.mrf.mxu0
      %9648 = vmatprep.mubr.f32.mxu0 0.0
      %9649 = vmatmul.mubr.f32.gmra.mxu0 %v7013
      %v9650 = vpop.f32.mrf.mxu0
      %v9651 = vadd.f32 0.0, %v9650
      %v9652 = vpop.f32.mrf.mxu0
      %9653 = vmatprep.mubr.f32.mxu0 0.0
      %9654 = vmatmul.mubr.f32.gmra.mxu0 %v7014
      %v9655 = vpop.f32.mrf.mxu0
      %v9656 = vadd.f32 0.0, %v9655
      %v9657 = vpop.f32.mrf.mxu0
      %9658 = vmatprep.mubr.f32.mxu0 0.0
      %9659 = vmatmul.mubr.f32.gmra.mxu0 %v7015
      %v9660 = vpop.f32.mrf.mxu0
      %v9661 = vadd.f32 0.0, %v9660
      %v9662 = vpop.f32.mrf.mxu0
      %9663 = vmatprep.mubr.f32.mxu0 0.0
      %9664 = vmatmul.mubr.f32.gmra.mxu0 %v7016
      %v9665 = vpop.f32.mrf.mxu0
      %v9666 = vadd.f32 0.0, %v9665
      %v9667 = vpop.f32.mrf.mxu0
      %9668 = vmatprep.mubr.f32.mxu0 0.0
      %9669 = vmatmul.mubr.f32.gmra.mxu0 %v7017
      %v9670 = vpop.f32.mrf.mxu0
      %v9671 = vadd.f32 0.0, %v9670
      %v9672 = vpop.f32.mrf.mxu0
      %9673 = vmatprep.mubr.f32.mxu0 0.0
      %9674 = vmatmul.mubr.f32.gmra.mxu0 %v7018
      %v9675 = vpop.f32.mrf.mxu0
      %v9676 = vadd.f32 0.0, %v9675
      %v9677 = vpop.f32.mrf.mxu0
      %9678 = vmatprep.mubr.f32.mxu0 0.0
      %9679 = vmatmul.mubr.f32.gmra.mxu0 %v7019
      %v9680 = vpop.f32.mrf.mxu0
      %v9681 = vadd.f32 0.0, %v9680
      %v9682 = vpop.f32.mrf.mxu0
      %9683 = vmatprep.mubr.f32.mxu0 0.0
      %9684 = vmatmul.mubr.f32.gmra.mxu0 %v7020
      %v9685 = vpop.f32.mrf.mxu0
      %v9686 = vadd.f32 0.0, %v9685
      %v9687 = vpop.f32.mrf.mxu0
      %9688 = vdwg.mxu0
      %s9689 = scalar_lea.vmem %s13, 896
      %v9690 = vld [vmem:[%s9689] sm:$0xff]
      %v9691 = vld [vmem:[%s9689 + $0x8] sm:$0xff]
      %v9692 = vld [vmem:[%s9689 + $0x10] sm:$0xff]
      %v9693 = vld [vmem:[%s9689 + $0x18] sm:$0xff]
      %v9694 = vld [vmem:[%s9689 + $0x20] sm:$0xff]
      %v9695 = vld [vmem:[%s9689 + $0x28] sm:$0xff]
      %v9696 = vld [vmem:[%s9689 + $0x30] sm:$0xff]
      %v9697 = vld [vmem:[%s9689 + $0x38] sm:$0xff]
      %v9698 = vld [vmem:[%s9689 + $0x40] sm:$0xff]
      %v9699 = vld [vmem:[%s9689 + $0x48] sm:$0xff]
      %v9700 = vld [vmem:[%s9689 + $0x50] sm:$0xff]
      %v9701 = vld [vmem:[%s9689 + $0x58] sm:$0xff]
      %v9702 = vld [vmem:[%s9689 + $0x60] sm:$0xff]
      %v9703 = vld [vmem:[%s9689 + $0x68] sm:$0xff]
      %v9704 = vld [vmem:[%s9689 + $0x70] sm:$0xff]
      %v9705 = vld [vmem:[%s9689 + $0x78] sm:$0xff]
      %9706 = vmatprep.subr.mxu0 0.0
      %9707 = vmatpush1.msra.mxu0 %v9686
      %9708 = vmatprep.subr.mxu0 0.0
      %9709 = vmatpush1.msra.mxu0 %v9681
      %9710 = vmatprep.subr.mxu0 0.0
      %9711 = vmatpush1.msra.mxu0 %v9676
      %9712 = vmatprep.subr.mxu0 0.0
      %9713 = vmatpush1.msra.mxu0 %v9671
      %9714 = vmatprep.subr.mxu0 0.0
      %9715 = vmatpush1.msra.mxu0 %v9666
      %9716 = vmatprep.subr.mxu0 0.0
      %9717 = vmatpush1.msra.mxu0 %v9661
      %9718 = vmatprep.subr.mxu0 0.0
      %9719 = vmatpush1.msra.mxu0 %v9656
      %9720 = vmatprep.subr.mxu0 0.0
      %9721 = vmatpush1.msra.mxu0 %v9651
      %9722 = vmatprep.subr.mxu0 0.0
      %9723 = vmatpush1.msra.mxu0 %v9646
      %9724 = vmatprep.subr.mxu0 0.0
      %9725 = vmatpush1.msra.mxu0 %v9641
      %9726 = vmatprep.subr.mxu0 0.0
      %9727 = vmatpush1.msra.mxu0 %v9636
      %9728 = vmatprep.subr.mxu0 0.0
      %9729 = vmatpush1.msra.mxu0 %v9631
      %9730 = vmatprep.subr.mxu0 0.0
      %9731 = vmatpush1.msra.mxu0 %v9626
      %9732 = vmatprep.subr.mxu0 0.0
      %9733 = vmatpush1.msra.mxu0 %v9621
      %9734 = vmatprep.subr.mxu0 0.0
      %9735 = vmatpush1.msra.mxu0 %v9616
      %9736 = vmatprep.subr.mxu0 0.0
      %9737 = vmatpush1.msra.mxu0 %v9611
      %9738 = vmatprep.subr.mxu0 0.0
      %9739 = vmatpush2.msra.mxu0 0.0
      %9740 = vmatprep.subr.mxu0 0.0
      %9741 = vmatpush2.msra.mxu0 0.0
      %9742 = vmatprep.subr.mxu0 0.0
      %9743 = vmatpush2.msra.mxu0 0.0
      %9744 = vmatprep.subr.mxu0 0.0
      %9745 = vmatpush2.msra.mxu0 0.0
      %9746 = vmatprep.subr.mxu0 0.0
      %9747 = vmatpush2.msra.mxu0 0.0
      %9748 = vmatprep.subr.mxu0 0.0
      %9749 = vmatpush2.msra.mxu0 0.0
      %9750 = vmatprep.subr.mxu0 0.0
      %9751 = vmatpush2.msra.mxu0 0.0
      %9752 = vmatprep.subr.mxu0 0.0
      %9753 = vmatpush2.msra.mxu0 0.0
      %9754 = vmatprep.subr.mxu0 0.0
      %9755 = vmatpush2.msra.mxu0 0.0
      %9756 = vmatprep.subr.mxu0 0.0
      %9757 = vmatpush2.msra.mxu0 0.0
      %9758 = vmatprep.subr.mxu0 0.0
      %9759 = vmatpush2.msra.mxu0 0.0
      %9760 = vmatprep.subr.mxu0 0.0
      %9761 = vmatpush2.msra.mxu0 0.0
      %9762 = vmatprep.subr.mxu0 0.0
      %9763 = vmatpush2.msra.mxu0 0.0
      %9764 = vmatprep.subr.mxu0 0.0
      %9765 = vmatpush2.msra.mxu0 0.0
      %9766 = vmatprep.subr.mxu0 0.0
      %9767 = vmatpush2.msra.mxu0 0.0
      %9768 = vmatprep.subr.mxu0 0.0
      %9769 = vmatpush2.msra.mxu0 0.0
      %9770 = vmatprep.mubr.f32.mxu0 0.0
      %9771 = vmatmul.mubr.f32.gmra.mxu0 %v9690
      %v9772 = vpop.f32.mrf.mxu0
      %v9773 = vadd.f32 0.0, %v9772
      %v9774 = vpop.f32.mrf.mxu0
      %9775 = vmatprep.mubr.f32.mxu0 0.0
      %9776 = vmatmul.mubr.f32.gmra.mxu0 %v9691
      %v9777 = vpop.f32.mrf.mxu0
      %v9778 = vadd.f32 0.0, %v9777
      %v9779 = vpop.f32.mrf.mxu0
      %9780 = vmatprep.mubr.f32.mxu0 0.0
      %9781 = vmatmul.mubr.f32.gmra.mxu0 %v9692
      %v9782 = vpop.f32.mrf.mxu0
      %v9783 = vadd.f32 0.0, %v9782
      %v9784 = vpop.f32.mrf.mxu0
      %9785 = vmatprep.mubr.f32.mxu0 0.0
      %9786 = vmatmul.mubr.f32.gmra.mxu0 %v9693
      %v9787 = vpop.f32.mrf.mxu0
      %v9788 = vadd.f32 0.0, %v9787
      %v9789 = vpop.f32.mrf.mxu0
      %9790 = vmatprep.mubr.f32.mxu0 0.0
      %9791 = vmatmul.mubr.f32.gmra.mxu0 %v9694
      %v9792 = vpop.f32.mrf.mxu0
      %v9793 = vadd.f32 0.0, %v9792
      %v9794 = vpop.f32.mrf.mxu0
      %9795 = vmatprep.mubr.f32.mxu0 0.0
      %9796 = vmatmul.mubr.f32.gmra.mxu0 %v9695
      %v9797 = vpop.f32.mrf.mxu0
      %v9798 = vadd.f32 0.0, %v9797
      %v9799 = vpop.f32.mrf.mxu0
      %9800 = vmatprep.mubr.f32.mxu0 0.0
      %9801 = vmatmul.mubr.f32.gmra.mxu0 %v9696
      %v9802 = vpop.f32.mrf.mxu0
      %v9803 = vadd.f32 0.0, %v9802
      %v9804 = vpop.f32.mrf.mxu0
      %9805 = vmatprep.mubr.f32.mxu0 0.0
      %9806 = vmatmul.mubr.f32.gmra.mxu0 %v9697
      %v9807 = vpop.f32.mrf.mxu0
      %v9808 = vadd.f32 0.0, %v9807
      %v9809 = vpop.f32.mrf.mxu0
      %9810 = vmatprep.mubr.f32.mxu0 0.0
      %9811 = vmatmul.mubr.f32.gmra.mxu0 %v9698
      %v9812 = vpop.f32.mrf.mxu0
      %v9813 = vadd.f32 0.0, %v9812
      %v9814 = vpop.f32.mrf.mxu0
      %9815 = vmatprep.mubr.f32.mxu0 0.0
      %9816 = vmatmul.mubr.f32.gmra.mxu0 %v9699
      %v9817 = vpop.f32.mrf.mxu0
      %v9818 = vadd.f32 0.0, %v9817
      %v9819 = vpop.f32.mrf.mxu0
      %9820 = vmatprep.mubr.f32.mxu0 0.0
      %9821 = vmatmul.mubr.f32.gmra.mxu0 %v9700
      %v9822 = vpop.f32.mrf.mxu0
      %v9823 = vadd.f32 0.0, %v9822
      %v9824 = vpop.f32.mrf.mxu0
      %9825 = vmatprep.mubr.f32.mxu0 0.0
      %9826 = vmatmul.mubr.f32.gmra.mxu0 %v9701
      %v9827 = vpop.f32.mrf.mxu0
      %v9828 = vadd.f32 0.0, %v9827
      %v9829 = vpop.f32.mrf.mxu0
      %9830 = vmatprep.mubr.f32.mxu0 0.0
      %9831 = vmatmul.mubr.f32.gmra.mxu0 %v9702
      %v9832 = vpop.f32.mrf.mxu0
      %v9833 = vadd.f32 0.0, %v9832
      %v9834 = vpop.f32.mrf.mxu0
      %9835 = vmatprep.mubr.f32.mxu0 0.0
      %9836 = vmatmul.mubr.f32.gmra.mxu0 %v9703
      %v9837 = vpop.f32.mrf.mxu0
      %v9838 = vadd.f32 0.0, %v9837
      %v9839 = vpop.f32.mrf.mxu0
      %9840 = vmatprep.mubr.f32.mxu0 0.0
      %9841 = vmatmul.mubr.f32.gmra.mxu0 %v9704
      %v9842 = vpop.f32.mrf.mxu0
      %v9843 = vadd.f32 0.0, %v9842
      %v9844 = vpop.f32.mrf.mxu0
      %9845 = vmatprep.mubr.f32.mxu0 0.0
      %9846 = vmatmul.mubr.f32.gmra.mxu0 %v9705
      %v9847 = vpop.f32.mrf.mxu0
      %v9848 = vadd.f32 0.0, %v9847
      %v9849 = vpop.f32.mrf.mxu0
      %9850 = vdwg.mxu0
      %v9851 = vadd.f32 %v9511, %v9773
      %v9852 = vadd.f32 %v9512, %v9778
      %v9853 = vadd.f32 %v9513, %v9783
      %v9854 = vadd.f32 %v9514, %v9788
      %v9855 = vadd.f32 %v9515, %v9793
      %v9856 = vadd.f32 %v9516, %v9798
      %v9857 = vadd.f32 %v9517, %v9803
      %v9858 = vadd.f32 %v9518, %v9808
      %v9859 = vadd.f32 %v9519, %v9813
      %v9860 = vadd.f32 %v9520, %v9818
      %v9861 = vadd.f32 %v9521, %v9823
      %v9862 = vadd.f32 %v9522, %v9828
      %v9863 = vadd.f32 %v9523, %v9833
      %v9864 = vadd.f32 %v9524, %v9838
      %v9865 = vadd.f32 %v9525, %v9843
      %v9866 = vadd.f32 %v9526, %v9848
      %s9867 = scalar_lea.vmem %s12, 1024
      %v9868 = vld [vmem:[%s9867] sm:$0xff]
      %v9869 = vld [vmem:[%s9867 + $0x8] sm:$0xff]
      %v9870 = vld [vmem:[%s9867 + $0x10] sm:$0xff]
      %v9871 = vld [vmem:[%s9867 + $0x18] sm:$0xff]
      %v9872 = vld [vmem:[%s9867 + $0x20] sm:$0xff]
      %v9873 = vld [vmem:[%s9867 + $0x28] sm:$0xff]
      %v9874 = vld [vmem:[%s9867 + $0x30] sm:$0xff]
      %v9875 = vld [vmem:[%s9867 + $0x38] sm:$0xff]
      %v9876 = vld [vmem:[%s9867 + $0x40] sm:$0xff]
      %v9877 = vld [vmem:[%s9867 + $0x48] sm:$0xff]
      %v9878 = vld [vmem:[%s9867 + $0x50] sm:$0xff]
      %v9879 = vld [vmem:[%s9867 + $0x58] sm:$0xff]
      %v9880 = vld [vmem:[%s9867 + $0x60] sm:$0xff]
      %v9881 = vld [vmem:[%s9867 + $0x68] sm:$0xff]
      %v9882 = vld [vmem:[%s9867 + $0x70] sm:$0xff]
      %v9883 = vld [vmem:[%s9867 + $0x78] sm:$0xff]
      %9884 = vmatprep.subr.mxu0 0.0
      %9885 = vmatpush1.msra.mxu0 %v9883
      %9886 = vmatprep.subr.mxu0 0.0
      %9887 = vmatpush1.msra.mxu0 %v9882
      %9888 = vmatprep.subr.mxu0 0.0
      %9889 = vmatpush1.msra.mxu0 %v9881
      %9890 = vmatprep.subr.mxu0 0.0
      %9891 = vmatpush1.msra.mxu0 %v9880
      %9892 = vmatprep.subr.mxu0 0.0
      %9893 = vmatpush1.msra.mxu0 %v9879
      %9894 = vmatprep.subr.mxu0 0.0
      %9895 = vmatpush1.msra.mxu0 %v9878
      %9896 = vmatprep.subr.mxu0 0.0
      %9897 = vmatpush1.msra.mxu0 %v9877
      %9898 = vmatprep.subr.mxu0 0.0
      %9899 = vmatpush1.msra.mxu0 %v9876
      %9900 = vmatprep.subr.mxu0 0.0
      %9901 = vmatpush1.msra.mxu0 %v9875
      %9902 = vmatprep.subr.mxu0 0.0
      %9903 = vmatpush1.msra.mxu0 %v9874
      %9904 = vmatprep.subr.mxu0 0.0
      %9905 = vmatpush1.msra.mxu0 %v9873
      %9906 = vmatprep.subr.mxu0 0.0
      %9907 = vmatpush1.msra.mxu0 %v9872
      %9908 = vmatprep.subr.mxu0 0.0
      %9909 = vmatpush1.msra.mxu0 %v9871
      %9910 = vmatprep.subr.mxu0 0.0
      %9911 = vmatpush1.msra.mxu0 %v9870
      %9912 = vmatprep.subr.mxu0 0.0
      %9913 = vmatpush1.msra.mxu0 %v9869
      %9914 = vmatprep.subr.mxu0 0.0
      %9915 = vmatpush1.msra.mxu0 %v9868
      %9916 = vmatprep.subr.mxu0 0.0
      %9917 = vmatpush2.msra.mxu0 0.0
      %9918 = vmatprep.subr.mxu0 0.0
      %9919 = vmatpush2.msra.mxu0 0.0
      %9920 = vmatprep.subr.mxu0 0.0
      %9921 = vmatpush2.msra.mxu0 0.0
      %9922 = vmatprep.subr.mxu0 0.0
      %9923 = vmatpush2.msra.mxu0 0.0
      %9924 = vmatprep.subr.mxu0 0.0
      %9925 = vmatpush2.msra.mxu0 0.0
      %9926 = vmatprep.subr.mxu0 0.0
      %9927 = vmatpush2.msra.mxu0 0.0
      %9928 = vmatprep.subr.mxu0 0.0
      %9929 = vmatpush2.msra.mxu0 0.0
      %9930 = vmatprep.subr.mxu0 0.0
      %9931 = vmatpush2.msra.mxu0 0.0
      %9932 = vmatprep.subr.mxu0 0.0
      %9933 = vmatpush2.msra.mxu0 0.0
      %9934 = vmatprep.subr.mxu0 0.0
      %9935 = vmatpush2.msra.mxu0 0.0
      %9936 = vmatprep.subr.mxu0 0.0
      %9937 = vmatpush2.msra.mxu0 0.0
      %9938 = vmatprep.subr.mxu0 0.0
      %9939 = vmatpush2.msra.mxu0 0.0
      %9940 = vmatprep.subr.mxu0 0.0
      %9941 = vmatpush2.msra.mxu0 0.0
      %9942 = vmatprep.subr.mxu0 0.0
      %9943 = vmatpush2.msra.mxu0 0.0
      %9944 = vmatprep.subr.mxu0 0.0
      %9945 = vmatpush2.msra.mxu0 0.0
      %9946 = vmatprep.subr.mxu0 0.0
      %9947 = vmatpush2.msra.mxu0 0.0
      %9948 = vmatprep.mubr.f32.mxu0 0.0
      %9949 = vmatmul.mubr.f32.gmra.mxu0 %v7005
      %v9950 = vpop.f32.mrf.mxu0
      %v9951 = vadd.f32 0.0, %v9950
      %v9952 = vpop.f32.mrf.mxu0
      %9953 = vmatprep.mubr.f32.mxu0 0.0
      %9954 = vmatmul.mubr.f32.gmra.mxu0 %v7006
      %v9955 = vpop.f32.mrf.mxu0
      %v9956 = vadd.f32 0.0, %v9955
      %v9957 = vpop.f32.mrf.mxu0
      %9958 = vmatprep.mubr.f32.mxu0 0.0
      %9959 = vmatmul.mubr.f32.gmra.mxu0 %v7007
      %v9960 = vpop.f32.mrf.mxu0
      %v9961 = vadd.f32 0.0, %v9960
      %v9962 = vpop.f32.mrf.mxu0
      %9963 = vmatprep.mubr.f32.mxu0 0.0
      %9964 = vmatmul.mubr.f32.gmra.mxu0 %v7008
      %v9965 = vpop.f32.mrf.mxu0
      %v9966 = vadd.f32 0.0, %v9965
      %v9967 = vpop.f32.mrf.mxu0
      %9968 = vmatprep.mubr.f32.mxu0 0.0
      %9969 = vmatmul.mubr.f32.gmra.mxu0 %v7009
      %v9970 = vpop.f32.mrf.mxu0
      %v9971 = vadd.f32 0.0, %v9970
      %v9972 = vpop.f32.mrf.mxu0
      %9973 = vmatprep.mubr.f32.mxu0 0.0
      %9974 = vmatmul.mubr.f32.gmra.mxu0 %v7010
      %v9975 = vpop.f32.mrf.mxu0
      %v9976 = vadd.f32 0.0, %v9975
      %v9977 = vpop.f32.mrf.mxu0
      %9978 = vmatprep.mubr.f32.mxu0 0.0
      %9979 = vmatmul.mubr.f32.gmra.mxu0 %v7011
      %v9980 = vpop.f32.mrf.mxu0
      %v9981 = vadd.f32 0.0, %v9980
      %v9982 = vpop.f32.mrf.mxu0
      %9983 = vmatprep.mubr.f32.mxu0 0.0
      %9984 = vmatmul.mubr.f32.gmra.mxu0 %v7012
      %v9985 = vpop.f32.mrf.mxu0
      %v9986 = vadd.f32 0.0, %v9985
      %v9987 = vpop.f32.mrf.mxu0
      %9988 = vmatprep.mubr.f32.mxu0 0.0
      %9989 = vmatmul.mubr.f32.gmra.mxu0 %v7013
      %v9990 = vpop.f32.mrf.mxu0
      %v9991 = vadd.f32 0.0, %v9990
      %v9992 = vpop.f32.mrf.mxu0
      %9993 = vmatprep.mubr.f32.mxu0 0.0
      %9994 = vmatmul.mubr.f32.gmra.mxu0 %v7014
      %v9995 = vpop.f32.mrf.mxu0
      %v9996 = vadd.f32 0.0, %v9995
      %v9997 = vpop.f32.mrf.mxu0
      %9998 = vmatprep.mubr.f32.mxu0 0.0
      %9999 = vmatmul.mubr.f32.gmra.mxu0 %v7015
      %v10000 = vpop.f32.mrf.mxu0
      %v10001 = vadd.f32 0.0, %v10000
      %v10002 = vpop.f32.mrf.mxu0
      %10003 = vmatprep.mubr.f32.mxu0 0.0
      %10004 = vmatmul.mubr.f32.gmra.mxu0 %v7016
      %v10005 = vpop.f32.mrf.mxu0
      %v10006 = vadd.f32 0.0, %v10005
      %v10007 = vpop.f32.mrf.mxu0
      %10008 = vmatprep.mubr.f32.mxu0 0.0
      %10009 = vmatmul.mubr.f32.gmra.mxu0 %v7017
      %v10010 = vpop.f32.mrf.mxu0
      %v10011 = vadd.f32 0.0, %v10010
      %v10012 = vpop.f32.mrf.mxu0
      %10013 = vmatprep.mubr.f32.mxu0 0.0
      %10014 = vmatmul.mubr.f32.gmra.mxu0 %v7018
      %v10015 = vpop.f32.mrf.mxu0
      %v10016 = vadd.f32 0.0, %v10015
      %v10017 = vpop.f32.mrf.mxu0
      %10018 = vmatprep.mubr.f32.mxu0 0.0
      %10019 = vmatmul.mubr.f32.gmra.mxu0 %v7019
      %v10020 = vpop.f32.mrf.mxu0
      %v10021 = vadd.f32 0.0, %v10020
      %v10022 = vpop.f32.mrf.mxu0
      %10023 = vmatprep.mubr.f32.mxu0 0.0
      %10024 = vmatmul.mubr.f32.gmra.mxu0 %v7020
      %v10025 = vpop.f32.mrf.mxu0
      %v10026 = vadd.f32 0.0, %v10025
      %v10027 = vpop.f32.mrf.mxu0
      %10028 = vdwg.mxu0
      %s10029 = scalar_lea.vmem %s13, 1024
      %v10030 = vld [vmem:[%s10029] sm:$0xff]
      %v10031 = vld [vmem:[%s10029 + $0x8] sm:$0xff]
      %v10032 = vld [vmem:[%s10029 + $0x10] sm:$0xff]
      %v10033 = vld [vmem:[%s10029 + $0x18] sm:$0xff]
      %v10034 = vld [vmem:[%s10029 + $0x20] sm:$0xff]
      %v10035 = vld [vmem:[%s10029 + $0x28] sm:$0xff]
      %v10036 = vld [vmem:[%s10029 + $0x30] sm:$0xff]
      %v10037 = vld [vmem:[%s10029 + $0x38] sm:$0xff]
      %v10038 = vld [vmem:[%s10029 + $0x40] sm:$0xff]
      %v10039 = vld [vmem:[%s10029 + $0x48] sm:$0xff]
      %v10040 = vld [vmem:[%s10029 + $0x50] sm:$0xff]
      %v10041 = vld [vmem:[%s10029 + $0x58] sm:$0xff]
      %v10042 = vld [vmem:[%s10029 + $0x60] sm:$0xff]
      %v10043 = vld [vmem:[%s10029 + $0x68] sm:$0xff]
      %v10044 = vld [vmem:[%s10029 + $0x70] sm:$0xff]
      %v10045 = vld [vmem:[%s10029 + $0x78] sm:$0xff]
      %10046 = vmatprep.subr.mxu0 0.0
      %10047 = vmatpush1.msra.mxu0 %v10026
      %10048 = vmatprep.subr.mxu0 0.0
      %10049 = vmatpush1.msra.mxu0 %v10021
      %10050 = vmatprep.subr.mxu0 0.0
      %10051 = vmatpush1.msra.mxu0 %v10016
      %10052 = vmatprep.subr.mxu0 0.0
      %10053 = vmatpush1.msra.mxu0 %v10011
      %10054 = vmatprep.subr.mxu0 0.0
      %10055 = vmatpush1.msra.mxu0 %v10006
      %10056 = vmatprep.subr.mxu0 0.0
      %10057 = vmatpush1.msra.mxu0 %v10001
      %10058 = vmatprep.subr.mxu0 0.0
      %10059 = vmatpush1.msra.mxu0 %v9996
      %10060 = vmatprep.subr.mxu0 0.0
      %10061 = vmatpush1.msra.mxu0 %v9991
      %10062 = vmatprep.subr.mxu0 0.0
      %10063 = vmatpush1.msra.mxu0 %v9986
      %10064 = vmatprep.subr.mxu0 0.0
      %10065 = vmatpush1.msra.mxu0 %v9981
      %10066 = vmatprep.subr.mxu0 0.0
      %10067 = vmatpush1.msra.mxu0 %v9976
      %10068 = vmatprep.subr.mxu0 0.0
      %10069 = vmatpush1.msra.mxu0 %v9971
      %10070 = vmatprep.subr.mxu0 0.0
      %10071 = vmatpush1.msra.mxu0 %v9966
      %10072 = vmatprep.subr.mxu0 0.0
      %10073 = vmatpush1.msra.mxu0 %v9961
      %10074 = vmatprep.subr.mxu0 0.0
      %10075 = vmatpush1.msra.mxu0 %v9956
      %10076 = vmatprep.subr.mxu0 0.0
      %10077 = vmatpush1.msra.mxu0 %v9951
      %10078 = vmatprep.subr.mxu0 0.0
      %10079 = vmatpush2.msra.mxu0 0.0
      %10080 = vmatprep.subr.mxu0 0.0
      %10081 = vmatpush2.msra.mxu0 0.0
      %10082 = vmatprep.subr.mxu0 0.0
      %10083 = vmatpush2.msra.mxu0 0.0
      %10084 = vmatprep.subr.mxu0 0.0
      %10085 = vmatpush2.msra.mxu0 0.0
      %10086 = vmatprep.subr.mxu0 0.0
      %10087 = vmatpush2.msra.mxu0 0.0
      %10088 = vmatprep.subr.mxu0 0.0
      %10089 = vmatpush2.msra.mxu0 0.0
      %10090 = vmatprep.subr.mxu0 0.0
      %10091 = vmatpush2.msra.mxu0 0.0
      %10092 = vmatprep.subr.mxu0 0.0
      %10093 = vmatpush2.msra.mxu0 0.0
      %10094 = vmatprep.subr.mxu0 0.0
      %10095 = vmatpush2.msra.mxu0 0.0
      %10096 = vmatprep.subr.mxu0 0.0
      %10097 = vmatpush2.msra.mxu0 0.0
      %10098 = vmatprep.subr.mxu0 0.0
      %10099 = vmatpush2.msra.mxu0 0.0
      %10100 = vmatprep.subr.mxu0 0.0
      %10101 = vmatpush2.msra.mxu0 0.0
      %10102 = vmatprep.subr.mxu0 0.0
      %10103 = vmatpush2.msra.mxu0 0.0
      %10104 = vmatprep.subr.mxu0 0.0
      %10105 = vmatpush2.msra.mxu0 0.0
      %10106 = vmatprep.subr.mxu0 0.0
      %10107 = vmatpush2.msra.mxu0 0.0
      %10108 = vmatprep.subr.mxu0 0.0
      %10109 = vmatpush2.msra.mxu0 0.0
      %10110 = vmatprep.mubr.f32.mxu0 0.0
      %10111 = vmatmul.mubr.f32.gmra.mxu0 %v10030
      %v10112 = vpop.f32.mrf.mxu0
      %v10113 = vadd.f32 0.0, %v10112
      %v10114 = vpop.f32.mrf.mxu0
      %10115 = vmatprep.mubr.f32.mxu0 0.0
      %10116 = vmatmul.mubr.f32.gmra.mxu0 %v10031
      %v10117 = vpop.f32.mrf.mxu0
      %v10118 = vadd.f32 0.0, %v10117
      %v10119 = vpop.f32.mrf.mxu0
      %10120 = vmatprep.mubr.f32.mxu0 0.0
      %10121 = vmatmul.mubr.f32.gmra.mxu0 %v10032
      %v10122 = vpop.f32.mrf.mxu0
      %v10123 = vadd.f32 0.0, %v10122
      %v10124 = vpop.f32.mrf.mxu0
      %10125 = vmatprep.mubr.f32.mxu0 0.0
      %10126 = vmatmul.mubr.f32.gmra.mxu0 %v10033
      %v10127 = vpop.f32.mrf.mxu0
      %v10128 = vadd.f32 0.0, %v10127
      %v10129 = vpop.f32.mrf.mxu0
      %10130 = vmatprep.mubr.f32.mxu0 0.0
      %10131 = vmatmul.mubr.f32.gmra.mxu0 %v10034
      %v10132 = vpop.f32.mrf.mxu0
      %v10133 = vadd.f32 0.0, %v10132
      %v10134 = vpop.f32.mrf.mxu0
      %10135 = vmatprep.mubr.f32.mxu0 0.0
      %10136 = vmatmul.mubr.f32.gmra.mxu0 %v10035
      %v10137 = vpop.f32.mrf.mxu0
      %v10138 = vadd.f32 0.0, %v10137
      %v10139 = vpop.f32.mrf.mxu0
      %10140 = vmatprep.mubr.f32.mxu0 0.0
      %10141 = vmatmul.mubr.f32.gmra.mxu0 %v10036
      %v10142 = vpop.f32.mrf.mxu0
      %v10143 = vadd.f32 0.0, %v10142
      %v10144 = vpop.f32.mrf.mxu0
      %10145 = vmatprep.mubr.f32.mxu0 0.0
      %10146 = vmatmul.mubr.f32.gmra.mxu0 %v10037
      %v10147 = vpop.f32.mrf.mxu0
      %v10148 = vadd.f32 0.0, %v10147
      %v10149 = vpop.f32.mrf.mxu0
      %10150 = vmatprep.mubr.f32.mxu0 0.0
      %10151 = vmatmul.mubr.f32.gmra.mxu0 %v10038
      %v10152 = vpop.f32.mrf.mxu0
      %v10153 = vadd.f32 0.0, %v10152
      %v10154 = vpop.f32.mrf.mxu0
      %10155 = vmatprep.mubr.f32.mxu0 0.0
      %10156 = vmatmul.mubr.f32.gmra.mxu0 %v10039
      %v10157 = vpop.f32.mrf.mxu0
      %v10158 = vadd.f32 0.0, %v10157
      %v10159 = vpop.f32.mrf.mxu0
      %10160 = vmatprep.mubr.f32.mxu0 0.0
      %10161 = vmatmul.mubr.f32.gmra.mxu0 %v10040
      %v10162 = vpop.f32.mrf.mxu0
      %v10163 = vadd.f32 0.0, %v10162
      %v10164 = vpop.f32.mrf.mxu0
      %10165 = vmatprep.mubr.f32.mxu0 0.0
      %10166 = vmatmul.mubr.f32.gmra.mxu0 %v10041
      %v10167 = vpop.f32.mrf.mxu0
      %v10168 = vadd.f32 0.0, %v10167
      %v10169 = vpop.f32.mrf.mxu0
      %10170 = vmatprep.mubr.f32.mxu0 0.0
      %10171 = vmatmul.mubr.f32.gmra.mxu0 %v10042
      %v10172 = vpop.f32.mrf.mxu0
      %v10173 = vadd.f32 0.0, %v10172
      %v10174 = vpop.f32.mrf.mxu0
      %10175 = vmatprep.mubr.f32.mxu0 0.0
      %10176 = vmatmul.mubr.f32.gmra.mxu0 %v10043
      %v10177 = vpop.f32.mrf.mxu0
      %v10178 = vadd.f32 0.0, %v10177
      %v10179 = vpop.f32.mrf.mxu0
      %10180 = vmatprep.mubr.f32.mxu0 0.0
      %10181 = vmatmul.mubr.f32.gmra.mxu0 %v10044
      %v10182 = vpop.f32.mrf.mxu0
      %v10183 = vadd.f32 0.0, %v10182
      %v10184 = vpop.f32.mrf.mxu0
      %10185 = vmatprep.mubr.f32.mxu0 0.0
      %10186 = vmatmul.mubr.f32.gmra.mxu0 %v10045
      %v10187 = vpop.f32.mrf.mxu0
      %v10188 = vadd.f32 0.0, %v10187
      %v10189 = vpop.f32.mrf.mxu0
      %10190 = vdwg.mxu0
      %v10191 = vadd.f32 %v9851, %v10113
      %v10192 = vadd.f32 %v9852, %v10118
      %v10193 = vadd.f32 %v9853, %v10123
      %v10194 = vadd.f32 %v9854, %v10128
      %v10195 = vadd.f32 %v9855, %v10133
      %v10196 = vadd.f32 %v9856, %v10138
      %v10197 = vadd.f32 %v9857, %v10143
      %v10198 = vadd.f32 %v9858, %v10148
      %v10199 = vadd.f32 %v9859, %v10153
      %v10200 = vadd.f32 %v9860, %v10158
      %v10201 = vadd.f32 %v9861, %v10163
      %v10202 = vadd.f32 %v9862, %v10168
      %v10203 = vadd.f32 %v9863, %v10173
      %v10204 = vadd.f32 %v9864, %v10178
      %v10205 = vadd.f32 %v9865, %v10183
      %v10206 = vadd.f32 %v9866, %v10188
      %10207 = vst.msk [vmem:[%s514] sm:$0xff] %vm755, %v10191
      %10208 = vst.msk [vmem:[%s514 + $0x8] sm:$0xff] %vm755, %v10192
      %10209 = vst.msk [vmem:[%s514 + $0x10] sm:$0xff] %vm755, %v10193
      %10210 = vst.msk [vmem:[%s514 + $0x18] sm:$0xff] %vm755, %v10194
      %10211 = vst.msk [vmem:[%s514 + $0x20] sm:$0xff] %vm755, %v10195
      %10212 = vst.msk [vmem:[%s514 + $0x28] sm:$0xff] %vm755, %v10196
      %10213 = vst.msk [vmem:[%s514 + $0x30] sm:$0xff] %vm755, %v10197
      %10214 = vst.msk [vmem:[%s514 + $0x38] sm:$0xff] %vm755, %v10198
      %10215 = vst.msk [vmem:[%s514 + $0x40] sm:$0xff] %vm755, %v10199
      %10216 = vst.msk [vmem:[%s514 + $0x48] sm:$0xff] %vm755, %v10200
      %10217 = vst.msk [vmem:[%s514 + $0x50] sm:$0xff] %vm755, %v10201
      %10218 = vst.msk [vmem:[%s514 + $0x58] sm:$0xff] %vm755, %v10202
      %10219 = vst.msk [vmem:[%s514 + $0x60] sm:$0xff] %vm755, %v10203
      %10220 = vst.msk [vmem:[%s514 + $0x68] sm:$0xff] %vm755, %v10204
      %10221 = vst.msk [vmem:[%s514 + $0x70] sm:$0xff] %vm755, %v10205
      %10222 = vst.msk [vmem:[%s514 + $0x78] sm:$0xff] %vm755, %v10206
      %p10223 = scmp.lt.s32.totalorder %s26, 1
      %s10224 = scalar_select %p10223, %s26, 1
      %s10225 = smul.addr %s10224, 16
      %s10226 = smul.addr %s10225, 8
      %s10227 = scalar_lea.vmem %s15, %s10226
      // Predicated region
      $region81: #{resblock_forward.1} parent=79 // pred_check
        %p10228 = pneg %p369
      $region82: #{resblock_forward.1} parent=79 // pred_check_branch
        %10230 = sbr.rel (%p10228) target = $region84
      $region83: #{resblock_forward.1} parent=79 // pred_region
        _
      $region84: #{resblock_forward.1} parent=79 // pred_fallthru
        _
    $region80: #{resblock_forward.1} parent=5 // pred_fallthru
      _
    %p10231 = scmp.le.s32.totalorder 2, %s21
    // Predicated region
    $region85: #{resblock_forward.1} parent=5 // pred_check
      %p10232 = pneg %p10231
    $region86: #{resblock_forward.1} parent=5 // pred_check_branch
      %10234 = sbr.rel (%p10232) target = $region88
    $region87: #{resblock_forward.1} parent=5 // pred_region
      %s10235 = ssub.s32 %s21, 2
      // Predicated region
      $region89: #{resblock_forward.1} parent=87 // pred_check
        %p10236 = pneg %p375
      $region90: #{resblock_forward.1} parent=87 // pred_check_branch
        %10238 = sbr.rel (%p10236) target = $region92
      $region91: #{resblock_forward.1} parent=87 // pred_region
        %p10239 = scmp.lt.s32.totalorder %s27, 1
        %s10240 = scalar_select %p10239, %s27, 1
        %s10241 = smul.addr %s10240, 16
        %s10242 = smul.addr %s10241, 8
        %s10243 = scalar_lea.vmem %s15, %s10242
      $region92: #{resblock_forward.1} parent=87 // pred_fallthru
        _
    $region88: #{resblock_forward.1} parent=5 // pred_fallthru
      _
  $region6: #{resblock_forward.1} parent=0 // loop_footer
    %s25 = sadd.s32 1, %s21
  $region7: #{resblock_forward.1} parent=0 // loop_footer_branch
    %20 = sbr.rel target = $region3
  $region8: #{resblock_forward.1} parent=0 // loop_exit
    _

</llo_original>
